<compile_context>
chip_gen: v7x
topology: tpu7x:2x2x1
jax: 0.10.0
libtpu: 0.0.40
codegen_flags: <defaults>
</compile_context>

<pallas_src>
import functools

import jax
import jax.numpy as jnp
from jax import lax
from jax.experimental import pallas as pl
from jax.experimental.pallas import tpu as pltpu

_VMEM = pl.BlockSpec(memory_space=pltpu.MemorySpace.VMEM)
_VMEM_LIMIT = 64 * 1024 * 1024


# ---------------------------------------------------------------------------
# Small helpers
# ---------------------------------------------------------------------------
def _chip_is_v7x():
    try:
        kind = jax.devices()[0].device_kind.lower()
    except Exception:
        return False
    return ("v7" in kind) or ("tpu7" in kind)


def _pick_tile(dim, prefs, align):
    """Largest preferred tile that divides `dim` and respects the (8,128) rule."""
    for t in prefs:
        if t <= dim and dim % t == 0 and t % align == 0:
            return t
    return dim  # full extent is always a legal block size


def _time_chunk(S, max_chunk=16):
    """Timesteps per grid step (statically unrolled).  Must be a multiple of 8
    or equal S so the batch-major decoder output block stays (8,128)-legal."""
    for c in range(min(S, max_chunk), 0, -1):
        if S % c == 0 and (c % 8 == 0 or c == S):
            return c
    return S


def _pick_row_tile(M, K, itemsize, budget=8 * 1024 * 1024):
    """Row tile for fc_out: as large as fits a modest VMEM budget."""
    if M * K * itemsize <= budget:
        return M
    for cand in (4096, 2048, 1024, 512, 256, 128, 64, 32, 16, 8):
        if cand < M and M % cand == 0 and cand * K * itemsize <= budget:
            return cand
    return M  # rare awkward M: full extent fallback


def _const_spec(arr, n_grid):
    """Single-buffered whole-array VMEM block (index never changes)."""
    nd = arr.ndim
    idx = (lambda *_: (0,) * nd)
    del n_grid
    return pl.BlockSpec(arr.shape, idx, pipeline_mode=pl.Buffered(1))


# ---------------------------------------------------------------------------
# Kernel 1: fused LayerNorm + hoisted layer-0 input projections (enc & dec)
#   emb_flat [(S+1)*B, E]  ->  enc_gi, dec_gi  [(S+1)*B, 3H]  (bf16, lane-dense)
# ---------------------------------------------------------------------------
def _ln_proj_kernel(x_ref, g_ref, b_ref, ew_ref, eb_ref, dw_ref, db_ref,
                    egi_ref, dgi_ref):
    x = x_ref[...].astype(jnp.float32)
    mean = jnp.mean(x, axis=-1, keepdims=True)
    var = jnp.mean(jnp.square(x - mean), axis=-1, keepdims=True)
    ln = ((x - mean) * lax.rsqrt(var + 1e-5) * g_ref[...]
          + b_ref[...]).astype(jnp.bfloat16)
    egi_ref[...] = (jnp.dot(ln, ew_ref[...], preferred_element_type=jnp.float32)
                    + eb_ref[...]).astype(jnp.bfloat16)
    dgi_ref[...] = (jnp.dot(ln, dw_ref[...], preferred_element_type=jnp.float32)
                    + db_ref[...]).astype(jnp.bfloat16)


def embed_ln_proj(emb_flat, gamma, beta, enc_w0, enc_b0, dec_w0, dec_b0):
    R, E = emb_flat.shape
    threeH = enc_w0.shape[1]
    TR = 256 if R >= 256 else ((R + 7) // 8) * 8
    R_pad = ((R + TR - 1) // TR) * TR
    if R_pad != R:  # pad rows instead of falling back to tiny tiles
        emb_flat = jnp.pad(emb_flat, ((0, R_pad - R), (0, 0)))
    grid = (R_pad // TR,)
    row_spec = pl.BlockSpec((TR, E), lambda i: (i, 0))
    out_spec = pl.BlockSpec((TR, threeH), lambda i: (i, 0))

    egi, dgi = pl.pallas_call(
        _ln_proj_kernel,
        grid=grid,
        out_shape=(jax.ShapeDtypeStruct((R_pad, threeH), jnp.bfloat16),
                   jax.ShapeDtypeStruct((R_pad, threeH), jnp.bfloat16)),
        in_specs=[row_spec,
                  _const_spec(gamma, 1), _const_spec(beta, 1),
                  _const_spec(enc_w0, 1), _const_spec(enc_b0, 1),
                  _const_spec(dec_w0, 1), _const_spec(dec_b0, 1)],
        out_specs=(out_spec, out_spec),
        compiler_params=pltpu.CompilerParams(
            dimension_semantics=("parallel",),
            vmem_limit_bytes=_VMEM_LIMIT),
    )(emb_flat, gamma, beta, enc_w0, enc_b0, dec_w0, dec_b0)
    if R_pad != R:
        egi, dgi = egi[:R], dgi[:R]
    return egi, dgi


# ---------------------------------------------------------------------------
# GRU cell: ONE fused [BS,H]@[H,3H] recurrent matmul, PyTorch gate order r,z,n
# ---------------------------------------------------------------------------
def _gru_cell(gi, h_prev, whh, bhh, H):
    gh = jnp.dot(h_prev.astype(jnp.bfloat16), whh,
                 preferred_element_type=jnp.float32) + bhh
    r = jax.nn.sigmoid(gi[:, :H] + gh[:, :H])
    z = jax.nn.sigmoid(gi[:, H:2 * H] + gh[:, H:2 * H])
    n = jnp.tanh(gi[:, 2 * H:] + r * gh[:, 2 * H:])
    return (1.0 - z) * n + z * h_prev


# ---------------------------------------------------------------------------
# Kernel 2: encoder recurrence.  Grid = (batch_shards, time_chunks);
# stacked hidden state lives in the revisited VMEM output block.
# ---------------------------------------------------------------------------
def _encoder_kernel(*refs, num_layers, t_chunk, hidden_dim):
    H = hidden_dim
    if num_layers > 1:
        gi_ref, wih_ref, bih_ref, whh_ref, bhh_ref, hn_ref = refs
    else:
        gi_ref, whh_ref, bhh_ref, hn_ref = refs
        wih_ref = bih_ref = None

    @pl.when(pl.program_id(1) == 0)
    def _():
        hn_ref[...] = jnp.zeros_like(hn_ref)

    # Weight refs are indexed inside the (statically unrolled) time loop so the
    # compiler can bound live ranges instead of pinning every slab in vregs.
    for t in range(t_chunk):
        h_new = _gru_cell(gi_ref[t], hn_ref[0], whh_ref[0], bhh_ref[0], H)
        hn_ref[0] = h_new
        inp = h_new
        for l in range(1, num_layers):
            gi = (jnp.dot(inp.astype(jnp.bfloat16), wih_ref[l - 1],
                          preferred_element_type=jnp.float32) + bih_ref[l - 1])
            h_new = _gru_cell(gi, hn_ref[l], whh_ref[l], bhh_ref[l], H)
            hn_ref[l] = h_new
            inp = h_new


def encoder_gru(gi, wih_u, bih_u, whh, bhh, *, batch_shards=1, max_chunk=16):
    S, B, threeH = gi.shape
    L, H, _ = whh.shape
    TC = _time_chunk(S, max_chunk)
    BS = B // batch_shards
    grid = (batch_shards, S // TC)
    gi_spec = pl.BlockSpec((TC, BS, threeH), lambda b, t: (t, b, 0))

    in_arrays, in_specs = [gi], [gi_spec]
    if L > 1:  # layer-0 input-projection slabs were hoisted; never passed here
        in_arrays += [wih_u, bih_u]
        in_specs += [_const_spec(wih_u, 2), _const_spec(bih_u, 2)]
    in_arrays += [whh, bhh]
    in_specs += [_const_spec(whh, 2), _const_spec(bhh, 2)]

    return pl.pallas_call(
        functools.partial(_encoder_kernel, num_layers=L, t_chunk=TC, hidden_dim=H),
        grid=grid,
        out_shape=jax.ShapeDtypeStruct((L, B, H), jnp.float32),
        in_specs=in_specs,
        out_specs=pl.BlockSpec((L, BS, H), lambda b, t: (0, b, 0)),
        compiler_params=pltpu.CompilerParams(
            dimension_semantics=("parallel", "arbitrary"),
            vmem_limit_bytes=_VMEM_LIMIT),
    )(*in_arrays)


# ---------------------------------------------------------------------------
# Kernel 3: decoder recurrence.  Hidden state in VMEM scratch; emits the
# top-layer hidden states BATCH-MAJOR [B, S, H] (bf16) so fc_out needs no
# wrapper transpose.
# ---------------------------------------------------------------------------
def _decoder_kernel(*refs, num_layers, t_chunk, hidden_dim):
    H = hidden_dim
    if num_layers > 1:
        gi_ref, h0_ref, wih_ref, bih_ref, whh_ref, bhh_ref, hid_ref, h_scr = refs
    else:
        gi_ref, h0_ref, whh_ref, bhh_ref, hid_ref, h_scr = refs
        wih_ref = bih_ref = None

    @pl.when(pl.program_id(1) == 0)
    def _():
        h_scr[...] = h0_ref[...].astype(jnp.float32)

    for t in range(t_chunk):
        h_new = _gru_cell(gi_ref[t], h_scr[0], whh_ref[0], bhh_ref[0], H)
        h_scr[0] = h_new
        inp = h_new
        for l in range(1, num_layers):
            gi = (jnp.dot(inp.astype(jnp.bfloat16), wih_ref[l - 1],
                          preferred_element_type=jnp.float32) + bih_ref[l - 1])
            h_new = _gru_cell(gi, h_scr[l], whh_ref[l], bhh_ref[l], H)
            h_scr[l] = h_new
            inp = h_new
        hid_ref[:, t:t + 1, :] = inp[:, None, :].astype(jnp.bfloat16)


def decoder_gru(gi, h0, wih_u, bih_u, whh, bhh, *, batch_shards=1, max_chunk=16):
    S, B, threeH = gi.shape
    L, H, _ = whh.shape
    TC = _time_chunk(S, max_chunk)
    BS = B // batch_shards
    grid = (batch_shards, S // TC)
    gi_spec = pl.BlockSpec((TC, BS, threeH), lambda b, t: (t, b, 0))
    h0_spec = pl.BlockSpec((L, BS, H), lambda b, t: (0, b, 0),
                           pipeline_mode=pl.Buffered(1))

    in_arrays, in_specs = [gi, h0], [gi_spec, h0_spec]
    if L > 1:
        in_arrays += [wih_u, bih_u]
        in_specs += [_const_spec(wih_u, 2), _const_spec(bih_u, 2)]
    in_arrays += [whh, bhh]
    in_specs += [_const_spec(whh, 2), _const_spec(bhh, 2)]

    return pl.pallas_call(
        functools.partial(_decoder_kernel, num_layers=L, t_chunk=TC, hidden_dim=H),
        grid=grid,
        out_shape=jax.ShapeDtypeStruct((B, S, H), jnp.bfloat16),
        in_specs=in_specs,
        out_specs=pl.BlockSpec((BS, TC, H), lambda b, t: (b, t, 0)),
        scratch_shapes=[pltpu.VMEM((L, BS, H), jnp.float32)],
        compiler_params=pltpu.CompilerParams(
            dimension_semantics=("parallel", "arbitrary"),
            vmem_limit_bytes=_VMEM_LIMIT),
    )(*in_arrays)


# ---------------------------------------------------------------------------
# Kernel 4: lane-dense tiled linear for fc_out: [B*S, H](bf16) @ [H, Vpad](bf16)
# Vocab grid axis is OUTER so each weight tile streams from HBM exactly once.
# ---------------------------------------------------------------------------
def _linear_kernel(x_ref, w_ref, b_ref, o_ref):
    o_ref[...] = (jnp.dot(x_ref[...], w_ref[...],
                          preferred_element_type=jnp.float32) + b_ref[...])


def tiled_linear(x2d, w_t, b_row):
    M, K = x2d.shape
    N = w_t.shape[1]                       # already padded to a multiple of 256
    TM = _pick_row_tile(M, K, x2d.dtype.itemsize)
    TN = _pick_tile(N, (512, 256, 128), 128)
    grid = (N // TN, M // TM)
    return pl.pallas_call(
        _linear_kernel,
        grid=grid,
        out_shape=jax.ShapeDtypeStruct((M, N), jnp.float32),
        in_specs=[pl.BlockSpec((TM, K), lambda j, i: (i, 0)),
                  pl.BlockSpec((K, TN), lambda j, i: (0, j)),
                  pl.BlockSpec((1, TN), lambda j, i: (0, j))],
        out_specs=pl.BlockSpec((TM, TN), lambda j, i: (i, j)),
        compiler_params=pltpu.CompilerParams(
            dimension_semantics=("parallel", "parallel"),
            vmem_limit_bytes=_VMEM_LIMIT),
    )(x2d, w_t, b_row)


# ---------------------------------------------------------------------------
# Kernel 5: latent heads (one fused head matmul) + reparametrization + fc
# ---------------------------------------------------------------------------
def _latent_kernel(hn_ref, wh_ref, bh_ref, wfs_ref, wfc_ref, bfc_ref,
                   eps_s_ref, eps_c_ref,
                   heads_ref, style_ref, content_ref, z_ref,
                   *, style_dim, content_dim):
    SD, CD = style_dim, content_dim
    hn = hn_ref[...]
    heads = jnp.dot(hn, wh_ref[...], preferred_element_type=jnp.float32) + bh_ref[...]
    mu_s = heads[:, :SD]
    lv_s = heads[:, SD:2 * SD]
    mu_c = heads[:, 2 * SD:2 * SD + CD]
    lv_c = heads[:, 2 * SD + CD:]
    style = mu_s + eps_s_ref[...] * jnp.exp(0.5 * lv_s)
    content = mu_c + eps_c_ref[...] * jnp.exp(0.5 * lv_c)
    # z = cat(style, content) @ W_fc^T + b_fc  (split weight -> no in-kernel concat)
    z = (jnp.dot(style, wfs_ref[...], preferred_element_type=jnp.float32)
         + jnp.dot(content, wfc_ref[...], preferred_element_type=jnp.float32)
         + bfc_ref[...])
    heads_ref[...] = heads
    style_ref[...] = style
    content_ref[...] = content
    z_ref[...] = z


def latent_heads(hn_flat, w_heads, b_heads, wfc_s, wfc_c, b_fc, eps_s, eps_c):
    N, H = hn_flat.shape
    SD = wfc_s.shape[0]
    CD = wfc_c.shape[0]
    W = w_heads.shape[1]
    return pl.pallas_call(
        functools.partial(_latent_kernel, style_dim=SD, content_dim=CD),
        out_shape=(jax.ShapeDtypeStruct((N, W), jnp.float32),    # mu/logvar heads
                   jax.ShapeDtypeStruct((N, SD), jnp.float32),   # style
                   jax.ShapeDtypeStruct((N, CD), jnp.float32),   # content
                   jax.ShapeDtypeStruct((N, H), jnp.float32)),   # z
        in_specs=[_VMEM] * 8,
        out_specs=(_VMEM,) * 4,
    )(hn_flat, w_heads, b_heads, wfc_s, wfc_c, b_fc, eps_s, eps_c)


# ---------------------------------------------------------------------------
# Full forward pass (matches GRUVAE.forward semantics)
# ---------------------------------------------------------------------------
def gruvae_forward(p, x, key):
    B, S = x.shape
    L, H, threeH = p["enc_whh"].shape
    SD = p["wfc_s"].shape[0]
    CD = p["wfc_c"].shape[0]
    V = p["embedding"].shape[0]

    # Token embedding (data-dependent gather) kept as plain-JAX glue, gathered
    # directly time-major so the flatten below is free.
    sos_ids = jnp.full((B, 1), p["sos_token"], dtype=x.dtype)
    tokens = jnp.concatenate([sos_ids, x], axis=1)              # [B, S+1]
    emb_tm = p["embedding"][tokens.T]                           # [S+1, B, E]
    E = emb_tm.shape[-1]
    emb_flat = emb_tm.reshape((S + 1) * B, E)

    # Fused LayerNorm + hoisted layer-0 input projections for enc & dec (bf16).
    egi, dgi = embed_ln_proj(emb_flat, p["ln_gamma"], p["ln_beta"],
                             p["enc_wih0"], p["enc_bih0"],
                             p["dec_wih0"], p["dec_bih0"])
    egi = egi.reshape(S + 1, B, threeH)
    dgi = dgi.reshape(S + 1, B, threeH)

    # Generation-specific knobs: only v7x has 2 TensorCores (batch sharding)
    # and only 64 MiB VMEM (smaller time chunk).
    is_v7x = _chip_is_v7x()
    batch_shards = 2 if (is_v7x and B % 16 == 0) else 1
    max_chunk = 8 if is_v7x else 16

    # Encoder: rows 1..S of the LN'd sequence == layernorm(embed(x)).
    hn = encoder_gru(egi[1:], p["enc_wih_u"], p["enc_bih_u"],
                     p["enc_whh"], p["enc_bhh"],
                     batch_shards=batch_shards, max_chunk=max_chunk)  # [L,B,H]

    # Latent heads, reparametrization, z = fc(cat(style, content)).
    k_s, k_c = jax.random.split(key)
    N = L * B
    eps_s = jax.random.normal(k_s, (N, SD), jnp.float32)
    eps_c = jax.random.normal(k_c, (N, CD), jnp.float32)
    heads, style, content, z = latent_heads(
        hn.reshape(N, H), p["w_heads"], p["b_heads"],
        p["wfc_s"], p["wfc_c"], p["b_fc"], eps_s, eps_c)
    mu_s = heads[:, :SD].reshape(L, B, SD)
    logvar_s = heads[:, SD:2 * SD].reshape(L, B, SD)
    mu_c = heads[:, 2 * SD:2 * SD + CD].reshape(L, B, CD)
    logvar_c = heads[:, 2 * SD + CD:].reshape(L, B, CD)
    style = style.reshape(L, B, SD)
    content = content.reshape(L, B, CD)
    z = z.reshape(L, B, H)

    # Decoder: the PyTorch loop re-runs the decoder on prefixes [:t+1] (hidden
    # re-initialized to z each time) and keeps only the last output; for a
    # deterministic GRU that equals the t-th output of ONE full-length pass
    # with initial hidden z, so a single pass suffices.
    hid = decoder_gru(dgi[:S], z, p["dec_wih_u"], p["dec_bih_u"],
                      p["dec_whh"], p["dec_bhh"],
                      batch_shards=batch_shards, max_chunk=max_chunk)  # [B,S,H] bf16

    # fc_out: lane-dense tiled matmul over all B*S rows (no wrapper transpose).
    logits = tiled_linear(hid.reshape(B * S, H), p["w_out_t"], p["b_out"])
    logits = logits[:, :V].reshape(B, S, V)

    return logits, style, content, mu_s, logvar_s, mu_c, logvar_c


# ---------------------------------------------------------------------------
# Parameter init (PyTorch layouts) + one-time kernel-layout preparation
# ---------------------------------------------------------------------------
def init_torch_params(key, vocab_size, embedding_dim, hidden_dim, num_layers,
                      style_dim, content_dim, sos_token):
    # PyTorch conventions: Linear/GRU weights are [out, in]; GRU gate order (r,z,n).
    assert embedding_dim == hidden_dim, "stacked GRU layer weights assume E == H"
    E, H, L = embedding_dim, hidden_dim, num_layers
    it = iter(jax.random.split(key, 24))
    u = lambda k, shape: jax.random.uniform(k, shape, jnp.float32, -0.1, 0.1)
    return {
        "sos_token": jnp.int32(sos_token),
        "embedding": jax.random.normal(next(it), (vocab_size, E), jnp.float32),
        "ln_gamma": jnp.ones((E,), jnp.float32),
        "ln_beta": jnp.zeros((E,), jnp.float32),
        "enc_w_ih": u(next(it), (L, 3 * H, E)),
        "enc_w_hh": u(next(it), (L, 3 * H, H)),
        "enc_b_ih": u(next(it), (L, 3 * H)),
        "enc_b_hh": u(next(it), (L, 3 * H)),
        "dec_w_ih": u(next(it), (L, 3 * H, E)),
        "dec_w_hh": u(next(it), (L, 3 * H, H)),
        "dec_b_ih": u(next(it), (L, 3 * H)),
        "dec_b_hh": u(next(it), (L, 3 * H)),
        "w_mu_s": u(next(it), (style_dim, H)),
        "b_mu_s": u(next(it), (style_dim,)),
        "w_var_s": u(next(it), (style_dim, H)),
        "b_var_s": u(next(it), (style_dim,)),
        "w_mu_c": u(next(it), (content_dim, H)),
        "b_mu_c": u(next(it), (content_dim,)),
        "w_var_c": u(next(it), (content_dim, H)),
        "b_var_c": u(next(it), (content_dim,)),
        "w_fc": u(next(it), (H, style_dim + content_dim)),
        "b_fc": u(next(it), (H,)),
        "w_out": u(next(it), (vocab_size, H)),
        "b_out": u(next(it), (vocab_size,)),
    }


def prepare_params(tp):
    """One-time layout conversion (called once, OUTSIDE jit): transposes,
    fused [L,H,3H] bf16 weight slabs, padded fc_out weight, fused latent heads."""
    L, threeH, H = tp["enc_w_hh"].shape
    E = tp["enc_w_ih"].shape[2]
    SD = tp["w_mu_s"].shape[0]
    V = tp["w_out"].shape[0]

    def rec_w(w):   # [l, 3H, IN] -> [l, IN, 3H] bf16 (fused-gate slab)
        return jnp.swapaxes(w, -1, -2).astype(jnp.bfloat16)

    def rec_b(b):   # [l, 3H] -> [l, 1, 3H] f32
        return b[:, None, :].astype(jnp.float32)

    # fc_out weight padded to a lane-aligned vocab width (one-time, zero-filled).
    VP = ((V + 255) // 256) * 256
    w_out_t = jnp.zeros((H, VP), jnp.bfloat16).at[:, :V].set(
        tp["w_out"].T.astype(jnp.bfloat16))
    b_out = jnp.zeros((1, VP), jnp.float32).at[0, :V].set(tp["b_out"])

    return {
        "sos_token": tp["sos_token"],
        "embedding": tp["embedding"].astype(jnp.float32),
        "ln_gamma": tp["ln_gamma"].reshape(1, E).astype(jnp.float32),
        "ln_beta": tp["ln_beta"].reshape(1, E).astype(jnp.float32),
        # layer-0 input projections (fused gates), hoisted out of the recurrence
        "enc_wih0": tp["enc_w_ih"][0].T.astype(jnp.bfloat16),
        "enc_bih0": tp["enc_b_ih"][0].reshape(1, threeH).astype(jnp.float32),
        "dec_wih0": tp["dec_w_ih"][0].T.astype(jnp.bfloat16),
        "dec_bih0": tp["dec_b_ih"][0].reshape(1, threeH).astype(jnp.float32),
        # fused recurrent slabs; dead layer-0 input slabs dropped entirely
        "enc_whh": rec_w(tp["enc_w_hh"]),
        "enc_bhh": rec_b(tp["enc_b_hh"]),
        "dec_whh": rec_w(tp["dec_w_hh"]),
        "dec_bhh": rec_b(tp["dec_b_hh"]),
        "enc_wih_u": rec_w(tp["enc_w_ih"][1:]) if L > 1 else None,
        "enc_bih_u": rec_b(tp["enc_b_ih"][1:]) if L > 1 else None,
        "dec_wih_u": rec_w(tp["dec_w_ih"][1:]) if L > 1 else None,
        "dec_bih_u": rec_b(tp["dec_b_ih"][1:]) if L > 1 else None,
        # latent heads fused into one [H, 2*SD+2*CD] matmul
        "w_heads": jnp.concatenate(
            [tp["w_mu_s"].T, tp["w_var_s"].T, tp["w_mu_c"].T, tp["w_var_c"].T], axis=1),
        "b_heads": jnp.concatenate(
            [tp["b_mu_s"], tp["b_var_s"], tp["b_mu_c"], tp["b_var_c"]]).reshape(1, -1),
        "wfc_s": tp["w_fc"].T[:SD],
        "wfc_c": tp["w_fc"].T[SD:],
        "b_fc": tp["b_fc"].reshape(1, H),
        "w_out_t": w_out_t,
        "b_out": b_out,
    }


if __name__ == "__main__":
    B, S = 2, 8
    E = H = 32
    L = 2
    SD = CD = 8
    V = 64

    key = jax.random.PRNGKey(0)
    k_param, k_x, k_eps = jax.random.split(key, 3)
    torch_layout = init_torch_params(k_param, V, E, H, L, SD, CD, sos_token=1)
    params = prepare_params(torch_layout)     # one-time layout prep, outside jit
    x = jax.random.randint(k_x, (B, S), 0, V, dtype=jnp.int32)

    fwd = jax.jit(gruvae_forward)
    outs = jax.block_until_ready(fwd(params, x, k_eps))
    logits, style, content, mu_s, logvar_s, mu_c, logvar_c = outs

    assert logits.shape == (B, S, V)
    assert style.shape == (L, B, SD) and content.shape == (L, B, CD)
    assert mu_s.shape == (L, B, SD) and logvar_s.shape == (L, B, SD)
    assert mu_c.shape == (L, B, CD) and logvar_c.shape == (L, B, CD)
    assert all(bool(jnp.isfinite(o.astype(jnp.float32)).all()) for o in outs)
    print("KERNEL_OK")
</pallas_src>

<mosaic_0001>
module attributes {stable_mosaic.version = 11 : i64} {
  func.func @_encoder_kernel(%arg0: i32, %arg1: i32, %arg2: memref<8x2x96xbf16, #tpu.memory_space<vmem>>, %arg3: memref<1x32x96xbf16, #tpu.memory_space<vmem>>, %arg4: memref<1x1x96xf32, #tpu.memory_space<vmem>>, %arg5: memref<2x32x96xbf16, #tpu.memory_space<vmem>>, %arg6: memref<2x1x96xf32, #tpu.memory_space<vmem>>, %arg7: memref<2x2x32xf32, #tpu.memory_space<vmem>>) attributes {dimension_semantics = [#tpu.dimension_semantics<parallel>, #tpu.dimension_semantics<arbitrary>], iteration_bounds = array<i64: 1, 1>, scalar_prefetch = 0 : i64, scratch_operands = 0 : i64, tpu.core_type = #tpu.core_type<tc>, window_params = [{transform_indices = @transform_0, window_bounds = array<i64: 8, 2, 96>}, {pipeline_mode = #tpu.pipeline_mode<synchronous>, transform_indices = @transform_1, window_bounds = array<i64: 1, 32, 96>}, {pipeline_mode = #tpu.pipeline_mode<synchronous>, transform_indices = @transform_2, window_bounds = array<i64: 1, 1, 96>}, {pipeline_mode = #tpu.pipeline_mode<synchronous>, transform_indices = @transform_3, window_bounds = array<i64: 2, 32, 96>}, {pipeline_mode = #tpu.pipeline_mode<synchronous>, transform_indices = @transform_4, window_bounds = array<i64: 2, 1, 96>}, {transform_indices = @transform_5, window_bounds = array<i64: 2, 2, 32>}]} {
    %c0_i32 = arith.constant 0 : i32
    %0 = arith.cmpi eq, %arg1, %c0_i32 : i32
    %1 = arith.extui %0 : i1 to i32
    %c0_i32_0 = arith.constant 0 : i32
    %2 = arith.cmpi ne, %1, %c0_i32_0 : i32
    scf.if %2 {
      %cst_328 = arith.constant 0.000000e+00 : f32
      %731 = vector.broadcast %cst_328 : f32 to vector<2x2x32xf32>
      %c0_329 = arith.constant 0 : index
      %c0_330 = arith.constant 0 : index
      %c0_331 = arith.constant 0 : index
      %732 = vector.load %arg7[%c0_329, %c0_330, %c0_331] : memref<2x2x32xf32, #tpu.memory_space<vmem>>, vector<2x2x32xf32>
      tpu.vector_store %arg7[%c0_329, %c0_330, %c0_331], %731 {strides = array<i32>} : memref<2x2x32xf32, #tpu.memory_space<vmem>>, vector<2x2x32xf32>,
    } else {
    }
    %c0 = arith.constant 0 : index
    %c0_1 = arith.constant 0 : index
    %c0_2 = arith.constant 0 : index
    %3 = vector.load %arg2[%c0, %c0_1, %c0_2] : memref<8x2x96xbf16, #tpu.memory_space<vmem>>, vector<1x2x96xbf16>
    %4 = vector.shape_cast %3 : vector<1x2x96xbf16> to vector<2x96xbf16>
    %c0_3 = arith.constant 0 : index
    %c0_4 = arith.constant 0 : index
    %c0_5 = arith.constant 0 : index
    %5 = vector.load %arg7[%c0_3, %c0_4, %c0_5] : memref<2x2x32xf32, #tpu.memory_space<vmem>>, vector<1x2x32xf32>
    %6 = vector.shape_cast %5 : vector<1x2x32xf32> to vector<2x32xf32>
    %c0_6 = arith.constant 0 : index
    %c0_7 = arith.constant 0 : index
    %c0_8 = arith.constant 0 : index
    %7 = vector.load %arg5[%c0_6, %c0_7, %c0_8] : memref<2x32x96xbf16, #tpu.memory_space<vmem>>, vector<1x32x96xbf16>
    %8 = vector.shape_cast %7 : vector<1x32x96xbf16> to vector<32x96xbf16>
    %c0_9 = arith.constant 0 : index
    %c0_10 = arith.constant 0 : index
    %c0_11 = arith.constant 0 : index
    %9 = vector.load %arg6[%c0_9, %c0_10, %c0_11] : memref<2x1x96xf32, #tpu.memory_space<vmem>>, vector<1x1x96xf32>
    %10 = vector.shape_cast %9 : vector<1x1x96xf32> to vector<1x96xf32>
    %11 = arith.truncf %6 : vector<2x32xf32> to vector<2x32xbf16>
    %cst = arith.constant dense<0.000000e+00> : vector<2x96xf32>
    %12 = tpu.matmul %11, %8, %cst {dimension_numbers = #tpu.dot_dimension_numbers<[1], [0], [0], [1], [0, 0, 1, 1], [], []>} : vector<2x32xbf16>, vector<32x96xbf16>, vector<2x96xf32> -> vector<2x96xf32>
    %13 = vector.broadcast %10 : vector<1x96xf32> to vector<2x96xf32>
    %14 = arith.addf %12, %13 : vector<2x96xf32>
    %15 = vector.extract_strided_slice %4 {offsets = [0, 0], sizes = [2, 32], strides = [1, 1]} : vector<2x96xbf16> to vector<2x32xbf16>
    %16 = vector.extract_strided_slice %14 {offsets = [0, 0], sizes = [2, 32], strides = [1, 1]} : vector<2x96xf32> to vector<2x32xf32>
    %17 = arith.extf %15 : vector<2x32xbf16> to vector<2x32xf32>
    %18 = arith.addf %17, %16 : vector<2x32xf32>
    %19 = arith.negf %18 : vector<2x32xf32>
    %20 = math.exp %19 : vector<2x32xf32>
    %cst_12 = arith.constant 1.000000e+00 : f32
    %21 = vector.broadcast %cst_12 : f32 to vector<2x32xf32>
    %22 = arith.addf %21, %20 : vector<2x32xf32>
    %23 = arith.divf %21, %22 : vector<2x32xf32>
    %24 = vector.extract_strided_slice %4 {offsets = [0, 32], sizes = [2, 32], strides = [1, 1]} : vector<2x96xbf16> to vector<2x32xbf16>
    %25 = vector.extract_strided_slice %14 {offsets = [0, 32], sizes = [2, 32], strides = [1, 1]} : vector<2x96xf32> to vector<2x32xf32>
    %26 = arith.extf %24 : vector<2x32xbf16> to vector<2x32xf32>
    %27 = arith.addf %26, %25 : vector<2x32xf32>
    %28 = arith.negf %27 : vector<2x32xf32>
    %29 = math.exp %28 : vector<2x32xf32>
    %cst_13 = arith.constant 1.000000e+00 : f32
    %30 = vector.broadcast %cst_13 : f32 to vector<2x32xf32>
    %31 = arith.addf %30, %29 : vector<2x32xf32>
    %32 = arith.divf %30, %31 : vector<2x32xf32>
    %33 = vector.extract_strided_slice %4 {offsets = [0, 64], sizes = [2, 32], strides = [1, 1]} : vector<2x96xbf16> to vector<2x32xbf16>
    %34 = vector.extract_strided_slice %14 {offsets = [0, 64], sizes = [2, 32], strides = [1, 1]} : vector<2x96xf32> to vector<2x32xf32>
    %35 = arith.mulf %23, %34 : vector<2x32xf32>
    %36 = arith.extf %33 : vector<2x32xbf16> to vector<2x32xf32>
    %37 = arith.addf %36, %35 : vector<2x32xf32>
    %38 = math.tanh %37 : vector<2x32xf32>
    %cst_14 = arith.constant 1.000000e+00 : f32
    %39 = vector.broadcast %cst_14 : f32 to vector<2x32xf32>
    %40 = arith.subf %39, %32 : vector<2x32xf32>
    %41 = arith.mulf %40, %38 : vector<2x32xf32>
    %42 = arith.mulf %32, %6 : vector<2x32xf32>
    %43 = arith.addf %41, %42 : vector<2x32xf32>
    %c0_15 = arith.constant 0 : index
    %c0_16 = arith.constant 0 : index
    %c0_17 = arith.constant 0 : index
    %44 = vector.load %arg7[%c0_15, %c0_16, %c0_17] : memref<2x2x32xf32, #tpu.memory_space<vmem>>, vector<1x2x32xf32>
    %45 = vector.shape_cast %44 : vector<1x2x32xf32> to vector<2x32xf32>
    %46 = vector.shape_cast %43 : vector<2x32xf32> to vector<1x2x32xf32>
    tpu.vector_store %arg7[%c0_15, %c0_16, %c0_17], %46 {strides = array<i32>} : memref<2x2x32xf32, #tpu.memory_space<vmem>>, vector<1x2x32xf32>,
    %47 = arith.truncf %43 : vector<2x32xf32> to vector<2x32xbf16>
    %c0_18 = arith.constant 0 : index
    %c0_19 = arith.constant 0 : index
    %c0_20 = arith.constant 0 : index
    %48 = vector.load %arg3[%c0_18, %c0_19, %c0_20] : memref<1x32x96xbf16, #tpu.memory_space<vmem>>, vector<1x32x96xbf16>
    %49 = vector.shape_cast %48 : vector<1x32x96xbf16> to vector<32x96xbf16>
    %cst_21 = arith.constant dense<0.000000e+00> : vector<2x96xf32>
    %50 = tpu.matmul %47, %49, %cst_21 {dimension_numbers = #tpu.dot_dimension_numbers<[1], [0], [0], [1], [0, 0, 1, 1], [], []>} : vector<2x32xbf16>, vector<32x96xbf16>, vector<2x96xf32> -> vector<2x96xf32>
    %c0_22 = arith.constant 0 : index
    %c0_23 = arith.constant 0 : index
    %c0_24 = arith.constant 0 : index
    %51 = vector.load %arg4[%c0_22, %c0_23, %c0_24] : memref<1x1x96xf32, #tpu.memory_space<vmem>>, vector<1x1x96xf32>
    %52 = vector.shape_cast %51 : vector<1x1x96xf32> to vector<1x96xf32>
    %53 = vector.broadcast %52 : vector<1x96xf32> to vector<2x96xf32>
    %54 = arith.addf %50, %53 : vector<2x96xf32>
    %c1 = arith.constant 1 : index
    %c0_25 = arith.constant 0 : index
    %c0_26 = arith.constant 0 : index
    %55 = vector.load %arg7[%c1, %c0_25, %c0_26] : memref<2x2x32xf32, #tpu.memory_space<vmem>>, vector<1x2x32xf32>
    %56 = vector.shape_cast %55 : vector<1x2x32xf32> to vector<2x32xf32>
    %c1_27 = arith.constant 1 : index
    %c0_28 = arith.constant 0 : index
    %c0_29 = arith.constant 0 : index
    %57 = vector.load %arg5[%c1_27, %c0_28, %c0_29] : memref<2x32x96xbf16, #tpu.memory_space<vmem>>, vector<1x32x96xbf16>
    %58 = vector.shape_cast %57 : vector<1x32x96xbf16> to vector<32x96xbf16>
    %c1_30 = arith.constant 1 : index
    %c0_31 = arith.constant 0 : index
    %c0_32 = arith.constant 0 : index
    %59 = vector.load %arg6[%c1_30, %c0_31, %c0_32] : memref<2x1x96xf32, #tpu.memory_space<vmem>>, vector<1x1x96xf32>
    %60 = vector.shape_cast %59 : vector<1x1x96xf32> to vector<1x96xf32>
    %61 = arith.truncf %56 : vector<2x32xf32> to vector<2x32xbf16>
    %cst_33 = arith.constant dense<0.000000e+00> : vector<2x96xf32>
    %62 = tpu.matmul %61, %58, %cst_33 {dimension_numbers = #tpu.dot_dimension_numbers<[1], [0], [0], [1], [0, 0, 1, 1], [], []>} : vector<2x32xbf16>, vector<32x96xbf16>, vector<2x96xf32> -> vector<2x96xf32>
    %63 = vector.broadcast %60 : vector<1x96xf32> to vector<2x96xf32>
    %64 = arith.addf %62, %63 : vector<2x96xf32>
    %65 = vector.extract_strided_slice %54 {offsets = [0, 0], sizes = [2, 32], strides = [1, 1]} : vector<2x96xf32> to vector<2x32xf32>
    %66 = vector.extract_strided_slice %64 {offsets = [0, 0], sizes = [2, 32], strides = [1, 1]} : vector<2x96xf32> to vector<2x32xf32>
    %67 = arith.addf %65, %66 : vector<2x32xf32>
    %68 = arith.negf %67 : vector<2x32xf32>
    %69 = math.exp %68 : vector<2x32xf32>
    %cst_34 = arith.constant 1.000000e+00 : f32
    %70 = vector.broadcast %cst_34 : f32 to vector<2x32xf32>
    %71 = arith.addf %70, %69 : vector<2x32xf32>
    %72 = arith.divf %70, %71 : vector<2x32xf32>
    %73 = vector.extract_strided_slice %54 {offsets = [0, 32], sizes = [2, 32], strides = [1, 1]} : vector<2x96xf32> to vector<2x32xf32>
    %74 = vector.extract_strided_slice %64 {offsets = [0, 32], sizes = [2, 32], strides = [1, 1]} : vector<2x96xf32> to vector<2x32xf32>
    %75 = arith.addf %73, %74 : vector<2x32xf32>
    %76 = arith.negf %75 : vector<2x32xf32>
    %77 = math.exp %76 : vector<2x32xf32>
    %cst_35 = arith.constant 1.000000e+00 : f32
    %78 = vector.broadcast %cst_35 : f32 to vector<2x32xf32>
    %79 = arith.addf %78, %77 : vector<2x32xf32>
    %80 = arith.divf %78, %79 : vector<2x32xf32>
    %81 = vector.extract_strided_slice %54 {offsets = [0, 64], sizes = [2, 32], strides = [1, 1]} : vector<2x96xf32> to vector<2x32xf32>
    %82 = vector.extract_strided_slice %64 {offsets = [0, 64], sizes = [2, 32], strides = [1, 1]} : vector<2x96xf32> to vector<2x32xf32>
    %83 = arith.mulf %72, %82 : vector<2x32xf32>
    %84 = arith.addf %81, %83 : vector<2x32xf32>
    %85 = math.tanh %84 : vector<2x32xf32>
    %cst_36 = arith.constant 1.000000e+00 : f32
    %86 = vector.broadcast %cst_36 : f32 to vector<2x32xf32>
    %87 = arith.subf %86, %80 : vector<2x32xf32>
    %88 = arith.mulf %87, %85 : vector<2x32xf32>
    %89 = arith.mulf %80, %56 : vector<2x32xf32>
    %90 = arith.addf %88, %89 : vector<2x32xf32>
    %c1_37 = arith.constant 1 : index
    %c0_38 = arith.constant 0 : index
    %c0_39 = arith.constant 0 : index
    %91 = vector.load %arg7[%c1_37, %c0_38, %c0_39] : memref<2x2x32xf32, #tpu.memory_space<vmem>>, vector<1x2x32xf32>
    %92 = vector.shape_cast %91 : vector<1x2x32xf32> to vector<2x32xf32>
    %93 = vector.shape_cast %90 : vector<2x32xf32> to vector<1x2x32xf32>
    tpu.vector_store %arg7[%c1_37, %c0_38, %c0_39], %93 {strides = array<i32>} : memref<2x2x32xf32, #tpu.memory_space<vmem>>, vector<1x2x32xf32>,
    %c1_40 = arith.constant 1 : index
    %c0_41 = arith.constant 0 : index
    %c0_42 = arith.constant 0 : index
    %94 = vector.load %arg2[%c1_40, %c0_41, %c0_42] : memref<8x2x96xbf16, #tpu.memory_space<vmem>>, vector<1x2x96xbf16>
    %95 = vector.shape_cast %94 : vector<1x2x96xbf16> to vector<2x96xbf16>
    %c0_43 = arith.constant 0 : index
    %c0_44 = arith.constant 0 : index
    %c0_45 = arith.constant 0 : index
    %96 = vector.load %arg7[%c0_43, %c0_44, %c0_45] : memref<2x2x32xf32, #tpu.memory_space<vmem>>, vector<1x2x32xf32>
    %97 = vector.shape_cast %96 : vector<1x2x32xf32> to vector<2x32xf32>
    %c0_46 = arith.constant 0 : index
    %c0_47 = arith.constant 0 : index
    %c0_48 = arith.constant 0 : index
    %98 = vector.load %arg5[%c0_46, %c0_47, %c0_48] : memref<2x32x96xbf16, #tpu.memory_space<vmem>>, vector<1x32x96xbf16>
    %99 = vector.shape_cast %98 : vector<1x32x96xbf16> to vector<32x96xbf16>
    %c0_49 = arith.constant 0 : index
    %c0_50 = arith.constant 0 : index
    %c0_51 = arith.constant 0 : index
    %100 = vector.load %arg6[%c0_49, %c0_50, %c0_51] : memref<2x1x96xf32, #tpu.memory_space<vmem>>, vector<1x1x96xf32>
    %101 = vector.shape_cast %100 : vector<1x1x96xf32> to vector<1x96xf32>
    %102 = arith.truncf %97 : vector<2x32xf32> to vector<2x32xbf16>
    %cst_52 = arith.constant dense<0.000000e+00> : vector<2x96xf32>
    %103 = tpu.matmul %102, %99, %cst_52 {dimension_numbers = #tpu.dot_dimension_numbers<[1], [0], [0], [1], [0, 0, 1, 1], [], []>} : vector<2x32xbf16>, vector<32x96xbf16>, vector<2x96xf32> -> vector<2x96xf32>
    %104 = vector.broadcast %101 : vector<1x96xf32> to vector<2x96xf32>
    %105 = arith.addf %103, %104 : vector<2x96xf32>
    %106 = vector.extract_strided_slice %95 {offsets = [0, 0], sizes = [2, 32], strides = [1, 1]} : vector<2x96xbf16> to vector<2x32xbf16>
    %107 = vector.extract_strided_slice %105 {offsets = [0, 0], sizes = [2, 32], strides = [1, 1]} : vector<2x96xf32> to vector<2x32xf32>
    %108 = arith.extf %106 : vector<2x32xbf16> to vector<2x32xf32>
    %109 = arith.addf %108, %107 : vector<2x32xf32>
    %110 = arith.negf %109 : vector<2x32xf32>
    %111 = math.exp %110 : vector<2x32xf32>
    %cst_53 = arith.constant 1.000000e+00 : f32
    %112 = vector.broadcast %cst_53 : f32 to vector<2x32xf32>
    %113 = arith.addf %112, %111 : vector<2x32xf32>
    %114 = arith.divf %112, %113 : vector<2x32xf32>
    %115 = vector.extract_strided_slice %95 {offsets = [0, 32], sizes = [2, 32], strides = [1, 1]} : vector<2x96xbf16> to vector<2x32xbf16>
    %116 = vector.extract_strided_slice %105 {offsets = [0, 32], sizes = [2, 32], strides = [1, 1]} : vector<2x96xf32> to vector<2x32xf32>
    %117 = arith.extf %115 : vector<2x32xbf16> to vector<2x32xf32>
    %118 = arith.addf %117, %116 : vector<2x32xf32>
    %119 = arith.negf %118 : vector<2x32xf32>
    %120 = math.exp %119 : vector<2x32xf32>
    %cst_54 = arith.constant 1.000000e+00 : f32
    %121 = vector.broadcast %cst_54 : f32 to vector<2x32xf32>
    %122 = arith.addf %121, %120 : vector<2x32xf32>
    %123 = arith.divf %121, %122 : vector<2x32xf32>
    %124 = vector.extract_strided_slice %95 {offsets = [0, 64], sizes = [2, 32], strides = [1, 1]} : vector<2x96xbf16> to vector<2x32xbf16>
    %125 = vector.extract_strided_slice %105 {offsets = [0, 64], sizes = [2, 32], strides = [1, 1]} : vector<2x96xf32> to vector<2x32xf32>
    %126 = arith.mulf %114, %125 : vector<2x32xf32>
    %127 = arith.extf %124 : vector<2x32xbf16> to vector<2x32xf32>
    %128 = arith.addf %127, %126 : vector<2x32xf32>
    %129 = math.tanh %128 : vector<2x32xf32>
    %cst_55 = arith.constant 1.000000e+00 : f32
    %130 = vector.broadcast %cst_55 : f32 to vector<2x32xf32>
    %131 = arith.subf %130, %123 : vector<2x32xf32>
    %132 = arith.mulf %131, %129 : vector<2x32xf32>
    %133 = arith.mulf %123, %97 : vector<2x32xf32>
    %134 = arith.addf %132, %133 : vector<2x32xf32>
    %c0_56 = arith.constant 0 : index
    %c0_57 = arith.constant 0 : index
    %c0_58 = arith.constant 0 : index
    %135 = vector.load %arg7[%c0_56, %c0_57, %c0_58] : memref<2x2x32xf32, #tpu.memory_space<vmem>>, vector<1x2x32xf32>
    %136 = vector.shape_cast %135 : vector<1x2x32xf32> to vector<2x32xf32>
    %137 = vector.shape_cast %134 : vector<2x32xf32> to vector<1x2x32xf32>
    tpu.vector_store %arg7[%c0_56, %c0_57, %c0_58], %137 {strides = array<i32>} : memref<2x2x32xf32, #tpu.memory_space<vmem>>, vector<1x2x32xf32>,
    %138 = arith.truncf %134 : vector<2x32xf32> to vector<2x32xbf16>
    %c0_59 = arith.constant 0 : index
    %c0_60 = arith.constant 0 : index
    %c0_61 = arith.constant 0 : index
    %139 = vector.load %arg3[%c0_59, %c0_60, %c0_61] : memref<1x32x96xbf16, #tpu.memory_space<vmem>>, vector<1x32x96xbf16>
    %140 = vector.shape_cast %139 : vector<1x32x96xbf16> to vector<32x96xbf16>
    %cst_62 = arith.constant dense<0.000000e+00> : vector<2x96xf32>
    %141 = tpu.matmul %138, %140, %cst_62 {dimension_numbers = #tpu.dot_dimension_numbers<[1], [0], [0], [1], [0, 0, 1, 1], [], []>} : vector<2x32xbf16>, vector<32x96xbf16>, vector<2x96xf32> -> vector<2x96xf32>
    %c0_63 = arith.constant 0 : index
    %c0_64 = arith.constant 0 : index
    %c0_65 = arith.constant 0 : index
    %142 = vector.load %arg4[%c0_63, %c0_64, %c0_65] : memref<1x1x96xf32, #tpu.memory_space<vmem>>, vector<1x1x96xf32>
    %143 = vector.shape_cast %142 : vector<1x1x96xf32> to vector<1x96xf32>
    %144 = vector.broadcast %143 : vector<1x96xf32> to vector<2x96xf32>
    %145 = arith.addf %141, %144 : vector<2x96xf32>
    %c1_66 = arith.constant 1 : index
    %c0_67 = arith.constant 0 : index
    %c0_68 = arith.constant 0 : index
    %146 = vector.load %arg7[%c1_66, %c0_67, %c0_68] : memref<2x2x32xf32, #tpu.memory_space<vmem>>, vector<1x2x32xf32>
    %147 = vector.shape_cast %146 : vector<1x2x32xf32> to vector<2x32xf32>
    %c1_69 = arith.constant 1 : index
    %c0_70 = arith.constant 0 : index
    %c0_71 = arith.constant 0 : index
    %148 = vector.load %arg5[%c1_69, %c0_70, %c0_71] : memref<2x32x96xbf16, #tpu.memory_space<vmem>>, vector<1x32x96xbf16>
    %149 = vector.shape_cast %148 : vector<1x32x96xbf16> to vector<32x96xbf16>
    %c1_72 = arith.constant 1 : index
    %c0_73 = arith.constant 0 : index
    %c0_74 = arith.constant 0 : index
    %150 = vector.load %arg6[%c1_72, %c0_73, %c0_74] : memref<2x1x96xf32, #tpu.memory_space<vmem>>, vector<1x1x96xf32>
    %151 = vector.shape_cast %150 : vector<1x1x96xf32> to vector<1x96xf32>
    %152 = arith.truncf %147 : vector<2x32xf32> to vector<2x32xbf16>
    %cst_75 = arith.constant dense<0.000000e+00> : vector<2x96xf32>
    %153 = tpu.matmul %152, %149, %cst_75 {dimension_numbers = #tpu.dot_dimension_numbers<[1], [0], [0], [1], [0, 0, 1, 1], [], []>} : vector<2x32xbf16>, vector<32x96xbf16>, vector<2x96xf32> -> vector<2x96xf32>
    %154 = vector.broadcast %151 : vector<1x96xf32> to vector<2x96xf32>
    %155 = arith.addf %153, %154 : vector<2x96xf32>
    %156 = vector.extract_strided_slice %145 {offsets = [0, 0], sizes = [2, 32], strides = [1, 1]} : vector<2x96xf32> to vector<2x32xf32>
    %157 = vector.extract_strided_slice %155 {offsets = [0, 0], sizes = [2, 32], strides = [1, 1]} : vector<2x96xf32> to vector<2x32xf32>
    %158 = arith.addf %156, %157 : vector<2x32xf32>
    %159 = arith.negf %158 : vector<2x32xf32>
    %160 = math.exp %159 : vector<2x32xf32>
    %cst_76 = arith.constant 1.000000e+00 : f32
    %161 = vector.broadcast %cst_76 : f32 to vector<2x32xf32>
    %162 = arith.addf %161, %160 : vector<2x32xf32>
    %163 = arith.divf %161, %162 : vector<2x32xf32>
    %164 = vector.extract_strided_slice %145 {offsets = [0, 32], sizes = [2, 32], strides = [1, 1]} : vector<2x96xf32> to vector<2x32xf32>
    %165 = vector.extract_strided_slice %155 {offsets = [0, 32], sizes = [2, 32], strides = [1, 1]} : vector<2x96xf32> to vector<2x32xf32>
    %166 = arith.addf %164, %165 : vector<2x32xf32>
    %167 = arith.negf %166 : vector<2x32xf32>
    %168 = math.exp %167 : vector<2x32xf32>
    %cst_77 = arith.constant 1.000000e+00 : f32
    %169 = vector.broadcast %cst_77 : f32 to vector<2x32xf32>
    %170 = arith.addf %169, %168 : vector<2x32xf32>
    %171 = arith.divf %169, %170 : vector<2x32xf32>
    %172 = vector.extract_strided_slice %145 {offsets = [0, 64], sizes = [2, 32], strides = [1, 1]} : vector<2x96xf32> to vector<2x32xf32>
    %173 = vector.extract_strided_slice %155 {offsets = [0, 64], sizes = [2, 32], strides = [1, 1]} : vector<2x96xf32> to vector<2x32xf32>
    %174 = arith.mulf %163, %173 : vector<2x32xf32>
    %175 = arith.addf %172, %174 : vector<2x32xf32>
    %176 = math.tanh %175 : vector<2x32xf32>
    %cst_78 = arith.constant 1.000000e+00 : f32
    %177 = vector.broadcast %cst_78 : f32 to vector<2x32xf32>
    %178 = arith.subf %177, %171 : vector<2x32xf32>
    %179 = arith.mulf %178, %176 : vector<2x32xf32>
    %180 = arith.mulf %171, %147 : vector<2x32xf32>
    %181 = arith.addf %179, %180 : vector<2x32xf32>
    %c1_79 = arith.constant 1 : index
    %c0_80 = arith.constant 0 : index
    %c0_81 = arith.constant 0 : index
    %182 = vector.load %arg7[%c1_79, %c0_80, %c0_81] : memref<2x2x32xf32, #tpu.memory_space<vmem>>, vector<1x2x32xf32>
    %183 = vector.shape_cast %182 : vector<1x2x32xf32> to vector<2x32xf32>
    %184 = vector.shape_cast %181 : vector<2x32xf32> to vector<1x2x32xf32>
    tpu.vector_store %arg7[%c1_79, %c0_80, %c0_81], %184 {strides = array<i32>} : memref<2x2x32xf32, #tpu.memory_space<vmem>>, vector<1x2x32xf32>,
    %c2 = arith.constant 2 : index
    %c0_82 = arith.constant 0 : index
    %c0_83 = arith.constant 0 : index
    %185 = vector.load %arg2[%c2, %c0_82, %c0_83] : memref<8x2x96xbf16, #tpu.memory_space<vmem>>, vector<1x2x96xbf16>
    %186 = vector.shape_cast %185 : vector<1x2x96xbf16> to vector<2x96xbf16>
    %c0_84 = arith.constant 0 : index
    %c0_85 = arith.constant 0 : index
    %c0_86 = arith.constant 0 : index
    %187 = vector.load %arg7[%c0_84, %c0_85, %c0_86] : memref<2x2x32xf32, #tpu.memory_space<vmem>>, vector<1x2x32xf32>
    %188 = vector.shape_cast %187 : vector<1x2x32xf32> to vector<2x32xf32>
    %c0_87 = arith.constant 0 : index
    %c0_88 = arith.constant 0 : index
    %c0_89 = arith.constant 0 : index
    %189 = vector.load %arg5[%c0_87, %c0_88, %c0_89] : memref<2x32x96xbf16, #tpu.memory_space<vmem>>, vector<1x32x96xbf16>
    %190 = vector.shape_cast %189 : vector<1x32x96xbf16> to vector<32x96xbf16>
    %c0_90 = arith.constant 0 : index
    %c0_91 = arith.constant 0 : index
    %c0_92 = arith.constant 0 : index
    %191 = vector.load %arg6[%c0_90, %c0_91, %c0_92] : memref<2x1x96xf32, #tpu.memory_space<vmem>>, vector<1x1x96xf32>
    %192 = vector.shape_cast %191 : vector<1x1x96xf32> to vector<1x96xf32>
    %193 = arith.truncf %188 : vector<2x32xf32> to vector<2x32xbf16>
    %cst_93 = arith.constant dense<0.000000e+00> : vector<2x96xf32>
    %194 = tpu.matmul %193, %190, %cst_93 {dimension_numbers = #tpu.dot_dimension_numbers<[1], [0], [0], [1], [0, 0, 1, 1], [], []>} : vector<2x32xbf16>, vector<32x96xbf16>, vector<2x96xf32> -> vector<2x96xf32>
    %195 = vector.broadcast %192 : vector<1x96xf32> to vector<2x96xf32>
    %196 = arith.addf %194, %195 : vector<2x96xf32>
    %197 = vector.extract_strided_slice %186 {offsets = [0, 0], sizes = [2, 32], strides = [1, 1]} : vector<2x96xbf16> to vector<2x32xbf16>
    %198 = vector.extract_strided_slice %196 {offsets = [0, 0], sizes = [2, 32], strides = [1, 1]} : vector<2x96xf32> to vector<2x32xf32>
    %199 = arith.extf %197 : vector<2x32xbf16> to vector<2x32xf32>
    %200 = arith.addf %199, %198 : vector<2x32xf32>
    %201 = arith.negf %200 : vector<2x32xf32>
    %202 = math.exp %201 : vector<2x32xf32>
    %cst_94 = arith.constant 1.000000e+00 : f32
    %203 = vector.broadcast %cst_94 : f32 to vector<2x32xf32>
    %204 = arith.addf %203, %202 : vector<2x32xf32>
    %205 = arith.divf %203, %204 : vector<2x32xf32>
    %206 = vector.extract_strided_slice %186 {offsets = [0, 32], sizes = [2, 32], strides = [1, 1]} : vector<2x96xbf16> to vector<2x32xbf16>
    %207 = vector.extract_strided_slice %196 {offsets = [0, 32], sizes = [2, 32], strides = [1, 1]} : vector<2x96xf32> to vector<2x32xf32>
    %208 = arith.extf %206 : vector<2x32xbf16> to vector<2x32xf32>
    %209 = arith.addf %208, %207 : vector<2x32xf32>
    %210 = arith.negf %209 : vector<2x32xf32>
    %211 = math.exp %210 : vector<2x32xf32>
    %cst_95 = arith.constant 1.000000e+00 : f32
    %212 = vector.broadcast %cst_95 : f32 to vector<2x32xf32>
    %213 = arith.addf %212, %211 : vector<2x32xf32>
    %214 = arith.divf %212, %213 : vector<2x32xf32>
    %215 = vector.extract_strided_slice %186 {offsets = [0, 64], sizes = [2, 32], strides = [1, 1]} : vector<2x96xbf16> to vector<2x32xbf16>
    %216 = vector.extract_strided_slice %196 {offsets = [0, 64], sizes = [2, 32], strides = [1, 1]} : vector<2x96xf32> to vector<2x32xf32>
    %217 = arith.mulf %205, %216 : vector<2x32xf32>
    %218 = arith.extf %215 : vector<2x32xbf16> to vector<2x32xf32>
    %219 = arith.addf %218, %217 : vector<2x32xf32>
    %220 = math.tanh %219 : vector<2x32xf32>
    %cst_96 = arith.constant 1.000000e+00 : f32
    %221 = vector.broadcast %cst_96 : f32 to vector<2x32xf32>
    %222 = arith.subf %221, %214 : vector<2x32xf32>
    %223 = arith.mulf %222, %220 : vector<2x32xf32>
    %224 = arith.mulf %214, %188 : vector<2x32xf32>
    %225 = arith.addf %223, %224 : vector<2x32xf32>
    %c0_97 = arith.constant 0 : index
    %c0_98 = arith.constant 0 : index
    %c0_99 = arith.constant 0 : index
    %226 = vector.load %arg7[%c0_97, %c0_98, %c0_99] : memref<2x2x32xf32, #tpu.memory_space<vmem>>, vector<1x2x32xf32>
    %227 = vector.shape_cast %226 : vector<1x2x32xf32> to vector<2x32xf32>
    %228 = vector.shape_cast %225 : vector<2x32xf32> to vector<1x2x32xf32>
    tpu.vector_store %arg7[%c0_97, %c0_98, %c0_99], %228 {strides = array<i32>} : memref<2x2x32xf32, #tpu.memory_space<vmem>>, vector<1x2x32xf32>,
    %229 = arith.truncf %225 : vector<2x32xf32> to vector<2x32xbf16>
    %c0_100 = arith.constant 0 : index
    %c0_101 = arith.constant 0 : index
    %c0_102 = arith.constant 0 : index
    %230 = vector.load %arg3[%c0_100, %c0_101, %c0_102] : memref<1x32x96xbf16, #tpu.memory_space<vmem>>, vector<1x32x96xbf16>
    %231 = vector.shape_cast %230 : vector<1x32x96xbf16> to vector<32x96xbf16>
    %cst_103 = arith.constant dense<0.000000e+00> : vector<2x96xf32>
    %232 = tpu.matmul %229, %231, %cst_103 {dimension_numbers = #tpu.dot_dimension_numbers<[1], [0], [0], [1], [0, 0, 1, 1], [], []>} : vector<2x32xbf16>, vector<32x96xbf16>, vector<2x96xf32> -> vector<2x96xf32>
    %c0_104 = arith.constant 0 : index
    %c0_105 = arith.constant 0 : index
    %c0_106 = arith.constant 0 : index
    %233 = vector.load %arg4[%c0_104, %c0_105, %c0_106] : memref<1x1x96xf32, #tpu.memory_space<vmem>>, vector<1x1x96xf32>
    %234 = vector.shape_cast %233 : vector<1x1x96xf32> to vector<1x96xf32>
    %235 = vector.broadcast %234 : vector<1x96xf32> to vector<2x96xf32>
    %236 = arith.addf %232, %235 : vector<2x96xf32>
    %c1_107 = arith.constant 1 : index
    %c0_108 = arith.constant 0 : index
    %c0_109 = arith.constant 0 : index
    %237 = vector.load %arg7[%c1_107, %c0_108, %c0_109] : memref<2x2x32xf32, #tpu.memory_space<vmem>>, vector<1x2x32xf32>
    %238 = vector.shape_cast %237 : vector<1x2x32xf32> to vector<2x32xf32>
    %c1_110 = arith.constant 1 : index
    %c0_111 = arith.constant 0 : index
    %c0_112 = arith.constant 0 : index
    %239 = vector.load %arg5[%c1_110, %c0_111, %c0_112] : memref<2x32x96xbf16, #tpu.memory_space<vmem>>, vector<1x32x96xbf16>
    %240 = vector.shape_cast %239 : vector<1x32x96xbf16> to vector<32x96xbf16>
    %c1_113 = arith.constant 1 : index
    %c0_114 = arith.constant 0 : index
    %c0_115 = arith.constant 0 : index
    %241 = vector.load %arg6[%c1_113, %c0_114, %c0_115] : memref<2x1x96xf32, #tpu.memory_space<vmem>>, vector<1x1x96xf32>
    %242 = vector.shape_cast %241 : vector<1x1x96xf32> to vector<1x96xf32>
    %243 = arith.truncf %238 : vector<2x32xf32> to vector<2x32xbf16>
    %cst_116 = arith.constant dense<0.000000e+00> : vector<2x96xf32>
    %244 = tpu.matmul %243, %240, %cst_116 {dimension_numbers = #tpu.dot_dimension_numbers<[1], [0], [0], [1], [0, 0, 1, 1], [], []>} : vector<2x32xbf16>, vector<32x96xbf16>, vector<2x96xf32> -> vector<2x96xf32>
    %245 = vector.broadcast %242 : vector<1x96xf32> to vector<2x96xf32>
    %246 = arith.addf %244, %245 : vector<2x96xf32>
    %247 = vector.extract_strided_slice %236 {offsets = [0, 0], sizes = [2, 32], strides = [1, 1]} : vector<2x96xf32> to vector<2x32xf32>
    %248 = vector.extract_strided_slice %246 {offsets = [0, 0], sizes = [2, 32], strides = [1, 1]} : vector<2x96xf32> to vector<2x32xf32>
    %249 = arith.addf %247, %248 : vector<2x32xf32>
    %250 = arith.negf %249 : vector<2x32xf32>
    %251 = math.exp %250 : vector<2x32xf32>
    %cst_117 = arith.constant 1.000000e+00 : f32
    %252 = vector.broadcast %cst_117 : f32 to vector<2x32xf32>
    %253 = arith.addf %252, %251 : vector<2x32xf32>
    %254 = arith.divf %252, %253 : vector<2x32xf32>
    %255 = vector.extract_strided_slice %236 {offsets = [0, 32], sizes = [2, 32], strides = [1, 1]} : vector<2x96xf32> to vector<2x32xf32>
    %256 = vector.extract_strided_slice %246 {offsets = [0, 32], sizes = [2, 32], strides = [1, 1]} : vector<2x96xf32> to vector<2x32xf32>
    %257 = arith.addf %255, %256 : vector<2x32xf32>
    %258 = arith.negf %257 : vector<2x32xf32>
    %259 = math.exp %258 : vector<2x32xf32>
    %cst_118 = arith.constant 1.000000e+00 : f32
    %260 = vector.broadcast %cst_118 : f32 to vector<2x32xf32>
    %261 = arith.addf %260, %259 : vector<2x32xf32>
    %262 = arith.divf %260, %261 : vector<2x32xf32>
    %263 = vector.extract_strided_slice %236 {offsets = [0, 64], sizes = [2, 32], strides = [1, 1]} : vector<2x96xf32> to vector<2x32xf32>
    %264 = vector.extract_strided_slice %246 {offsets = [0, 64], sizes = [2, 32], strides = [1, 1]} : vector<2x96xf32> to vector<2x32xf32>
    %265 = arith.mulf %254, %264 : vector<2x32xf32>
    %266 = arith.addf %263, %265 : vector<2x32xf32>
    %267 = math.tanh %266 : vector<2x32xf32>
    %cst_119 = arith.constant 1.000000e+00 : f32
    %268 = vector.broadcast %cst_119 : f32 to vector<2x32xf32>
    %269 = arith.subf %268, %262 : vector<2x32xf32>
    %270 = arith.mulf %269, %267 : vector<2x32xf32>
    %271 = arith.mulf %262, %238 : vector<2x32xf32>
    %272 = arith.addf %270, %271 : vector<2x32xf32>
    %c1_120 = arith.constant 1 : index
    %c0_121 = arith.constant 0 : index
    %c0_122 = arith.constant 0 : index
    %273 = vector.load %arg7[%c1_120, %c0_121, %c0_122] : memref<2x2x32xf32, #tpu.memory_space<vmem>>, vector<1x2x32xf32>
    %274 = vector.shape_cast %273 : vector<1x2x32xf32> to vector<2x32xf32>
    %275 = vector.shape_cast %272 : vector<2x32xf32> to vector<1x2x32xf32>
    tpu.vector_store %arg7[%c1_120, %c0_121, %c0_122], %275 {strides = array<i32>} : memref<2x2x32xf32, #tpu.memory_space<vmem>>, vector<1x2x32xf32>,
    %c3 = arith.constant 3 : index
    %c0_123 = arith.constant 0 : index
    %c0_124 = arith.constant 0 : index
    %276 = vector.load %arg2[%c3, %c0_123, %c0_124] : memref<8x2x96xbf16, #tpu.memory_space<vmem>>, vector<1x2x96xbf16>
    %277 = vector.shape_cast %276 : vector<1x2x96xbf16> to vector<2x96xbf16>
    %c0_125 = arith.constant 0 : index
    %c0_126 = arith.constant 0 : index
    %c0_127 = arith.constant 0 : index
    %278 = vector.load %arg7[%c0_125, %c0_126, %c0_127] : memref<2x2x32xf32, #tpu.memory_space<vmem>>, vector<1x2x32xf32>
    %279 = vector.shape_cast %278 : vector<1x2x32xf32> to vector<2x32xf32>
    %c0_128 = arith.constant 0 : index
    %c0_129 = arith.constant 0 : index
    %c0_130 = arith.constant 0 : index
    %280 = vector.load %arg5[%c0_128, %c0_129, %c0_130] : memref<2x32x96xbf16, #tpu.memory_space<vmem>>, vector<1x32x96xbf16>
    %281 = vector.shape_cast %280 : vector<1x32x96xbf16> to vector<32x96xbf16>
    %c0_131 = arith.constant 0 : index
    %c0_132 = arith.constant 0 : index
    %c0_133 = arith.constant 0 : index
    %282 = vector.load %arg6[%c0_131, %c0_132, %c0_133] : memref<2x1x96xf32, #tpu.memory_space<vmem>>, vector<1x1x96xf32>
    %283 = vector.shape_cast %282 : vector<1x1x96xf32> to vector<1x96xf32>
    %284 = arith.truncf %279 : vector<2x32xf32> to vector<2x32xbf16>
    %cst_134 = arith.constant dense<0.000000e+00> : vector<2x96xf32>
    %285 = tpu.matmul %284, %281, %cst_134 {dimension_numbers = #tpu.dot_dimension_numbers<[1], [0], [0], [1], [0, 0, 1, 1], [], []>} : vector<2x32xbf16>, vector<32x96xbf16>, vector<2x96xf32> -> vector<2x96xf32>
    %286 = vector.broadcast %283 : vector<1x96xf32> to vector<2x96xf32>
    %287 = arith.addf %285, %286 : vector<2x96xf32>
    %288 = vector.extract_strided_slice %277 {offsets = [0, 0], sizes = [2, 32], strides = [1, 1]} : vector<2x96xbf16> to vector<2x32xbf16>
    %289 = vector.extract_strided_slice %287 {offsets = [0, 0], sizes = [2, 32], strides = [1, 1]} : vector<2x96xf32> to vector<2x32xf32>
    %290 = arith.extf %288 : vector<2x32xbf16> to vector<2x32xf32>
    %291 = arith.addf %290, %289 : vector<2x32xf32>
    %292 = arith.negf %291 : vector<2x32xf32>
    %293 = math.exp %292 : vector<2x32xf32>
    %cst_135 = arith.constant 1.000000e+00 : f32
    %294 = vector.broadcast %cst_135 : f32 to vector<2x32xf32>
    %295 = arith.addf %294, %293 : vector<2x32xf32>
    %296 = arith.divf %294, %295 : vector<2x32xf32>
    %297 = vector.extract_strided_slice %277 {offsets = [0, 32], sizes = [2, 32], strides = [1, 1]} : vector<2x96xbf16> to vector<2x32xbf16>
    %298 = vector.extract_strided_slice %287 {offsets = [0, 32], sizes = [2, 32], strides = [1, 1]} : vector<2x96xf32> to vector<2x32xf32>
    %299 = arith.extf %297 : vector<2x32xbf16> to vector<2x32xf32>
    %300 = arith.addf %299, %298 : vector<2x32xf32>
    %301 = arith.negf %300 : vector<2x32xf32>
    %302 = math.exp %301 : vector<2x32xf32>
    %cst_136 = arith.constant 1.000000e+00 : f32
    %303 = vector.broadcast %cst_136 : f32 to vector<2x32xf32>
    %304 = arith.addf %303, %302 : vector<2x32xf32>
    %305 = arith.divf %303, %304 : vector<2x32xf32>
    %306 = vector.extract_strided_slice %277 {offsets = [0, 64], sizes = [2, 32], strides = [1, 1]} : vector<2x96xbf16> to vector<2x32xbf16>
    %307 = vector.extract_strided_slice %287 {offsets = [0, 64], sizes = [2, 32], strides = [1, 1]} : vector<2x96xf32> to vector<2x32xf32>
    %308 = arith.mulf %296, %307 : vector<2x32xf32>
    %309 = arith.extf %306 : vector<2x32xbf16> to vector<2x32xf32>
    %310 = arith.addf %309, %308 : vector<2x32xf32>
    %311 = math.tanh %310 : vector<2x32xf32>
    %cst_137 = arith.constant 1.000000e+00 : f32
    %312 = vector.broadcast %cst_137 : f32 to vector<2x32xf32>
    %313 = arith.subf %312, %305 : vector<2x32xf32>
    %314 = arith.mulf %313, %311 : vector<2x32xf32>
    %315 = arith.mulf %305, %279 : vector<2x32xf32>
    %316 = arith.addf %314, %315 : vector<2x32xf32>
    %c0_138 = arith.constant 0 : index
    %c0_139 = arith.constant 0 : index
    %c0_140 = arith.constant 0 : index
    %317 = vector.load %arg7[%c0_138, %c0_139, %c0_140] : memref<2x2x32xf32, #tpu.memory_space<vmem>>, vector<1x2x32xf32>
    %318 = vector.shape_cast %317 : vector<1x2x32xf32> to vector<2x32xf32>
    %319 = vector.shape_cast %316 : vector<2x32xf32> to vector<1x2x32xf32>
    tpu.vector_store %arg7[%c0_138, %c0_139, %c0_140], %319 {strides = array<i32>} : memref<2x2x32xf32, #tpu.memory_space<vmem>>, vector<1x2x32xf32>,
    %320 = arith.truncf %316 : vector<2x32xf32> to vector<2x32xbf16>
    %c0_141 = arith.constant 0 : index
    %c0_142 = arith.constant 0 : index
    %c0_143 = arith.constant 0 : index
    %321 = vector.load %arg3[%c0_141, %c0_142, %c0_143] : memref<1x32x96xbf16, #tpu.memory_space<vmem>>, vector<1x32x96xbf16>
    %322 = vector.shape_cast %321 : vector<1x32x96xbf16> to vector<32x96xbf16>
    %cst_144 = arith.constant dense<0.000000e+00> : vector<2x96xf32>
    %323 = tpu.matmul %320, %322, %cst_144 {dimension_numbers = #tpu.dot_dimension_numbers<[1], [0], [0], [1], [0, 0, 1, 1], [], []>} : vector<2x32xbf16>, vector<32x96xbf16>, vector<2x96xf32> -> vector<2x96xf32>
    %c0_145 = arith.constant 0 : index
    %c0_146 = arith.constant 0 : index
    %c0_147 = arith.constant 0 : index
    %324 = vector.load %arg4[%c0_145, %c0_146, %c0_147] : memref<1x1x96xf32, #tpu.memory_space<vmem>>, vector<1x1x96xf32>
    %325 = vector.shape_cast %324 : vector<1x1x96xf32> to vector<1x96xf32>
    %326 = vector.broadcast %325 : vector<1x96xf32> to vector<2x96xf32>
    %327 = arith.addf %323, %326 : vector<2x96xf32>
    %c1_148 = arith.constant 1 : index
    %c0_149 = arith.constant 0 : index
    %c0_150 = arith.constant 0 : index
    %328 = vector.load %arg7[%c1_148, %c0_149, %c0_150] : memref<2x2x32xf32, #tpu.memory_space<vmem>>, vector<1x2x32xf32>
    %329 = vector.shape_cast %328 : vector<1x2x32xf32> to vector<2x32xf32>
    %c1_151 = arith.constant 1 : index
    %c0_152 = arith.constant 0 : index
    %c0_153 = arith.constant 0 : index
    %330 = vector.load %arg5[%c1_151, %c0_152, %c0_153] : memref<2x32x96xbf16, #tpu.memory_space<vmem>>, vector<1x32x96xbf16>
    %331 = vector.shape_cast %330 : vector<1x32x96xbf16> to vector<32x96xbf16>
    %c1_154 = arith.constant 1 : index
    %c0_155 = arith.constant 0 : index
    %c0_156 = arith.constant 0 : index
    %332 = vector.load %arg6[%c1_154, %c0_155, %c0_156] : memref<2x1x96xf32, #tpu.memory_space<vmem>>, vector<1x1x96xf32>
    %333 = vector.shape_cast %332 : vector<1x1x96xf32> to vector<1x96xf32>
    %334 = arith.truncf %329 : vector<2x32xf32> to vector<2x32xbf16>
    %cst_157 = arith.constant dense<0.000000e+00> : vector<2x96xf32>
    %335 = tpu.matmul %334, %331, %cst_157 {dimension_numbers = #tpu.dot_dimension_numbers<[1], [0], [0], [1], [0, 0, 1, 1], [], []>} : vector<2x32xbf16>, vector<32x96xbf16>, vector<2x96xf32> -> vector<2x96xf32>
    %336 = vector.broadcast %333 : vector<1x96xf32> to vector<2x96xf32>
    %337 = arith.addf %335, %336 : vector<2x96xf32>
    %338 = vector.extract_strided_slice %327 {offsets = [0, 0], sizes = [2, 32], strides = [1, 1]} : vector<2x96xf32> to vector<2x32xf32>
    %339 = vector.extract_strided_slice %337 {offsets = [0, 0], sizes = [2, 32], strides = [1, 1]} : vector<2x96xf32> to vector<2x32xf32>
    %340 = arith.addf %338, %339 : vector<2x32xf32>
    %341 = arith.negf %340 : vector<2x32xf32>
    %342 = math.exp %341 : vector<2x32xf32>
    %cst_158 = arith.constant 1.000000e+00 : f32
    %343 = vector.broadcast %cst_158 : f32 to vector<2x32xf32>
    %344 = arith.addf %343, %342 : vector<2x32xf32>
    %345 = arith.divf %343, %344 : vector<2x32xf32>
    %346 = vector.extract_strided_slice %327 {offsets = [0, 32], sizes = [2, 32], strides = [1, 1]} : vector<2x96xf32> to vector<2x32xf32>
    %347 = vector.extract_strided_slice %337 {offsets = [0, 32], sizes = [2, 32], strides = [1, 1]} : vector<2x96xf32> to vector<2x32xf32>
    %348 = arith.addf %346, %347 : vector<2x32xf32>
    %349 = arith.negf %348 : vector<2x32xf32>
    %350 = math.exp %349 : vector<2x32xf32>
    %cst_159 = arith.constant 1.000000e+00 : f32
    %351 = vector.broadcast %cst_159 : f32 to vector<2x32xf32>
    %352 = arith.addf %351, %350 : vector<2x32xf32>
    %353 = arith.divf %351, %352 : vector<2x32xf32>
    %354 = vector.extract_strided_slice %327 {offsets = [0, 64], sizes = [2, 32], strides = [1, 1]} : vector<2x96xf32> to vector<2x32xf32>
    %355 = vector.extract_strided_slice %337 {offsets = [0, 64], sizes = [2, 32], strides = [1, 1]} : vector<2x96xf32> to vector<2x32xf32>
    %356 = arith.mulf %345, %355 : vector<2x32xf32>
    %357 = arith.addf %354, %356 : vector<2x32xf32>
    %358 = math.tanh %357 : vector<2x32xf32>
    %cst_160 = arith.constant 1.000000e+00 : f32
    %359 = vector.broadcast %cst_160 : f32 to vector<2x32xf32>
    %360 = arith.subf %359, %353 : vector<2x32xf32>
    %361 = arith.mulf %360, %358 : vector<2x32xf32>
    %362 = arith.mulf %353, %329 : vector<2x32xf32>
    %363 = arith.addf %361, %362 : vector<2x32xf32>
    %c1_161 = arith.constant 1 : index
    %c0_162 = arith.constant 0 : index
    %c0_163 = arith.constant 0 : index
    %364 = vector.load %arg7[%c1_161, %c0_162, %c0_163] : memref<2x2x32xf32, #tpu.memory_space<vmem>>, vector<1x2x32xf32>
    %365 = vector.shape_cast %364 : vector<1x2x32xf32> to vector<2x32xf32>
    %366 = vector.shape_cast %363 : vector<2x32xf32> to vector<1x2x32xf32>
    tpu.vector_store %arg7[%c1_161, %c0_162, %c0_163], %366 {strides = array<i32>} : memref<2x2x32xf32, #tpu.memory_space<vmem>>, vector<1x2x32xf32>,
    %c4 = arith.constant 4 : index
    %c0_164 = arith.constant 0 : index
    %c0_165 = arith.constant 0 : index
    %367 = vector.load %arg2[%c4, %c0_164, %c0_165] : memref<8x2x96xbf16, #tpu.memory_space<vmem>>, vector<1x2x96xbf16>
    %368 = vector.shape_cast %367 : vector<1x2x96xbf16> to vector<2x96xbf16>
    %c0_166 = arith.constant 0 : index
    %c0_167 = arith.constant 0 : index
    %c0_168 = arith.constant 0 : index
    %369 = vector.load %arg7[%c0_166, %c0_167, %c0_168] : memref<2x2x32xf32, #tpu.memory_space<vmem>>, vector<1x2x32xf32>
    %370 = vector.shape_cast %369 : vector<1x2x32xf32> to vector<2x32xf32>
    %c0_169 = arith.constant 0 : index
    %c0_170 = arith.constant 0 : index
    %c0_171 = arith.constant 0 : index
    %371 = vector.load %arg5[%c0_169, %c0_170, %c0_171] : memref<2x32x96xbf16, #tpu.memory_space<vmem>>, vector<1x32x96xbf16>
    %372 = vector.shape_cast %371 : vector<1x32x96xbf16> to vector<32x96xbf16>
    %c0_172 = arith.constant 0 : index
    %c0_173 = arith.constant 0 : index
    %c0_174 = arith.constant 0 : index
    %373 = vector.load %arg6[%c0_172, %c0_173, %c0_174] : memref<2x1x96xf32, #tpu.memory_space<vmem>>, vector<1x1x96xf32>
    %374 = vector.shape_cast %373 : vector<1x1x96xf32> to vector<1x96xf32>
    %375 = arith.truncf %370 : vector<2x32xf32> to vector<2x32xbf16>
    %cst_175 = arith.constant dense<0.000000e+00> : vector<2x96xf32>
    %376 = tpu.matmul %375, %372, %cst_175 {dimension_numbers = #tpu.dot_dimension_numbers<[1], [0], [0], [1], [0, 0, 1, 1], [], []>} : vector<2x32xbf16>, vector<32x96xbf16>, vector<2x96xf32> -> vector<2x96xf32>
    %377 = vector.broadcast %374 : vector<1x96xf32> to vector<2x96xf32>
    %378 = arith.addf %376, %377 : vector<2x96xf32>
    %379 = vector.extract_strided_slice %368 {offsets = [0, 0], sizes = [2, 32], strides = [1, 1]} : vector<2x96xbf16> to vector<2x32xbf16>
    %380 = vector.extract_strided_slice %378 {offsets = [0, 0], sizes = [2, 32], strides = [1, 1]} : vector<2x96xf32> to vector<2x32xf32>
    %381 = arith.extf %379 : vector<2x32xbf16> to vector<2x32xf32>
    %382 = arith.addf %381, %380 : vector<2x32xf32>
    %383 = arith.negf %382 : vector<2x32xf32>
    %384 = math.exp %383 : vector<2x32xf32>
    %cst_176 = arith.constant 1.000000e+00 : f32
    %385 = vector.broadcast %cst_176 : f32 to vector<2x32xf32>
    %386 = arith.addf %385, %384 : vector<2x32xf32>
    %387 = arith.divf %385, %386 : vector<2x32xf32>
    %388 = vector.extract_strided_slice %368 {offsets = [0, 32], sizes = [2, 32], strides = [1, 1]} : vector<2x96xbf16> to vector<2x32xbf16>
    %389 = vector.extract_strided_slice %378 {offsets = [0, 32], sizes = [2, 32], strides = [1, 1]} : vector<2x96xf32> to vector<2x32xf32>
    %390 = arith.extf %388 : vector<2x32xbf16> to vector<2x32xf32>
    %391 = arith.addf %390, %389 : vector<2x32xf32>
    %392 = arith.negf %391 : vector<2x32xf32>
    %393 = math.exp %392 : vector<2x32xf32>
    %cst_177 = arith.constant 1.000000e+00 : f32
    %394 = vector.broadcast %cst_177 : f32 to vector<2x32xf32>
    %395 = arith.addf %394, %393 : vector<2x32xf32>
    %396 = arith.divf %394, %395 : vector<2x32xf32>
    %397 = vector.extract_strided_slice %368 {offsets = [0, 64], sizes = [2, 32], strides = [1, 1]} : vector<2x96xbf16> to vector<2x32xbf16>
    %398 = vector.extract_strided_slice %378 {offsets = [0, 64], sizes = [2, 32], strides = [1, 1]} : vector<2x96xf32> to vector<2x32xf32>
    %399 = arith.mulf %387, %398 : vector<2x32xf32>
    %400 = arith.extf %397 : vector<2x32xbf16> to vector<2x32xf32>
    %401 = arith.addf %400, %399 : vector<2x32xf32>
    %402 = math.tanh %401 : vector<2x32xf32>
    %cst_178 = arith.constant 1.000000e+00 : f32
    %403 = vector.broadcast %cst_178 : f32 to vector<2x32xf32>
    %404 = arith.subf %403, %396 : vector<2x32xf32>
    %405 = arith.mulf %404, %402 : vector<2x32xf32>
    %406 = arith.mulf %396, %370 : vector<2x32xf32>
    %407 = arith.addf %405, %406 : vector<2x32xf32>
    %c0_179 = arith.constant 0 : index
    %c0_180 = arith.constant 0 : index
    %c0_181 = arith.constant 0 : index
    %408 = vector.load %arg7[%c0_179, %c0_180, %c0_181] : memref<2x2x32xf32, #tpu.memory_space<vmem>>, vector<1x2x32xf32>
    %409 = vector.shape_cast %408 : vector<1x2x32xf32> to vector<2x32xf32>
    %410 = vector.shape_cast %407 : vector<2x32xf32> to vector<1x2x32xf32>
    tpu.vector_store %arg7[%c0_179, %c0_180, %c0_181], %410 {strides = array<i32>} : memref<2x2x32xf32, #tpu.memory_space<vmem>>, vector<1x2x32xf32>,
    %411 = arith.truncf %407 : vector<2x32xf32> to vector<2x32xbf16>
    %c0_182 = arith.constant 0 : index
    %c0_183 = arith.constant 0 : index
    %c0_184 = arith.constant 0 : index
    %412 = vector.load %arg3[%c0_182, %c0_183, %c0_184] : memref<1x32x96xbf16, #tpu.memory_space<vmem>>, vector<1x32x96xbf16>
    %413 = vector.shape_cast %412 : vector<1x32x96xbf16> to vector<32x96xbf16>
    %cst_185 = arith.constant dense<0.000000e+00> : vector<2x96xf32>
    %414 = tpu.matmul %411, %413, %cst_185 {dimension_numbers = #tpu.dot_dimension_numbers<[1], [0], [0], [1], [0, 0, 1, 1], [], []>} : vector<2x32xbf16>, vector<32x96xbf16>, vector<2x96xf32> -> vector<2x96xf32>
    %c0_186 = arith.constant 0 : index
    %c0_187 = arith.constant 0 : index
    %c0_188 = arith.constant 0 : index
    %415 = vector.load %arg4[%c0_186, %c0_187, %c0_188] : memref<1x1x96xf32, #tpu.memory_space<vmem>>, vector<1x1x96xf32>
    %416 = vector.shape_cast %415 : vector<1x1x96xf32> to vector<1x96xf32>
    %417 = vector.broadcast %416 : vector<1x96xf32> to vector<2x96xf32>
    %418 = arith.addf %414, %417 : vector<2x96xf32>
    %c1_189 = arith.constant 1 : index
    %c0_190 = arith.constant 0 : index
    %c0_191 = arith.constant 0 : index
    %419 = vector.load %arg7[%c1_189, %c0_190, %c0_191] : memref<2x2x32xf32, #tpu.memory_space<vmem>>, vector<1x2x32xf32>
    %420 = vector.shape_cast %419 : vector<1x2x32xf32> to vector<2x32xf32>
    %c1_192 = arith.constant 1 : index
    %c0_193 = arith.constant 0 : index
    %c0_194 = arith.constant 0 : index
    %421 = vector.load %arg5[%c1_192, %c0_193, %c0_194] : memref<2x32x96xbf16, #tpu.memory_space<vmem>>, vector<1x32x96xbf16>
    %422 = vector.shape_cast %421 : vector<1x32x96xbf16> to vector<32x96xbf16>
    %c1_195 = arith.constant 1 : index
    %c0_196 = arith.constant 0 : index
    %c0_197 = arith.constant 0 : index
    %423 = vector.load %arg6[%c1_195, %c0_196, %c0_197] : memref<2x1x96xf32, #tpu.memory_space<vmem>>, vector<1x1x96xf32>
    %424 = vector.shape_cast %423 : vector<1x1x96xf32> to vector<1x96xf32>
    %425 = arith.truncf %420 : vector<2x32xf32> to vector<2x32xbf16>
    %cst_198 = arith.constant dense<0.000000e+00> : vector<2x96xf32>
    %426 = tpu.matmul %425, %422, %cst_198 {dimension_numbers = #tpu.dot_dimension_numbers<[1], [0], [0], [1], [0, 0, 1, 1], [], []>} : vector<2x32xbf16>, vector<32x96xbf16>, vector<2x96xf32> -> vector<2x96xf32>
    %427 = vector.broadcast %424 : vector<1x96xf32> to vector<2x96xf32>
    %428 = arith.addf %426, %427 : vector<2x96xf32>
    %429 = vector.extract_strided_slice %418 {offsets = [0, 0], sizes = [2, 32], strides = [1, 1]} : vector<2x96xf32> to vector<2x32xf32>
    %430 = vector.extract_strided_slice %428 {offsets = [0, 0], sizes = [2, 32], strides = [1, 1]} : vector<2x96xf32> to vector<2x32xf32>
    %431 = arith.addf %429, %430 : vector<2x32xf32>
    %432 = arith.negf %431 : vector<2x32xf32>
    %433 = math.exp %432 : vector<2x32xf32>
    %cst_199 = arith.constant 1.000000e+00 : f32
    %434 = vector.broadcast %cst_199 : f32 to vector<2x32xf32>
    %435 = arith.addf %434, %433 : vector<2x32xf32>
    %436 = arith.divf %434, %435 : vector<2x32xf32>
    %437 = vector.extract_strided_slice %418 {offsets = [0, 32], sizes = [2, 32], strides = [1, 1]} : vector<2x96xf32> to vector<2x32xf32>
    %438 = vector.extract_strided_slice %428 {offsets = [0, 32], sizes = [2, 32], strides = [1, 1]} : vector<2x96xf32> to vector<2x32xf32>
    %439 = arith.addf %437, %438 : vector<2x32xf32>
    %440 = arith.negf %439 : vector<2x32xf32>
    %441 = math.exp %440 : vector<2x32xf32>
    %cst_200 = arith.constant 1.000000e+00 : f32
    %442 = vector.broadcast %cst_200 : f32 to vector<2x32xf32>
    %443 = arith.addf %442, %441 : vector<2x32xf32>
    %444 = arith.divf %442, %443 : vector<2x32xf32>
    %445 = vector.extract_strided_slice %418 {offsets = [0, 64], sizes = [2, 32], strides = [1, 1]} : vector<2x96xf32> to vector<2x32xf32>
    %446 = vector.extract_strided_slice %428 {offsets = [0, 64], sizes = [2, 32], strides = [1, 1]} : vector<2x96xf32> to vector<2x32xf32>
    %447 = arith.mulf %436, %446 : vector<2x32xf32>
    %448 = arith.addf %445, %447 : vector<2x32xf32>
    %449 = math.tanh %448 : vector<2x32xf32>
    %cst_201 = arith.constant 1.000000e+00 : f32
    %450 = vector.broadcast %cst_201 : f32 to vector<2x32xf32>
    %451 = arith.subf %450, %444 : vector<2x32xf32>
    %452 = arith.mulf %451, %449 : vector<2x32xf32>
    %453 = arith.mulf %444, %420 : vector<2x32xf32>
    %454 = arith.addf %452, %453 : vector<2x32xf32>
    %c1_202 = arith.constant 1 : index
    %c0_203 = arith.constant 0 : index
    %c0_204 = arith.constant 0 : index
    %455 = vector.load %arg7[%c1_202, %c0_203, %c0_204] : memref<2x2x32xf32, #tpu.memory_space<vmem>>, vector<1x2x32xf32>
    %456 = vector.shape_cast %455 : vector<1x2x32xf32> to vector<2x32xf32>
    %457 = vector.shape_cast %454 : vector<2x32xf32> to vector<1x2x32xf32>
    tpu.vector_store %arg7[%c1_202, %c0_203, %c0_204], %457 {strides = array<i32>} : memref<2x2x32xf32, #tpu.memory_space<vmem>>, vector<1x2x32xf32>,
    %c5 = arith.constant 5 : index
    %c0_205 = arith.constant 0 : index
    %c0_206 = arith.constant 0 : index
    %458 = vector.load %arg2[%c5, %c0_205, %c0_206] : memref<8x2x96xbf16, #tpu.memory_space<vmem>>, vector<1x2x96xbf16>
    %459 = vector.shape_cast %458 : vector<1x2x96xbf16> to vector<2x96xbf16>
    %c0_207 = arith.constant 0 : index
    %c0_208 = arith.constant 0 : index
    %c0_209 = arith.constant 0 : index
    %460 = vector.load %arg7[%c0_207, %c0_208, %c0_209] : memref<2x2x32xf32, #tpu.memory_space<vmem>>, vector<1x2x32xf32>
    %461 = vector.shape_cast %460 : vector<1x2x32xf32> to vector<2x32xf32>
    %c0_210 = arith.constant 0 : index
    %c0_211 = arith.constant 0 : index
    %c0_212 = arith.constant 0 : index
    %462 = vector.load %arg5[%c0_210, %c0_211, %c0_212] : memref<2x32x96xbf16, #tpu.memory_space<vmem>>, vector<1x32x96xbf16>
    %463 = vector.shape_cast %462 : vector<1x32x96xbf16> to vector<32x96xbf16>
    %c0_213 = arith.constant 0 : index
    %c0_214 = arith.constant 0 : index
    %c0_215 = arith.constant 0 : index
    %464 = vector.load %arg6[%c0_213, %c0_214, %c0_215] : memref<2x1x96xf32, #tpu.memory_space<vmem>>, vector<1x1x96xf32>
    %465 = vector.shape_cast %464 : vector<1x1x96xf32> to vector<1x96xf32>
    %466 = arith.truncf %461 : vector<2x32xf32> to vector<2x32xbf16>
    %cst_216 = arith.constant dense<0.000000e+00> : vector<2x96xf32>
    %467 = tpu.matmul %466, %463, %cst_216 {dimension_numbers = #tpu.dot_dimension_numbers<[1], [0], [0], [1], [0, 0, 1, 1], [], []>} : vector<2x32xbf16>, vector<32x96xbf16>, vector<2x96xf32> -> vector<2x96xf32>
    %468 = vector.broadcast %465 : vector<1x96xf32> to vector<2x96xf32>
    %469 = arith.addf %467, %468 : vector<2x96xf32>
    %470 = vector.extract_strided_slice %459 {offsets = [0, 0], sizes = [2, 32], strides = [1, 1]} : vector<2x96xbf16> to vector<2x32xbf16>
    %471 = vector.extract_strided_slice %469 {offsets = [0, 0], sizes = [2, 32], strides = [1, 1]} : vector<2x96xf32> to vector<2x32xf32>
    %472 = arith.extf %470 : vector<2x32xbf16> to vector<2x32xf32>
    %473 = arith.addf %472, %471 : vector<2x32xf32>
    %474 = arith.negf %473 : vector<2x32xf32>
    %475 = math.exp %474 : vector<2x32xf32>
    %cst_217 = arith.constant 1.000000e+00 : f32
    %476 = vector.broadcast %cst_217 : f32 to vector<2x32xf32>
    %477 = arith.addf %476, %475 : vector<2x32xf32>
    %478 = arith.divf %476, %477 : vector<2x32xf32>
    %479 = vector.extract_strided_slice %459 {offsets = [0, 32], sizes = [2, 32], strides = [1, 1]} : vector<2x96xbf16> to vector<2x32xbf16>
    %480 = vector.extract_strided_slice %469 {offsets = [0, 32], sizes = [2, 32], strides = [1, 1]} : vector<2x96xf32> to vector<2x32xf32>
    %481 = arith.extf %479 : vector<2x32xbf16> to vector<2x32xf32>
    %482 = arith.addf %481, %480 : vector<2x32xf32>
    %483 = arith.negf %482 : vector<2x32xf32>
    %484 = math.exp %483 : vector<2x32xf32>
    %cst_218 = arith.constant 1.000000e+00 : f32
    %485 = vector.broadcast %cst_218 : f32 to vector<2x32xf32>
    %486 = arith.addf %485, %484 : vector<2x32xf32>
    %487 = arith.divf %485, %486 : vector<2x32xf32>
    %488 = vector.extract_strided_slice %459 {offsets = [0, 64], sizes = [2, 32], strides = [1, 1]} : vector<2x96xbf16> to vector<2x32xbf16>
    %489 = vector.extract_strided_slice %469 {offsets = [0, 64], sizes = [2, 32], strides = [1, 1]} : vector<2x96xf32> to vector<2x32xf32>
    %490 = arith.mulf %478, %489 : vector<2x32xf32>
    %491 = arith.extf %488 : vector<2x32xbf16> to vector<2x32xf32>
    %492 = arith.addf %491, %490 : vector<2x32xf32>
    %493 = math.tanh %492 : vector<2x32xf32>
    %cst_219 = arith.constant 1.000000e+00 : f32
    %494 = vector.broadcast %cst_219 : f32 to vector<2x32xf32>
    %495 = arith.subf %494, %487 : vector<2x32xf32>
    %496 = arith.mulf %495, %493 : vector<2x32xf32>
    %497 = arith.mulf %487, %461 : vector<2x32xf32>
    %498 = arith.addf %496, %497 : vector<2x32xf32>
    %c0_220 = arith.constant 0 : index
    %c0_221 = arith.constant 0 : index
    %c0_222 = arith.constant 0 : index
    %499 = vector.load %arg7[%c0_220, %c0_221, %c0_222] : memref<2x2x32xf32, #tpu.memory_space<vmem>>, vector<1x2x32xf32>
    %500 = vector.shape_cast %499 : vector<1x2x32xf32> to vector<2x32xf32>
    %501 = vector.shape_cast %498 : vector<2x32xf32> to vector<1x2x32xf32>
    tpu.vector_store %arg7[%c0_220, %c0_221, %c0_222], %501 {strides = array<i32>} : memref<2x2x32xf32, #tpu.memory_space<vmem>>, vector<1x2x32xf32>,
    %502 = arith.truncf %498 : vector<2x32xf32> to vector<2x32xbf16>
    %c0_223 = arith.constant 0 : index
    %c0_224 = arith.constant 0 : index
    %c0_225 = arith.constant 0 : index
    %503 = vector.load %arg3[%c0_223, %c0_224, %c0_225] : memref<1x32x96xbf16, #tpu.memory_space<vmem>>, vector<1x32x96xbf16>
    %504 = vector.shape_cast %503 : vector<1x32x96xbf16> to vector<32x96xbf16>
    %cst_226 = arith.constant dense<0.000000e+00> : vector<2x96xf32>
    %505 = tpu.matmul %502, %504, %cst_226 {dimension_numbers = #tpu.dot_dimension_numbers<[1], [0], [0], [1], [0, 0, 1, 1], [], []>} : vector<2x32xbf16>, vector<32x96xbf16>, vector<2x96xf32> -> vector<2x96xf32>
    %c0_227 = arith.constant 0 : index
    %c0_228 = arith.constant 0 : index
    %c0_229 = arith.constant 0 : index
    %506 = vector.load %arg4[%c0_227, %c0_228, %c0_229] : memref<1x1x96xf32, #tpu.memory_space<vmem>>, vector<1x1x96xf32>
    %507 = vector.shape_cast %506 : vector<1x1x96xf32> to vector<1x96xf32>
    %508 = vector.broadcast %507 : vector<1x96xf32> to vector<2x96xf32>
    %509 = arith.addf %505, %508 : vector<2x96xf32>
    %c1_230 = arith.constant 1 : index
    %c0_231 = arith.constant 0 : index
    %c0_232 = arith.constant 0 : index
    %510 = vector.load %arg7[%c1_230, %c0_231, %c0_232] : memref<2x2x32xf32, #tpu.memory_space<vmem>>, vector<1x2x32xf32>
    %511 = vector.shape_cast %510 : vector<1x2x32xf32> to vector<2x32xf32>
    %c1_233 = arith.constant 1 : index
    %c0_234 = arith.constant 0 : index
    %c0_235 = arith.constant 0 : index
    %512 = vector.load %arg5[%c1_233, %c0_234, %c0_235] : memref<2x32x96xbf16, #tpu.memory_space<vmem>>, vector<1x32x96xbf16>
    %513 = vector.shape_cast %512 : vector<1x32x96xbf16> to vector<32x96xbf16>
    %c1_236 = arith.constant 1 : index
    %c0_237 = arith.constant 0 : index
    %c0_238 = arith.constant 0 : index
    %514 = vector.load %arg6[%c1_236, %c0_237, %c0_238] : memref<2x1x96xf32, #tpu.memory_space<vmem>>, vector<1x1x96xf32>
    %515 = vector.shape_cast %514 : vector<1x1x96xf32> to vector<1x96xf32>
    %516 = arith.truncf %511 : vector<2x32xf32> to vector<2x32xbf16>
    %cst_239 = arith.constant dense<0.000000e+00> : vector<2x96xf32>
    %517 = tpu.matmul %516, %513, %cst_239 {dimension_numbers = #tpu.dot_dimension_numbers<[1], [0], [0], [1], [0, 0, 1, 1], [], []>} : vector<2x32xbf16>, vector<32x96xbf16>, vector<2x96xf32> -> vector<2x96xf32>
    %518 = vector.broadcast %515 : vector<1x96xf32> to vector<2x96xf32>
    %519 = arith.addf %517, %518 : vector<2x96xf32>
    %520 = vector.extract_strided_slice %509 {offsets = [0, 0], sizes = [2, 32], strides = [1, 1]} : vector<2x96xf32> to vector<2x32xf32>
    %521 = vector.extract_strided_slice %519 {offsets = [0, 0], sizes = [2, 32], strides = [1, 1]} : vector<2x96xf32> to vector<2x32xf32>
    %522 = arith.addf %520, %521 : vector<2x32xf32>
    %523 = arith.negf %522 : vector<2x32xf32>
    %524 = math.exp %523 : vector<2x32xf32>
    %cst_240 = arith.constant 1.000000e+00 : f32
    %525 = vector.broadcast %cst_240 : f32 to vector<2x32xf32>
    %526 = arith.addf %525, %524 : vector<2x32xf32>
    %527 = arith.divf %525, %526 : vector<2x32xf32>
    %528 = vector.extract_strided_slice %509 {offsets = [0, 32], sizes = [2, 32], strides = [1, 1]} : vector<2x96xf32> to vector<2x32xf32>
    %529 = vector.extract_strided_slice %519 {offsets = [0, 32], sizes = [2, 32], strides = [1, 1]} : vector<2x96xf32> to vector<2x32xf32>
    %530 = arith.addf %528, %529 : vector<2x32xf32>
    %531 = arith.negf %530 : vector<2x32xf32>
    %532 = math.exp %531 : vector<2x32xf32>
    %cst_241 = arith.constant 1.000000e+00 : f32
    %533 = vector.broadcast %cst_241 : f32 to vector<2x32xf32>
    %534 = arith.addf %533, %532 : vector<2x32xf32>
    %535 = arith.divf %533, %534 : vector<2x32xf32>
    %536 = vector.extract_strided_slice %509 {offsets = [0, 64], sizes = [2, 32], strides = [1, 1]} : vector<2x96xf32> to vector<2x32xf32>
    %537 = vector.extract_strided_slice %519 {offsets = [0, 64], sizes = [2, 32], strides = [1, 1]} : vector<2x96xf32> to vector<2x32xf32>
    %538 = arith.mulf %527, %537 : vector<2x32xf32>
    %539 = arith.addf %536, %538 : vector<2x32xf32>
    %540 = math.tanh %539 : vector<2x32xf32>
    %cst_242 = arith.constant 1.000000e+00 : f32
    %541 = vector.broadcast %cst_242 : f32 to vector<2x32xf32>
    %542 = arith.subf %541, %535 : vector<2x32xf32>
    %543 = arith.mulf %542, %540 : vector<2x32xf32>
    %544 = arith.mulf %535, %511 : vector<2x32xf32>
    %545 = arith.addf %543, %544 : vector<2x32xf32>
    %c1_243 = arith.constant 1 : index
    %c0_244 = arith.constant 0 : index
    %c0_245 = arith.constant 0 : index
    %546 = vector.load %arg7[%c1_243, %c0_244, %c0_245] : memref<2x2x32xf32, #tpu.memory_space<vmem>>, vector<1x2x32xf32>
    %547 = vector.shape_cast %546 : vector<1x2x32xf32> to vector<2x32xf32>
    %548 = vector.shape_cast %545 : vector<2x32xf32> to vector<1x2x32xf32>
    tpu.vector_store %arg7[%c1_243, %c0_244, %c0_245], %548 {strides = array<i32>} : memref<2x2x32xf32, #tpu.memory_space<vmem>>, vector<1x2x32xf32>,
    %c6 = arith.constant 6 : index
    %c0_246 = arith.constant 0 : index
    %c0_247 = arith.constant 0 : index
    %549 = vector.load %arg2[%c6, %c0_246, %c0_247] : memref<8x2x96xbf16, #tpu.memory_space<vmem>>, vector<1x2x96xbf16>
    %550 = vector.shape_cast %549 : vector<1x2x96xbf16> to vector<2x96xbf16>
    %c0_248 = arith.constant 0 : index
    %c0_249 = arith.constant 0 : index
    %c0_250 = arith.constant 0 : index
    %551 = vector.load %arg7[%c0_248, %c0_249, %c0_250] : memref<2x2x32xf32, #tpu.memory_space<vmem>>, vector<1x2x32xf32>
    %552 = vector.shape_cast %551 : vector<1x2x32xf32> to vector<2x32xf32>
    %c0_251 = arith.constant 0 : index
    %c0_252 = arith.constant 0 : index
    %c0_253 = arith.constant 0 : index
    %553 = vector.load %arg5[%c0_251, %c0_252, %c0_253] : memref<2x32x96xbf16, #tpu.memory_space<vmem>>, vector<1x32x96xbf16>
    %554 = vector.shape_cast %553 : vector<1x32x96xbf16> to vector<32x96xbf16>
    %c0_254 = arith.constant 0 : index
    %c0_255 = arith.constant 0 : index
    %c0_256 = arith.constant 0 : index
    %555 = vector.load %arg6[%c0_254, %c0_255, %c0_256] : memref<2x1x96xf32, #tpu.memory_space<vmem>>, vector<1x1x96xf32>
    %556 = vector.shape_cast %555 : vector<1x1x96xf32> to vector<1x96xf32>
    %557 = arith.truncf %552 : vector<2x32xf32> to vector<2x32xbf16>
    %cst_257 = arith.constant dense<0.000000e+00> : vector<2x96xf32>
    %558 = tpu.matmul %557, %554, %cst_257 {dimension_numbers = #tpu.dot_dimension_numbers<[1], [0], [0], [1], [0, 0, 1, 1], [], []>} : vector<2x32xbf16>, vector<32x96xbf16>, vector<2x96xf32> -> vector<2x96xf32>
    %559 = vector.broadcast %556 : vector<1x96xf32> to vector<2x96xf32>
    %560 = arith.addf %558, %559 : vector<2x96xf32>
    %561 = vector.extract_strided_slice %550 {offsets = [0, 0], sizes = [2, 32], strides = [1, 1]} : vector<2x96xbf16> to vector<2x32xbf16>
    %562 = vector.extract_strided_slice %560 {offsets = [0, 0], sizes = [2, 32], strides = [1, 1]} : vector<2x96xf32> to vector<2x32xf32>
    %563 = arith.extf %561 : vector<2x32xbf16> to vector<2x32xf32>
    %564 = arith.addf %563, %562 : vector<2x32xf32>
    %565 = arith.negf %564 : vector<2x32xf32>
    %566 = math.exp %565 : vector<2x32xf32>
    %cst_258 = arith.constant 1.000000e+00 : f32
    %567 = vector.broadcast %cst_258 : f32 to vector<2x32xf32>
    %568 = arith.addf %567, %566 : vector<2x32xf32>
    %569 = arith.divf %567, %568 : vector<2x32xf32>
    %570 = vector.extract_strided_slice %550 {offsets = [0, 32], sizes = [2, 32], strides = [1, 1]} : vector<2x96xbf16> to vector<2x32xbf16>
    %571 = vector.extract_strided_slice %560 {offsets = [0, 32], sizes = [2, 32], strides = [1, 1]} : vector<2x96xf32> to vector<2x32xf32>
    %572 = arith.extf %570 : vector<2x32xbf16> to vector<2x32xf32>
    %573 = arith.addf %572, %571 : vector<2x32xf32>
    %574 = arith.negf %573 : vector<2x32xf32>
    %575 = math.exp %574 : vector<2x32xf32>
    %cst_259 = arith.constant 1.000000e+00 : f32
    %576 = vector.broadcast %cst_259 : f32 to vector<2x32xf32>
    %577 = arith.addf %576, %575 : vector<2x32xf32>
    %578 = arith.divf %576, %577 : vector<2x32xf32>
    %579 = vector.extract_strided_slice %550 {offsets = [0, 64], sizes = [2, 32], strides = [1, 1]} : vector<2x96xbf16> to vector<2x32xbf16>
    %580 = vector.extract_strided_slice %560 {offsets = [0, 64], sizes = [2, 32], strides = [1, 1]} : vector<2x96xf32> to vector<2x32xf32>
    %581 = arith.mulf %569, %580 : vector<2x32xf32>
    %582 = arith.extf %579 : vector<2x32xbf16> to vector<2x32xf32>
    %583 = arith.addf %582, %581 : vector<2x32xf32>
    %584 = math.tanh %583 : vector<2x32xf32>
    %cst_260 = arith.constant 1.000000e+00 : f32
    %585 = vector.broadcast %cst_260 : f32 to vector<2x32xf32>
    %586 = arith.subf %585, %578 : vector<2x32xf32>
    %587 = arith.mulf %586, %584 : vector<2x32xf32>
    %588 = arith.mulf %578, %552 : vector<2x32xf32>
    %589 = arith.addf %587, %588 : vector<2x32xf32>
    %c0_261 = arith.constant 0 : index
    %c0_262 = arith.constant 0 : index
    %c0_263 = arith.constant 0 : index
    %590 = vector.load %arg7[%c0_261, %c0_262, %c0_263] : memref<2x2x32xf32, #tpu.memory_space<vmem>>, vector<1x2x32xf32>
    %591 = vector.shape_cast %590 : vector<1x2x32xf32> to vector<2x32xf32>
    %592 = vector.shape_cast %589 : vector<2x32xf32> to vector<1x2x32xf32>
    tpu.vector_store %arg7[%c0_261, %c0_262, %c0_263], %592 {strides = array<i32>} : memref<2x2x32xf32, #tpu.memory_space<vmem>>, vector<1x2x32xf32>,
    %593 = arith.truncf %589 : vector<2x32xf32> to vector<2x32xbf16>
    %c0_264 = arith.constant 0 : index
    %c0_265 = arith.constant 0 : index
    %c0_266 = arith.constant 0 : index
    %594 = vector.load %arg3[%c0_264, %c0_265, %c0_266] : memref<1x32x96xbf16, #tpu.memory_space<vmem>>, vector<1x32x96xbf16>
    %595 = vector.shape_cast %594 : vector<1x32x96xbf16> to vector<32x96xbf16>
    %cst_267 = arith.constant dense<0.000000e+00> : vector<2x96xf32>
    %596 = tpu.matmul %593, %595, %cst_267 {dimension_numbers = #tpu.dot_dimension_numbers<[1], [0], [0], [1], [0, 0, 1, 1], [], []>} : vector<2x32xbf16>, vector<32x96xbf16>, vector<2x96xf32> -> vector<2x96xf32>
    %c0_268 = arith.constant 0 : index
    %c0_269 = arith.constant 0 : index
    %c0_270 = arith.constant 0 : index
    %597 = vector.load %arg4[%c0_268, %c0_269, %c0_270] : memref<1x1x96xf32, #tpu.memory_space<vmem>>, vector<1x1x96xf32>
    %598 = vector.shape_cast %597 : vector<1x1x96xf32> to vector<1x96xf32>
    %599 = vector.broadcast %598 : vector<1x96xf32> to vector<2x96xf32>
    %600 = arith.addf %596, %599 : vector<2x96xf32>
    %c1_271 = arith.constant 1 : index
    %c0_272 = arith.constant 0 : index
    %c0_273 = arith.constant 0 : index
    %601 = vector.load %arg7[%c1_271, %c0_272, %c0_273] : memref<2x2x32xf32, #tpu.memory_space<vmem>>, vector<1x2x32xf32>
    %602 = vector.shape_cast %601 : vector<1x2x32xf32> to vector<2x32xf32>
    %c1_274 = arith.constant 1 : index
    %c0_275 = arith.constant 0 : index
    %c0_276 = arith.constant 0 : index
    %603 = vector.load %arg5[%c1_274, %c0_275, %c0_276] : memref<2x32x96xbf16, #tpu.memory_space<vmem>>, vector<1x32x96xbf16>
    %604 = vector.shape_cast %603 : vector<1x32x96xbf16> to vector<32x96xbf16>
    %c1_277 = arith.constant 1 : index
    %c0_278 = arith.constant 0 : index
    %c0_279 = arith.constant 0 : index
    %605 = vector.load %arg6[%c1_277, %c0_278, %c0_279] : memref<2x1x96xf32, #tpu.memory_space<vmem>>, vector<1x1x96xf32>
    %606 = vector.shape_cast %605 : vector<1x1x96xf32> to vector<1x96xf32>
    %607 = arith.truncf %602 : vector<2x32xf32> to vector<2x32xbf16>
    %cst_280 = arith.constant dense<0.000000e+00> : vector<2x96xf32>
    %608 = tpu.matmul %607, %604, %cst_280 {dimension_numbers = #tpu.dot_dimension_numbers<[1], [0], [0], [1], [0, 0, 1, 1], [], []>} : vector<2x32xbf16>, vector<32x96xbf16>, vector<2x96xf32> -> vector<2x96xf32>
    %609 = vector.broadcast %606 : vector<1x96xf32> to vector<2x96xf32>
    %610 = arith.addf %608, %609 : vector<2x96xf32>
    %611 = vector.extract_strided_slice %600 {offsets = [0, 0], sizes = [2, 32], strides = [1, 1]} : vector<2x96xf32> to vector<2x32xf32>
    %612 = vector.extract_strided_slice %610 {offsets = [0, 0], sizes = [2, 32], strides = [1, 1]} : vector<2x96xf32> to vector<2x32xf32>
    %613 = arith.addf %611, %612 : vector<2x32xf32>
    %614 = arith.negf %613 : vector<2x32xf32>
    %615 = math.exp %614 : vector<2x32xf32>
    %cst_281 = arith.constant 1.000000e+00 : f32
    %616 = vector.broadcast %cst_281 : f32 to vector<2x32xf32>
    %617 = arith.addf %616, %615 : vector<2x32xf32>
    %618 = arith.divf %616, %617 : vector<2x32xf32>
    %619 = vector.extract_strided_slice %600 {offsets = [0, 32], sizes = [2, 32], strides = [1, 1]} : vector<2x96xf32> to vector<2x32xf32>
    %620 = vector.extract_strided_slice %610 {offsets = [0, 32], sizes = [2, 32], strides = [1, 1]} : vector<2x96xf32> to vector<2x32xf32>
    %621 = arith.addf %619, %620 : vector<2x32xf32>
    %622 = arith.negf %621 : vector<2x32xf32>
    %623 = math.exp %622 : vector<2x32xf32>
    %cst_282 = arith.constant 1.000000e+00 : f32
    %624 = vector.broadcast %cst_282 : f32 to vector<2x32xf32>
    %625 = arith.addf %624, %623 : vector<2x32xf32>
    %626 = arith.divf %624, %625 : vector<2x32xf32>
    %627 = vector.extract_strided_slice %600 {offsets = [0, 64], sizes = [2, 32], strides = [1, 1]} : vector<2x96xf32> to vector<2x32xf32>
    %628 = vector.extract_strided_slice %610 {offsets = [0, 64], sizes = [2, 32], strides = [1, 1]} : vector<2x96xf32> to vector<2x32xf32>
    %629 = arith.mulf %618, %628 : vector<2x32xf32>
    %630 = arith.addf %627, %629 : vector<2x32xf32>
    %631 = math.tanh %630 : vector<2x32xf32>
    %cst_283 = arith.constant 1.000000e+00 : f32
    %632 = vector.broadcast %cst_283 : f32 to vector<2x32xf32>
    %633 = arith.subf %632, %626 : vector<2x32xf32>
    %634 = arith.mulf %633, %631 : vector<2x32xf32>
    %635 = arith.mulf %626, %602 : vector<2x32xf32>
    %636 = arith.addf %634, %635 : vector<2x32xf32>
    %c1_284 = arith.constant 1 : index
    %c0_285 = arith.constant 0 : index
    %c0_286 = arith.constant 0 : index
    %637 = vector.load %arg7[%c1_284, %c0_285, %c0_286] : memref<2x2x32xf32, #tpu.memory_space<vmem>>, vector<1x2x32xf32>
    %638 = vector.shape_cast %637 : vector<1x2x32xf32> to vector<2x32xf32>
    %639 = vector.shape_cast %636 : vector<2x32xf32> to vector<1x2x32xf32>
    tpu.vector_store %arg7[%c1_284, %c0_285, %c0_286], %639 {strides = array<i32>} : memref<2x2x32xf32, #tpu.memory_space<vmem>>, vector<1x2x32xf32>,
    %c7 = arith.constant 7 : index
    %c0_287 = arith.constant 0 : index
    %c0_288 = arith.constant 0 : index
    %640 = vector.load %arg2[%c7, %c0_287, %c0_288] : memref<8x2x96xbf16, #tpu.memory_space<vmem>>, vector<1x2x96xbf16>
    %641 = vector.shape_cast %640 : vector<1x2x96xbf16> to vector<2x96xbf16>
    %c0_289 = arith.constant 0 : index
    %c0_290 = arith.constant 0 : index
    %c0_291 = arith.constant 0 : index
    %642 = vector.load %arg7[%c0_289, %c0_290, %c0_291] : memref<2x2x32xf32, #tpu.memory_space<vmem>>, vector<1x2x32xf32>
    %643 = vector.shape_cast %642 : vector<1x2x32xf32> to vector<2x32xf32>
    %c0_292 = arith.constant 0 : index
    %c0_293 = arith.constant 0 : index
    %c0_294 = arith.constant 0 : index
    %644 = vector.load %arg5[%c0_292, %c0_293, %c0_294] : memref<2x32x96xbf16, #tpu.memory_space<vmem>>, vector<1x32x96xbf16>
    %645 = vector.shape_cast %644 : vector<1x32x96xbf16> to vector<32x96xbf16>
    %c0_295 = arith.constant 0 : index
    %c0_296 = arith.constant 0 : index
    %c0_297 = arith.constant 0 : index
    %646 = vector.load %arg6[%c0_295, %c0_296, %c0_297] : memref<2x1x96xf32, #tpu.memory_space<vmem>>, vector<1x1x96xf32>
    %647 = vector.shape_cast %646 : vector<1x1x96xf32> to vector<1x96xf32>
    %648 = arith.truncf %643 : vector<2x32xf32> to vector<2x32xbf16>
    %cst_298 = arith.constant dense<0.000000e+00> : vector<2x96xf32>
    %649 = tpu.matmul %648, %645, %cst_298 {dimension_numbers = #tpu.dot_dimension_numbers<[1], [0], [0], [1], [0, 0, 1, 1], [], []>} : vector<2x32xbf16>, vector<32x96xbf16>, vector<2x96xf32> -> vector<2x96xf32>
    %650 = vector.broadcast %647 : vector<1x96xf32> to vector<2x96xf32>
    %651 = arith.addf %649, %650 : vector<2x96xf32>
    %652 = vector.extract_strided_slice %641 {offsets = [0, 0], sizes = [2, 32], strides = [1, 1]} : vector<2x96xbf16> to vector<2x32xbf16>
    %653 = vector.extract_strided_slice %651 {offsets = [0, 0], sizes = [2, 32], strides = [1, 1]} : vector<2x96xf32> to vector<2x32xf32>
    %654 = arith.extf %652 : vector<2x32xbf16> to vector<2x32xf32>
    %655 = arith.addf %654, %653 : vector<2x32xf32>
    %656 = arith.negf %655 : vector<2x32xf32>
    %657 = math.exp %656 : vector<2x32xf32>
    %cst_299 = arith.constant 1.000000e+00 : f32
    %658 = vector.broadcast %cst_299 : f32 to vector<2x32xf32>
    %659 = arith.addf %658, %657 : vector<2x32xf32>
    %660 = arith.divf %658, %659 : vector<2x32xf32>
    %661 = vector.extract_strided_slice %641 {offsets = [0, 32], sizes = [2, 32], strides = [1, 1]} : vector<2x96xbf16> to vector<2x32xbf16>
    %662 = vector.extract_strided_slice %651 {offsets = [0, 32], sizes = [2, 32], strides = [1, 1]} : vector<2x96xf32> to vector<2x32xf32>
    %663 = arith.extf %661 : vector<2x32xbf16> to vector<2x32xf32>
    %664 = arith.addf %663, %662 : vector<2x32xf32>
    %665 = arith.negf %664 : vector<2x32xf32>
    %666 = math.exp %665 : vector<2x32xf32>
    %cst_300 = arith.constant 1.000000e+00 : f32
    %667 = vector.broadcast %cst_300 : f32 to vector<2x32xf32>
    %668 = arith.addf %667, %666 : vector<2x32xf32>
    %669 = arith.divf %667, %668 : vector<2x32xf32>
    %670 = vector.extract_strided_slice %641 {offsets = [0, 64], sizes = [2, 32], strides = [1, 1]} : vector<2x96xbf16> to vector<2x32xbf16>
    %671 = vector.extract_strided_slice %651 {offsets = [0, 64], sizes = [2, 32], strides = [1, 1]} : vector<2x96xf32> to vector<2x32xf32>
    %672 = arith.mulf %660, %671 : vector<2x32xf32>
    %673 = arith.extf %670 : vector<2x32xbf16> to vector<2x32xf32>
    %674 = arith.addf %673, %672 : vector<2x32xf32>
    %675 = math.tanh %674 : vector<2x32xf32>
    %cst_301 = arith.constant 1.000000e+00 : f32
    %676 = vector.broadcast %cst_301 : f32 to vector<2x32xf32>
    %677 = arith.subf %676, %669 : vector<2x32xf32>
    %678 = arith.mulf %677, %675 : vector<2x32xf32>
    %679 = arith.mulf %669, %643 : vector<2x32xf32>
    %680 = arith.addf %678, %679 : vector<2x32xf32>
    %c0_302 = arith.constant 0 : index
    %c0_303 = arith.constant 0 : index
    %c0_304 = arith.constant 0 : index
    %681 = vector.load %arg7[%c0_302, %c0_303, %c0_304] : memref<2x2x32xf32, #tpu.memory_space<vmem>>, vector<1x2x32xf32>
    %682 = vector.shape_cast %681 : vector<1x2x32xf32> to vector<2x32xf32>
    %683 = vector.shape_cast %680 : vector<2x32xf32> to vector<1x2x32xf32>
    tpu.vector_store %arg7[%c0_302, %c0_303, %c0_304], %683 {strides = array<i32>} : memref<2x2x32xf32, #tpu.memory_space<vmem>>, vector<1x2x32xf32>,
    %684 = arith.truncf %680 : vector<2x32xf32> to vector<2x32xbf16>
    %c0_305 = arith.constant 0 : index
    %c0_306 = arith.constant 0 : index
    %c0_307 = arith.constant 0 : index
    %685 = vector.load %arg3[%c0_305, %c0_306, %c0_307] : memref<1x32x96xbf16, #tpu.memory_space<vmem>>, vector<1x32x96xbf16>
    %686 = vector.shape_cast %685 : vector<1x32x96xbf16> to vector<32x96xbf16>
    %cst_308 = arith.constant dense<0.000000e+00> : vector<2x96xf32>
    %687 = tpu.matmul %684, %686, %cst_308 {dimension_numbers = #tpu.dot_dimension_numbers<[1], [0], [0], [1], [0, 0, 1, 1], [], []>} : vector<2x32xbf16>, vector<32x96xbf16>, vector<2x96xf32> -> vector<2x96xf32>
    %c0_309 = arith.constant 0 : index
    %c0_310 = arith.constant 0 : index
    %c0_311 = arith.constant 0 : index
    %688 = vector.load %arg4[%c0_309, %c0_310, %c0_311] : memref<1x1x96xf32, #tpu.memory_space<vmem>>, vector<1x1x96xf32>
    %689 = vector.shape_cast %688 : vector<1x1x96xf32> to vector<1x96xf32>
    %690 = vector.broadcast %689 : vector<1x96xf32> to vector<2x96xf32>
    %691 = arith.addf %687, %690 : vector<2x96xf32>
    %c1_312 = arith.constant 1 : index
    %c0_313 = arith.constant 0 : index
    %c0_314 = arith.constant 0 : index
    %692 = vector.load %arg7[%c1_312, %c0_313, %c0_314] : memref<2x2x32xf32, #tpu.memory_space<vmem>>, vector<1x2x32xf32>
    %693 = vector.shape_cast %692 : vector<1x2x32xf32> to vector<2x32xf32>
    %c1_315 = arith.constant 1 : index
    %c0_316 = arith.constant 0 : index
    %c0_317 = arith.constant 0 : index
    %694 = vector.load %arg5[%c1_315, %c0_316, %c0_317] : memref<2x32x96xbf16, #tpu.memory_space<vmem>>, vector<1x32x96xbf16>
    %695 = vector.shape_cast %694 : vector<1x32x96xbf16> to vector<32x96xbf16>
    %c1_318 = arith.constant 1 : index
    %c0_319 = arith.constant 0 : index
    %c0_320 = arith.constant 0 : index
    %696 = vector.load %arg6[%c1_318, %c0_319, %c0_320] : memref<2x1x96xf32, #tpu.memory_space<vmem>>, vector<1x1x96xf32>
    %697 = vector.shape_cast %696 : vector<1x1x96xf32> to vector<1x96xf32>
    %698 = arith.truncf %693 : vector<2x32xf32> to vector<2x32xbf16>
    %cst_321 = arith.constant dense<0.000000e+00> : vector<2x96xf32>
    %699 = tpu.matmul %698, %695, %cst_321 {dimension_numbers = #tpu.dot_dimension_numbers<[1], [0], [0], [1], [0, 0, 1, 1], [], []>} : vector<2x32xbf16>, vector<32x96xbf16>, vector<2x96xf32> -> vector<2x96xf32>
    %700 = vector.broadcast %697 : vector<1x96xf32> to vector<2x96xf32>
    %701 = arith.addf %699, %700 : vector<2x96xf32>
    %702 = vector.extract_strided_slice %691 {offsets = [0, 0], sizes = [2, 32], strides = [1, 1]} : vector<2x96xf32> to vector<2x32xf32>
    %703 = vector.extract_strided_slice %701 {offsets = [0, 0], sizes = [2, 32], strides = [1, 1]} : vector<2x96xf32> to vector<2x32xf32>
    %704 = arith.addf %702, %703 : vector<2x32xf32>
    %705 = arith.negf %704 : vector<2x32xf32>
    %706 = math.exp %705 : vector<2x32xf32>
    %cst_322 = arith.constant 1.000000e+00 : f32
    %707 = vector.broadcast %cst_322 : f32 to vector<2x32xf32>
    %708 = arith.addf %707, %706 : vector<2x32xf32>
    %709 = arith.divf %707, %708 : vector<2x32xf32>
    %710 = vector.extract_strided_slice %691 {offsets = [0, 32], sizes = [2, 32], strides = [1, 1]} : vector<2x96xf32> to vector<2x32xf32>
    %711 = vector.extract_strided_slice %701 {offsets = [0, 32], sizes = [2, 32], strides = [1, 1]} : vector<2x96xf32> to vector<2x32xf32>
    %712 = arith.addf %710, %711 : vector<2x32xf32>
    %713 = arith.negf %712 : vector<2x32xf32>
    %714 = math.exp %713 : vector<2x32xf32>
    %cst_323 = arith.constant 1.000000e+00 : f32
    %715 = vector.broadcast %cst_323 : f32 to vector<2x32xf32>
    %716 = arith.addf %715, %714 : vector<2x32xf32>
    %717 = arith.divf %715, %716 : vector<2x32xf32>
    %718 = vector.extract_strided_slice %691 {offsets = [0, 64], sizes = [2, 32], strides = [1, 1]} : vector<2x96xf32> to vector<2x32xf32>
    %719 = vector.extract_strided_slice %701 {offsets = [0, 64], sizes = [2, 32], strides = [1, 1]} : vector<2x96xf32> to vector<2x32xf32>
    %720 = arith.mulf %709, %719 : vector<2x32xf32>
    %721 = arith.addf %718, %720 : vector<2x32xf32>
    %722 = math.tanh %721 : vector<2x32xf32>
    %cst_324 = arith.constant 1.000000e+00 : f32
    %723 = vector.broadcast %cst_324 : f32 to vector<2x32xf32>
    %724 = arith.subf %723, %717 : vector<2x32xf32>
    %725 = arith.mulf %724, %722 : vector<2x32xf32>
    %726 = arith.mulf %717, %693 : vector<2x32xf32>
    %727 = arith.addf %725, %726 : vector<2x32xf32>
    %c1_325 = arith.constant 1 : index
    %c0_326 = arith.constant 0 : index
    %c0_327 = arith.constant 0 : index
    %728 = vector.load %arg7[%c1_325, %c0_326, %c0_327] : memref<2x2x32xf32, #tpu.memory_space<vmem>>, vector<1x2x32xf32>
    %729 = vector.shape_cast %728 : vector<1x2x32xf32> to vector<2x32xf32>
    %730 = vector.shape_cast %727 : vector<2x32xf32> to vector<1x2x32xf32>
    tpu.vector_store %arg7[%c1_325, %c0_326, %c0_327], %730 {strides = array<i32>} : memref<2x2x32xf32, #tpu.memory_space<vmem>>, vector<1x2x32xf32>,
    return
  }
  func.func @transform_0(%arg0: i32, %arg1: i32) -> (i32, i32, i32) {
    %c0_i32 = arith.constant 0 : i32
    %c0_i32_0 = arith.constant 0 : i32
    return %arg1, %arg0, %c0_i32 : i32, i32, i32
  }
  func.func @transform_1(%arg0: i32, %arg1: i32) -> (i32, i32, i32) {
    %c0_i32 = arith.constant 0 : i32
    %c0_i32_0 = arith.constant 0 : i32
    %c0_i32_1 = arith.constant 0 : i32
    %c0_i32_2 = arith.constant 0 : i32
    return %c0_i32, %c0_i32_0, %c0_i32_1 : i32, i32, i32
  }
  func.func @transform_2(%arg0: i32, %arg1: i32) -> (i32, i32, i32) {
    %c0_i32 = arith.constant 0 : i32
    %c0_i32_0 = arith.constant 0 : i32
    %c0_i32_1 = arith.constant 0 : i32
    %c0_i32_2 = arith.constant 0 : i32
    return %c0_i32, %c0_i32_0, %c0_i32_1 : i32, i32, i32
  }
  func.func @transform_3(%arg0: i32, %arg1: i32) -> (i32, i32, i32) {
    %c0_i32 = arith.constant 0 : i32
    %c0_i32_0 = arith.constant 0 : i32
    %c0_i32_1 = arith.constant 0 : i32
    %c0_i32_2 = arith.constant 0 : i32
    return %c0_i32, %c0_i32_0, %c0_i32_1 : i32, i32, i32
  }
  func.func @transform_4(%arg0: i32, %arg1: i32) -> (i32, i32, i32) {
    %c0_i32 = arith.constant 0 : i32
    %c0_i32_0 = arith.constant 0 : i32
    %c0_i32_1 = arith.constant 0 : i32
    %c0_i32_2 = arith.constant 0 : i32
    return %c0_i32, %c0_i32_0, %c0_i32_1 : i32, i32, i32
  }
  func.func @transform_5(%arg0: i32, %arg1: i32) -> (i32, i32, i32) {
    %c0_i32 = arith.constant 0 : i32
    %c0_i32_0 = arith.constant 0 : i32
    %c0_i32_1 = arith.constant 0 : i32
    return %c0_i32, %arg0, %c0_i32_0 : i32, i32, i32
  }
}

module attributes {stable_mosaic.version = 11 : i64} {
  func.func @_ln_proj_kernel(%arg0: i32, %arg1: memref<24x32xf32, #tpu.memory_space<vmem>>, %arg2: memref<1x32xf32, #tpu.memory_space<vmem>>, %arg3: memref<1x32xf32, #tpu.memory_space<vmem>>, %arg4: memref<32x96xbf16, #tpu.memory_space<vmem>>, %arg5: memref<1x96xf32, #tpu.memory_space<vmem>>, %arg6: memref<32x96xbf16, #tpu.memory_space<vmem>>, %arg7: memref<1x96xf32, #tpu.memory_space<vmem>>, %arg8: memref<24x96xbf16, #tpu.memory_space<vmem>>, %arg9: memref<24x96xbf16, #tpu.memory_space<vmem>>) attributes {dimension_semantics = [#tpu.dimension_semantics<parallel>], iteration_bounds = array<i64: 1>, scalar_prefetch = 0 : i64, scratch_operands = 0 : i64, tpu.core_type = #tpu.core_type<tc>, window_params = [{transform_indices = @transform_0, window_bounds = array<i64: 24, 32>}, {pipeline_mode = #tpu.pipeline_mode<synchronous>, transform_indices = @transform_1, window_bounds = array<i64: 1, 32>}, {pipeline_mode = #tpu.pipeline_mode<synchronous>, transform_indices = @transform_2, window_bounds = array<i64: 1, 32>}, {pipeline_mode = #tpu.pipeline_mode<synchronous>, transform_indices = @transform_3, window_bounds = array<i64: 32, 96>}, {pipeline_mode = #tpu.pipeline_mode<synchronous>, transform_indices = @transform_4, window_bounds = array<i64: 1, 96>}, {pipeline_mode = #tpu.pipeline_mode<synchronous>, transform_indices = @transform_5, window_bounds = array<i64: 32, 96>}, {pipeline_mode = #tpu.pipeline_mode<synchronous>, transform_indices = @transform_6, window_bounds = array<i64: 1, 96>}, {transform_indices = @transform_7, window_bounds = array<i64: 24, 96>}, {transform_indices = @transform_8, window_bounds = array<i64: 24, 96>}]} {
    %c0 = arith.constant 0 : index
    %c0_0 = arith.constant 0 : index
    %0 = vector.load %arg1[%c0, %c0_0] : memref<24x32xf32, #tpu.memory_space<vmem>>, vector<24x32xf32>
    %cst = arith.constant dense<0.000000e+00> : vector<24xf32>
    %1 = vector.multi_reduction <add>, %0, %cst [1] : vector<24x32xf32> to vector<24xf32>
    %2 = vector.shape_cast %1 : vector<24xf32> to vector<24x1xf32>
    %cst_1 = arith.constant 3.200000e+01 : f32
    %3 = vector.broadcast %cst_1 : f32 to vector<24x1xf32>
    %4 = arith.divf %2, %3 : vector<24x1xf32>
    %5 = vector.broadcast %4 : vector<24x1xf32> to vector<24x32xf32>
    %6 = arith.subf %0, %5 : vector<24x32xf32>
    %7 = arith.mulf %6, %6 : vector<24x32xf32>
    %cst_2 = arith.constant dense<0.000000e+00> : vector<24xf32>
    %8 = vector.multi_reduction <add>, %7, %cst_2 [1] : vector<24x32xf32> to vector<24xf32>
    %9 = vector.shape_cast %8 : vector<24xf32> to vector<24x1xf32>
    %cst_3 = arith.constant 3.200000e+01 : f32
    %10 = vector.broadcast %cst_3 : f32 to vector<24x1xf32>
    %11 = arith.divf %9, %10 : vector<24x1xf32>
    %12 = vector.broadcast %4 : vector<24x1xf32> to vector<24x32xf32>
    %13 = arith.subf %0, %12 : vector<24x32xf32>
    %cst_4 = arith.constant 9.99999974E-6 : f32
    %14 = vector.broadcast %cst_4 : f32 to vector<24x1xf32>
    %15 = arith.addf %11, %14 : vector<24x1xf32>
    %16 = math.rsqrt %15 : vector<24x1xf32>
    %17 = vector.broadcast %16 : vector<24x1xf32> to vector<24x32xf32>
    %18 = arith.mulf %13, %17 : vector<24x32xf32>
    %c0_5 = arith.constant 0 : index
    %c0_6 = arith.constant 0 : index
    %19 = vector.load %arg2[%c0_5, %c0_6] : memref<1x32xf32, #tpu.memory_space<vmem>>, vector<1x32xf32>
    %20 = vector.broadcast %19 : vector<1x32xf32> to vector<24x32xf32>
    %21 = arith.mulf %18, %20 : vector<24x32xf32>
    %c0_7 = arith.constant 0 : index
    %c0_8 = arith.constant 0 : index
    %22 = vector.load %arg3[%c0_7, %c0_8] : memref<1x32xf32, #tpu.memory_space<vmem>>, vector<1x32xf32>
    %23 = vector.broadcast %22 : vector<1x32xf32> to vector<24x32xf32>
    %24 = arith.addf %21, %23 : vector<24x32xf32>
    %25 = arith.truncf %24 : vector<24x32xf32> to vector<24x32xbf16>
    %c0_9 = arith.constant 0 : index
    %c0_10 = arith.constant 0 : index
    %26 = vector.load %arg4[%c0_9, %c0_10] : memref<32x96xbf16, #tpu.memory_space<vmem>>, vector<32x96xbf16>
    %cst_11 = arith.constant dense<0.000000e+00> : vector<24x96xf32>
    %27 = tpu.matmul %25, %26, %cst_11 {dimension_numbers = #tpu.dot_dimension_numbers<[1], [0], [0], [1], [0, 0, 1, 1], [], []>} : vector<24x32xbf16>, vector<32x96xbf16>, vector<24x96xf32> -> vector<24x96xf32>
    %c0_12 = arith.constant 0 : index
    %c0_13 = arith.constant 0 : index
    %28 = vector.load %arg5[%c0_12, %c0_13] : memref<1x96xf32, #tpu.memory_space<vmem>>, vector<1x96xf32>
    %29 = vector.broadcast %28 : vector<1x96xf32> to vector<24x96xf32>
    %30 = arith.addf %27, %29 : vector<24x96xf32>
    %31 = arith.truncf %30 : vector<24x96xf32> to vector<24x96xbf16>
    %c0_14 = arith.constant 0 : index
    %c0_15 = arith.constant 0 : index
    %32 = vector.load %arg8[%c0_14, %c0_15] : memref<24x96xbf16, #tpu.memory_space<vmem>>, vector<24x96xbf16>
    tpu.vector_store %arg8[%c0_14, %c0_15], %31 {strides = array<i32>} : memref<24x96xbf16, #tpu.memory_space<vmem>>, vector<24x96xbf16>,
    %c0_16 = arith.constant 0 : index
    %c0_17 = arith.constant 0 : index
    %33 = vector.load %arg6[%c0_16, %c0_17] : memref<32x96xbf16, #tpu.memory_space<vmem>>, vector<32x96xbf16>
    %cst_18 = arith.constant dense<0.000000e+00> : vector<24x96xf32>
    %34 = tpu.matmul %25, %33, %cst_18 {dimension_numbers = #tpu.dot_dimension_numbers<[1], [0], [0], [1], [0, 0, 1, 1], [], []>} : vector<24x32xbf16>, vector<32x96xbf16>, vector<24x96xf32> -> vector<24x96xf32>
    %c0_19 = arith.constant 0 : index
    %c0_20 = arith.constant 0 : index
    %35 = vector.load %arg7[%c0_19, %c0_20] : memref<1x96xf32, #tpu.memory_space<vmem>>, vector<1x96xf32>
    %36 = vector.broadcast %35 : vector<1x96xf32> to vector<24x96xf32>
    %37 = arith.addf %34, %36 : vector<24x96xf32>
    %38 = arith.truncf %37 : vector<24x96xf32> to vector<24x96xbf16>
    %c0_21 = arith.constant 0 : index
    %c0_22 = arith.constant 0 : index
    %39 = vector.load %arg9[%c0_21, %c0_22] : memref<24x96xbf16, #tpu.memory_space<vmem>>, vector<24x96xbf16>
    tpu.vector_store %arg9[%c0_21, %c0_22], %38 {strides = array<i32>} : memref<24x96xbf16, #tpu.memory_space<vmem>>, vector<24x96xbf16>,
    return
  }
  func.func @transform_0(%arg0: i32) -> (i32, i32) {
    %c0_i32 = arith.constant 0 : i32
    %c0_i32_0 = arith.constant 0 : i32
    return %arg0, %c0_i32 : i32, i32
  }
  func.func @transform_1(%arg0: i32) -> (i32, i32) {
    %c0_i32 = arith.constant 0 : i32
    %c0_i32_0 = arith.constant 0 : i32
    %c0_i32_1 = arith.constant 0 : i32
    return %c0_i32, %c0_i32_0 : i32, i32
  }
  func.func @transform_2(%arg0: i32) -> (i32, i32) {
    %c0_i32 = arith.constant 0 : i32
    %c0_i32_0 = arith.constant 0 : i32
    %c0_i32_1 = arith.constant 0 : i32
    return %c0_i32, %c0_i32_0 : i32, i32
  }
  func.func @transform_3(%arg0: i32) -> (i32, i32) {
    %c0_i32 = arith.constant 0 : i32
    %c0_i32_0 = arith.constant 0 : i32
    %c0_i32_1 = arith.constant 0 : i32
    return %c0_i32, %c0_i32_0 : i32, i32
  }
  func.func @transform_4(%arg0: i32) -> (i32, i32) {
    %c0_i32 = arith.constant 0 : i32
    %c0_i32_0 = arith.constant 0 : i32
    %c0_i32_1 = arith.constant 0 : i32
    return %c0_i32, %c0_i32_0 : i32, i32
  }
  func.func @transform_5(%arg0: i32) -> (i32, i32) {
    %c0_i32 = arith.constant 0 : i32
    %c0_i32_0 = arith.constant 0 : i32
    %c0_i32_1 = arith.constant 0 : i32
    return %c0_i32, %c0_i32_0 : i32, i32
  }
  func.func @transform_6(%arg0: i32) -> (i32, i32) {
    %c0_i32 = arith.constant 0 : i32
    %c0_i32_0 = arith.constant 0 : i32
    %c0_i32_1 = arith.constant 0 : i32
    return %c0_i32, %c0_i32_0 : i32, i32
  }
  func.func @transform_7(%arg0: i32) -> (i32, i32) {
    %c0_i32 = arith.constant 0 : i32
    %c0_i32_0 = arith.constant 0 : i32
    return %arg0, %c0_i32 : i32, i32
  }
  func.func @transform_8(%arg0: i32) -> (i32, i32) {
    %c0_i32 = arith.constant 0 : i32
    %c0_i32_0 = arith.constant 0 : i32
    return %arg0, %c0_i32 : i32, i32
  }
}

module attributes {stable_mosaic.version = 11 : i64} {
  func.func @_latent_kernel(%arg0: memref<4x32xf32, #tpu.memory_space<vmem>>, %arg1: memref<32x32xf32, #tpu.memory_space<vmem>>, %arg2: memref<1x32xf32, #tpu.memory_space<vmem>>, %arg3: memref<8x32xf32, #tpu.memory_space<vmem>>, %arg4: memref<8x32xf32, #tpu.memory_space<vmem>>, %arg5: memref<1x32xf32, #tpu.memory_space<vmem>>, %arg6: memref<4x8xf32, #tpu.memory_space<vmem>>, %arg7: memref<4x8xf32, #tpu.memory_space<vmem>>, %arg8: memref<4x32xf32, #tpu.memory_space<vmem>>, %arg9: memref<4x8xf32, #tpu.memory_space<vmem>>, %arg10: memref<4x8xf32, #tpu.memory_space<vmem>>, %arg11: memref<4x32xf32, #tpu.memory_space<vmem>>) attributes {dimension_semantics = [], scalar_prefetch = 0 : i64, scratch_operands = 0 : i64, tpu.core_type = #tpu.core_type<tc>} {
    %c0 = arith.constant 0 : index
    %c0_0 = arith.constant 0 : index
    %0 = vector.load %arg0[%c0, %c0_0] : memref<4x32xf32, #tpu.memory_space<vmem>>, vector<4x32xf32>
    %c0_1 = arith.constant 0 : index
    %c0_2 = arith.constant 0 : index
    %1 = vector.load %arg1[%c0_1, %c0_2] : memref<32x32xf32, #tpu.memory_space<vmem>>, vector<32x32xf32>
    %cst = arith.constant dense<0.000000e+00> : vector<4x32xf32>
    %2 = tpu.matmul %0, %1, %cst {dimension_numbers = #tpu.dot_dimension_numbers<[1], [0], [0], [1], [0, 0, 1, 1], [], []>} : vector<4x32xf32>, vector<32x32xf32>, vector<4x32xf32> -> vector<4x32xf32>
    %c0_3 = arith.constant 0 : index
    %c0_4 = arith.constant 0 : index
    %3 = vector.load %arg2[%c0_3, %c0_4] : memref<1x32xf32, #tpu.memory_space<vmem>>, vector<1x32xf32>
    %4 = vector.broadcast %3 : vector<1x32xf32> to vector<4x32xf32>
    %5 = arith.addf %2, %4 : vector<4x32xf32>
    %6 = vector.extract_strided_slice %5 {offsets = [0, 0], sizes = [4, 8], strides = [1, 1]} : vector<4x32xf32> to vector<4x8xf32>
    %7 = vector.extract_strided_slice %5 {offsets = [0, 8], sizes = [4, 8], strides = [1, 1]} : vector<4x32xf32> to vector<4x8xf32>
    %8 = vector.extract_strided_slice %5 {offsets = [0, 16], sizes = [4, 8], strides = [1, 1]} : vector<4x32xf32> to vector<4x8xf32>
    %9 = vector.extract_strided_slice %5 {offsets = [0, 24], sizes = [4, 8], strides = [1, 1]} : vector<4x32xf32> to vector<4x8xf32>
    %c0_5 = arith.constant 0 : index
    %c0_6 = arith.constant 0 : index
    %10 = vector.load %arg6[%c0_5, %c0_6] : memref<4x8xf32, #tpu.memory_space<vmem>>, vector<4x8xf32>
    %cst_7 = arith.constant 5.000000e-01 : f32
    %11 = vector.broadcast %cst_7 : f32 to vector<4x8xf32>
    %12 = arith.mulf %11, %7 : vector<4x8xf32>
    %13 = math.exp %12 : vector<4x8xf32>
    %14 = arith.mulf %10, %13 : vector<4x8xf32>
    %15 = arith.addf %6, %14 : vector<4x8xf32>
    %c0_8 = arith.constant 0 : index
    %c0_9 = arith.constant 0 : index
    %16 = vector.load %arg7[%c0_8, %c0_9] : memref<4x8xf32, #tpu.memory_space<vmem>>, vector<4x8xf32>
    %cst_10 = arith.constant 5.000000e-01 : f32
    %17 = vector.broadcast %cst_10 : f32 to vector<4x8xf32>
    %18 = arith.mulf %17, %9 : vector<4x8xf32>
    %19 = math.exp %18 : vector<4x8xf32>
    %20 = arith.mulf %16, %19 : vector<4x8xf32>
    %21 = arith.addf %8, %20 : vector<4x8xf32>
    %c0_11 = arith.constant 0 : index
    %c0_12 = arith.constant 0 : index
    %22 = vector.load %arg3[%c0_11, %c0_12] : memref<8x32xf32, #tpu.memory_space<vmem>>, vector<8x32xf32>
    %cst_13 = arith.constant dense<0.000000e+00> : vector<4x32xf32>
    %23 = tpu.matmul %15, %22, %cst_13 {dimension_numbers = #tpu.dot_dimension_numbers<[1], [0], [0], [1], [0, 0, 1, 1], [], []>} : vector<4x8xf32>, vector<8x32xf32>, vector<4x32xf32> -> vector<4x32xf32>
    %c0_14 = arith.constant 0 : index
    %c0_15 = arith.constant 0 : index
    %24 = vector.load %arg4[%c0_14, %c0_15] : memref<8x32xf32, #tpu.memory_space<vmem>>, vector<8x32xf32>
    %cst_16 = arith.constant dense<0.000000e+00> : vector<4x32xf32>
    %25 = tpu.matmul %21, %24, %cst_16 {dimension_numbers = #tpu.dot_dimension_numbers<[1], [0], [0], [1], [0, 0, 1, 1], [], []>} : vector<4x8xf32>, vector<8x32xf32>, vector<4x32xf32> -> vector<4x32xf32>
    %26 = arith.addf %23, %25 : vector<4x32xf32>
    %c0_17 = arith.constant 0 : index
    %c0_18 = arith.constant 0 : index
    %27 = vector.load %arg5[%c0_17, %c0_18] : memref<1x32xf32, #tpu.memory_space<vmem>>, vector<1x32xf32>
    %28 = vector.broadcast %27 : vector<1x32xf32> to vector<4x32xf32>
    %29 = arith.addf %26, %28 : vector<4x32xf32>
    %c0_19 = arith.constant 0 : index
    %c0_20 = arith.constant 0 : index
    %30 = vector.load %arg8[%c0_19, %c0_20] : memref<4x32xf32, #tpu.memory_space<vmem>>, vector<4x32xf32>
    tpu.vector_store %arg8[%c0_19, %c0_20], %5 {strides = array<i32>} : memref<4x32xf32, #tpu.memory_space<vmem>>, vector<4x32xf32>,
    %c0_21 = arith.constant 0 : index
    %c0_22 = arith.constant 0 : index
    %31 = vector.load %arg9[%c0_21, %c0_22] : memref<4x8xf32, #tpu.memory_space<vmem>>, vector<4x8xf32>
    tpu.vector_store %arg9[%c0_21, %c0_22], %15 {strides = array<i32>} : memref<4x8xf32, #tpu.memory_space<vmem>>, vector<4x8xf32>,
    %c0_23 = arith.constant 0 : index
    %c0_24 = arith.constant 0 : index
    %32 = vector.load %arg10[%c0_23, %c0_24] : memref<4x8xf32, #tpu.memory_space<vmem>>, vector<4x8xf32>
    tpu.vector_store %arg10[%c0_23, %c0_24], %21 {strides = array<i32>} : memref<4x8xf32, #tpu.memory_space<vmem>>, vector<4x8xf32>,
    %c0_25 = arith.constant 0 : index
    %c0_26 = arith.constant 0 : index
    %33 = vector.load %arg11[%c0_25, %c0_26] : memref<4x32xf32, #tpu.memory_space<vmem>>, vector<4x32xf32>
    tpu.vector_store %arg11[%c0_25, %c0_26], %29 {strides = array<i32>} : memref<4x32xf32, #tpu.memory_space<vmem>>, vector<4x32xf32>,
    return
  }
}

module attributes {stable_mosaic.version = 11 : i64} {
  func.func @_decoder_kernel(%arg0: i32, %arg1: i32, %arg2: memref<8x2x96xbf16, #tpu.memory_space<vmem>>, %arg3: memref<2x2x32xf32, #tpu.memory_space<vmem>>, %arg4: memref<1x32x96xbf16, #tpu.memory_space<vmem>>, %arg5: memref<1x1x96xf32, #tpu.memory_space<vmem>>, %arg6: memref<2x32x96xbf16, #tpu.memory_space<vmem>>, %arg7: memref<2x1x96xf32, #tpu.memory_space<vmem>>, %arg8: memref<2x8x32xbf16, #tpu.memory_space<vmem>>, %arg9: memref<2x2x32xf32, #tpu.memory_space<vmem>>) attributes {dimension_semantics = [#tpu.dimension_semantics<parallel>, #tpu.dimension_semantics<arbitrary>], iteration_bounds = array<i64: 1, 1>, scalar_prefetch = 0 : i64, scratch_operands = 1 : i64, tpu.core_type = #tpu.core_type<tc>, window_params = [{transform_indices = @transform_0, window_bounds = array<i64: 8, 2, 96>}, {pipeline_mode = #tpu.pipeline_mode<synchronous>, transform_indices = @transform_1, window_bounds = array<i64: 2, 2, 32>}, {pipeline_mode = #tpu.pipeline_mode<synchronous>, transform_indices = @transform_2, window_bounds = array<i64: 1, 32, 96>}, {pipeline_mode = #tpu.pipeline_mode<synchronous>, transform_indices = @transform_3, window_bounds = array<i64: 1, 1, 96>}, {pipeline_mode = #tpu.pipeline_mode<synchronous>, transform_indices = @transform_4, window_bounds = array<i64: 2, 32, 96>}, {pipeline_mode = #tpu.pipeline_mode<synchronous>, transform_indices = @transform_5, window_bounds = array<i64: 2, 1, 96>}, {transform_indices = @transform_6, window_bounds = array<i64: 2, 8, 32>}]} {
    %c0_i32 = arith.constant 0 : i32
    %0 = arith.cmpi eq, %arg1, %c0_i32 : i32
    %1 = arith.extui %0 : i1 to i32
    %c0_i32_0 = arith.constant 0 : i32
    %2 = arith.cmpi ne, %1, %c0_i32_0 : i32
    scf.if %2 {
      %c0_352 = arith.constant 0 : index
      %c0_353 = arith.constant 0 : index
      %c0_354 = arith.constant 0 : index
      %755 = vector.load %arg3[%c0_352, %c0_353, %c0_354] : memref<2x2x32xf32, #tpu.memory_space<vmem>>, vector<2x2x32xf32>
      %c0_355 = arith.constant 0 : index
      %c0_356 = arith.constant 0 : index
      %c0_357 = arith.constant 0 : index
      %756 = vector.load %arg9[%c0_355, %c0_356, %c0_357] : memref<2x2x32xf32, #tpu.memory_space<vmem>>, vector<2x2x32xf32>
      tpu.vector_store %arg9[%c0_355, %c0_356, %c0_357], %755 {strides = array<i32>} : memref<2x2x32xf32, #tpu.memory_space<vmem>>, vector<2x2x32xf32>,
    } else {
    }
    %c0 = arith.constant 0 : index
    %c0_1 = arith.constant 0 : index
    %c0_2 = arith.constant 0 : index
    %3 = vector.load %arg2[%c0, %c0_1, %c0_2] : memref<8x2x96xbf16, #tpu.memory_space<vmem>>, vector<1x2x96xbf16>
    %4 = vector.shape_cast %3 : vector<1x2x96xbf16> to vector<2x96xbf16>
    %c0_3 = arith.constant 0 : index
    %c0_4 = arith.constant 0 : index
    %c0_5 = arith.constant 0 : index
    %5 = vector.load %arg9[%c0_3, %c0_4, %c0_5] : memref<2x2x32xf32, #tpu.memory_space<vmem>>, vector<1x2x32xf32>
    %6 = vector.shape_cast %5 : vector<1x2x32xf32> to vector<2x32xf32>
    %c0_6 = arith.constant 0 : index
    %c0_7 = arith.constant 0 : index
    %c0_8 = arith.constant 0 : index
    %7 = vector.load %arg6[%c0_6, %c0_7, %c0_8] : memref<2x32x96xbf16, #tpu.memory_space<vmem>>, vector<1x32x96xbf16>
    %8 = vector.shape_cast %7 : vector<1x32x96xbf16> to vector<32x96xbf16>
    %c0_9 = arith.constant 0 : index
    %c0_10 = arith.constant 0 : index
    %c0_11 = arith.constant 0 : index
    %9 = vector.load %arg7[%c0_9, %c0_10, %c0_11] : memref<2x1x96xf32, #tpu.memory_space<vmem>>, vector<1x1x96xf32>
    %10 = vector.shape_cast %9 : vector<1x1x96xf32> to vector<1x96xf32>
    %11 = arith.truncf %6 : vector<2x32xf32> to vector<2x32xbf16>
    %cst = arith.constant dense<0.000000e+00> : vector<2x96xf32>
    %12 = tpu.matmul %11, %8, %cst {dimension_numbers = #tpu.dot_dimension_numbers<[1], [0], [0], [1], [0, 0, 1, 1], [], []>} : vector<2x32xbf16>, vector<32x96xbf16>, vector<2x96xf32> -> vector<2x96xf32>
    %13 = vector.broadcast %10 : vector<1x96xf32> to vector<2x96xf32>
    %14 = arith.addf %12, %13 : vector<2x96xf32>
    %15 = vector.extract_strided_slice %4 {offsets = [0, 0], sizes = [2, 32], strides = [1, 1]} : vector<2x96xbf16> to vector<2x32xbf16>
    %16 = vector.extract_strided_slice %14 {offsets = [0, 0], sizes = [2, 32], strides = [1, 1]} : vector<2x96xf32> to vector<2x32xf32>
    %17 = arith.extf %15 : vector<2x32xbf16> to vector<2x32xf32>
    %18 = arith.addf %17, %16 : vector<2x32xf32>
    %19 = arith.negf %18 : vector<2x32xf32>
    %20 = math.exp %19 : vector<2x32xf32>
    %cst_12 = arith.constant 1.000000e+00 : f32
    %21 = vector.broadcast %cst_12 : f32 to vector<2x32xf32>
    %22 = arith.addf %21, %20 : vector<2x32xf32>
    %23 = arith.divf %21, %22 : vector<2x32xf32>
    %24 = vector.extract_strided_slice %4 {offsets = [0, 32], sizes = [2, 32], strides = [1, 1]} : vector<2x96xbf16> to vector<2x32xbf16>
    %25 = vector.extract_strided_slice %14 {offsets = [0, 32], sizes = [2, 32], strides = [1, 1]} : vector<2x96xf32> to vector<2x32xf32>
    %26 = arith.extf %24 : vector<2x32xbf16> to vector<2x32xf32>
    %27 = arith.addf %26, %25 : vector<2x32xf32>
    %28 = arith.negf %27 : vector<2x32xf32>
    %29 = math.exp %28 : vector<2x32xf32>
    %cst_13 = arith.constant 1.000000e+00 : f32
    %30 = vector.broadcast %cst_13 : f32 to vector<2x32xf32>
    %31 = arith.addf %30, %29 : vector<2x32xf32>
    %32 = arith.divf %30, %31 : vector<2x32xf32>
    %33 = vector.extract_strided_slice %4 {offsets = [0, 64], sizes = [2, 32], strides = [1, 1]} : vector<2x96xbf16> to vector<2x32xbf16>
    %34 = vector.extract_strided_slice %14 {offsets = [0, 64], sizes = [2, 32], strides = [1, 1]} : vector<2x96xf32> to vector<2x32xf32>
    %35 = arith.mulf %23, %34 : vector<2x32xf32>
    %36 = arith.extf %33 : vector<2x32xbf16> to vector<2x32xf32>
    %37 = arith.addf %36, %35 : vector<2x32xf32>
    %38 = math.tanh %37 : vector<2x32xf32>
    %cst_14 = arith.constant 1.000000e+00 : f32
    %39 = vector.broadcast %cst_14 : f32 to vector<2x32xf32>
    %40 = arith.subf %39, %32 : vector<2x32xf32>
    %41 = arith.mulf %40, %38 : vector<2x32xf32>
    %42 = arith.mulf %32, %6 : vector<2x32xf32>
    %43 = arith.addf %41, %42 : vector<2x32xf32>
    %c0_15 = arith.constant 0 : index
    %c0_16 = arith.constant 0 : index
    %c0_17 = arith.constant 0 : index
    %44 = vector.load %arg9[%c0_15, %c0_16, %c0_17] : memref<2x2x32xf32, #tpu.memory_space<vmem>>, vector<1x2x32xf32>
    %45 = vector.shape_cast %44 : vector<1x2x32xf32> to vector<2x32xf32>
    %46 = vector.shape_cast %43 : vector<2x32xf32> to vector<1x2x32xf32>
    tpu.vector_store %arg9[%c0_15, %c0_16, %c0_17], %46 {strides = array<i32>} : memref<2x2x32xf32, #tpu.memory_space<vmem>>, vector<1x2x32xf32>,
    %47 = arith.truncf %43 : vector<2x32xf32> to vector<2x32xbf16>
    %c0_18 = arith.constant 0 : index
    %c0_19 = arith.constant 0 : index
    %c0_20 = arith.constant 0 : index
    %48 = vector.load %arg4[%c0_18, %c0_19, %c0_20] : memref<1x32x96xbf16, #tpu.memory_space<vmem>>, vector<1x32x96xbf16>
    %49 = vector.shape_cast %48 : vector<1x32x96xbf16> to vector<32x96xbf16>
    %cst_21 = arith.constant dense<0.000000e+00> : vector<2x96xf32>
    %50 = tpu.matmul %47, %49, %cst_21 {dimension_numbers = #tpu.dot_dimension_numbers<[1], [0], [0], [1], [0, 0, 1, 1], [], []>} : vector<2x32xbf16>, vector<32x96xbf16>, vector<2x96xf32> -> vector<2x96xf32>
    %c0_22 = arith.constant 0 : index
    %c0_23 = arith.constant 0 : index
    %c0_24 = arith.constant 0 : index
    %51 = vector.load %arg5[%c0_22, %c0_23, %c0_24] : memref<1x1x96xf32, #tpu.memory_space<vmem>>, vector<1x1x96xf32>
    %52 = vector.shape_cast %51 : vector<1x1x96xf32> to vector<1x96xf32>
    %53 = vector.broadcast %52 : vector<1x96xf32> to vector<2x96xf32>
    %54 = arith.addf %50, %53 : vector<2x96xf32>
    %c1 = arith.constant 1 : index
    %c0_25 = arith.constant 0 : index
    %c0_26 = arith.constant 0 : index
    %55 = vector.load %arg9[%c1, %c0_25, %c0_26] : memref<2x2x32xf32, #tpu.memory_space<vmem>>, vector<1x2x32xf32>
    %56 = vector.shape_cast %55 : vector<1x2x32xf32> to vector<2x32xf32>
    %c1_27 = arith.constant 1 : index
    %c0_28 = arith.constant 0 : index
    %c0_29 = arith.constant 0 : index
    %57 = vector.load %arg6[%c1_27, %c0_28, %c0_29] : memref<2x32x96xbf16, #tpu.memory_space<vmem>>, vector<1x32x96xbf16>
    %58 = vector.shape_cast %57 : vector<1x32x96xbf16> to vector<32x96xbf16>
    %c1_30 = arith.constant 1 : index
    %c0_31 = arith.constant 0 : index
    %c0_32 = arith.constant 0 : index
    %59 = vector.load %arg7[%c1_30, %c0_31, %c0_32] : memref<2x1x96xf32, #tpu.memory_space<vmem>>, vector<1x1x96xf32>
    %60 = vector.shape_cast %59 : vector<1x1x96xf32> to vector<1x96xf32>
    %61 = arith.truncf %56 : vector<2x32xf32> to vector<2x32xbf16>
    %cst_33 = arith.constant dense<0.000000e+00> : vector<2x96xf32>
    %62 = tpu.matmul %61, %58, %cst_33 {dimension_numbers = #tpu.dot_dimension_numbers<[1], [0], [0], [1], [0, 0, 1, 1], [], []>} : vector<2x32xbf16>, vector<32x96xbf16>, vector<2x96xf32> -> vector<2x96xf32>
    %63 = vector.broadcast %60 : vector<1x96xf32> to vector<2x96xf32>
    %64 = arith.addf %62, %63 : vector<2x96xf32>
    %65 = vector.extract_strided_slice %54 {offsets = [0, 0], sizes = [2, 32], strides = [1, 1]} : vector<2x96xf32> to vector<2x32xf32>
    %66 = vector.extract_strided_slice %64 {offsets = [0, 0], sizes = [2, 32], strides = [1, 1]} : vector<2x96xf32> to vector<2x32xf32>
    %67 = arith.addf %65, %66 : vector<2x32xf32>
    %68 = arith.negf %67 : vector<2x32xf32>
    %69 = math.exp %68 : vector<2x32xf32>
    %cst_34 = arith.constant 1.000000e+00 : f32
    %70 = vector.broadcast %cst_34 : f32 to vector<2x32xf32>
    %71 = arith.addf %70, %69 : vector<2x32xf32>
    %72 = arith.divf %70, %71 : vector<2x32xf32>
    %73 = vector.extract_strided_slice %54 {offsets = [0, 32], sizes = [2, 32], strides = [1, 1]} : vector<2x96xf32> to vector<2x32xf32>
    %74 = vector.extract_strided_slice %64 {offsets = [0, 32], sizes = [2, 32], strides = [1, 1]} : vector<2x96xf32> to vector<2x32xf32>
    %75 = arith.addf %73, %74 : vector<2x32xf32>
    %76 = arith.negf %75 : vector<2x32xf32>
    %77 = math.exp %76 : vector<2x32xf32>
    %cst_35 = arith.constant 1.000000e+00 : f32
    %78 = vector.broadcast %cst_35 : f32 to vector<2x32xf32>
    %79 = arith.addf %78, %77 : vector<2x32xf32>
    %80 = arith.divf %78, %79 : vector<2x32xf32>
    %81 = vector.extract_strided_slice %54 {offsets = [0, 64], sizes = [2, 32], strides = [1, 1]} : vector<2x96xf32> to vector<2x32xf32>
    %82 = vector.extract_strided_slice %64 {offsets = [0, 64], sizes = [2, 32], strides = [1, 1]} : vector<2x96xf32> to vector<2x32xf32>
    %83 = arith.mulf %72, %82 : vector<2x32xf32>
    %84 = arith.addf %81, %83 : vector<2x32xf32>
    %85 = math.tanh %84 : vector<2x32xf32>
    %cst_36 = arith.constant 1.000000e+00 : f32
    %86 = vector.broadcast %cst_36 : f32 to vector<2x32xf32>
    %87 = arith.subf %86, %80 : vector<2x32xf32>
    %88 = arith.mulf %87, %85 : vector<2x32xf32>
    %89 = arith.mulf %80, %56 : vector<2x32xf32>
    %90 = arith.addf %88, %89 : vector<2x32xf32>
    %c1_37 = arith.constant 1 : index
    %c0_38 = arith.constant 0 : index
    %c0_39 = arith.constant 0 : index
    %91 = vector.load %arg9[%c1_37, %c0_38, %c0_39] : memref<2x2x32xf32, #tpu.memory_space<vmem>>, vector<1x2x32xf32>
    %92 = vector.shape_cast %91 : vector<1x2x32xf32> to vector<2x32xf32>
    %93 = vector.shape_cast %90 : vector<2x32xf32> to vector<1x2x32xf32>
    tpu.vector_store %arg9[%c1_37, %c0_38, %c0_39], %93 {strides = array<i32>} : memref<2x2x32xf32, #tpu.memory_space<vmem>>, vector<1x2x32xf32>,
    %94 = vector.shape_cast %90 : vector<2x32xf32> to vector<2x1x32xf32>
    %95 = arith.truncf %94 : vector<2x1x32xf32> to vector<2x1x32xbf16>
    %c0_40 = arith.constant 0 : index
    %c0_41 = arith.constant 0 : index
    %c0_42 = arith.constant 0 : index
    %96 = vector.load %arg8[%c0_40, %c0_41, %c0_42] : memref<2x8x32xbf16, #tpu.memory_space<vmem>>, vector<2x1x32xbf16>
    tpu.vector_store %arg8[%c0_40, %c0_41, %c0_42], %95 {strides = array<i32>} : memref<2x8x32xbf16, #tpu.memory_space<vmem>>, vector<2x1x32xbf16>,
    %c1_43 = arith.constant 1 : index
    %c0_44 = arith.constant 0 : index
    %c0_45 = arith.constant 0 : index
    %97 = vector.load %arg2[%c1_43, %c0_44, %c0_45] : memref<8x2x96xbf16, #tpu.memory_space<vmem>>, vector<1x2x96xbf16>
    %98 = vector.shape_cast %97 : vector<1x2x96xbf16> to vector<2x96xbf16>
    %c0_46 = arith.constant 0 : index
    %c0_47 = arith.constant 0 : index
    %c0_48 = arith.constant 0 : index
    %99 = vector.load %arg9[%c0_46, %c0_47, %c0_48] : memref<2x2x32xf32, #tpu.memory_space<vmem>>, vector<1x2x32xf32>
    %100 = vector.shape_cast %99 : vector<1x2x32xf32> to vector<2x32xf32>
    %c0_49 = arith.constant 0 : index
    %c0_50 = arith.constant 0 : index
    %c0_51 = arith.constant 0 : index
    %101 = vector.load %arg6[%c0_49, %c0_50, %c0_51] : memref<2x32x96xbf16, #tpu.memory_space<vmem>>, vector<1x32x96xbf16>
    %102 = vector.shape_cast %101 : vector<1x32x96xbf16> to vector<32x96xbf16>
    %c0_52 = arith.constant 0 : index
    %c0_53 = arith.constant 0 : index
    %c0_54 = arith.constant 0 : index
    %103 = vector.load %arg7[%c0_52, %c0_53, %c0_54] : memref<2x1x96xf32, #tpu.memory_space<vmem>>, vector<1x1x96xf32>
    %104 = vector.shape_cast %103 : vector<1x1x96xf32> to vector<1x96xf32>
    %105 = arith.truncf %100 : vector<2x32xf32> to vector<2x32xbf16>
    %cst_55 = arith.constant dense<0.000000e+00> : vector<2x96xf32>
    %106 = tpu.matmul %105, %102, %cst_55 {dimension_numbers = #tpu.dot_dimension_numbers<[1], [0], [0], [1], [0, 0, 1, 1], [], []>} : vector<2x32xbf16>, vector<32x96xbf16>, vector<2x96xf32> -> vector<2x96xf32>
    %107 = vector.broadcast %104 : vector<1x96xf32> to vector<2x96xf32>
    %108 = arith.addf %106, %107 : vector<2x96xf32>
    %109 = vector.extract_strided_slice %98 {offsets = [0, 0], sizes = [2, 32], strides = [1, 1]} : vector<2x96xbf16> to vector<2x32xbf16>
    %110 = vector.extract_strided_slice %108 {offsets = [0, 0], sizes = [2, 32], strides = [1, 1]} : vector<2x96xf32> to vector<2x32xf32>
    %111 = arith.extf %109 : vector<2x32xbf16> to vector<2x32xf32>
    %112 = arith.addf %111, %110 : vector<2x32xf32>
    %113 = arith.negf %112 : vector<2x32xf32>
    %114 = math.exp %113 : vector<2x32xf32>
    %cst_56 = arith.constant 1.000000e+00 : f32
    %115 = vector.broadcast %cst_56 : f32 to vector<2x32xf32>
    %116 = arith.addf %115, %114 : vector<2x32xf32>
    %117 = arith.divf %115, %116 : vector<2x32xf32>
    %118 = vector.extract_strided_slice %98 {offsets = [0, 32], sizes = [2, 32], strides = [1, 1]} : vector<2x96xbf16> to vector<2x32xbf16>
    %119 = vector.extract_strided_slice %108 {offsets = [0, 32], sizes = [2, 32], strides = [1, 1]} : vector<2x96xf32> to vector<2x32xf32>
    %120 = arith.extf %118 : vector<2x32xbf16> to vector<2x32xf32>
    %121 = arith.addf %120, %119 : vector<2x32xf32>
    %122 = arith.negf %121 : vector<2x32xf32>
    %123 = math.exp %122 : vector<2x32xf32>
    %cst_57 = arith.constant 1.000000e+00 : f32
    %124 = vector.broadcast %cst_57 : f32 to vector<2x32xf32>
    %125 = arith.addf %124, %123 : vector<2x32xf32>
    %126 = arith.divf %124, %125 : vector<2x32xf32>
    %127 = vector.extract_strided_slice %98 {offsets = [0, 64], sizes = [2, 32], strides = [1, 1]} : vector<2x96xbf16> to vector<2x32xbf16>
    %128 = vector.extract_strided_slice %108 {offsets = [0, 64], sizes = [2, 32], strides = [1, 1]} : vector<2x96xf32> to vector<2x32xf32>
    %129 = arith.mulf %117, %128 : vector<2x32xf32>
    %130 = arith.extf %127 : vector<2x32xbf16> to vector<2x32xf32>
    %131 = arith.addf %130, %129 : vector<2x32xf32>
    %132 = math.tanh %131 : vector<2x32xf32>
    %cst_58 = arith.constant 1.000000e+00 : f32
    %133 = vector.broadcast %cst_58 : f32 to vector<2x32xf32>
    %134 = arith.subf %133, %126 : vector<2x32xf32>
    %135 = arith.mulf %134, %132 : vector<2x32xf32>
    %136 = arith.mulf %126, %100 : vector<2x32xf32>
    %137 = arith.addf %135, %136 : vector<2x32xf32>
    %c0_59 = arith.constant 0 : index
    %c0_60 = arith.constant 0 : index
    %c0_61 = arith.constant 0 : index
    %138 = vector.load %arg9[%c0_59, %c0_60, %c0_61] : memref<2x2x32xf32, #tpu.memory_space<vmem>>, vector<1x2x32xf32>
    %139 = vector.shape_cast %138 : vector<1x2x32xf32> to vector<2x32xf32>
    %140 = vector.shape_cast %137 : vector<2x32xf32> to vector<1x2x32xf32>
    tpu.vector_store %arg9[%c0_59, %c0_60, %c0_61], %140 {strides = array<i32>} : memref<2x2x32xf32, #tpu.memory_space<vmem>>, vector<1x2x32xf32>,
    %141 = arith.truncf %137 : vector<2x32xf32> to vector<2x32xbf16>
    %c0_62 = arith.constant 0 : index
    %c0_63 = arith.constant 0 : index
    %c0_64 = arith.constant 0 : index
    %142 = vector.load %arg4[%c0_62, %c0_63, %c0_64] : memref<1x32x96xbf16, #tpu.memory_space<vmem>>, vector<1x32x96xbf16>
    %143 = vector.shape_cast %142 : vector<1x32x96xbf16> to vector<32x96xbf16>
    %cst_65 = arith.constant dense<0.000000e+00> : vector<2x96xf32>
    %144 = tpu.matmul %141, %143, %cst_65 {dimension_numbers = #tpu.dot_dimension_numbers<[1], [0], [0], [1], [0, 0, 1, 1], [], []>} : vector<2x32xbf16>, vector<32x96xbf16>, vector<2x96xf32> -> vector<2x96xf32>
    %c0_66 = arith.constant 0 : index
    %c0_67 = arith.constant 0 : index
    %c0_68 = arith.constant 0 : index
    %145 = vector.load %arg5[%c0_66, %c0_67, %c0_68] : memref<1x1x96xf32, #tpu.memory_space<vmem>>, vector<1x1x96xf32>
    %146 = vector.shape_cast %145 : vector<1x1x96xf32> to vector<1x96xf32>
    %147 = vector.broadcast %146 : vector<1x96xf32> to vector<2x96xf32>
    %148 = arith.addf %144, %147 : vector<2x96xf32>
    %c1_69 = arith.constant 1 : index
    %c0_70 = arith.constant 0 : index
    %c0_71 = arith.constant 0 : index
    %149 = vector.load %arg9[%c1_69, %c0_70, %c0_71] : memref<2x2x32xf32, #tpu.memory_space<vmem>>, vector<1x2x32xf32>
    %150 = vector.shape_cast %149 : vector<1x2x32xf32> to vector<2x32xf32>
    %c1_72 = arith.constant 1 : index
    %c0_73 = arith.constant 0 : index
    %c0_74 = arith.constant 0 : index
    %151 = vector.load %arg6[%c1_72, %c0_73, %c0_74] : memref<2x32x96xbf16, #tpu.memory_space<vmem>>, vector<1x32x96xbf16>
    %152 = vector.shape_cast %151 : vector<1x32x96xbf16> to vector<32x96xbf16>
    %c1_75 = arith.constant 1 : index
    %c0_76 = arith.constant 0 : index
    %c0_77 = arith.constant 0 : index
    %153 = vector.load %arg7[%c1_75, %c0_76, %c0_77] : memref<2x1x96xf32, #tpu.memory_space<vmem>>, vector<1x1x96xf32>
    %154 = vector.shape_cast %153 : vector<1x1x96xf32> to vector<1x96xf32>
    %155 = arith.truncf %150 : vector<2x32xf32> to vector<2x32xbf16>
    %cst_78 = arith.constant dense<0.000000e+00> : vector<2x96xf32>
    %156 = tpu.matmul %155, %152, %cst_78 {dimension_numbers = #tpu.dot_dimension_numbers<[1], [0], [0], [1], [0, 0, 1, 1], [], []>} : vector<2x32xbf16>, vector<32x96xbf16>, vector<2x96xf32> -> vector<2x96xf32>
    %157 = vector.broadcast %154 : vector<1x96xf32> to vector<2x96xf32>
    %158 = arith.addf %156, %157 : vector<2x96xf32>
    %159 = vector.extract_strided_slice %148 {offsets = [0, 0], sizes = [2, 32], strides = [1, 1]} : vector<2x96xf32> to vector<2x32xf32>
    %160 = vector.extract_strided_slice %158 {offsets = [0, 0], sizes = [2, 32], strides = [1, 1]} : vector<2x96xf32> to vector<2x32xf32>
    %161 = arith.addf %159, %160 : vector<2x32xf32>
    %162 = arith.negf %161 : vector<2x32xf32>
    %163 = math.exp %162 : vector<2x32xf32>
    %cst_79 = arith.constant 1.000000e+00 : f32
    %164 = vector.broadcast %cst_79 : f32 to vector<2x32xf32>
    %165 = arith.addf %164, %163 : vector<2x32xf32>
    %166 = arith.divf %164, %165 : vector<2x32xf32>
    %167 = vector.extract_strided_slice %148 {offsets = [0, 32], sizes = [2, 32], strides = [1, 1]} : vector<2x96xf32> to vector<2x32xf32>
    %168 = vector.extract_strided_slice %158 {offsets = [0, 32], sizes = [2, 32], strides = [1, 1]} : vector<2x96xf32> to vector<2x32xf32>
    %169 = arith.addf %167, %168 : vector<2x32xf32>
    %170 = arith.negf %169 : vector<2x32xf32>
    %171 = math.exp %170 : vector<2x32xf32>
    %cst_80 = arith.constant 1.000000e+00 : f32
    %172 = vector.broadcast %cst_80 : f32 to vector<2x32xf32>
    %173 = arith.addf %172, %171 : vector<2x32xf32>
    %174 = arith.divf %172, %173 : vector<2x32xf32>
    %175 = vector.extract_strided_slice %148 {offsets = [0, 64], sizes = [2, 32], strides = [1, 1]} : vector<2x96xf32> to vector<2x32xf32>
    %176 = vector.extract_strided_slice %158 {offsets = [0, 64], sizes = [2, 32], strides = [1, 1]} : vector<2x96xf32> to vector<2x32xf32>
    %177 = arith.mulf %166, %176 : vector<2x32xf32>
    %178 = arith.addf %175, %177 : vector<2x32xf32>
    %179 = math.tanh %178 : vector<2x32xf32>
    %cst_81 = arith.constant 1.000000e+00 : f32
    %180 = vector.broadcast %cst_81 : f32 to vector<2x32xf32>
    %181 = arith.subf %180, %174 : vector<2x32xf32>
    %182 = arith.mulf %181, %179 : vector<2x32xf32>
    %183 = arith.mulf %174, %150 : vector<2x32xf32>
    %184 = arith.addf %182, %183 : vector<2x32xf32>
    %c1_82 = arith.constant 1 : index
    %c0_83 = arith.constant 0 : index
    %c0_84 = arith.constant 0 : index
    %185 = vector.load %arg9[%c1_82, %c0_83, %c0_84] : memref<2x2x32xf32, #tpu.memory_space<vmem>>, vector<1x2x32xf32>
    %186 = vector.shape_cast %185 : vector<1x2x32xf32> to vector<2x32xf32>
    %187 = vector.shape_cast %184 : vector<2x32xf32> to vector<1x2x32xf32>
    tpu.vector_store %arg9[%c1_82, %c0_83, %c0_84], %187 {strides = array<i32>} : memref<2x2x32xf32, #tpu.memory_space<vmem>>, vector<1x2x32xf32>,
    %188 = vector.shape_cast %184 : vector<2x32xf32> to vector<2x1x32xf32>
    %189 = arith.truncf %188 : vector<2x1x32xf32> to vector<2x1x32xbf16>
    %c0_85 = arith.constant 0 : index
    %c1_86 = arith.constant 1 : index
    %c0_87 = arith.constant 0 : index
    %190 = vector.load %arg8[%c0_85, %c1_86, %c0_87] : memref<2x8x32xbf16, #tpu.memory_space<vmem>>, vector<2x1x32xbf16>
    tpu.vector_store %arg8[%c0_85, %c1_86, %c0_87], %189 {strides = array<i32>} : memref<2x8x32xbf16, #tpu.memory_space<vmem>>, vector<2x1x32xbf16>,
    %c2 = arith.constant 2 : index
    %c0_88 = arith.constant 0 : index
    %c0_89 = arith.constant 0 : index
    %191 = vector.load %arg2[%c2, %c0_88, %c0_89] : memref<8x2x96xbf16, #tpu.memory_space<vmem>>, vector<1x2x96xbf16>
    %192 = vector.shape_cast %191 : vector<1x2x96xbf16> to vector<2x96xbf16>
    %c0_90 = arith.constant 0 : index
    %c0_91 = arith.constant 0 : index
    %c0_92 = arith.constant 0 : index
    %193 = vector.load %arg9[%c0_90, %c0_91, %c0_92] : memref<2x2x32xf32, #tpu.memory_space<vmem>>, vector<1x2x32xf32>
    %194 = vector.shape_cast %193 : vector<1x2x32xf32> to vector<2x32xf32>
    %c0_93 = arith.constant 0 : index
    %c0_94 = arith.constant 0 : index
    %c0_95 = arith.constant 0 : index
    %195 = vector.load %arg6[%c0_93, %c0_94, %c0_95] : memref<2x32x96xbf16, #tpu.memory_space<vmem>>, vector<1x32x96xbf16>
    %196 = vector.shape_cast %195 : vector<1x32x96xbf16> to vector<32x96xbf16>
    %c0_96 = arith.constant 0 : index
    %c0_97 = arith.constant 0 : index
    %c0_98 = arith.constant 0 : index
    %197 = vector.load %arg7[%c0_96, %c0_97, %c0_98] : memref<2x1x96xf32, #tpu.memory_space<vmem>>, vector<1x1x96xf32>
    %198 = vector.shape_cast %197 : vector<1x1x96xf32> to vector<1x96xf32>
    %199 = arith.truncf %194 : vector<2x32xf32> to vector<2x32xbf16>
    %cst_99 = arith.constant dense<0.000000e+00> : vector<2x96xf32>
    %200 = tpu.matmul %199, %196, %cst_99 {dimension_numbers = #tpu.dot_dimension_numbers<[1], [0], [0], [1], [0, 0, 1, 1], [], []>} : vector<2x32xbf16>, vector<32x96xbf16>, vector<2x96xf32> -> vector<2x96xf32>
    %201 = vector.broadcast %198 : vector<1x96xf32> to vector<2x96xf32>
    %202 = arith.addf %200, %201 : vector<2x96xf32>
    %203 = vector.extract_strided_slice %192 {offsets = [0, 0], sizes = [2, 32], strides = [1, 1]} : vector<2x96xbf16> to vector<2x32xbf16>
    %204 = vector.extract_strided_slice %202 {offsets = [0, 0], sizes = [2, 32], strides = [1, 1]} : vector<2x96xf32> to vector<2x32xf32>
    %205 = arith.extf %203 : vector<2x32xbf16> to vector<2x32xf32>
    %206 = arith.addf %205, %204 : vector<2x32xf32>
    %207 = arith.negf %206 : vector<2x32xf32>
    %208 = math.exp %207 : vector<2x32xf32>
    %cst_100 = arith.constant 1.000000e+00 : f32
    %209 = vector.broadcast %cst_100 : f32 to vector<2x32xf32>
    %210 = arith.addf %209, %208 : vector<2x32xf32>
    %211 = arith.divf %209, %210 : vector<2x32xf32>
    %212 = vector.extract_strided_slice %192 {offsets = [0, 32], sizes = [2, 32], strides = [1, 1]} : vector<2x96xbf16> to vector<2x32xbf16>
    %213 = vector.extract_strided_slice %202 {offsets = [0, 32], sizes = [2, 32], strides = [1, 1]} : vector<2x96xf32> to vector<2x32xf32>
    %214 = arith.extf %212 : vector<2x32xbf16> to vector<2x32xf32>
    %215 = arith.addf %214, %213 : vector<2x32xf32>
    %216 = arith.negf %215 : vector<2x32xf32>
    %217 = math.exp %216 : vector<2x32xf32>
    %cst_101 = arith.constant 1.000000e+00 : f32
    %218 = vector.broadcast %cst_101 : f32 to vector<2x32xf32>
    %219 = arith.addf %218, %217 : vector<2x32xf32>
    %220 = arith.divf %218, %219 : vector<2x32xf32>
    %221 = vector.extract_strided_slice %192 {offsets = [0, 64], sizes = [2, 32], strides = [1, 1]} : vector<2x96xbf16> to vector<2x32xbf16>
    %222 = vector.extract_strided_slice %202 {offsets = [0, 64], sizes = [2, 32], strides = [1, 1]} : vector<2x96xf32> to vector<2x32xf32>
    %223 = arith.mulf %211, %222 : vector<2x32xf32>
    %224 = arith.extf %221 : vector<2x32xbf16> to vector<2x32xf32>
    %225 = arith.addf %224, %223 : vector<2x32xf32>
    %226 = math.tanh %225 : vector<2x32xf32>
    %cst_102 = arith.constant 1.000000e+00 : f32
    %227 = vector.broadcast %cst_102 : f32 to vector<2x32xf32>
    %228 = arith.subf %227, %220 : vector<2x32xf32>
    %229 = arith.mulf %228, %226 : vector<2x32xf32>
    %230 = arith.mulf %220, %194 : vector<2x32xf32>
    %231 = arith.addf %229, %230 : vector<2x32xf32>
    %c0_103 = arith.constant 0 : index
    %c0_104 = arith.constant 0 : index
    %c0_105 = arith.constant 0 : index
    %232 = vector.load %arg9[%c0_103, %c0_104, %c0_105] : memref<2x2x32xf32, #tpu.memory_space<vmem>>, vector<1x2x32xf32>
    %233 = vector.shape_cast %232 : vector<1x2x32xf32> to vector<2x32xf32>
    %234 = vector.shape_cast %231 : vector<2x32xf32> to vector<1x2x32xf32>
    tpu.vector_store %arg9[%c0_103, %c0_104, %c0_105], %234 {strides = array<i32>} : memref<2x2x32xf32, #tpu.memory_space<vmem>>, vector<1x2x32xf32>,
    %235 = arith.truncf %231 : vector<2x32xf32> to vector<2x32xbf16>
    %c0_106 = arith.constant 0 : index
    %c0_107 = arith.constant 0 : index
    %c0_108 = arith.constant 0 : index
    %236 = vector.load %arg4[%c0_106, %c0_107, %c0_108] : memref<1x32x96xbf16, #tpu.memory_space<vmem>>, vector<1x32x96xbf16>
    %237 = vector.shape_cast %236 : vector<1x32x96xbf16> to vector<32x96xbf16>
    %cst_109 = arith.constant dense<0.000000e+00> : vector<2x96xf32>
    %238 = tpu.matmul %235, %237, %cst_109 {dimension_numbers = #tpu.dot_dimension_numbers<[1], [0], [0], [1], [0, 0, 1, 1], [], []>} : vector<2x32xbf16>, vector<32x96xbf16>, vector<2x96xf32> -> vector<2x96xf32>
    %c0_110 = arith.constant 0 : index
    %c0_111 = arith.constant 0 : index
    %c0_112 = arith.constant 0 : index
    %239 = vector.load %arg5[%c0_110, %c0_111, %c0_112] : memref<1x1x96xf32, #tpu.memory_space<vmem>>, vector<1x1x96xf32>
    %240 = vector.shape_cast %239 : vector<1x1x96xf32> to vector<1x96xf32>
    %241 = vector.broadcast %240 : vector<1x96xf32> to vector<2x96xf32>
    %242 = arith.addf %238, %241 : vector<2x96xf32>
    %c1_113 = arith.constant 1 : index
    %c0_114 = arith.constant 0 : index
    %c0_115 = arith.constant 0 : index
    %243 = vector.load %arg9[%c1_113, %c0_114, %c0_115] : memref<2x2x32xf32, #tpu.memory_space<vmem>>, vector<1x2x32xf32>
    %244 = vector.shape_cast %243 : vector<1x2x32xf32> to vector<2x32xf32>
    %c1_116 = arith.constant 1 : index
    %c0_117 = arith.constant 0 : index
    %c0_118 = arith.constant 0 : index
    %245 = vector.load %arg6[%c1_116, %c0_117, %c0_118] : memref<2x32x96xbf16, #tpu.memory_space<vmem>>, vector<1x32x96xbf16>
    %246 = vector.shape_cast %245 : vector<1x32x96xbf16> to vector<32x96xbf16>
    %c1_119 = arith.constant 1 : index
    %c0_120 = arith.constant 0 : index
    %c0_121 = arith.constant 0 : index
    %247 = vector.load %arg7[%c1_119, %c0_120, %c0_121] : memref<2x1x96xf32, #tpu.memory_space<vmem>>, vector<1x1x96xf32>
    %248 = vector.shape_cast %247 : vector<1x1x96xf32> to vector<1x96xf32>
    %249 = arith.truncf %244 : vector<2x32xf32> to vector<2x32xbf16>
    %cst_122 = arith.constant dense<0.000000e+00> : vector<2x96xf32>
    %250 = tpu.matmul %249, %246, %cst_122 {dimension_numbers = #tpu.dot_dimension_numbers<[1], [0], [0], [1], [0, 0, 1, 1], [], []>} : vector<2x32xbf16>, vector<32x96xbf16>, vector<2x96xf32> -> vector<2x96xf32>
    %251 = vector.broadcast %248 : vector<1x96xf32> to vector<2x96xf32>
    %252 = arith.addf %250, %251 : vector<2x96xf32>
    %253 = vector.extract_strided_slice %242 {offsets = [0, 0], sizes = [2, 32], strides = [1, 1]} : vector<2x96xf32> to vector<2x32xf32>
    %254 = vector.extract_strided_slice %252 {offsets = [0, 0], sizes = [2, 32], strides = [1, 1]} : vector<2x96xf32> to vector<2x32xf32>
    %255 = arith.addf %253, %254 : vector<2x32xf32>
    %256 = arith.negf %255 : vector<2x32xf32>
    %257 = math.exp %256 : vector<2x32xf32>
    %cst_123 = arith.constant 1.000000e+00 : f32
    %258 = vector.broadcast %cst_123 : f32 to vector<2x32xf32>
    %259 = arith.addf %258, %257 : vector<2x32xf32>
    %260 = arith.divf %258, %259 : vector<2x32xf32>
    %261 = vector.extract_strided_slice %242 {offsets = [0, 32], sizes = [2, 32], strides = [1, 1]} : vector<2x96xf32> to vector<2x32xf32>
    %262 = vector.extract_strided_slice %252 {offsets = [0, 32], sizes = [2, 32], strides = [1, 1]} : vector<2x96xf32> to vector<2x32xf32>
    %263 = arith.addf %261, %262 : vector<2x32xf32>
    %264 = arith.negf %263 : vector<2x32xf32>
    %265 = math.exp %264 : vector<2x32xf32>
    %cst_124 = arith.constant 1.000000e+00 : f32
    %266 = vector.broadcast %cst_124 : f32 to vector<2x32xf32>
    %267 = arith.addf %266, %265 : vector<2x32xf32>
    %268 = arith.divf %266, %267 : vector<2x32xf32>
    %269 = vector.extract_strided_slice %242 {offsets = [0, 64], sizes = [2, 32], strides = [1, 1]} : vector<2x96xf32> to vector<2x32xf32>
    %270 = vector.extract_strided_slice %252 {offsets = [0, 64], sizes = [2, 32], strides = [1, 1]} : vector<2x96xf32> to vector<2x32xf32>
    %271 = arith.mulf %260, %270 : vector<2x32xf32>
    %272 = arith.addf %269, %271 : vector<2x32xf32>
    %273 = math.tanh %272 : vector<2x32xf32>
    %cst_125 = arith.constant 1.000000e+00 : f32
    %274 = vector.broadcast %cst_125 : f32 to vector<2x32xf32>
    %275 = arith.subf %274, %268 : vector<2x32xf32>
    %276 = arith.mulf %275, %273 : vector<2x32xf32>
    %277 = arith.mulf %268, %244 : vector<2x32xf32>
    %278 = arith.addf %276, %277 : vector<2x32xf32>
    %c1_126 = arith.constant 1 : index
    %c0_127 = arith.constant 0 : index
    %c0_128 = arith.constant 0 : index
    %279 = vector.load %arg9[%c1_126, %c0_127, %c0_128] : memref<2x2x32xf32, #tpu.memory_space<vmem>>, vector<1x2x32xf32>
    %280 = vector.shape_cast %279 : vector<1x2x32xf32> to vector<2x32xf32>
    %281 = vector.shape_cast %278 : vector<2x32xf32> to vector<1x2x32xf32>
    tpu.vector_store %arg9[%c1_126, %c0_127, %c0_128], %281 {strides = array<i32>} : memref<2x2x32xf32, #tpu.memory_space<vmem>>, vector<1x2x32xf32>,
    %282 = vector.shape_cast %278 : vector<2x32xf32> to vector<2x1x32xf32>
    %283 = arith.truncf %282 : vector<2x1x32xf32> to vector<2x1x32xbf16>
    %c0_129 = arith.constant 0 : index
    %c2_130 = arith.constant 2 : index
    %c0_131 = arith.constant 0 : index
    %284 = vector.load %arg8[%c0_129, %c2_130, %c0_131] : memref<2x8x32xbf16, #tpu.memory_space<vmem>>, vector<2x1x32xbf16>
    tpu.vector_store %arg8[%c0_129, %c2_130, %c0_131], %283 {strides = array<i32>} : memref<2x8x32xbf16, #tpu.memory_space<vmem>>, vector<2x1x32xbf16>,
    %c3 = arith.constant 3 : index
    %c0_132 = arith.constant 0 : index
    %c0_133 = arith.constant 0 : index
    %285 = vector.load %arg2[%c3, %c0_132, %c0_133] : memref<8x2x96xbf16, #tpu.memory_space<vmem>>, vector<1x2x96xbf16>
    %286 = vector.shape_cast %285 : vector<1x2x96xbf16> to vector<2x96xbf16>
    %c0_134 = arith.constant 0 : index
    %c0_135 = arith.constant 0 : index
    %c0_136 = arith.constant 0 : index
    %287 = vector.load %arg9[%c0_134, %c0_135, %c0_136] : memref<2x2x32xf32, #tpu.memory_space<vmem>>, vector<1x2x32xf32>
    %288 = vector.shape_cast %287 : vector<1x2x32xf32> to vector<2x32xf32>
    %c0_137 = arith.constant 0 : index
    %c0_138 = arith.constant 0 : index
    %c0_139 = arith.constant 0 : index
    %289 = vector.load %arg6[%c0_137, %c0_138, %c0_139] : memref<2x32x96xbf16, #tpu.memory_space<vmem>>, vector<1x32x96xbf16>
    %290 = vector.shape_cast %289 : vector<1x32x96xbf16> to vector<32x96xbf16>
    %c0_140 = arith.constant 0 : index
    %c0_141 = arith.constant 0 : index
    %c0_142 = arith.constant 0 : index
    %291 = vector.load %arg7[%c0_140, %c0_141, %c0_142] : memref<2x1x96xf32, #tpu.memory_space<vmem>>, vector<1x1x96xf32>
    %292 = vector.shape_cast %291 : vector<1x1x96xf32> to vector<1x96xf32>
    %293 = arith.truncf %288 : vector<2x32xf32> to vector<2x32xbf16>
    %cst_143 = arith.constant dense<0.000000e+00> : vector<2x96xf32>
    %294 = tpu.matmul %293, %290, %cst_143 {dimension_numbers = #tpu.dot_dimension_numbers<[1], [0], [0], [1], [0, 0, 1, 1], [], []>} : vector<2x32xbf16>, vector<32x96xbf16>, vector<2x96xf32> -> vector<2x96xf32>
    %295 = vector.broadcast %292 : vector<1x96xf32> to vector<2x96xf32>
    %296 = arith.addf %294, %295 : vector<2x96xf32>
    %297 = vector.extract_strided_slice %286 {offsets = [0, 0], sizes = [2, 32], strides = [1, 1]} : vector<2x96xbf16> to vector<2x32xbf16>
    %298 = vector.extract_strided_slice %296 {offsets = [0, 0], sizes = [2, 32], strides = [1, 1]} : vector<2x96xf32> to vector<2x32xf32>
    %299 = arith.extf %297 : vector<2x32xbf16> to vector<2x32xf32>
    %300 = arith.addf %299, %298 : vector<2x32xf32>
    %301 = arith.negf %300 : vector<2x32xf32>
    %302 = math.exp %301 : vector<2x32xf32>
    %cst_144 = arith.constant 1.000000e+00 : f32
    %303 = vector.broadcast %cst_144 : f32 to vector<2x32xf32>
    %304 = arith.addf %303, %302 : vector<2x32xf32>
    %305 = arith.divf %303, %304 : vector<2x32xf32>
    %306 = vector.extract_strided_slice %286 {offsets = [0, 32], sizes = [2, 32], strides = [1, 1]} : vector<2x96xbf16> to vector<2x32xbf16>
    %307 = vector.extract_strided_slice %296 {offsets = [0, 32], sizes = [2, 32], strides = [1, 1]} : vector<2x96xf32> to vector<2x32xf32>
    %308 = arith.extf %306 : vector<2x32xbf16> to vector<2x32xf32>
    %309 = arith.addf %308, %307 : vector<2x32xf32>
    %310 = arith.negf %309 : vector<2x32xf32>
    %311 = math.exp %310 : vector<2x32xf32>
    %cst_145 = arith.constant 1.000000e+00 : f32
    %312 = vector.broadcast %cst_145 : f32 to vector<2x32xf32>
    %313 = arith.addf %312, %311 : vector<2x32xf32>
    %314 = arith.divf %312, %313 : vector<2x32xf32>
    %315 = vector.extract_strided_slice %286 {offsets = [0, 64], sizes = [2, 32], strides = [1, 1]} : vector<2x96xbf16> to vector<2x32xbf16>
    %316 = vector.extract_strided_slice %296 {offsets = [0, 64], sizes = [2, 32], strides = [1, 1]} : vector<2x96xf32> to vector<2x32xf32>
    %317 = arith.mulf %305, %316 : vector<2x32xf32>
    %318 = arith.extf %315 : vector<2x32xbf16> to vector<2x32xf32>
    %319 = arith.addf %318, %317 : vector<2x32xf32>
    %320 = math.tanh %319 : vector<2x32xf32>
    %cst_146 = arith.constant 1.000000e+00 : f32
    %321 = vector.broadcast %cst_146 : f32 to vector<2x32xf32>
    %322 = arith.subf %321, %314 : vector<2x32xf32>
    %323 = arith.mulf %322, %320 : vector<2x32xf32>
    %324 = arith.mulf %314, %288 : vector<2x32xf32>
    %325 = arith.addf %323, %324 : vector<2x32xf32>
    %c0_147 = arith.constant 0 : index
    %c0_148 = arith.constant 0 : index
    %c0_149 = arith.constant 0 : index
    %326 = vector.load %arg9[%c0_147, %c0_148, %c0_149] : memref<2x2x32xf32, #tpu.memory_space<vmem>>, vector<1x2x32xf32>
    %327 = vector.shape_cast %326 : vector<1x2x32xf32> to vector<2x32xf32>
    %328 = vector.shape_cast %325 : vector<2x32xf32> to vector<1x2x32xf32>
    tpu.vector_store %arg9[%c0_147, %c0_148, %c0_149], %328 {strides = array<i32>} : memref<2x2x32xf32, #tpu.memory_space<vmem>>, vector<1x2x32xf32>,
    %329 = arith.truncf %325 : vector<2x32xf32> to vector<2x32xbf16>
    %c0_150 = arith.constant 0 : index
    %c0_151 = arith.constant 0 : index
    %c0_152 = arith.constant 0 : index
    %330 = vector.load %arg4[%c0_150, %c0_151, %c0_152] : memref<1x32x96xbf16, #tpu.memory_space<vmem>>, vector<1x32x96xbf16>
    %331 = vector.shape_cast %330 : vector<1x32x96xbf16> to vector<32x96xbf16>
    %cst_153 = arith.constant dense<0.000000e+00> : vector<2x96xf32>
    %332 = tpu.matmul %329, %331, %cst_153 {dimension_numbers = #tpu.dot_dimension_numbers<[1], [0], [0], [1], [0, 0, 1, 1], [], []>} : vector<2x32xbf16>, vector<32x96xbf16>, vector<2x96xf32> -> vector<2x96xf32>
    %c0_154 = arith.constant 0 : index
    %c0_155 = arith.constant 0 : index
    %c0_156 = arith.constant 0 : index
    %333 = vector.load %arg5[%c0_154, %c0_155, %c0_156] : memref<1x1x96xf32, #tpu.memory_space<vmem>>, vector<1x1x96xf32>
    %334 = vector.shape_cast %333 : vector<1x1x96xf32> to vector<1x96xf32>
    %335 = vector.broadcast %334 : vector<1x96xf32> to vector<2x96xf32>
    %336 = arith.addf %332, %335 : vector<2x96xf32>
    %c1_157 = arith.constant 1 : index
    %c0_158 = arith.constant 0 : index
    %c0_159 = arith.constant 0 : index
    %337 = vector.load %arg9[%c1_157, %c0_158, %c0_159] : memref<2x2x32xf32, #tpu.memory_space<vmem>>, vector<1x2x32xf32>
    %338 = vector.shape_cast %337 : vector<1x2x32xf32> to vector<2x32xf32>
    %c1_160 = arith.constant 1 : index
    %c0_161 = arith.constant 0 : index
    %c0_162 = arith.constant 0 : index
    %339 = vector.load %arg6[%c1_160, %c0_161, %c0_162] : memref<2x32x96xbf16, #tpu.memory_space<vmem>>, vector<1x32x96xbf16>
    %340 = vector.shape_cast %339 : vector<1x32x96xbf16> to vector<32x96xbf16>
    %c1_163 = arith.constant 1 : index
    %c0_164 = arith.constant 0 : index
    %c0_165 = arith.constant 0 : index
    %341 = vector.load %arg7[%c1_163, %c0_164, %c0_165] : memref<2x1x96xf32, #tpu.memory_space<vmem>>, vector<1x1x96xf32>
    %342 = vector.shape_cast %341 : vector<1x1x96xf32> to vector<1x96xf32>
    %343 = arith.truncf %338 : vector<2x32xf32> to vector<2x32xbf16>
    %cst_166 = arith.constant dense<0.000000e+00> : vector<2x96xf32>
    %344 = tpu.matmul %343, %340, %cst_166 {dimension_numbers = #tpu.dot_dimension_numbers<[1], [0], [0], [1], [0, 0, 1, 1], [], []>} : vector<2x32xbf16>, vector<32x96xbf16>, vector<2x96xf32> -> vector<2x96xf32>
    %345 = vector.broadcast %342 : vector<1x96xf32> to vector<2x96xf32>
    %346 = arith.addf %344, %345 : vector<2x96xf32>
    %347 = vector.extract_strided_slice %336 {offsets = [0, 0], sizes = [2, 32], strides = [1, 1]} : vector<2x96xf32> to vector<2x32xf32>
    %348 = vector.extract_strided_slice %346 {offsets = [0, 0], sizes = [2, 32], strides = [1, 1]} : vector<2x96xf32> to vector<2x32xf32>
    %349 = arith.addf %347, %348 : vector<2x32xf32>
    %350 = arith.negf %349 : vector<2x32xf32>
    %351 = math.exp %350 : vector<2x32xf32>
    %cst_167 = arith.constant 1.000000e+00 : f32
    %352 = vector.broadcast %cst_167 : f32 to vector<2x32xf32>
    %353 = arith.addf %352, %351 : vector<2x32xf32>
    %354 = arith.divf %352, %353 : vector<2x32xf32>
    %355 = vector.extract_strided_slice %336 {offsets = [0, 32], sizes = [2, 32], strides = [1, 1]} : vector<2x96xf32> to vector<2x32xf32>
    %356 = vector.extract_strided_slice %346 {offsets = [0, 32], sizes = [2, 32], strides = [1, 1]} : vector<2x96xf32> to vector<2x32xf32>
    %357 = arith.addf %355, %356 : vector<2x32xf32>
    %358 = arith.negf %357 : vector<2x32xf32>
    %359 = math.exp %358 : vector<2x32xf32>
    %cst_168 = arith.constant 1.000000e+00 : f32
    %360 = vector.broadcast %cst_168 : f32 to vector<2x32xf32>
    %361 = arith.addf %360, %359 : vector<2x32xf32>
    %362 = arith.divf %360, %361 : vector<2x32xf32>
    %363 = vector.extract_strided_slice %336 {offsets = [0, 64], sizes = [2, 32], strides = [1, 1]} : vector<2x96xf32> to vector<2x32xf32>
    %364 = vector.extract_strided_slice %346 {offsets = [0, 64], sizes = [2, 32], strides = [1, 1]} : vector<2x96xf32> to vector<2x32xf32>
    %365 = arith.mulf %354, %364 : vector<2x32xf32>
    %366 = arith.addf %363, %365 : vector<2x32xf32>
    %367 = math.tanh %366 : vector<2x32xf32>
    %cst_169 = arith.constant 1.000000e+00 : f32
    %368 = vector.broadcast %cst_169 : f32 to vector<2x32xf32>
    %369 = arith.subf %368, %362 : vector<2x32xf32>
    %370 = arith.mulf %369, %367 : vector<2x32xf32>
    %371 = arith.mulf %362, %338 : vector<2x32xf32>
    %372 = arith.addf %370, %371 : vector<2x32xf32>
    %c1_170 = arith.constant 1 : index
    %c0_171 = arith.constant 0 : index
    %c0_172 = arith.constant 0 : index
    %373 = vector.load %arg9[%c1_170, %c0_171, %c0_172] : memref<2x2x32xf32, #tpu.memory_space<vmem>>, vector<1x2x32xf32>
    %374 = vector.shape_cast %373 : vector<1x2x32xf32> to vector<2x32xf32>
    %375 = vector.shape_cast %372 : vector<2x32xf32> to vector<1x2x32xf32>
    tpu.vector_store %arg9[%c1_170, %c0_171, %c0_172], %375 {strides = array<i32>} : memref<2x2x32xf32, #tpu.memory_space<vmem>>, vector<1x2x32xf32>,
    %376 = vector.shape_cast %372 : vector<2x32xf32> to vector<2x1x32xf32>
    %377 = arith.truncf %376 : vector<2x1x32xf32> to vector<2x1x32xbf16>
    %c0_173 = arith.constant 0 : index
    %c3_174 = arith.constant 3 : index
    %c0_175 = arith.constant 0 : index
    %378 = vector.load %arg8[%c0_173, %c3_174, %c0_175] : memref<2x8x32xbf16, #tpu.memory_space<vmem>>, vector<2x1x32xbf16>
    tpu.vector_store %arg8[%c0_173, %c3_174, %c0_175], %377 {strides = array<i32>} : memref<2x8x32xbf16, #tpu.memory_space<vmem>>, vector<2x1x32xbf16>,
    %c4 = arith.constant 4 : index
    %c0_176 = arith.constant 0 : index
    %c0_177 = arith.constant 0 : index
    %379 = vector.load %arg2[%c4, %c0_176, %c0_177] : memref<8x2x96xbf16, #tpu.memory_space<vmem>>, vector<1x2x96xbf16>
    %380 = vector.shape_cast %379 : vector<1x2x96xbf16> to vector<2x96xbf16>
    %c0_178 = arith.constant 0 : index
    %c0_179 = arith.constant 0 : index
    %c0_180 = arith.constant 0 : index
    %381 = vector.load %arg9[%c0_178, %c0_179, %c0_180] : memref<2x2x32xf32, #tpu.memory_space<vmem>>, vector<1x2x32xf32>
    %382 = vector.shape_cast %381 : vector<1x2x32xf32> to vector<2x32xf32>
    %c0_181 = arith.constant 0 : index
    %c0_182 = arith.constant 0 : index
    %c0_183 = arith.constant 0 : index
    %383 = vector.load %arg6[%c0_181, %c0_182, %c0_183] : memref<2x32x96xbf16, #tpu.memory_space<vmem>>, vector<1x32x96xbf16>
    %384 = vector.shape_cast %383 : vector<1x32x96xbf16> to vector<32x96xbf16>
    %c0_184 = arith.constant 0 : index
    %c0_185 = arith.constant 0 : index
    %c0_186 = arith.constant 0 : index
    %385 = vector.load %arg7[%c0_184, %c0_185, %c0_186] : memref<2x1x96xf32, #tpu.memory_space<vmem>>, vector<1x1x96xf32>
    %386 = vector.shape_cast %385 : vector<1x1x96xf32> to vector<1x96xf32>
    %387 = arith.truncf %382 : vector<2x32xf32> to vector<2x32xbf16>
    %cst_187 = arith.constant dense<0.000000e+00> : vector<2x96xf32>
    %388 = tpu.matmul %387, %384, %cst_187 {dimension_numbers = #tpu.dot_dimension_numbers<[1], [0], [0], [1], [0, 0, 1, 1], [], []>} : vector<2x32xbf16>, vector<32x96xbf16>, vector<2x96xf32> -> vector<2x96xf32>
    %389 = vector.broadcast %386 : vector<1x96xf32> to vector<2x96xf32>
    %390 = arith.addf %388, %389 : vector<2x96xf32>
    %391 = vector.extract_strided_slice %380 {offsets = [0, 0], sizes = [2, 32], strides = [1, 1]} : vector<2x96xbf16> to vector<2x32xbf16>
    %392 = vector.extract_strided_slice %390 {offsets = [0, 0], sizes = [2, 32], strides = [1, 1]} : vector<2x96xf32> to vector<2x32xf32>
    %393 = arith.extf %391 : vector<2x32xbf16> to vector<2x32xf32>
    %394 = arith.addf %393, %392 : vector<2x32xf32>
    %395 = arith.negf %394 : vector<2x32xf32>
    %396 = math.exp %395 : vector<2x32xf32>
    %cst_188 = arith.constant 1.000000e+00 : f32
    %397 = vector.broadcast %cst_188 : f32 to vector<2x32xf32>
    %398 = arith.addf %397, %396 : vector<2x32xf32>
    %399 = arith.divf %397, %398 : vector<2x32xf32>
    %400 = vector.extract_strided_slice %380 {offsets = [0, 32], sizes = [2, 32], strides = [1, 1]} : vector<2x96xbf16> to vector<2x32xbf16>
    %401 = vector.extract_strided_slice %390 {offsets = [0, 32], sizes = [2, 32], strides = [1, 1]} : vector<2x96xf32> to vector<2x32xf32>
    %402 = arith.extf %400 : vector<2x32xbf16> to vector<2x32xf32>
    %403 = arith.addf %402, %401 : vector<2x32xf32>
    %404 = arith.negf %403 : vector<2x32xf32>
    %405 = math.exp %404 : vector<2x32xf32>
    %cst_189 = arith.constant 1.000000e+00 : f32
    %406 = vector.broadcast %cst_189 : f32 to vector<2x32xf32>
    %407 = arith.addf %406, %405 : vector<2x32xf32>
    %408 = arith.divf %406, %407 : vector<2x32xf32>
    %409 = vector.extract_strided_slice %380 {offsets = [0, 64], sizes = [2, 32], strides = [1, 1]} : vector<2x96xbf16> to vector<2x32xbf16>
    %410 = vector.extract_strided_slice %390 {offsets = [0, 64], sizes = [2, 32], strides = [1, 1]} : vector<2x96xf32> to vector<2x32xf32>
    %411 = arith.mulf %399, %410 : vector<2x32xf32>
    %412 = arith.extf %409 : vector<2x32xbf16> to vector<2x32xf32>
    %413 = arith.addf %412, %411 : vector<2x32xf32>
    %414 = math.tanh %413 : vector<2x32xf32>
    %cst_190 = arith.constant 1.000000e+00 : f32
    %415 = vector.broadcast %cst_190 : f32 to vector<2x32xf32>
    %416 = arith.subf %415, %408 : vector<2x32xf32>
    %417 = arith.mulf %416, %414 : vector<2x32xf32>
    %418 = arith.mulf %408, %382 : vector<2x32xf32>
    %419 = arith.addf %417, %418 : vector<2x32xf32>
    %c0_191 = arith.constant 0 : index
    %c0_192 = arith.constant 0 : index
    %c0_193 = arith.constant 0 : index
    %420 = vector.load %arg9[%c0_191, %c0_192, %c0_193] : memref<2x2x32xf32, #tpu.memory_space<vmem>>, vector<1x2x32xf32>
    %421 = vector.shape_cast %420 : vector<1x2x32xf32> to vector<2x32xf32>
    %422 = vector.shape_cast %419 : vector<2x32xf32> to vector<1x2x32xf32>
    tpu.vector_store %arg9[%c0_191, %c0_192, %c0_193], %422 {strides = array<i32>} : memref<2x2x32xf32, #tpu.memory_space<vmem>>, vector<1x2x32xf32>,
    %423 = arith.truncf %419 : vector<2x32xf32> to vector<2x32xbf16>
    %c0_194 = arith.constant 0 : index
    %c0_195 = arith.constant 0 : index
    %c0_196 = arith.constant 0 : index
    %424 = vector.load %arg4[%c0_194, %c0_195, %c0_196] : memref<1x32x96xbf16, #tpu.memory_space<vmem>>, vector<1x32x96xbf16>
    %425 = vector.shape_cast %424 : vector<1x32x96xbf16> to vector<32x96xbf16>
    %cst_197 = arith.constant dense<0.000000e+00> : vector<2x96xf32>
    %426 = tpu.matmul %423, %425, %cst_197 {dimension_numbers = #tpu.dot_dimension_numbers<[1], [0], [0], [1], [0, 0, 1, 1], [], []>} : vector<2x32xbf16>, vector<32x96xbf16>, vector<2x96xf32> -> vector<2x96xf32>
    %c0_198 = arith.constant 0 : index
    %c0_199 = arith.constant 0 : index
    %c0_200 = arith.constant 0 : index
    %427 = vector.load %arg5[%c0_198, %c0_199, %c0_200] : memref<1x1x96xf32, #tpu.memory_space<vmem>>, vector<1x1x96xf32>
    %428 = vector.shape_cast %427 : vector<1x1x96xf32> to vector<1x96xf32>
    %429 = vector.broadcast %428 : vector<1x96xf32> to vector<2x96xf32>
    %430 = arith.addf %426, %429 : vector<2x96xf32>
    %c1_201 = arith.constant 1 : index
    %c0_202 = arith.constant 0 : index
    %c0_203 = arith.constant 0 : index
    %431 = vector.load %arg9[%c1_201, %c0_202, %c0_203] : memref<2x2x32xf32, #tpu.memory_space<vmem>>, vector<1x2x32xf32>
    %432 = vector.shape_cast %431 : vector<1x2x32xf32> to vector<2x32xf32>
    %c1_204 = arith.constant 1 : index
    %c0_205 = arith.constant 0 : index
    %c0_206 = arith.constant 0 : index
    %433 = vector.load %arg6[%c1_204, %c0_205, %c0_206] : memref<2x32x96xbf16, #tpu.memory_space<vmem>>, vector<1x32x96xbf16>
    %434 = vector.shape_cast %433 : vector<1x32x96xbf16> to vector<32x96xbf16>
    %c1_207 = arith.constant 1 : index
    %c0_208 = arith.constant 0 : index
    %c0_209 = arith.constant 0 : index
    %435 = vector.load %arg7[%c1_207, %c0_208, %c0_209] : memref<2x1x96xf32, #tpu.memory_space<vmem>>, vector<1x1x96xf32>
    %436 = vector.shape_cast %435 : vector<1x1x96xf32> to vector<1x96xf32>
    %437 = arith.truncf %432 : vector<2x32xf32> to vector<2x32xbf16>
    %cst_210 = arith.constant dense<0.000000e+00> : vector<2x96xf32>
    %438 = tpu.matmul %437, %434, %cst_210 {dimension_numbers = #tpu.dot_dimension_numbers<[1], [0], [0], [1], [0, 0, 1, 1], [], []>} : vector<2x32xbf16>, vector<32x96xbf16>, vector<2x96xf32> -> vector<2x96xf32>
    %439 = vector.broadcast %436 : vector<1x96xf32> to vector<2x96xf32>
    %440 = arith.addf %438, %439 : vector<2x96xf32>
    %441 = vector.extract_strided_slice %430 {offsets = [0, 0], sizes = [2, 32], strides = [1, 1]} : vector<2x96xf32> to vector<2x32xf32>
    %442 = vector.extract_strided_slice %440 {offsets = [0, 0], sizes = [2, 32], strides = [1, 1]} : vector<2x96xf32> to vector<2x32xf32>
    %443 = arith.addf %441, %442 : vector<2x32xf32>
    %444 = arith.negf %443 : vector<2x32xf32>
    %445 = math.exp %444 : vector<2x32xf32>
    %cst_211 = arith.constant 1.000000e+00 : f32
    %446 = vector.broadcast %cst_211 : f32 to vector<2x32xf32>
    %447 = arith.addf %446, %445 : vector<2x32xf32>
    %448 = arith.divf %446, %447 : vector<2x32xf32>
    %449 = vector.extract_strided_slice %430 {offsets = [0, 32], sizes = [2, 32], strides = [1, 1]} : vector<2x96xf32> to vector<2x32xf32>
    %450 = vector.extract_strided_slice %440 {offsets = [0, 32], sizes = [2, 32], strides = [1, 1]} : vector<2x96xf32> to vector<2x32xf32>
    %451 = arith.addf %449, %450 : vector<2x32xf32>
    %452 = arith.negf %451 : vector<2x32xf32>
    %453 = math.exp %452 : vector<2x32xf32>
    %cst_212 = arith.constant 1.000000e+00 : f32
    %454 = vector.broadcast %cst_212 : f32 to vector<2x32xf32>
    %455 = arith.addf %454, %453 : vector<2x32xf32>
    %456 = arith.divf %454, %455 : vector<2x32xf32>
    %457 = vector.extract_strided_slice %430 {offsets = [0, 64], sizes = [2, 32], strides = [1, 1]} : vector<2x96xf32> to vector<2x32xf32>
    %458 = vector.extract_strided_slice %440 {offsets = [0, 64], sizes = [2, 32], strides = [1, 1]} : vector<2x96xf32> to vector<2x32xf32>
    %459 = arith.mulf %448, %458 : vector<2x32xf32>
    %460 = arith.addf %457, %459 : vector<2x32xf32>
    %461 = math.tanh %460 : vector<2x32xf32>
    %cst_213 = arith.constant 1.000000e+00 : f32
    %462 = vector.broadcast %cst_213 : f32 to vector<2x32xf32>
    %463 = arith.subf %462, %456 : vector<2x32xf32>
    %464 = arith.mulf %463, %461 : vector<2x32xf32>
    %465 = arith.mulf %456, %432 : vector<2x32xf32>
    %466 = arith.addf %464, %465 : vector<2x32xf32>
    %c1_214 = arith.constant 1 : index
    %c0_215 = arith.constant 0 : index
    %c0_216 = arith.constant 0 : index
    %467 = vector.load %arg9[%c1_214, %c0_215, %c0_216] : memref<2x2x32xf32, #tpu.memory_space<vmem>>, vector<1x2x32xf32>
    %468 = vector.shape_cast %467 : vector<1x2x32xf32> to vector<2x32xf32>
    %469 = vector.shape_cast %466 : vector<2x32xf32> to vector<1x2x32xf32>
    tpu.vector_store %arg9[%c1_214, %c0_215, %c0_216], %469 {strides = array<i32>} : memref<2x2x32xf32, #tpu.memory_space<vmem>>, vector<1x2x32xf32>,
    %470 = vector.shape_cast %466 : vector<2x32xf32> to vector<2x1x32xf32>
    %471 = arith.truncf %470 : vector<2x1x32xf32> to vector<2x1x32xbf16>
    %c0_217 = arith.constant 0 : index
    %c4_218 = arith.constant 4 : index
    %c0_219 = arith.constant 0 : index
    %472 = vector.load %arg8[%c0_217, %c4_218, %c0_219] : memref<2x8x32xbf16, #tpu.memory_space<vmem>>, vector<2x1x32xbf16>
    tpu.vector_store %arg8[%c0_217, %c4_218, %c0_219], %471 {strides = array<i32>} : memref<2x8x32xbf16, #tpu.memory_space<vmem>>, vector<2x1x32xbf16>,
    %c5 = arith.constant 5 : index
    %c0_220 = arith.constant 0 : index
    %c0_221 = arith.constant 0 : index
    %473 = vector.load %arg2[%c5, %c0_220, %c0_221] : memref<8x2x96xbf16, #tpu.memory_space<vmem>>, vector<1x2x96xbf16>
    %474 = vector.shape_cast %473 : vector<1x2x96xbf16> to vector<2x96xbf16>
    %c0_222 = arith.constant 0 : index
    %c0_223 = arith.constant 0 : index
    %c0_224 = arith.constant 0 : index
    %475 = vector.load %arg9[%c0_222, %c0_223, %c0_224] : memref<2x2x32xf32, #tpu.memory_space<vmem>>, vector<1x2x32xf32>
    %476 = vector.shape_cast %475 : vector<1x2x32xf32> to vector<2x32xf32>
    %c0_225 = arith.constant 0 : index
    %c0_226 = arith.constant 0 : index
    %c0_227 = arith.constant 0 : index
    %477 = vector.load %arg6[%c0_225, %c0_226, %c0_227] : memref<2x32x96xbf16, #tpu.memory_space<vmem>>, vector<1x32x96xbf16>
    %478 = vector.shape_cast %477 : vector<1x32x96xbf16> to vector<32x96xbf16>
    %c0_228 = arith.constant 0 : index
    %c0_229 = arith.constant 0 : index
    %c0_230 = arith.constant 0 : index
    %479 = vector.load %arg7[%c0_228, %c0_229, %c0_230] : memref<2x1x96xf32, #tpu.memory_space<vmem>>, vector<1x1x96xf32>
    %480 = vector.shape_cast %479 : vector<1x1x96xf32> to vector<1x96xf32>
    %481 = arith.truncf %476 : vector<2x32xf32> to vector<2x32xbf16>
    %cst_231 = arith.constant dense<0.000000e+00> : vector<2x96xf32>
    %482 = tpu.matmul %481, %478, %cst_231 {dimension_numbers = #tpu.dot_dimension_numbers<[1], [0], [0], [1], [0, 0, 1, 1], [], []>} : vector<2x32xbf16>, vector<32x96xbf16>, vector<2x96xf32> -> vector<2x96xf32>
    %483 = vector.broadcast %480 : vector<1x96xf32> to vector<2x96xf32>
    %484 = arith.addf %482, %483 : vector<2x96xf32>
    %485 = vector.extract_strided_slice %474 {offsets = [0, 0], sizes = [2, 32], strides = [1, 1]} : vector<2x96xbf16> to vector<2x32xbf16>
    %486 = vector.extract_strided_slice %484 {offsets = [0, 0], sizes = [2, 32], strides = [1, 1]} : vector<2x96xf32> to vector<2x32xf32>
    %487 = arith.extf %485 : vector<2x32xbf16> to vector<2x32xf32>
    %488 = arith.addf %487, %486 : vector<2x32xf32>
    %489 = arith.negf %488 : vector<2x32xf32>
    %490 = math.exp %489 : vector<2x32xf32>
    %cst_232 = arith.constant 1.000000e+00 : f32
    %491 = vector.broadcast %cst_232 : f32 to vector<2x32xf32>
    %492 = arith.addf %491, %490 : vector<2x32xf32>
    %493 = arith.divf %491, %492 : vector<2x32xf32>
    %494 = vector.extract_strided_slice %474 {offsets = [0, 32], sizes = [2, 32], strides = [1, 1]} : vector<2x96xbf16> to vector<2x32xbf16>
    %495 = vector.extract_strided_slice %484 {offsets = [0, 32], sizes = [2, 32], strides = [1, 1]} : vector<2x96xf32> to vector<2x32xf32>
    %496 = arith.extf %494 : vector<2x32xbf16> to vector<2x32xf32>
    %497 = arith.addf %496, %495 : vector<2x32xf32>
    %498 = arith.negf %497 : vector<2x32xf32>
    %499 = math.exp %498 : vector<2x32xf32>
    %cst_233 = arith.constant 1.000000e+00 : f32
    %500 = vector.broadcast %cst_233 : f32 to vector<2x32xf32>
    %501 = arith.addf %500, %499 : vector<2x32xf32>
    %502 = arith.divf %500, %501 : vector<2x32xf32>
    %503 = vector.extract_strided_slice %474 {offsets = [0, 64], sizes = [2, 32], strides = [1, 1]} : vector<2x96xbf16> to vector<2x32xbf16>
    %504 = vector.extract_strided_slice %484 {offsets = [0, 64], sizes = [2, 32], strides = [1, 1]} : vector<2x96xf32> to vector<2x32xf32>
    %505 = arith.mulf %493, %504 : vector<2x32xf32>
    %506 = arith.extf %503 : vector<2x32xbf16> to vector<2x32xf32>
    %507 = arith.addf %506, %505 : vector<2x32xf32>
    %508 = math.tanh %507 : vector<2x32xf32>
    %cst_234 = arith.constant 1.000000e+00 : f32
    %509 = vector.broadcast %cst_234 : f32 to vector<2x32xf32>
    %510 = arith.subf %509, %502 : vector<2x32xf32>
    %511 = arith.mulf %510, %508 : vector<2x32xf32>
    %512 = arith.mulf %502, %476 : vector<2x32xf32>
    %513 = arith.addf %511, %512 : vector<2x32xf32>
    %c0_235 = arith.constant 0 : index
    %c0_236 = arith.constant 0 : index
    %c0_237 = arith.constant 0 : index
    %514 = vector.load %arg9[%c0_235, %c0_236, %c0_237] : memref<2x2x32xf32, #tpu.memory_space<vmem>>, vector<1x2x32xf32>
    %515 = vector.shape_cast %514 : vector<1x2x32xf32> to vector<2x32xf32>
    %516 = vector.shape_cast %513 : vector<2x32xf32> to vector<1x2x32xf32>
    tpu.vector_store %arg9[%c0_235, %c0_236, %c0_237], %516 {strides = array<i32>} : memref<2x2x32xf32, #tpu.memory_space<vmem>>, vector<1x2x32xf32>,
    %517 = arith.truncf %513 : vector<2x32xf32> to vector<2x32xbf16>
    %c0_238 = arith.constant 0 : index
    %c0_239 = arith.constant 0 : index
    %c0_240 = arith.constant 0 : index
    %518 = vector.load %arg4[%c0_238, %c0_239, %c0_240] : memref<1x32x96xbf16, #tpu.memory_space<vmem>>, vector<1x32x96xbf16>
    %519 = vector.shape_cast %518 : vector<1x32x96xbf16> to vector<32x96xbf16>
    %cst_241 = arith.constant dense<0.000000e+00> : vector<2x96xf32>
    %520 = tpu.matmul %517, %519, %cst_241 {dimension_numbers = #tpu.dot_dimension_numbers<[1], [0], [0], [1], [0, 0, 1, 1], [], []>} : vector<2x32xbf16>, vector<32x96xbf16>, vector<2x96xf32> -> vector<2x96xf32>
    %c0_242 = arith.constant 0 : index
    %c0_243 = arith.constant 0 : index
    %c0_244 = arith.constant 0 : index
    %521 = vector.load %arg5[%c0_242, %c0_243, %c0_244] : memref<1x1x96xf32, #tpu.memory_space<vmem>>, vector<1x1x96xf32>
    %522 = vector.shape_cast %521 : vector<1x1x96xf32> to vector<1x96xf32>
    %523 = vector.broadcast %522 : vector<1x96xf32> to vector<2x96xf32>
    %524 = arith.addf %520, %523 : vector<2x96xf32>
    %c1_245 = arith.constant 1 : index
    %c0_246 = arith.constant 0 : index
    %c0_247 = arith.constant 0 : index
    %525 = vector.load %arg9[%c1_245, %c0_246, %c0_247] : memref<2x2x32xf32, #tpu.memory_space<vmem>>, vector<1x2x32xf32>
    %526 = vector.shape_cast %525 : vector<1x2x32xf32> to vector<2x32xf32>
    %c1_248 = arith.constant 1 : index
    %c0_249 = arith.constant 0 : index
    %c0_250 = arith.constant 0 : index
    %527 = vector.load %arg6[%c1_248, %c0_249, %c0_250] : memref<2x32x96xbf16, #tpu.memory_space<vmem>>, vector<1x32x96xbf16>
    %528 = vector.shape_cast %527 : vector<1x32x96xbf16> to vector<32x96xbf16>
    %c1_251 = arith.constant 1 : index
    %c0_252 = arith.constant 0 : index
    %c0_253 = arith.constant 0 : index
    %529 = vector.load %arg7[%c1_251, %c0_252, %c0_253] : memref<2x1x96xf32, #tpu.memory_space<vmem>>, vector<1x1x96xf32>
    %530 = vector.shape_cast %529 : vector<1x1x96xf32> to vector<1x96xf32>
    %531 = arith.truncf %526 : vector<2x32xf32> to vector<2x32xbf16>
    %cst_254 = arith.constant dense<0.000000e+00> : vector<2x96xf32>
    %532 = tpu.matmul %531, %528, %cst_254 {dimension_numbers = #tpu.dot_dimension_numbers<[1], [0], [0], [1], [0, 0, 1, 1], [], []>} : vector<2x32xbf16>, vector<32x96xbf16>, vector<2x96xf32> -> vector<2x96xf32>
    %533 = vector.broadcast %530 : vector<1x96xf32> to vector<2x96xf32>
    %534 = arith.addf %532, %533 : vector<2x96xf32>
    %535 = vector.extract_strided_slice %524 {offsets = [0, 0], sizes = [2, 32], strides = [1, 1]} : vector<2x96xf32> to vector<2x32xf32>
    %536 = vector.extract_strided_slice %534 {offsets = [0, 0], sizes = [2, 32], strides = [1, 1]} : vector<2x96xf32> to vector<2x32xf32>
    %537 = arith.addf %535, %536 : vector<2x32xf32>
    %538 = arith.negf %537 : vector<2x32xf32>
    %539 = math.exp %538 : vector<2x32xf32>
    %cst_255 = arith.constant 1.000000e+00 : f32
    %540 = vector.broadcast %cst_255 : f32 to vector<2x32xf32>
    %541 = arith.addf %540, %539 : vector<2x32xf32>
    %542 = arith.divf %540, %541 : vector<2x32xf32>
    %543 = vector.extract_strided_slice %524 {offsets = [0, 32], sizes = [2, 32], strides = [1, 1]} : vector<2x96xf32> to vector<2x32xf32>
    %544 = vector.extract_strided_slice %534 {offsets = [0, 32], sizes = [2, 32], strides = [1, 1]} : vector<2x96xf32> to vector<2x32xf32>
    %545 = arith.addf %543, %544 : vector<2x32xf32>
    %546 = arith.negf %545 : vector<2x32xf32>
    %547 = math.exp %546 : vector<2x32xf32>
    %cst_256 = arith.constant 1.000000e+00 : f32
    %548 = vector.broadcast %cst_256 : f32 to vector<2x32xf32>
    %549 = arith.addf %548, %547 : vector<2x32xf32>
    %550 = arith.divf %548, %549 : vector<2x32xf32>
    %551 = vector.extract_strided_slice %524 {offsets = [0, 64], sizes = [2, 32], strides = [1, 1]} : vector<2x96xf32> to vector<2x32xf32>
    %552 = vector.extract_strided_slice %534 {offsets = [0, 64], sizes = [2, 32], strides = [1, 1]} : vector<2x96xf32> to vector<2x32xf32>
    %553 = arith.mulf %542, %552 : vector<2x32xf32>
    %554 = arith.addf %551, %553 : vector<2x32xf32>
    %555 = math.tanh %554 : vector<2x32xf32>
    %cst_257 = arith.constant 1.000000e+00 : f32
    %556 = vector.broadcast %cst_257 : f32 to vector<2x32xf32>
    %557 = arith.subf %556, %550 : vector<2x32xf32>
    %558 = arith.mulf %557, %555 : vector<2x32xf32>
    %559 = arith.mulf %550, %526 : vector<2x32xf32>
    %560 = arith.addf %558, %559 : vector<2x32xf32>
    %c1_258 = arith.constant 1 : index
    %c0_259 = arith.constant 0 : index
    %c0_260 = arith.constant 0 : index
    %561 = vector.load %arg9[%c1_258, %c0_259, %c0_260] : memref<2x2x32xf32, #tpu.memory_space<vmem>>, vector<1x2x32xf32>
    %562 = vector.shape_cast %561 : vector<1x2x32xf32> to vector<2x32xf32>
    %563 = vector.shape_cast %560 : vector<2x32xf32> to vector<1x2x32xf32>
    tpu.vector_store %arg9[%c1_258, %c0_259, %c0_260], %563 {strides = array<i32>} : memref<2x2x32xf32, #tpu.memory_space<vmem>>, vector<1x2x32xf32>,
    %564 = vector.shape_cast %560 : vector<2x32xf32> to vector<2x1x32xf32>
    %565 = arith.truncf %564 : vector<2x1x32xf32> to vector<2x1x32xbf16>
    %c0_261 = arith.constant 0 : index
    %c5_262 = arith.constant 5 : index
    %c0_263 = arith.constant 0 : index
    %566 = vector.load %arg8[%c0_261, %c5_262, %c0_263] : memref<2x8x32xbf16, #tpu.memory_space<vmem>>, vector<2x1x32xbf16>
    tpu.vector_store %arg8[%c0_261, %c5_262, %c0_263], %565 {strides = array<i32>} : memref<2x8x32xbf16, #tpu.memory_space<vmem>>, vector<2x1x32xbf16>,
    %c6 = arith.constant 6 : index
    %c0_264 = arith.constant 0 : index
    %c0_265 = arith.constant 0 : index
    %567 = vector.load %arg2[%c6, %c0_264, %c0_265] : memref<8x2x96xbf16, #tpu.memory_space<vmem>>, vector<1x2x96xbf16>
    %568 = vector.shape_cast %567 : vector<1x2x96xbf16> to vector<2x96xbf16>
    %c0_266 = arith.constant 0 : index
    %c0_267 = arith.constant 0 : index
    %c0_268 = arith.constant 0 : index
    %569 = vector.load %arg9[%c0_266, %c0_267, %c0_268] : memref<2x2x32xf32, #tpu.memory_space<vmem>>, vector<1x2x32xf32>
    %570 = vector.shape_cast %569 : vector<1x2x32xf32> to vector<2x32xf32>
    %c0_269 = arith.constant 0 : index
    %c0_270 = arith.constant 0 : index
    %c0_271 = arith.constant 0 : index
    %571 = vector.load %arg6[%c0_269, %c0_270, %c0_271] : memref<2x32x96xbf16, #tpu.memory_space<vmem>>, vector<1x32x96xbf16>
    %572 = vector.shape_cast %571 : vector<1x32x96xbf16> to vector<32x96xbf16>
    %c0_272 = arith.constant 0 : index
    %c0_273 = arith.constant 0 : index
    %c0_274 = arith.constant 0 : index
    %573 = vector.load %arg7[%c0_272, %c0_273, %c0_274] : memref<2x1x96xf32, #tpu.memory_space<vmem>>, vector<1x1x96xf32>
    %574 = vector.shape_cast %573 : vector<1x1x96xf32> to vector<1x96xf32>
    %575 = arith.truncf %570 : vector<2x32xf32> to vector<2x32xbf16>
    %cst_275 = arith.constant dense<0.000000e+00> : vector<2x96xf32>
    %576 = tpu.matmul %575, %572, %cst_275 {dimension_numbers = #tpu.dot_dimension_numbers<[1], [0], [0], [1], [0, 0, 1, 1], [], []>} : vector<2x32xbf16>, vector<32x96xbf16>, vector<2x96xf32> -> vector<2x96xf32>
    %577 = vector.broadcast %574 : vector<1x96xf32> to vector<2x96xf32>
    %578 = arith.addf %576, %577 : vector<2x96xf32>
    %579 = vector.extract_strided_slice %568 {offsets = [0, 0], sizes = [2, 32], strides = [1, 1]} : vector<2x96xbf16> to vector<2x32xbf16>
    %580 = vector.extract_strided_slice %578 {offsets = [0, 0], sizes = [2, 32], strides = [1, 1]} : vector<2x96xf32> to vector<2x32xf32>
    %581 = arith.extf %579 : vector<2x32xbf16> to vector<2x32xf32>
    %582 = arith.addf %581, %580 : vector<2x32xf32>
    %583 = arith.negf %582 : vector<2x32xf32>
    %584 = math.exp %583 : vector<2x32xf32>
    %cst_276 = arith.constant 1.000000e+00 : f32
    %585 = vector.broadcast %cst_276 : f32 to vector<2x32xf32>
    %586 = arith.addf %585, %584 : vector<2x32xf32>
    %587 = arith.divf %585, %586 : vector<2x32xf32>
    %588 = vector.extract_strided_slice %568 {offsets = [0, 32], sizes = [2, 32], strides = [1, 1]} : vector<2x96xbf16> to vector<2x32xbf16>
    %589 = vector.extract_strided_slice %578 {offsets = [0, 32], sizes = [2, 32], strides = [1, 1]} : vector<2x96xf32> to vector<2x32xf32>
    %590 = arith.extf %588 : vector<2x32xbf16> to vector<2x32xf32>
    %591 = arith.addf %590, %589 : vector<2x32xf32>
    %592 = arith.negf %591 : vector<2x32xf32>
    %593 = math.exp %592 : vector<2x32xf32>
    %cst_277 = arith.constant 1.000000e+00 : f32
    %594 = vector.broadcast %cst_277 : f32 to vector<2x32xf32>
    %595 = arith.addf %594, %593 : vector<2x32xf32>
    %596 = arith.divf %594, %595 : vector<2x32xf32>
    %597 = vector.extract_strided_slice %568 {offsets = [0, 64], sizes = [2, 32], strides = [1, 1]} : vector<2x96xbf16> to vector<2x32xbf16>
    %598 = vector.extract_strided_slice %578 {offsets = [0, 64], sizes = [2, 32], strides = [1, 1]} : vector<2x96xf32> to vector<2x32xf32>
    %599 = arith.mulf %587, %598 : vector<2x32xf32>
    %600 = arith.extf %597 : vector<2x32xbf16> to vector<2x32xf32>
    %601 = arith.addf %600, %599 : vector<2x32xf32>
    %602 = math.tanh %601 : vector<2x32xf32>
    %cst_278 = arith.constant 1.000000e+00 : f32
    %603 = vector.broadcast %cst_278 : f32 to vector<2x32xf32>
    %604 = arith.subf %603, %596 : vector<2x32xf32>
    %605 = arith.mulf %604, %602 : vector<2x32xf32>
    %606 = arith.mulf %596, %570 : vector<2x32xf32>
    %607 = arith.addf %605, %606 : vector<2x32xf32>
    %c0_279 = arith.constant 0 : index
    %c0_280 = arith.constant 0 : index
    %c0_281 = arith.constant 0 : index
    %608 = vector.load %arg9[%c0_279, %c0_280, %c0_281] : memref<2x2x32xf32, #tpu.memory_space<vmem>>, vector<1x2x32xf32>
    %609 = vector.shape_cast %608 : vector<1x2x32xf32> to vector<2x32xf32>
    %610 = vector.shape_cast %607 : vector<2x32xf32> to vector<1x2x32xf32>
    tpu.vector_store %arg9[%c0_279, %c0_280, %c0_281], %610 {strides = array<i32>} : memref<2x2x32xf32, #tpu.memory_space<vmem>>, vector<1x2x32xf32>,
    %611 = arith.truncf %607 : vector<2x32xf32> to vector<2x32xbf16>
    %c0_282 = arith.constant 0 : index
    %c0_283 = arith.constant 0 : index
    %c0_284 = arith.constant 0 : index
    %612 = vector.load %arg4[%c0_282, %c0_283, %c0_284] : memref<1x32x96xbf16, #tpu.memory_space<vmem>>, vector<1x32x96xbf16>
    %613 = vector.shape_cast %612 : vector<1x32x96xbf16> to vector<32x96xbf16>
    %cst_285 = arith.constant dense<0.000000e+00> : vector<2x96xf32>
    %614 = tpu.matmul %611, %613, %cst_285 {dimension_numbers = #tpu.dot_dimension_numbers<[1], [0], [0], [1], [0, 0, 1, 1], [], []>} : vector<2x32xbf16>, vector<32x96xbf16>, vector<2x96xf32> -> vector<2x96xf32>
    %c0_286 = arith.constant 0 : index
    %c0_287 = arith.constant 0 : index
    %c0_288 = arith.constant 0 : index
    %615 = vector.load %arg5[%c0_286, %c0_287, %c0_288] : memref<1x1x96xf32, #tpu.memory_space<vmem>>, vector<1x1x96xf32>
    %616 = vector.shape_cast %615 : vector<1x1x96xf32> to vector<1x96xf32>
    %617 = vector.broadcast %616 : vector<1x96xf32> to vector<2x96xf32>
    %618 = arith.addf %614, %617 : vector<2x96xf32>
    %c1_289 = arith.constant 1 : index
    %c0_290 = arith.constant 0 : index
    %c0_291 = arith.constant 0 : index
    %619 = vector.load %arg9[%c1_289, %c0_290, %c0_291] : memref<2x2x32xf32, #tpu.memory_space<vmem>>, vector<1x2x32xf32>
    %620 = vector.shape_cast %619 : vector<1x2x32xf32> to vector<2x32xf32>
    %c1_292 = arith.constant 1 : index
    %c0_293 = arith.constant 0 : index
    %c0_294 = arith.constant 0 : index
    %621 = vector.load %arg6[%c1_292, %c0_293, %c0_294] : memref<2x32x96xbf16, #tpu.memory_space<vmem>>, vector<1x32x96xbf16>
    %622 = vector.shape_cast %621 : vector<1x32x96xbf16> to vector<32x96xbf16>
    %c1_295 = arith.constant 1 : index
    %c0_296 = arith.constant 0 : index
    %c0_297 = arith.constant 0 : index
    %623 = vector.load %arg7[%c1_295, %c0_296, %c0_297] : memref<2x1x96xf32, #tpu.memory_space<vmem>>, vector<1x1x96xf32>
    %624 = vector.shape_cast %623 : vector<1x1x96xf32> to vector<1x96xf32>
    %625 = arith.truncf %620 : vector<2x32xf32> to vector<2x32xbf16>
    %cst_298 = arith.constant dense<0.000000e+00> : vector<2x96xf32>
    %626 = tpu.matmul %625, %622, %cst_298 {dimension_numbers = #tpu.dot_dimension_numbers<[1], [0], [0], [1], [0, 0, 1, 1], [], []>} : vector<2x32xbf16>, vector<32x96xbf16>, vector<2x96xf32> -> vector<2x96xf32>
    %627 = vector.broadcast %624 : vector<1x96xf32> to vector<2x96xf32>
    %628 = arith.addf %626, %627 : vector<2x96xf32>
    %629 = vector.extract_strided_slice %618 {offsets = [0, 0], sizes = [2, 32], strides = [1, 1]} : vector<2x96xf32> to vector<2x32xf32>
    %630 = vector.extract_strided_slice %628 {offsets = [0, 0], sizes = [2, 32], strides = [1, 1]} : vector<2x96xf32> to vector<2x32xf32>
    %631 = arith.addf %629, %630 : vector<2x32xf32>
    %632 = arith.negf %631 : vector<2x32xf32>
    %633 = math.exp %632 : vector<2x32xf32>
    %cst_299 = arith.constant 1.000000e+00 : f32
    %634 = vector.broadcast %cst_299 : f32 to vector<2x32xf32>
    %635 = arith.addf %634, %633 : vector<2x32xf32>
    %636 = arith.divf %634, %635 : vector<2x32xf32>
    %637 = vector.extract_strided_slice %618 {offsets = [0, 32], sizes = [2, 32], strides = [1, 1]} : vector<2x96xf32> to vector<2x32xf32>
    %638 = vector.extract_strided_slice %628 {offsets = [0, 32], sizes = [2, 32], strides = [1, 1]} : vector<2x96xf32> to vector<2x32xf32>
    %639 = arith.addf %637, %638 : vector<2x32xf32>
    %640 = arith.negf %639 : vector<2x32xf32>
    %641 = math.exp %640 : vector<2x32xf32>
    %cst_300 = arith.constant 1.000000e+00 : f32
    %642 = vector.broadcast %cst_300 : f32 to vector<2x32xf32>
    %643 = arith.addf %642, %641 : vector<2x32xf32>
    %644 = arith.divf %642, %643 : vector<2x32xf32>
    %645 = vector.extract_strided_slice %618 {offsets = [0, 64], sizes = [2, 32], strides = [1, 1]} : vector<2x96xf32> to vector<2x32xf32>
    %646 = vector.extract_strided_slice %628 {offsets = [0, 64], sizes = [2, 32], strides = [1, 1]} : vector<2x96xf32> to vector<2x32xf32>
    %647 = arith.mulf %636, %646 : vector<2x32xf32>
    %648 = arith.addf %645, %647 : vector<2x32xf32>
    %649 = math.tanh %648 : vector<2x32xf32>
    %cst_301 = arith.constant 1.000000e+00 : f32
    %650 = vector.broadcast %cst_301 : f32 to vector<2x32xf32>
    %651 = arith.subf %650, %644 : vector<2x32xf32>
    %652 = arith.mulf %651, %649 : vector<2x32xf32>
    %653 = arith.mulf %644, %620 : vector<2x32xf32>
    %654 = arith.addf %652, %653 : vector<2x32xf32>
    %c1_302 = arith.constant 1 : index
    %c0_303 = arith.constant 0 : index
    %c0_304 = arith.constant 0 : index
    %655 = vector.load %arg9[%c1_302, %c0_303, %c0_304] : memref<2x2x32xf32, #tpu.memory_space<vmem>>, vector<1x2x32xf32>
    %656 = vector.shape_cast %655 : vector<1x2x32xf32> to vector<2x32xf32>
    %657 = vector.shape_cast %654 : vector<2x32xf32> to vector<1x2x32xf32>
    tpu.vector_store %arg9[%c1_302, %c0_303, %c0_304], %657 {strides = array<i32>} : memref<2x2x32xf32, #tpu.memory_space<vmem>>, vector<1x2x32xf32>,
    %658 = vector.shape_cast %654 : vector<2x32xf32> to vector<2x1x32xf32>
    %659 = arith.truncf %658 : vector<2x1x32xf32> to vector<2x1x32xbf16>
    %c0_305 = arith.constant 0 : index
    %c6_306 = arith.constant 6 : index
    %c0_307 = arith.constant 0 : index
    %660 = vector.load %arg8[%c0_305, %c6_306, %c0_307] : memref<2x8x32xbf16, #tpu.memory_space<vmem>>, vector<2x1x32xbf16>
    tpu.vector_store %arg8[%c0_305, %c6_306, %c0_307], %659 {strides = array<i32>} : memref<2x8x32xbf16, #tpu.memory_space<vmem>>, vector<2x1x32xbf16>,
    %c7 = arith.constant 7 : index
    %c0_308 = arith.constant 0 : index
    %c0_309 = arith.constant 0 : index
    %661 = vector.load %arg2[%c7, %c0_308, %c0_309] : memref<8x2x96xbf16, #tpu.memory_space<vmem>>, vector<1x2x96xbf16>
    %662 = vector.shape_cast %661 : vector<1x2x96xbf16> to vector<2x96xbf16>
    %c0_310 = arith.constant 0 : index
    %c0_311 = arith.constant 0 : index
    %c0_312 = arith.constant 0 : index
    %663 = vector.load %arg9[%c0_310, %c0_311, %c0_312] : memref<2x2x32xf32, #tpu.memory_space<vmem>>, vector<1x2x32xf32>
    %664 = vector.shape_cast %663 : vector<1x2x32xf32> to vector<2x32xf32>
    %c0_313 = arith.constant 0 : index
    %c0_314 = arith.constant 0 : index
    %c0_315 = arith.constant 0 : index
    %665 = vector.load %arg6[%c0_313, %c0_314, %c0_315] : memref<2x32x96xbf16, #tpu.memory_space<vmem>>, vector<1x32x96xbf16>
    %666 = vector.shape_cast %665 : vector<1x32x96xbf16> to vector<32x96xbf16>
    %c0_316 = arith.constant 0 : index
    %c0_317 = arith.constant 0 : index
    %c0_318 = arith.constant 0 : index
    %667 = vector.load %arg7[%c0_316, %c0_317, %c0_318] : memref<2x1x96xf32, #tpu.memory_space<vmem>>, vector<1x1x96xf32>
    %668 = vector.shape_cast %667 : vector<1x1x96xf32> to vector<1x96xf32>
    %669 = arith.truncf %664 : vector<2x32xf32> to vector<2x32xbf16>
    %cst_319 = arith.constant dense<0.000000e+00> : vector<2x96xf32>
    %670 = tpu.matmul %669, %666, %cst_319 {dimension_numbers = #tpu.dot_dimension_numbers<[1], [0], [0], [1], [0, 0, 1, 1], [], []>} : vector<2x32xbf16>, vector<32x96xbf16>, vector<2x96xf32> -> vector<2x96xf32>
    %671 = vector.broadcast %668 : vector<1x96xf32> to vector<2x96xf32>
    %672 = arith.addf %670, %671 : vector<2x96xf32>
    %673 = vector.extract_strided_slice %662 {offsets = [0, 0], sizes = [2, 32], strides = [1, 1]} : vector<2x96xbf16> to vector<2x32xbf16>
    %674 = vector.extract_strided_slice %672 {offsets = [0, 0], sizes = [2, 32], strides = [1, 1]} : vector<2x96xf32> to vector<2x32xf32>
    %675 = arith.extf %673 : vector<2x32xbf16> to vector<2x32xf32>
    %676 = arith.addf %675, %674 : vector<2x32xf32>
    %677 = arith.negf %676 : vector<2x32xf32>
    %678 = math.exp %677 : vector<2x32xf32>
    %cst_320 = arith.constant 1.000000e+00 : f32
    %679 = vector.broadcast %cst_320 : f32 to vector<2x32xf32>
    %680 = arith.addf %679, %678 : vector<2x32xf32>
    %681 = arith.divf %679, %680 : vector<2x32xf32>
    %682 = vector.extract_strided_slice %662 {offsets = [0, 32], sizes = [2, 32], strides = [1, 1]} : vector<2x96xbf16> to vector<2x32xbf16>
    %683 = vector.extract_strided_slice %672 {offsets = [0, 32], sizes = [2, 32], strides = [1, 1]} : vector<2x96xf32> to vector<2x32xf32>
    %684 = arith.extf %682 : vector<2x32xbf16> to vector<2x32xf32>
    %685 = arith.addf %684, %683 : vector<2x32xf32>
    %686 = arith.negf %685 : vector<2x32xf32>
    %687 = math.exp %686 : vector<2x32xf32>
    %cst_321 = arith.constant 1.000000e+00 : f32
    %688 = vector.broadcast %cst_321 : f32 to vector<2x32xf32>
    %689 = arith.addf %688, %687 : vector<2x32xf32>
    %690 = arith.divf %688, %689 : vector<2x32xf32>
    %691 = vector.extract_strided_slice %662 {offsets = [0, 64], sizes = [2, 32], strides = [1, 1]} : vector<2x96xbf16> to vector<2x32xbf16>
    %692 = vector.extract_strided_slice %672 {offsets = [0, 64], sizes = [2, 32], strides = [1, 1]} : vector<2x96xf32> to vector<2x32xf32>
    %693 = arith.mulf %681, %692 : vector<2x32xf32>
    %694 = arith.extf %691 : vector<2x32xbf16> to vector<2x32xf32>
    %695 = arith.addf %694, %693 : vector<2x32xf32>
    %696 = math.tanh %695 : vector<2x32xf32>
    %cst_322 = arith.constant 1.000000e+00 : f32
    %697 = vector.broadcast %cst_322 : f32 to vector<2x32xf32>
    %698 = arith.subf %697, %690 : vector<2x32xf32>
    %699 = arith.mulf %698, %696 : vector<2x32xf32>
    %700 = arith.mulf %690, %664 : vector<2x32xf32>
    %701 = arith.addf %699, %700 : vector<2x32xf32>
    %c0_323 = arith.constant 0 : index
    %c0_324 = arith.constant 0 : index
    %c0_325 = arith.constant 0 : index
    %702 = vector.load %arg9[%c0_323, %c0_324, %c0_325] : memref<2x2x32xf32, #tpu.memory_space<vmem>>, vector<1x2x32xf32>
    %703 = vector.shape_cast %702 : vector<1x2x32xf32> to vector<2x32xf32>
    %704 = vector.shape_cast %701 : vector<2x32xf32> to vector<1x2x32xf32>
    tpu.vector_store %arg9[%c0_323, %c0_324, %c0_325], %704 {strides = array<i32>} : memref<2x2x32xf32, #tpu.memory_space<vmem>>, vector<1x2x32xf32>,
    %705 = arith.truncf %701 : vector<2x32xf32> to vector<2x32xbf16>
    %c0_326 = arith.constant 0 : index
    %c0_327 = arith.constant 0 : index
    %c0_328 = arith.constant 0 : index
    %706 = vector.load %arg4[%c0_326, %c0_327, %c0_328] : memref<1x32x96xbf16, #tpu.memory_space<vmem>>, vector<1x32x96xbf16>
    %707 = vector.shape_cast %706 : vector<1x32x96xbf16> to vector<32x96xbf16>
    %cst_329 = arith.constant dense<0.000000e+00> : vector<2x96xf32>
    %708 = tpu.matmul %705, %707, %cst_329 {dimension_numbers = #tpu.dot_dimension_numbers<[1], [0], [0], [1], [0, 0, 1, 1], [], []>} : vector<2x32xbf16>, vector<32x96xbf16>, vector<2x96xf32> -> vector<2x96xf32>
    %c0_330 = arith.constant 0 : index
    %c0_331 = arith.constant 0 : index
    %c0_332 = arith.constant 0 : index
    %709 = vector.load %arg5[%c0_330, %c0_331, %c0_332] : memref<1x1x96xf32, #tpu.memory_space<vmem>>, vector<1x1x96xf32>
    %710 = vector.shape_cast %709 : vector<1x1x96xf32> to vector<1x96xf32>
    %711 = vector.broadcast %710 : vector<1x96xf32> to vector<2x96xf32>
    %712 = arith.addf %708, %711 : vector<2x96xf32>
    %c1_333 = arith.constant 1 : index
    %c0_334 = arith.constant 0 : index
    %c0_335 = arith.constant 0 : index
    %713 = vector.load %arg9[%c1_333, %c0_334, %c0_335] : memref<2x2x32xf32, #tpu.memory_space<vmem>>, vector<1x2x32xf32>
    %714 = vector.shape_cast %713 : vector<1x2x32xf32> to vector<2x32xf32>
    %c1_336 = arith.constant 1 : index
    %c0_337 = arith.constant 0 : index
    %c0_338 = arith.constant 0 : index
    %715 = vector.load %arg6[%c1_336, %c0_337, %c0_338] : memref<2x32x96xbf16, #tpu.memory_space<vmem>>, vector<1x32x96xbf16>
    %716 = vector.shape_cast %715 : vector<1x32x96xbf16> to vector<32x96xbf16>
    %c1_339 = arith.constant 1 : index
    %c0_340 = arith.constant 0 : index
    %c0_341 = arith.constant 0 : index
    %717 = vector.load %arg7[%c1_339, %c0_340, %c0_341] : memref<2x1x96xf32, #tpu.memory_space<vmem>>, vector<1x1x96xf32>
    %718 = vector.shape_cast %717 : vector<1x1x96xf32> to vector<1x96xf32>
    %719 = arith.truncf %714 : vector<2x32xf32> to vector<2x32xbf16>
    %cst_342 = arith.constant dense<0.000000e+00> : vector<2x96xf32>
    %720 = tpu.matmul %719, %716, %cst_342 {dimension_numbers = #tpu.dot_dimension_numbers<[1], [0], [0], [1], [0, 0, 1, 1], [], []>} : vector<2x32xbf16>, vector<32x96xbf16>, vector<2x96xf32> -> vector<2x96xf32>
    %721 = vector.broadcast %718 : vector<1x96xf32> to vector<2x96xf32>
    %722 = arith.addf %720, %721 : vector<2x96xf32>
    %723 = vector.extract_strided_slice %712 {offsets = [0, 0], sizes = [2, 32], strides = [1, 1]} : vector<2x96xf32> to vector<2x32xf32>
    %724 = vector.extract_strided_slice %722 {offsets = [0, 0], sizes = [2, 32], strides = [1, 1]} : vector<2x96xf32> to vector<2x32xf32>
    %725 = arith.addf %723, %724 : vector<2x32xf32>
    %726 = arith.negf %725 : vector<2x32xf32>
    %727 = math.exp %726 : vector<2x32xf32>
    %cst_343 = arith.constant 1.000000e+00 : f32
    %728 = vector.broadcast %cst_343 : f32 to vector<2x32xf32>
    %729 = arith.addf %728, %727 : vector<2x32xf32>
    %730 = arith.divf %728, %729 : vector<2x32xf32>
    %731 = vector.extract_strided_slice %712 {offsets = [0, 32], sizes = [2, 32], strides = [1, 1]} : vector<2x96xf32> to vector<2x32xf32>
    %732 = vector.extract_strided_slice %722 {offsets = [0, 32], sizes = [2, 32], strides = [1, 1]} : vector<2x96xf32> to vector<2x32xf32>
    %733 = arith.addf %731, %732 : vector<2x32xf32>
    %734 = arith.negf %733 : vector<2x32xf32>
    %735 = math.exp %734 : vector<2x32xf32>
    %cst_344 = arith.constant 1.000000e+00 : f32
    %736 = vector.broadcast %cst_344 : f32 to vector<2x32xf32>
    %737 = arith.addf %736, %735 : vector<2x32xf32>
    %738 = arith.divf %736, %737 : vector<2x32xf32>
    %739 = vector.extract_strided_slice %712 {offsets = [0, 64], sizes = [2, 32], strides = [1, 1]} : vector<2x96xf32> to vector<2x32xf32>
    %740 = vector.extract_strided_slice %722 {offsets = [0, 64], sizes = [2, 32], strides = [1, 1]} : vector<2x96xf32> to vector<2x32xf32>
    %741 = arith.mulf %730, %740 : vector<2x32xf32>
    %742 = arith.addf %739, %741 : vector<2x32xf32>
    %743 = math.tanh %742 : vector<2x32xf32>
    %cst_345 = arith.constant 1.000000e+00 : f32
    %744 = vector.broadcast %cst_345 : f32 to vector<2x32xf32>
    %745 = arith.subf %744, %738 : vector<2x32xf32>
    %746 = arith.mulf %745, %743 : vector<2x32xf32>
    %747 = arith.mulf %738, %714 : vector<2x32xf32>
    %748 = arith.addf %746, %747 : vector<2x32xf32>
    %c1_346 = arith.constant 1 : index
    %c0_347 = arith.constant 0 : index
    %c0_348 = arith.constant 0 : index
    %749 = vector.load %arg9[%c1_346, %c0_347, %c0_348] : memref<2x2x32xf32, #tpu.memory_space<vmem>>, vector<1x2x32xf32>
    %750 = vector.shape_cast %749 : vector<1x2x32xf32> to vector<2x32xf32>
    %751 = vector.shape_cast %748 : vector<2x32xf32> to vector<1x2x32xf32>
    tpu.vector_store %arg9[%c1_346, %c0_347, %c0_348], %751 {strides = array<i32>} : memref<2x2x32xf32, #tpu.memory_space<vmem>>, vector<1x2x32xf32>,
    %752 = vector.shape_cast %748 : vector<2x32xf32> to vector<2x1x32xf32>
    %753 = arith.truncf %752 : vector<2x1x32xf32> to vector<2x1x32xbf16>
    %c0_349 = arith.constant 0 : index
    %c7_350 = arith.constant 7 : index
    %c0_351 = arith.constant 0 : index
    %754 = vector.load %arg8[%c0_349, %c7_350, %c0_351] : memref<2x8x32xbf16, #tpu.memory_space<vmem>>, vector<2x1x32xbf16>
    tpu.vector_store %arg8[%c0_349, %c7_350, %c0_351], %753 {strides = array<i32>} : memref<2x8x32xbf16, #tpu.memory_space<vmem>>, vector<2x1x32xbf16>,
    return
  }
  func.func @transform_0(%arg0: i32, %arg1: i32) -> (i32, i32, i32) {
    %c0_i32 = arith.constant 0 : i32
    %c0_i32_0 = arith.constant 0 : i32
    return %arg1, %arg0, %c0_i32 : i32, i32, i32
  }
  func.func @transform_1(%arg0: i32, %arg1: i32) -> (i32, i32, i32) {
    %c0_i32 = arith.constant 0 : i32
    %c0_i32_0 = arith.constant 0 : i32
    %c0_i32_1 = arith.constant 0 : i32
    return %c0_i32, %arg0, %c0_i32_0 : i32, i32, i32
  }
  func.func @transform_2(%arg0: i32, %arg1: i32) -> (i32, i32, i32) {
    %c0_i32 = arith.constant 0 : i32
    %c0_i32_0 = arith.constant 0 : i32
    %c0_i32_1 = arith.constant 0 : i32
    %c0_i32_2 = arith.constant 0 : i32
    return %c0_i32, %c0_i32_0, %c0_i32_1 : i32, i32, i32
  }
  func.func @transform_3(%arg0: i32, %arg1: i32) -> (i32, i32, i32) {
    %c0_i32 = arith.constant 0 : i32
    %c0_i32_0 = arith.constant 0 : i32
    %c0_i32_1 = arith.constant 0 : i32
    %c0_i32_2 = arith.constant 0 : i32
    return %c0_i32, %c0_i32_0, %c0_i32_1 : i32, i32, i32
  }
  func.func @transform_4(%arg0: i32, %arg1: i32) -> (i32, i32, i32) {
    %c0_i32 = arith.constant 0 : i32
    %c0_i32_0 = arith.constant 0 : i32
    %c0_i32_1 = arith.constant 0 : i32
    %c0_i32_2 = arith.constant 0 : i32
    return %c0_i32, %c0_i32_0, %c0_i32_1 : i32, i32, i32
  }
  func.func @transform_5(%arg0: i32, %arg1: i32) -> (i32, i32, i32) {
    %c0_i32 = arith.constant 0 : i32
    %c0_i32_0 = arith.constant 0 : i32
    %c0_i32_1 = arith.constant 0 : i32
    %c0_i32_2 = arith.constant 0 : i32
    return %c0_i32, %c0_i32_0, %c0_i32_1 : i32, i32, i32
  }
  func.func @transform_6(%arg0: i32, %arg1: i32) -> (i32, i32, i32) {
    %c0_i32 = arith.constant 0 : i32
    %c0_i32_0 = arith.constant 0 : i32
    return %arg0, %arg1, %c0_i32 : i32, i32, i32
  }
}

module attributes {stable_mosaic.version = 11 : i64} {
  func.func @_linear_kernel(%arg0: i32, %arg1: i32, %arg2: memref<16x32xbf16, #tpu.memory_space<vmem>>, %arg3: memref<32x256xbf16, #tpu.memory_space<vmem>>, %arg4: memref<1x256xf32, #tpu.memory_space<vmem>>, %arg5: memref<16x256xf32, #tpu.memory_space<vmem>>) attributes {dimension_semantics = [#tpu.dimension_semantics<parallel>, #tpu.dimension_semantics<parallel>], iteration_bounds = array<i64: 1, 1>, scalar_prefetch = 0 : i64, scratch_operands = 0 : i64, tpu.core_type = #tpu.core_type<tc>, window_params = [{transform_indices = @transform_0, window_bounds = array<i64: 16, 32>}, {transform_indices = @transform_1, window_bounds = array<i64: 32, 256>}, {transform_indices = @transform_2, window_bounds = array<i64: 1, 256>}, {transform_indices = @transform_3, window_bounds = array<i64: 16, 256>}]} {
    %c0 = arith.constant 0 : index
    %c0_0 = arith.constant 0 : index
    %0 = vector.load %arg2[%c0, %c0_0] : memref<16x32xbf16, #tpu.memory_space<vmem>>, vector<16x32xbf16>
    %c0_1 = arith.constant 0 : index
    %c0_2 = arith.constant 0 : index
    %1 = vector.load %arg3[%c0_1, %c0_2] : memref<32x256xbf16, #tpu.memory_space<vmem>>, vector<32x256xbf16>
    %cst = arith.constant dense<0.000000e+00> : vector<16x256xf32>
    %2 = tpu.matmul %0, %1, %cst {dimension_numbers = #tpu.dot_dimension_numbers<[1], [0], [0], [1], [0, 0, 1, 1], [], []>} : vector<16x32xbf16>, vector<32x256xbf16>, vector<16x256xf32> -> vector<16x256xf32>
    %c0_3 = arith.constant 0 : index
    %c0_4 = arith.constant 0 : index
    %3 = vector.load %arg4[%c0_3, %c0_4] : memref<1x256xf32, #tpu.memory_space<vmem>>, vector<1x256xf32>
    %4 = vector.broadcast %3 : vector<1x256xf32> to vector<16x256xf32>
    %5 = arith.addf %2, %4 : vector<16x256xf32>
    %c0_5 = arith.constant 0 : index
    %c0_6 = arith.constant 0 : index
    %6 = vector.load %arg5[%c0_5, %c0_6] : memref<16x256xf32, #tpu.memory_space<vmem>>, vector<16x256xf32>
    tpu.vector_store %arg5[%c0_5, %c0_6], %5 {strides = array<i32>} : memref<16x256xf32, #tpu.memory_space<vmem>>, vector<16x256xf32>,
    return
  }
  func.func @transform_0(%arg0: i32, %arg1: i32) -> (i32, i32) {
    %c0_i32 = arith.constant 0 : i32
    %c0_i32_0 = arith.constant 0 : i32
    return %arg1, %c0_i32 : i32, i32
  }
  func.func @transform_1(%arg0: i32, %arg1: i32) -> (i32, i32) {
    %c0_i32 = arith.constant 0 : i32
    %c0_i32_0 = arith.constant 0 : i32
    return %c0_i32, %arg0 : i32, i32
  }
  func.func @transform_2(%arg0: i32, %arg1: i32) -> (i32, i32) {
    %c0_i32 = arith.constant 0 : i32
    %c0_i32_0 = arith.constant 0 : i32
    return %c0_i32, %arg0 : i32, i32
  }
  func.func @transform_3(%arg0: i32, %arg1: i32) -> (i32, i32) {
    %c0_i32 = arith.constant 0 : i32
    return %arg1, %arg0 : i32, i32
  }
}

</mosaic_0001>

<llo_original>
// kernel: gruvae_forward.5
$region0: #{gruvae_forward.5}
  #allocation0 [shape = 'u32[]', space=smem, size = 0x4, offset = 0x4, fixed_abs, tag = 'smem constant byte address 0x4 - core index']
  #allocation1 [shape = 'u32[144,128]{1,0:T(1,128)}', space=vmem, size = 0x12000, scoped, tag = 'internal scratch']
  %s0 = inlined_call_operand.hbm [shape: f32[24,32], index: 0, kind: input, shape index: {}]
  %s1 = inlined_call_operand.hbm [shape: f32[1,32], index: 1, kind: input, shape index: {}]
  %s2 = inlined_call_operand.hbm [shape: f32[1,32], index: 2, kind: input, shape index: {}]
  %s3 = inlined_call_operand.hbm [shape: bf16[32,96], index: 3, kind: input, shape index: {}]
  %s4 = inlined_call_operand.hbm [shape: f32[1,96], index: 4, kind: input, shape index: {}]
  %s5 = inlined_call_operand.hbm [shape: bf16[32,96], index: 5, kind: input, shape index: {}]
  %s6 = inlined_call_operand.hbm [shape: f32[1,96], index: 6, kind: input, shape index: {}]
  %s7 = inlined_call_operand.hbm [shape: bf16[24,96], index: 7, kind: output, shape index: {0}]
  %s8 = inlined_call_operand.hbm [shape: bf16[24,96], index: 8, kind: output, shape index: {1}]
  %9 = xla_tuple %s7, %s8
  %s10 = sld [smem:[#allocation0]]
  $region74: #{gruvae_forward.5} parent=0
    _
  %s12 = ssub.s32 1, %s10
  %s13 = scalar_select 0, %s12, %s10
  $region1: #{gruvae_forward.5} parent=0
    #allocation2 [shape = 'u8[12288]{0}', space=vmem, size = 0x3000, scoped, tag = 'input window, operand 0, single buffered']
    #allocation3 [shape = 's32[1]{0}', space=sflag, size = 0x4, scoped, tag = 'scoped memory for gruvae_forward.5']
    #allocation4 [shape = 's32[1]{0}', space=sflag, size = 0x4, scoped, tag = 'scoped memory for gruvae_forward.5']
    #allocation5 [shape = 'u8[512]{0}', space=vmem, size = 0x400, scoped, tag = 'input window, operand 1, single buffered']
    #allocation6 [shape = 's32[1]{0}', space=sflag, size = 0x4, scoped, tag = 'scoped memory for gruvae_forward.5']
    #allocation7 [shape = 'u8[512]{0}', space=vmem, size = 0x400, scoped, tag = 'input window, operand 2, single buffered']
    #allocation8 [shape = 'u8[8192]{0}', space=vmem, size = 0x2000, scoped, tag = 'input window, operand 3, single buffered']
    #allocation9 [shape = 's32[1]{0}', space=sflag, size = 0x4, scoped, tag = 'scoped memory for gruvae_forward.5']
    #allocation10 [shape = 'u8[512]{0}', space=vmem, size = 0x400, scoped, tag = 'input window, operand 4, single buffered']
    #allocation11 [shape = 'u8[8192]{0}', space=vmem, size = 0x2000, scoped, tag = 'input window, operand 5, single buffered']
    #allocation12 [shape = 's32[1]{0}', space=sflag, size = 0x4, scoped, tag = 'scoped memory for gruvae_forward.5']
    #allocation13 [shape = 'u8[512]{0}', space=vmem, size = 0x400, scoped, tag = 'input window, operand 6, single buffered']
    #allocation14 [shape = 'u8[6144]{0}', space=vmem, size = 0x1800, scoped, tag = 'output window, operand 0, single buffered']
    #allocation15 [shape = 'u8[6144]{0}', space=vmem, size = 0x1800, scoped, tag = 'output window, operand 1, single buffered']
    #allocation16 [shape = 's32[1]{0}', space=sflag, size = 0x4, scoped, tag = 'scoped memory for gruvae_forward.5']
    %14 = vsyncpa [#allocation3], 0
    %15 = vsyncpa [#allocation6], 0
    %16 = vsyncpa [#allocation9], 0
    %17 = vsyncpa [#allocation12], 0
    %18 = vsyncpa [#allocation4], 0
    %19 = vsyncpa [#allocation16], 0
    // Predicated region
    $region2: #{gruvae_forward.5} parent=1 // pred_check
      _
    $region3: #{gruvae_forward.5} parent=1 // pred_check_branch
      %21 = sbr.rel (0) target = $region5
    $region4: #{gruvae_forward.5} parent=1 // pred_region
      %s23 = ssub.s32 384, 384
      %24 = vsyncadd [#allocation3], %s23
      %s25 = sshll.u32 [#allocation2], 4
      %s26 = int_to_ptr.vmem [resolvable:$true] %s25
      %31 = dma.hbm_to_vmem [thread:$0]  %s0, 384, %s26, [#allocation3], 128, 128, 8
    $region5: #{gruvae_forward.5} parent=1 // pred_fallthru
      _
    // Predicated region
    $region6: #{gruvae_forward.5} parent=1 // pred_check
      _
    $region7: #{gruvae_forward.5} parent=1 // pred_check_branch
      %33 = sbr.rel (0) target = $region9
    $region8: #{gruvae_forward.5} parent=1 // pred_region
      %s35 = ssub.s32 16, 16
      %36 = vsyncadd [#allocation6], %s35
      %s38 = sshll.u32 [#allocation5], 4
      %s39 = int_to_ptr.vmem [resolvable:$true] %s38
      %41 = dma.hbm_to_vmem [thread:$0]  %s1, 16, %s39, [#allocation6]
    $region9: #{gruvae_forward.5} parent=1 // pred_fallthru
      _
    // Predicated region
    $region10: #{gruvae_forward.5} parent=1 // pred_check
      _
    $region11: #{gruvae_forward.5} parent=1 // pred_check_branch
      %43 = sbr.rel (0) target = $region13
    $region12: #{gruvae_forward.5} parent=1 // pred_region
      %s45 = ssub.s32 16, 16
      %46 = vsyncadd [#allocation6], %s45
      %s48 = sshll.u32 [#allocation7], 4
      %s49 = int_to_ptr.vmem [resolvable:$true] %s48
      %51 = dma.hbm_to_vmem [thread:$0]  %s2, 16, %s49, [#allocation6]
    $region13: #{gruvae_forward.5} parent=1 // pred_fallthru
      _
    // Predicated region
    $region14: #{gruvae_forward.5} parent=1 // pred_check
      _
    $region15: #{gruvae_forward.5} parent=1 // pred_check_branch
      %53 = sbr.rel (0) target = $region17
    $region16: #{gruvae_forward.5} parent=1 // pred_region
      %s55 = ssub.s32 256, 256
      %56 = vsyncadd [#allocation9], %s55
      %s57 = sshll.u32 [#allocation8], 4
      %s58 = int_to_ptr.vmem [resolvable:$true] %s57
      %63 = dma.hbm_to_vmem [thread:$0]  %s3, 256, %s58, [#allocation9], 64, 64, 4
    $region17: #{gruvae_forward.5} parent=1 // pred_fallthru
      _
    // Predicated region
    $region18: #{gruvae_forward.5} parent=1 // pred_check
      _
    $region19: #{gruvae_forward.5} parent=1 // pred_check_branch
      %65 = sbr.rel (0) target = $region21
    $region20: #{gruvae_forward.5} parent=1 // pred_region
      %s67 = ssub.s32 16, 16
      %68 = vsyncadd [#allocation9], %s67
      %s70 = sshll.u32 [#allocation10], 4
      %s71 = int_to_ptr.vmem [resolvable:$true] %s70
      %73 = dma.hbm_to_vmem [thread:$0]  %s4, 16, %s71, [#allocation9]
    $region21: #{gruvae_forward.5} parent=1 // pred_fallthru
      _
    // Predicated region
    $region22: #{gruvae_forward.5} parent=1 // pred_check
      _
    $region23: #{gruvae_forward.5} parent=1 // pred_check_branch
      %75 = sbr.rel (0) target = $region25
    $region24: #{gruvae_forward.5} parent=1 // pred_region
      %s77 = ssub.s32 256, 256
      %78 = vsyncadd [#allocation12], %s77
      %s79 = sshll.u32 [#allocation11], 4
      %s80 = int_to_ptr.vmem [resolvable:$true] %s79
      %85 = dma.hbm_to_vmem [thread:$0]  %s5, 256, %s80, [#allocation12], 64, 64, 4
    $region25: #{gruvae_forward.5} parent=1 // pred_fallthru
      _
    // Predicated region
    $region26: #{gruvae_forward.5} parent=1 // pred_check
      _
    $region27: #{gruvae_forward.5} parent=1 // pred_check_branch
      %87 = sbr.rel (0) target = $region29
    $region28: #{gruvae_forward.5} parent=1 // pred_region
      %s89 = ssub.s32 16, 16
      %90 = vsyncadd [#allocation12], %s89
      %s92 = sshll.u32 [#allocation13], 4
      %s93 = int_to_ptr.vmem [resolvable:$true] %s92
      %95 = dma.hbm_to_vmem [thread:$0]  %s6, 16, %s93, [#allocation12]
    $region29: #{gruvae_forward.5} parent=1 // pred_fallthru
      _
    // Predicated region
    $region30: #{gruvae_forward.5} parent=1 // pred_check
      _
    $region31: #{gruvae_forward.5} parent=1 // pred_check_branch
      %97 = sbr.rel (0) target = $region33
    $region32: #{gruvae_forward.5} parent=1 // pred_region
      %98 = dma.done [#allocation3], 384
    $region33: #{gruvae_forward.5} parent=1 // pred_fallthru
      _
    // Predicated region
    $region34: #{gruvae_forward.5} parent=1 // pred_check
      _
    $region35: #{gruvae_forward.5} parent=1 // pred_check_branch
      %100 = sbr.rel (0) target = $region37
    $region36: #{gruvae_forward.5} parent=1 // pred_region
      %101 = dma.done [#allocation6], 16
    $region37: #{gruvae_forward.5} parent=1 // pred_fallthru
      _
    // Predicated region
    $region38: #{gruvae_forward.5} parent=1 // pred_check
      _
    $region39: #{gruvae_forward.5} parent=1 // pred_check_branch
      %103 = sbr.rel (0) target = $region41
    $region40: #{gruvae_forward.5} parent=1 // pred_region
      %104 = dma.done [#allocation6], 16
    $region41: #{gruvae_forward.5} parent=1 // pred_fallthru
      _
    // Predicated region
    $region42: #{gruvae_forward.5} parent=1 // pred_check
      _
    $region43: #{gruvae_forward.5} parent=1 // pred_check_branch
      %106 = sbr.rel (0) target = $region45
    $region44: #{gruvae_forward.5} parent=1 // pred_region
      %107 = dma.done [#allocation9], 256
    $region45: #{gruvae_forward.5} parent=1 // pred_fallthru
      _
    // Predicated region
    $region46: #{gruvae_forward.5} parent=1 // pred_check
      _
    $region47: #{gruvae_forward.5} parent=1 // pred_check_branch
      %109 = sbr.rel (0) target = $region49
    $region48: #{gruvae_forward.5} parent=1 // pred_region
      %110 = dma.done [#allocation9], 16
    $region49: #{gruvae_forward.5} parent=1 // pred_fallthru
      _
    // Predicated region
    $region50: #{gruvae_forward.5} parent=1 // pred_check
      _
    $region51: #{gruvae_forward.5} parent=1 // pred_check_branch
      %112 = sbr.rel (0) target = $region53
    $region52: #{gruvae_forward.5} parent=1 // pred_region
      %113 = dma.done [#allocation12], 256
    $region53: #{gruvae_forward.5} parent=1 // pred_fallthru
      _
    // Predicated region
    $region54: #{gruvae_forward.5} parent=1 // pred_check
      _
    $region55: #{gruvae_forward.5} parent=1 // pred_check_branch
      %115 = sbr.rel (0) target = $region57
    $region56: #{gruvae_forward.5} parent=1 // pred_region
      %116 = dma.done [#allocation12], 16
    $region57: #{gruvae_forward.5} parent=1 // pred_fallthru
      _
    %v118 = vld [vmem:[#allocation2] sm:$0xff]
    %v119 = vld [vmem:[#allocation2 + $0x8] sm:$0xff]
    %v120 = vld [vmem:[#allocation2 + $0x10] sm:$0xff]
    %vm121 = vcmask 261120
    %v122 = vsel %vm121, %v118, 0.0
    %123 = vadd.xlane.f32.xlu0 %v122
    %v124 = vpop.xlane.xlu0 %123
    %v125 = vsel %vm121, %v119, 0.0
    %126 = vadd.xlane.f32.xlu0 %v125
    %v127 = vpop.xlane.xlu0 %126
    %v128 = vsel %vm121, %v120, 0.0
    %129 = vadd.xlane.f32.xlu0 %v128
    %v130 = vpop.xlane.xlu0 %129
    %v131 = vrcp.pop 32.0
    %v132 = vmul.f32 %v124, %v131
    %v133 = vmul.f32 %v127, %v131
    %v134 = vmul.f32 %v130, %v131
    %v135 = vsub.f32 %v118, %v132
    %v136 = vsub.f32 %v119, %v133
    %v137 = vsub.f32 %v120, %v134
    %v138 = vmul.f32 %v135, %v135
    %v139 = vmul.f32 %v136, %v136
    %v140 = vmul.f32 %v137, %v137
    %v141 = vsel %vm121, %v138, 0.0
    %142 = vadd.xlane.f32.xlu0 %v141
    %v143 = vpop.xlane.xlu0 %142
    %v144 = vsel %vm121, %v139, 0.0
    %145 = vadd.xlane.f32.xlu0 %v144
    %v146 = vpop.xlane.xlu0 %145
    %v147 = vsel %vm121, %v140, 0.0
    %148 = vadd.xlane.f32.xlu0 %v147
    %v149 = vpop.xlane.xlu0 %148
    %v150 = vmul.f32 %v143, %v131
    %v151 = vmul.f32 %v146, %v131
    %v152 = vmul.f32 %v149, %v131
    %v153 = vadd.f32 %v150, 1e-05
    %v154 = vadd.f32 %v151, 1e-05
    %v155 = vadd.f32 %v152, 1e-05
    %v156 = vrsqrt.pop %v153
    %v157 = vrsqrt.pop %v154
    %v158 = vrsqrt.pop %v155
    %v159 = vmul.f32 %v135, %v156
    %v160 = vmul.f32 %v136, %v157
    %v161 = vmul.f32 %v137, %v158
    %v162 = vld [vmem:[#allocation5] sm:$0x1]
    %v164 = vlaneseq
    %v165 = vshrl.u32 %v164, 7
    %v166 = vsub.s32 0, %v165
    %v167 = vrot.slane %v162, %v166
    %v169 = vmul.f32 %v159, %v167
    %v170 = vmul.f32 %v160, %v167
    %v171 = vmul.f32 %v161, %v167
    %v172 = vld [vmem:[#allocation7] sm:$0x1]
    %v174 = vlaneseq
    %v175 = vshrl.u32 %v174, 7
    %v176 = vsub.s32 0, %v175
    %v177 = vrot.slane %v172, %v176
    %v179 = vadd.f32 %v169, %v177
    %v180 = vadd.f32 %v170, %v177
    %v181 = vadd.f32 %v171, %v177
    %v182 = vpack.c.bf16 %v180, %v179
    %v183 = vpack.c.bf16 %v181, %v181
    %v184 = vld [vmem:[#allocation8] sm:$0xf]
    %v185 = vld [vmem:[#allocation8 + $0x4] sm:$0xf]
    %v186 = vld [vmem:[#allocation8 + $0x8] sm:$0xf]
    %v187 = vld [vmem:[#allocation8 + $0xc] sm:$0xf]
    %v188 = vld [vmem:[#allocation10] sm:$0x1]
    %v190 = vlaneseq
    %v191 = vshrl.u32 %v190, 7
    %v192 = vsub.s32 0, %v191
    %v193 = vrot.slane %v188, %v192
    %v199 = vunpack.c.l.b16 %v184
    %v200 = vunpack.c.l.b16 %v185
    %v201 = vunpack.c.l.b16 %v186
    %v202 = vunpack.c.l.b16 %v187
    %v203 = vpack.c.b16 %v200, %v199
    %v204 = vpack.c.b16 %v202, %v201
    %v208 = vsel %vm121, %v182, 0
    %v211 = vsel %vm121, %v183, 0
    %213 = vmatprep.subr.bf16.mxu0 0
    %214 = vmatpush1.bf16.msra.mxu0 %v203
    %215 = vmatprep.subr.bf16.mxu0 0
    %216 = vmatpush1.bf16.msra.mxu0 %v204
    %217 = vmatprep.subr.bf16.mxu0 0
    %218 = vmatpush1.bf16.msra.mxu0 0
    %219 = vmatprep.subr.bf16.mxu0 0
    %220 = vmatpush1.bf16.msra.mxu0 0
    %221 = vmatprep.subr.bf16.mxu0 0
    %222 = vmatpush1.bf16.msra.mxu0 0
    %223 = vmatprep.subr.bf16.mxu0 0
    %224 = vmatpush1.bf16.msra.mxu0 0
    %225 = vmatprep.subr.bf16.mxu0 0
    %226 = vmatpush1.bf16.msra.mxu0 0
    %227 = vmatprep.subr.bf16.mxu0 0
    %228 = vmatpush1.bf16.msra.mxu0 0
    %229 = vmatprep.subr.bf16.mxu0 0
    %230 = vmatpush1.bf16.msra.mxu0 0
    %231 = vmatprep.subr.bf16.mxu0 0
    %232 = vmatpush1.bf16.msra.mxu0 0
    %233 = vmatprep.subr.bf16.mxu0 0
    %234 = vmatpush1.bf16.msra.mxu0 0
    %235 = vmatprep.subr.bf16.mxu0 0
    %236 = vmatpush1.bf16.msra.mxu0 0
    %237 = vmatprep.subr.bf16.mxu0 0
    %238 = vmatpush1.bf16.msra.mxu0 0
    %239 = vmatprep.subr.bf16.mxu0 0
    %240 = vmatpush1.bf16.msra.mxu0 0
    %241 = vmatprep.subr.bf16.mxu0 0
    %242 = vmatpush1.bf16.msra.mxu0 0
    %243 = vmatprep.subr.bf16.mxu0 0
    %244 = vmatpush1.bf16.msra.mxu0 0
    %245 = vmatprep.mubr.bf16.mxu0 0
    %246 = vmatmul.mubr.bf16.gmra.mrb[0].mxu0 %v208
    %v247 = vpop.f32.mrb[0].mxu0
    %v248 = vadd.f32 %v193, %v247
    %v249 = vpop.f32.mrb[0].mxu0
    %v250 = vpop.f32.mrb[0].mxu0
    %v251 = vadd.f32 %v193, %v250
    %v252 = vpop.f32.mrb[0].mxu0
    %253 = vmatprep.mubr.bf16.mxu0 0
    %254 = vmatmul.mubr.bf16.gmra.mrb[0].mxu0 %v211
    %v255 = vpop.f32.mrb[0].mxu0
    %v256 = vadd.f32 %v193, %v255
    %v257 = vpop.f32.mrb[0].mxu0
    %v258 = vpop.f32.mrb[0].mxu0
    %v259 = vpop.f32.mrb[0].mxu0
    %260 = vdwg.mxu0
    %v261 = vpack.c.bf16 %v251, %v248
    %v262 = vpack.c.bf16 %v256, %v256
    %v265 = vunpack.c.l.b16 %v261
    %v266 = vunpack.c.h.b16 %v261
    %v267 = vunpack.c.l.b16 %v262
    %v268 = vpack.c.b16 %v265, %v265
    %v269 = vpack.c.b16 %v266, %v266
    %v270 = vpack.c.b16 %v267, %v267
    %vm274 = vcmask 781312
    %275 = vst.msk [vmem:[#allocation14] sm:$0xf] %vm274, %v268
    %276 = vst.msk [vmem:[#allocation14 + $0x4] sm:$0xf] %vm274, %v269
    %277 = vst.msk [vmem:[#allocation14 + $0x8] sm:$0xf] %vm274, %v270
    %v278 = vld [vmem:[#allocation11] sm:$0xf]
    %v279 = vld [vmem:[#allocation11 + $0x4] sm:$0xf]
    %v280 = vld [vmem:[#allocation11 + $0x8] sm:$0xf]
    %v281 = vld [vmem:[#allocation11 + $0xc] sm:$0xf]
    %v282 = vld [vmem:[#allocation13] sm:$0x1]
    %v284 = vlaneseq
    %v285 = vshrl.u32 %v284, 7
    %v286 = vsub.s32 0, %v285
    %v287 = vrot.slane %v282, %v286
    %v293 = vunpack.c.l.b16 %v278
    %v294 = vunpack.c.l.b16 %v279
    %v295 = vunpack.c.l.b16 %v280
    %v296 = vunpack.c.l.b16 %v281
    %v297 = vpack.c.b16 %v294, %v293
    %v298 = vpack.c.b16 %v296, %v295
    %301 = vmatprep.subr.bf16.mxu0 0
    %302 = vmatpush1.bf16.msra.mxu0 %v297
    %303 = vmatprep.subr.bf16.mxu0 0
    %304 = vmatpush1.bf16.msra.mxu0 %v298
    %305 = vmatprep.subr.bf16.mxu0 0
    %306 = vmatpush1.bf16.msra.mxu0 0
    %307 = vmatprep.subr.bf16.mxu0 0
    %308 = vmatpush1.bf16.msra.mxu0 0
    %309 = vmatprep.subr.bf16.mxu0 0
    %310 = vmatpush1.bf16.msra.mxu0 0
    %311 = vmatprep.subr.bf16.mxu0 0
    %312 = vmatpush1.bf16.msra.mxu0 0
    %313 = vmatprep.subr.bf16.mxu0 0
    %314 = vmatpush1.bf16.msra.mxu0 0
    %315 = vmatprep.subr.bf16.mxu0 0
    %316 = vmatpush1.bf16.msra.mxu0 0
    %317 = vmatprep.subr.bf16.mxu0 0
    %318 = vmatpush1.bf16.msra.mxu0 0
    %319 = vmatprep.subr.bf16.mxu0 0
    %320 = vmatpush1.bf16.msra.mxu0 0
    %321 = vmatprep.subr.bf16.mxu0 0
    %322 = vmatpush1.bf16.msra.mxu0 0
    %323 = vmatprep.subr.bf16.mxu0 0
    %324 = vmatpush1.bf16.msra.mxu0 0
    %325 = vmatprep.subr.bf16.mxu0 0
    %326 = vmatpush1.bf16.msra.mxu0 0
    %327 = vmatprep.subr.bf16.mxu0 0
    %328 = vmatpush1.bf16.msra.mxu0 0
    %329 = vmatprep.subr.bf16.mxu0 0
    %330 = vmatpush1.bf16.msra.mxu0 0
    %331 = vmatprep.subr.bf16.mxu0 0
    %332 = vmatpush1.bf16.msra.mxu0 0
    %333 = vmatprep.mubr.bf16.mxu0 0
    %334 = vmatmul.mubr.bf16.gmra.mrb[0].mxu0 %v208
    %v335 = vpop.f32.mrb[0].mxu0
    %v336 = vadd.f32 %v287, %v335
    %v337 = vpop.f32.mrb[0].mxu0
    %v338 = vpop.f32.mrb[0].mxu0
    %v339 = vadd.f32 %v287, %v338
    %v340 = vpop.f32.mrb[0].mxu0
    %341 = vmatprep.mubr.bf16.mxu0 0
    %342 = vmatmul.mubr.bf16.gmra.mrb[0].mxu0 %v211
    %v343 = vpop.f32.mrb[0].mxu0
    %v344 = vadd.f32 %v287, %v343
    %v345 = vpop.f32.mrb[0].mxu0
    %v346 = vpop.f32.mrb[0].mxu0
    %v347 = vpop.f32.mrb[0].mxu0
    %348 = vdwg.mxu0
    %v349 = vpack.c.bf16 %v339, %v336
    %v350 = vpack.c.bf16 %v344, %v344
    %v353 = vunpack.c.l.b16 %v349
    %v354 = vunpack.c.h.b16 %v349
    %v355 = vunpack.c.l.b16 %v350
    %v356 = vpack.c.b16 %v353, %v353
    %v357 = vpack.c.b16 %v354, %v354
    %v358 = vpack.c.b16 %v355, %v355
    %362 = vst.msk [vmem:[#allocation15] sm:$0xf] %vm274, %v356
    %363 = vst.msk [vmem:[#allocation15 + $0x4] sm:$0xf] %vm274, %v357
    %364 = vst.msk [vmem:[#allocation15 + $0x8] sm:$0xf] %vm274, %v358
    // Predicated region
    $region58: #{gruvae_forward.5} parent=1 // pred_check
      _
    $region59: #{gruvae_forward.5} parent=1 // pred_check_branch
      %366 = sbr.rel (0) target = $region61
    $region60: #{gruvae_forward.5} parent=1 // pred_region
      %s368 = ssub.s32 192, 192
      %369 = vsyncadd [#allocation4], %s368
      %s370 = sshll.u32 [#allocation14], 4
      %s371 = int_to_ptr.vmem [resolvable:$true] %s370
      %376 = dma.vmem_to_hbm [thread:$0]  %s371, 192, %s7, [#allocation4], 64, 64, 4
    $region61: #{gruvae_forward.5} parent=1 // pred_fallthru
      _
    // Predicated region
    $region62: #{gruvae_forward.5} parent=1 // pred_check
      _
    $region63: #{gruvae_forward.5} parent=1 // pred_check_branch
      %378 = sbr.rel (0) target = $region65
    $region64: #{gruvae_forward.5} parent=1 // pred_region
      %s380 = ssub.s32 192, 192
      %381 = vsyncadd [#allocation16], %s380
      %s382 = sshll.u32 [#allocation15], 4
      %s383 = int_to_ptr.vmem [resolvable:$true] %s382
      %388 = dma.vmem_to_hbm [thread:$0]  %s383, 192, %s8, [#allocation16], 64, 64, 4
    $region65: #{gruvae_forward.5} parent=1 // pred_fallthru
      _
    // Predicated region
    $region66: #{gruvae_forward.5} parent=1 // pred_check
      _
    $region67: #{gruvae_forward.5} parent=1 // pred_check_branch
      %390 = sbr.rel (0) target = $region69
    $region68: #{gruvae_forward.5} parent=1 // pred_region
      %391 = dma.done [#allocation4], 192
    $region69: #{gruvae_forward.5} parent=1 // pred_fallthru
      _
    // Predicated region
    $region70: #{gruvae_forward.5} parent=1 // pred_check
      _
    $region71: #{gruvae_forward.5} parent=1 // pred_check_branch
      %393 = sbr.rel (0) target = $region73
    $region72: #{gruvae_forward.5} parent=1 // pred_region
      %394 = dma.done [#allocation16], 192
    $region73: #{gruvae_forward.5} parent=1 // pred_fallthru
      _
    %395 = vsyncpa [#allocation3], 1
    %396 = vsyncpa [#allocation6], 1
    %397 = vsyncpa [#allocation9], 1
    %398 = vsyncpa [#allocation12], 1
    %399 = vsyncpa [#allocation4], 1
    %400 = vsyncpa [#allocation16], 1

// kernel: gruvae_forward.7
$region0: #{gruvae_forward.7}
  #allocation0 [shape = 'u32[]', space=smem, size = 0x4, offset = 0x4, fixed_abs, tag = 'smem constant byte address 0x4 - core index']
  #allocation1 [shape = 'u32[144,128]{1,0:T(1,128)}', space=vmem, size = 0x12000, scoped, tag = 'internal scratch']
  %s0 = inlined_call_operand.vmem [shape: f32[4,32], index: 0, kind: input, shape index: {}]
  %s1 = inlined_call_operand.vmem [shape: f32[32,32], index: 1, kind: input, shape index: {}]
  %s2 = inlined_call_operand.vmem [shape: f32[1,32], index: 2, kind: input, shape index: {}]
  %s3 = inlined_call_operand.vmem [shape: f32[8,32], index: 3, kind: input, shape index: {}]
  %s4 = inlined_call_operand.vmem [shape: f32[8,32], index: 4, kind: input, shape index: {}]
  %s5 = inlined_call_operand.vmem [shape: f32[1,32], index: 5, kind: input, shape index: {}]
  %s6 = inlined_call_operand.vmem [shape: f32[4,8], index: 6, kind: input, shape index: {}]
  %s7 = inlined_call_operand.vmem [shape: f32[4,8], index: 7, kind: input, shape index: {}]
  %s8 = inlined_call_operand.hbm [shape: f32[4,32], index: 8, kind: output, shape index: {0}]
  %s9 = inlined_call_operand.hbm [shape: f32[4,8], index: 9, kind: output, shape index: {1}]
  %s10 = inlined_call_operand.hbm [shape: f32[4,8], index: 10, kind: output, shape index: {2}]
  %s11 = inlined_call_operand.hbm [shape: f32[4,32], index: 11, kind: output, shape index: {3}]
  %12 = xla_tuple %s8, %s9, %s10, %s11
  %s13 = sld [smem:[#allocation0]]
  $region66: #{gruvae_forward.7} parent=0
    _
  %s15 = ssub.s32 1, %s13
  %s16 = scalar_select 0, %s15, %s13
  $region1: #{gruvae_forward.7} parent=0
    #allocation2 [shape = 'u8[2048]{0}', space=vmem, size = 0x800, scoped, tag = 'output window, operand 0, single buffered']
    #allocation3 [shape = 's32[1]{0}', space=sflag, size = 0x4, scoped, tag = 'scoped memory for gruvae_forward.7']
    #allocation4 [shape = 'u8[2048]{0}', space=vmem, size = 0x800, scoped, tag = 'output window, operand 1, single buffered']
    #allocation5 [shape = 's32[1]{0}', space=sflag, size = 0x4, scoped, tag = 'scoped memory for gruvae_forward.7']
    #allocation6 [shape = 'u8[2048]{0}', space=vmem, size = 0x800, scoped, tag = 'output window, operand 2, single buffered']
    #allocation7 [shape = 'u8[2048]{0}', space=vmem, size = 0x800, scoped, tag = 'output window, operand 3, single buffered']
    #allocation8 [shape = 's32[1]{0}', space=sflag, size = 0x4, scoped, tag = 'scoped memory for gruvae_forward.7']
    %17 = vsyncpa [#allocation3], 0
    %18 = vsyncpa [#allocation5], 0
    %19 = vsyncpa [#allocation8], 0
    // Predicated region
    $region2: #{gruvae_forward.7} parent=1 // pred_check
      _
    $region3: #{gruvae_forward.7} parent=1 // pred_check_branch
      %21 = sbr.rel (0) target = $region5
    $region4: #{gruvae_forward.7} parent=1 // pred_region
      _
    $region5: #{gruvae_forward.7} parent=1 // pred_fallthru
      _
    // Predicated region
    $region6: #{gruvae_forward.7} parent=1 // pred_check
      _
    $region7: #{gruvae_forward.7} parent=1 // pred_check_branch
      %23 = sbr.rel (0) target = $region9
    $region8: #{gruvae_forward.7} parent=1 // pred_region
      _
    $region9: #{gruvae_forward.7} parent=1 // pred_fallthru
      _
    // Predicated region
    $region10: #{gruvae_forward.7} parent=1 // pred_check
      _
    $region11: #{gruvae_forward.7} parent=1 // pred_check_branch
      %25 = sbr.rel (0) target = $region13
    $region12: #{gruvae_forward.7} parent=1 // pred_region
      _
    $region13: #{gruvae_forward.7} parent=1 // pred_fallthru
      _
    // Predicated region
    $region14: #{gruvae_forward.7} parent=1 // pred_check
      _
    $region15: #{gruvae_forward.7} parent=1 // pred_check_branch
      %27 = sbr.rel (0) target = $region17
    $region16: #{gruvae_forward.7} parent=1 // pred_region
      _
    $region17: #{gruvae_forward.7} parent=1 // pred_fallthru
      _
    // Predicated region
    $region18: #{gruvae_forward.7} parent=1 // pred_check
      _
    $region19: #{gruvae_forward.7} parent=1 // pred_check_branch
      %29 = sbr.rel (0) target = $region21
    $region20: #{gruvae_forward.7} parent=1 // pred_region
      _
    $region21: #{gruvae_forward.7} parent=1 // pred_fallthru
      _
    // Predicated region
    $region22: #{gruvae_forward.7} parent=1 // pred_check
      _
    $region23: #{gruvae_forward.7} parent=1 // pred_check_branch
      %31 = sbr.rel (0) target = $region25
    $region24: #{gruvae_forward.7} parent=1 // pred_region
      _
    $region25: #{gruvae_forward.7} parent=1 // pred_fallthru
      _
    // Predicated region
    $region26: #{gruvae_forward.7} parent=1 // pred_check
      _
    $region27: #{gruvae_forward.7} parent=1 // pred_check_branch
      %33 = sbr.rel (0) target = $region29
    $region28: #{gruvae_forward.7} parent=1 // pred_region
      _
    $region29: #{gruvae_forward.7} parent=1 // pred_fallthru
      _
    // Predicated region
    $region30: #{gruvae_forward.7} parent=1 // pred_check
      _
    $region31: #{gruvae_forward.7} parent=1 // pred_check_branch
      %35 = sbr.rel (0) target = $region33
    $region32: #{gruvae_forward.7} parent=1 // pred_region
      _
    $region33: #{gruvae_forward.7} parent=1 // pred_fallthru
      _
    %v36 = vld [vmem:[%s0] sm:$0xf]
    %v37 = vld [vmem:[%s1] sm:$0xff]
    %v38 = vld [vmem:[%s1 + $0x8] sm:$0xff]
    %v39 = vld [vmem:[%s1 + $0x10] sm:$0xff]
    %v40 = vld [vmem:[%s1 + $0x18] sm:$0xff]
    %v41 = vld [vmem:[%s2] sm:$0x1]
    %v43 = vlaneseq
    %v44 = vshrl.u32 %v43, 7
    %v45 = vsub.s32 0, %v44
    %v46 = vrot.slane %v41, %v45
    %vm48 = vcmask 261120
    %v50 = vsel %vm48, %v36, 0
    %52 = vmatprep.subr.mxu0 0.0
    %53 = vmatpush1.msra.mxu0 %v37
    %54 = vmatprep.subr.mxu0 0.0
    %55 = vmatpush1.msra.mxu0 %v38
    %56 = vmatprep.subr.mxu0 0.0
    %57 = vmatpush1.msra.mxu0 %v39
    %58 = vmatprep.subr.mxu0 0.0
    %59 = vmatpush1.msra.mxu0 %v40
    %60 = vmatprep.subr.mxu0 0.0
    %61 = vmatpush1.msra.mxu0 0.0
    %62 = vmatprep.subr.mxu0 0.0
    %63 = vmatpush1.msra.mxu0 0.0
    %64 = vmatprep.subr.mxu0 0.0
    %65 = vmatpush1.msra.mxu0 0.0
    %66 = vmatprep.subr.mxu0 0.0
    %67 = vmatpush1.msra.mxu0 0.0
    %68 = vmatprep.subr.mxu0 0.0
    %69 = vmatpush1.msra.mxu0 0.0
    %70 = vmatprep.subr.mxu0 0.0
    %71 = vmatpush1.msra.mxu0 0.0
    %72 = vmatprep.subr.mxu0 0.0
    %73 = vmatpush1.msra.mxu0 0.0
    %74 = vmatprep.subr.mxu0 0.0
    %75 = vmatpush1.msra.mxu0 0.0
    %76 = vmatprep.subr.mxu0 0.0
    %77 = vmatpush1.msra.mxu0 0.0
    %78 = vmatprep.subr.mxu0 0.0
    %79 = vmatpush1.msra.mxu0 0.0
    %80 = vmatprep.subr.mxu0 0.0
    %81 = vmatpush1.msra.mxu0 0.0
    %82 = vmatprep.subr.mxu0 0.0
    %83 = vmatpush1.msra.mxu0 0.0
    %84 = vmatprep.subr.mxu0 0.0
    %85 = vmatpush1.msra.mxu0 0.0
    %86 = vmatprep.subr.mxu0 0.0
    %87 = vmatpush1.msra.mxu0 0.0
    %88 = vmatprep.subr.mxu0 0.0
    %89 = vmatpush1.msra.mxu0 0.0
    %90 = vmatprep.subr.mxu0 0.0
    %91 = vmatpush1.msra.mxu0 0.0
    %92 = vmatprep.subr.mxu0 0.0
    %93 = vmatpush1.msra.mxu0 0.0
    %94 = vmatprep.subr.mxu0 0.0
    %95 = vmatpush1.msra.mxu0 0.0
    %96 = vmatprep.subr.mxu0 0.0
    %97 = vmatpush1.msra.mxu0 0.0
    %98 = vmatprep.subr.mxu0 0.0
    %99 = vmatpush1.msra.mxu0 0.0
    %100 = vmatprep.subr.mxu0 0.0
    %101 = vmatpush1.msra.mxu0 0.0
    %102 = vmatprep.subr.mxu0 0.0
    %103 = vmatpush1.msra.mxu0 0.0
    %104 = vmatprep.subr.mxu0 0.0
    %105 = vmatpush1.msra.mxu0 0.0
    %106 = vmatprep.subr.mxu0 0.0
    %107 = vmatpush1.msra.mxu0 0.0
    %108 = vmatprep.subr.mxu0 0.0
    %109 = vmatpush1.msra.mxu0 0.0
    %110 = vmatprep.subr.mxu0 0.0
    %111 = vmatpush1.msra.mxu0 0.0
    %112 = vmatprep.subr.mxu0 0.0
    %113 = vmatpush1.msra.mxu0 0.0
    %114 = vmatprep.subr.mxu0 0.0
    %115 = vmatpush1.msra.mxu0 0.0
    %116 = vmatprep.mubr.f32.mxu0 0.0
    %117 = vmatmul.mubr.f32.gmra.mrb[0].mxu0 %v50
    %v118 = vpop.f32.mrb[0].mxu0
    %v119 = vadd.f32 %v46, %v118
    %v120 = vpop.f32.mrb[0].mxu0
    %121 = vdwg.mxu0
    %v122 = vld [vmem:[%s6] sm:$0xf]
    %v123 = vmul.f32 %v119, 0.5
    %v124 = vmul.f32 %v123, 1.442695
    %v125 = vpow.pop %v124
    %127 = vrot.lane.b32.xlu0 %v125, 120
    %v128 = vpop.permute.xlu0 %127
    %v130 = vmul.f32 %v122, %v128
    %v131 = vadd.f32 %v119, %v130
    %v132 = vld [vmem:[%s7] sm:$0xf]
    %133 = vrot.lane.b32.xlu0 %v125, 104
    %v134 = vpop.permute.xlu0 %133
    %v136 = vmul.f32 %v132, %v134
    %138 = vrot.lane.b32.xlu0 %v136, 16
    %v139 = vpop.permute.xlu0 %138
    %v141 = vadd.f32 %v119, %v139
    %v142 = vld [vmem:[%s3] sm:$0xff]
    %v143 = vld [vmem:[%s4] sm:$0xff]
    %145 = vrot.lane.b32.xlu0 %v141, 112
    %v146 = vpop.permute.xlu0 %145
    %vm147 = vcmask 64512
    %v148 = vsel %vm147, %v146, 0
    %150 = vmatprep.subr.mxu0 0.0
    %151 = vmatpush1.msra.mxu0 %v143
    %152 = vmatprep.subr.mxu0 0.0
    %153 = vmatpush1.msra.mxu0 0.0
    %154 = vmatprep.subr.mxu0 0.0
    %155 = vmatpush1.msra.mxu0 0.0
    %156 = vmatprep.subr.mxu0 0.0
    %157 = vmatpush1.msra.mxu0 0.0
    %158 = vmatprep.subr.mxu0 0.0
    %159 = vmatpush1.msra.mxu0 0.0
    %160 = vmatprep.subr.mxu0 0.0
    %161 = vmatpush1.msra.mxu0 0.0
    %162 = vmatprep.subr.mxu0 0.0
    %163 = vmatpush1.msra.mxu0 0.0
    %164 = vmatprep.subr.mxu0 0.0
    %165 = vmatpush1.msra.mxu0 0.0
    %166 = vmatprep.subr.mxu0 0.0
    %167 = vmatpush1.msra.mxu0 0.0
    %168 = vmatprep.subr.mxu0 0.0
    %169 = vmatpush1.msra.mxu0 0.0
    %170 = vmatprep.subr.mxu0 0.0
    %171 = vmatpush1.msra.mxu0 0.0
    %172 = vmatprep.subr.mxu0 0.0
    %173 = vmatpush1.msra.mxu0 0.0
    %174 = vmatprep.subr.mxu0 0.0
    %175 = vmatpush1.msra.mxu0 0.0
    %176 = vmatprep.subr.mxu0 0.0
    %177 = vmatpush1.msra.mxu0 0.0
    %178 = vmatprep.subr.mxu0 0.0
    %179 = vmatpush1.msra.mxu0 0.0
    %180 = vmatprep.subr.mxu0 0.0
    %181 = vmatpush1.msra.mxu0 0.0
    %182 = vmatprep.subr.mxu0 0.0
    %183 = vmatpush1.msra.mxu0 0.0
    %184 = vmatprep.subr.mxu0 0.0
    %185 = vmatpush1.msra.mxu0 0.0
    %186 = vmatprep.subr.mxu0 0.0
    %187 = vmatpush1.msra.mxu0 0.0
    %188 = vmatprep.subr.mxu0 0.0
    %189 = vmatpush1.msra.mxu0 0.0
    %190 = vmatprep.subr.mxu0 0.0
    %191 = vmatpush1.msra.mxu0 0.0
    %192 = vmatprep.subr.mxu0 0.0
    %193 = vmatpush1.msra.mxu0 0.0
    %194 = vmatprep.subr.mxu0 0.0
    %195 = vmatpush1.msra.mxu0 0.0
    %196 = vmatprep.subr.mxu0 0.0
    %197 = vmatpush1.msra.mxu0 0.0
    %198 = vmatprep.subr.mxu0 0.0
    %199 = vmatpush1.msra.mxu0 0.0
    %200 = vmatprep.subr.mxu0 0.0
    %201 = vmatpush1.msra.mxu0 0.0
    %202 = vmatprep.subr.mxu0 0.0
    %203 = vmatpush1.msra.mxu0 0.0
    %204 = vmatprep.subr.mxu0 0.0
    %205 = vmatpush1.msra.mxu0 0.0
    %206 = vmatprep.subr.mxu0 0.0
    %207 = vmatpush1.msra.mxu0 0.0
    %208 = vmatprep.subr.mxu0 0.0
    %209 = vmatpush1.msra.mxu0 0.0
    %210 = vmatprep.subr.mxu0 0.0
    %211 = vmatpush1.msra.mxu0 0.0
    %212 = vmatprep.subr.mxu0 0.0
    %213 = vmatpush1.msra.mxu0 0.0
    %214 = vmatprep.mubr.f32.mxu0 0.0
    %215 = vmatmul.mubr.f32.gmra.mrb[0].mxu0 %v148
    %v216 = vpop.f32.mrb[0].mxu0
    %v217 = vadd.f32 0.0, %v216
    %v218 = vpop.f32.mrb[0].mxu0
    %219 = vdwg.mxu0
    %v221 = vsel %vm147, %v131, 0
    %223 = vmatprep.subr.mxu0 0.0
    %224 = vmatpush1.msra.mxu0 %v142
    %225 = vmatprep.subr.mxu0 0.0
    %226 = vmatpush1.msra.mxu0 0.0
    %227 = vmatprep.subr.mxu0 0.0
    %228 = vmatpush1.msra.mxu0 0.0
    %229 = vmatprep.subr.mxu0 0.0
    %230 = vmatpush1.msra.mxu0 0.0
    %231 = vmatprep.subr.mxu0 0.0
    %232 = vmatpush1.msra.mxu0 0.0
    %233 = vmatprep.subr.mxu0 0.0
    %234 = vmatpush1.msra.mxu0 0.0
    %235 = vmatprep.subr.mxu0 0.0
    %236 = vmatpush1.msra.mxu0 0.0
    %237 = vmatprep.subr.mxu0 0.0
    %238 = vmatpush1.msra.mxu0 0.0
    %239 = vmatprep.subr.mxu0 0.0
    %240 = vmatpush1.msra.mxu0 0.0
    %241 = vmatprep.subr.mxu0 0.0
    %242 = vmatpush1.msra.mxu0 0.0
    %243 = vmatprep.subr.mxu0 0.0
    %244 = vmatpush1.msra.mxu0 0.0
    %245 = vmatprep.subr.mxu0 0.0
    %246 = vmatpush1.msra.mxu0 0.0
    %247 = vmatprep.subr.mxu0 0.0
    %248 = vmatpush1.msra.mxu0 0.0
    %249 = vmatprep.subr.mxu0 0.0
    %250 = vmatpush1.msra.mxu0 0.0
    %251 = vmatprep.subr.mxu0 0.0
    %252 = vmatpush1.msra.mxu0 0.0
    %253 = vmatprep.subr.mxu0 0.0
    %254 = vmatpush1.msra.mxu0 0.0
    %255 = vmatprep.subr.mxu0 0.0
    %256 = vmatpush1.msra.mxu0 0.0
    %257 = vmatprep.subr.mxu0 0.0
    %258 = vmatpush1.msra.mxu0 0.0
    %259 = vmatprep.subr.mxu0 0.0
    %260 = vmatpush1.msra.mxu0 0.0
    %261 = vmatprep.subr.mxu0 0.0
    %262 = vmatpush1.msra.mxu0 0.0
    %263 = vmatprep.subr.mxu0 0.0
    %264 = vmatpush1.msra.mxu0 0.0
    %265 = vmatprep.subr.mxu0 0.0
    %266 = vmatpush1.msra.mxu0 0.0
    %267 = vmatprep.subr.mxu0 0.0
    %268 = vmatpush1.msra.mxu0 0.0
    %269 = vmatprep.subr.mxu0 0.0
    %270 = vmatpush1.msra.mxu0 0.0
    %271 = vmatprep.subr.mxu0 0.0
    %272 = vmatpush1.msra.mxu0 0.0
    %273 = vmatprep.subr.mxu0 0.0
    %274 = vmatpush1.msra.mxu0 0.0
    %275 = vmatprep.subr.mxu0 0.0
    %276 = vmatpush1.msra.mxu0 0.0
    %277 = vmatprep.subr.mxu0 0.0
    %278 = vmatpush1.msra.mxu0 0.0
    %279 = vmatprep.subr.mxu0 0.0
    %280 = vmatpush1.msra.mxu0 0.0
    %281 = vmatprep.subr.mxu0 0.0
    %282 = vmatpush1.msra.mxu0 0.0
    %283 = vmatprep.subr.mxu0 0.0
    %284 = vmatpush1.msra.mxu0 0.0
    %285 = vmatprep.subr.mxu0 0.0
    %286 = vmatpush1.msra.mxu0 0.0
    %287 = vmatprep.mubr.f32.mxu0 0.0
    %288 = vmatmul.mubr.f32.gmra.mrb[0].mxu0 %v221
    %v289 = vpop.f32.mrb[0].mxu0
    %v290 = vadd.f32 %v217, %v289
    %v291 = vpop.f32.mrb[0].mxu0
    %292 = vdwg.mxu0
    %v293 = vld [vmem:[%s5] sm:$0x1]
    %v295 = vlaneseq
    %v296 = vshrl.u32 %v295, 7
    %v297 = vsub.s32 0, %v296
    %v298 = vrot.slane %v293, %v297
    %v300 = vadd.f32 %v290, %v298
    %vm301 = vcmask 257024
    %302 = vst.msk [vmem:[#allocation2] sm:$0xf] %vm301, %v119
    %vm303 = vcmask 60416
    %304 = vst.msk [vmem:[#allocation4] sm:$0xf] %vm303, %v131
    %306 = vst.msk [vmem:[#allocation6] sm:$0xf] %vm303, %v146
    %307 = vst.msk [vmem:[#allocation7] sm:$0xf] %vm301, %v300
    // Predicated region
    $region34: #{gruvae_forward.7} parent=1 // pred_check
      _
    $region35: #{gruvae_forward.7} parent=1 // pred_check_branch
      %309 = sbr.rel (0) target = $region37
    $region36: #{gruvae_forward.7} parent=1 // pred_region
      %s311 = ssub.s32 64, 64
      %312 = vsyncadd [#allocation3], %s311
      %s314 = sshll.u32 [#allocation2], 4
      %s315 = int_to_ptr.vmem [resolvable:$true] %s314
      %317 = dma.vmem_to_hbm [thread:$0]  %s315, 64, %s8, [#allocation3]
    $region37: #{gruvae_forward.7} parent=1 // pred_fallthru
      _
    // Predicated region
    $region38: #{gruvae_forward.7} parent=1 // pred_check
      _
    $region39: #{gruvae_forward.7} parent=1 // pred_check_branch
      %319 = sbr.rel (0) target = $region41
    $region40: #{gruvae_forward.7} parent=1 // pred_region
      %s321 = ssub.s32 64, 64
      %322 = vsyncadd [#allocation5], %s321
      %s324 = sshll.u32 [#allocation4], 4
      %s325 = int_to_ptr.vmem [resolvable:$true] %s324
      %327 = dma.vmem_to_hbm [thread:$0]  %s325, 64, %s9, [#allocation5]
    $region41: #{gruvae_forward.7} parent=1 // pred_fallthru
      _
    // Predicated region
    $region42: #{gruvae_forward.7} parent=1 // pred_check
      _
    $region43: #{gruvae_forward.7} parent=1 // pred_check_branch
      %329 = sbr.rel (0) target = $region45
    $region44: #{gruvae_forward.7} parent=1 // pred_region
      %s331 = ssub.s32 64, 64
      %332 = vsyncadd [#allocation5], %s331
      %s334 = sshll.u32 [#allocation6], 4
      %s335 = int_to_ptr.vmem [resolvable:$true] %s334
      %337 = dma.vmem_to_hbm [thread:$0]  %s335, 64, %s10, [#allocation5]
    $region45: #{gruvae_forward.7} parent=1 // pred_fallthru
      _
    // Predicated region
    $region46: #{gruvae_forward.7} parent=1 // pred_check
      _
    $region47: #{gruvae_forward.7} parent=1 // pred_check_branch
      %339 = sbr.rel (0) target = $region49
    $region48: #{gruvae_forward.7} parent=1 // pred_region
      %s341 = ssub.s32 64, 64
      %342 = vsyncadd [#allocation8], %s341
      %s344 = sshll.u32 [#allocation7], 4
      %s345 = int_to_ptr.vmem [resolvable:$true] %s344
      %347 = dma.vmem_to_hbm [thread:$0]  %s345, 64, %s11, [#allocation8]
    $region49: #{gruvae_forward.7} parent=1 // pred_fallthru
      _
    // Predicated region
    $region50: #{gruvae_forward.7} parent=1 // pred_check
      _
    $region51: #{gruvae_forward.7} parent=1 // pred_check_branch
      %349 = sbr.rel (0) target = $region53
    $region52: #{gruvae_forward.7} parent=1 // pred_region
      %350 = dma.done [#allocation3], 64
    $region53: #{gruvae_forward.7} parent=1 // pred_fallthru
      _
    // Predicated region
    $region54: #{gruvae_forward.7} parent=1 // pred_check
      _
    $region55: #{gruvae_forward.7} parent=1 // pred_check_branch
      %352 = sbr.rel (0) target = $region57
    $region56: #{gruvae_forward.7} parent=1 // pred_region
      %353 = dma.done [#allocation5], 64
    $region57: #{gruvae_forward.7} parent=1 // pred_fallthru
      _
    // Predicated region
    $region58: #{gruvae_forward.7} parent=1 // pred_check
      _
    $region59: #{gruvae_forward.7} parent=1 // pred_check_branch
      %355 = sbr.rel (0) target = $region61
    $region60: #{gruvae_forward.7} parent=1 // pred_region
      %356 = dma.done [#allocation5], 64
    $region61: #{gruvae_forward.7} parent=1 // pred_fallthru
      _
    // Predicated region
    $region62: #{gruvae_forward.7} parent=1 // pred_check
      _
    $region63: #{gruvae_forward.7} parent=1 // pred_check_branch
      %358 = sbr.rel (0) target = $region65
    $region64: #{gruvae_forward.7} parent=1 // pred_region
      %359 = dma.done [#allocation8], 64
    $region65: #{gruvae_forward.7} parent=1 // pred_fallthru
      _
    %360 = vsyncpa [#allocation3], 1
    %361 = vsyncpa [#allocation5], 1
    %362 = vsyncpa [#allocation8], 1

// kernel: gruvae_forward.9
$region0: #{gruvae_forward.9}
  #allocation0 [shape = 'u32[]', space=smem, size = 0x4, offset = 0x4, fixed_abs, tag = 'smem constant byte address 0x4 - core index']
  #allocation1 [shape = 'u32[144,128]{1,0:T(1,128)}', space=vmem, size = 0x12000, scoped, tag = 'internal scratch']
  %s0 = inlined_call_operand.hbm [shape: bf16[16,32], index: 0, kind: input, shape index: {}]
  %s1 = inlined_call_operand.hbm [shape: bf16[32,256], index: 1, kind: input, shape index: {}]
  %s2 = inlined_call_operand.hbm [shape: f32[1,256], index: 2, kind: input, shape index: {}]
  %s3 = inlined_call_operand.hbm [shape: f32[16,256], index: 3, kind: output, shape index: {}]
  %s4 = sld [smem:[#allocation0]]
  $region34: #{gruvae_forward.9} parent=0
    _
  %s6 = ssub.s32 1, %s4
  %s7 = scalar_select 0, %s6, %s4
  $region1: #{gruvae_forward.9} parent=0
    #allocation2 [shape = 'u8[4096]{0}', space=vmem, size = 0x1000, scoped, tag = 'input window, operand 0, single buffered']
    #allocation3 [shape = 's32[1]{0}', space=sflag, size = 0x4, scoped, tag = 'scoped memory for gruvae_forward.9']
    #allocation4 [shape = 's32[1]{0}', space=sflag, size = 0x4, scoped, tag = 'scoped memory for gruvae_forward.9']
    #allocation5 [shape = 'u8[16384]{0}', space=vmem, size = 0x4000, scoped, tag = 'input window, operand 1, single buffered']
    #allocation6 [shape = 's32[1]{0}', space=sflag, size = 0x4, scoped, tag = 'scoped memory for gruvae_forward.9']
    #allocation7 [shape = 'u8[1024]{0}', space=vmem, size = 0x400, scoped, tag = 'input window, operand 2, single buffered']
    #allocation8 [shape = 'u8[16384]{0}', space=vmem, size = 0x4000, scoped, tag = 'output window, operand 0, single buffered']
    %8 = vsyncpa [#allocation3], 0
    %9 = vsyncpa [#allocation6], 0
    %10 = vsyncpa [#allocation4], 0
    // Predicated region
    $region2: #{gruvae_forward.9} parent=1 // pred_check
      _
    $region3: #{gruvae_forward.9} parent=1 // pred_check_branch
      %12 = sbr.rel (0) target = $region5
    $region4: #{gruvae_forward.9} parent=1 // pred_region
      %s14 = ssub.s32 128, 128
      %15 = vsyncadd [#allocation3], %s14
      %s16 = sshll.u32 [#allocation2], 4
      %s17 = int_to_ptr.vmem [resolvable:$true] %s16
      %22 = dma.hbm_to_vmem [thread:$0]  %s0, 128, %s17, [#allocation3], 64, 64, 4
    $region5: #{gruvae_forward.9} parent=1 // pred_fallthru
      _
    // Predicated region
    $region6: #{gruvae_forward.9} parent=1 // pred_check
      _
    $region7: #{gruvae_forward.9} parent=1 // pred_check_branch
      %24 = sbr.rel (0) target = $region9
    $region8: #{gruvae_forward.9} parent=1 // pred_region
      %s26 = ssub.s32 512, 512
      %27 = vsyncadd [#allocation6], %s26
      %s28 = sshll.u32 [#allocation5], 4
      %s29 = int_to_ptr.vmem [resolvable:$true] %s28
      %34 = dma.hbm_to_vmem [thread:$0]  %s1, 512, %s29, [#allocation6], 128, 128, 8
    $region9: #{gruvae_forward.9} parent=1 // pred_fallthru
      _
    // Predicated region
    $region10: #{gruvae_forward.9} parent=1 // pred_check
      _
    $region11: #{gruvae_forward.9} parent=1 // pred_check_branch
      %36 = sbr.rel (0) target = $region13
    $region12: #{gruvae_forward.9} parent=1 // pred_region
      %s38 = ssub.s32 32, 32
      %39 = vsyncadd [#allocation6], %s38
      %s41 = sshll.u32 [#allocation7], 4
      %s42 = int_to_ptr.vmem [resolvable:$true] %s41
      %44 = dma.hbm_to_vmem [thread:$0]  %s2, 32, %s42, [#allocation6]
    $region13: #{gruvae_forward.9} parent=1 // pred_fallthru
      _
    // Predicated region
    $region14: #{gruvae_forward.9} parent=1 // pred_check
      _
    $region15: #{gruvae_forward.9} parent=1 // pred_check_branch
      %46 = sbr.rel (0) target = $region17
    $region16: #{gruvae_forward.9} parent=1 // pred_region
      %47 = dma.done [#allocation3], 128
    $region17: #{gruvae_forward.9} parent=1 // pred_fallthru
      _
    // Predicated region
    $region18: #{gruvae_forward.9} parent=1 // pred_check
      _
    $region19: #{gruvae_forward.9} parent=1 // pred_check_branch
      %49 = sbr.rel (0) target = $region21
    $region20: #{gruvae_forward.9} parent=1 // pred_region
      %50 = dma.done [#allocation6], 512
    $region21: #{gruvae_forward.9} parent=1 // pred_fallthru
      _
    // Predicated region
    $region22: #{gruvae_forward.9} parent=1 // pred_check
      _
    $region23: #{gruvae_forward.9} parent=1 // pred_check_branch
      %52 = sbr.rel (0) target = $region25
    $region24: #{gruvae_forward.9} parent=1 // pred_region
      %53 = dma.done [#allocation6], 32
    $region25: #{gruvae_forward.9} parent=1 // pred_fallthru
      _
    %v55 = vld [vmem:[#allocation2] sm:$0xf]
    %v56 = vld [vmem:[#allocation2 + $0x4] sm:$0xf]
    %v57 = vld [vmem:[#allocation5] sm:$0xff]
    %v58 = vld [vmem:[#allocation5 + $0x8] sm:$0xff]
    %v59 = vld [vmem:[#allocation5 + $0x10] sm:$0xff]
    %v60 = vld [vmem:[#allocation5 + $0x18] sm:$0xff]
    %v61 = vld [vmem:[#allocation7] sm:$0x3]
    %v63 = vlaneseq
    %v64 = vshrl.u32 %v63, 7
    %v65 = vsub.s32 0, %v64
    %v66 = vrot.slane %v61, %v65
    %v67 = vlaneseq
    %v68 = vshrl.u32 %v67, 7
    %v69 = vsub.s32 1, %v68
    %v70 = vrot.slane %v61, %v69
    %v75 = vunpack.c.l.b16 %v55
    %v76 = vunpack.c.l.b16 %v56
    %v77 = vpack.c.b16 %v76, %v75
    %v82 = vunpack.c.l.b16 %v57
    %v83 = vunpack.c.h.b16 %v57
    %v84 = vunpack.c.l.b16 %v58
    %v85 = vunpack.c.h.b16 %v58
    %v86 = vunpack.c.l.b16 %v59
    %v87 = vunpack.c.h.b16 %v59
    %v88 = vunpack.c.l.b16 %v60
    %v89 = vunpack.c.h.b16 %v60
    %v90 = vpack.c.b16 %v84, %v82
    %v91 = vpack.c.b16 %v85, %v83
    %v92 = vpack.c.b16 %v88, %v86
    %v93 = vpack.c.b16 %v89, %v87
    %vm98 = vcmask 261120
    %v100 = vsel %vm98, %v77, 0
    %102 = vmatprep.subr.bf16.mxu0 %v91
    %103 = vmatpush1.bf16.msra.mxu0 %v90
    %104 = vmatprep.subr.bf16.mxu0 %v93
    %105 = vmatpush1.bf16.msra.mxu0 %v92
    %106 = vmatprep.subr.bf16.mxu0 0
    %107 = vmatpush1.bf16.msra.mxu0 0
    %108 = vmatprep.subr.bf16.mxu0 0
    %109 = vmatpush1.bf16.msra.mxu0 0
    %110 = vmatprep.subr.bf16.mxu0 0
    %111 = vmatpush1.bf16.msra.mxu0 0
    %112 = vmatprep.subr.bf16.mxu0 0
    %113 = vmatpush1.bf16.msra.mxu0 0
    %114 = vmatprep.subr.bf16.mxu0 0
    %115 = vmatpush1.bf16.msra.mxu0 0
    %116 = vmatprep.subr.bf16.mxu0 0
    %117 = vmatpush1.bf16.msra.mxu0 0
    %118 = vmatprep.subr.bf16.mxu0 0
    %119 = vmatpush1.bf16.msra.mxu0 0
    %120 = vmatprep.subr.bf16.mxu0 0
    %121 = vmatpush1.bf16.msra.mxu0 0
    %122 = vmatprep.subr.bf16.mxu0 0
    %123 = vmatpush1.bf16.msra.mxu0 0
    %124 = vmatprep.subr.bf16.mxu0 0
    %125 = vmatpush1.bf16.msra.mxu0 0
    %126 = vmatprep.subr.bf16.mxu0 0
    %127 = vmatpush1.bf16.msra.mxu0 0
    %128 = vmatprep.subr.bf16.mxu0 0
    %129 = vmatpush1.bf16.msra.mxu0 0
    %130 = vmatprep.subr.bf16.mxu0 0
    %131 = vmatpush1.bf16.msra.mxu0 0
    %132 = vmatprep.subr.bf16.mxu0 0
    %133 = vmatpush1.bf16.msra.mxu0 0
    %134 = vmatprep.mubr.bf16.mxu0 0
    %135 = vmatmul.mubr.bf16.gmra.mrb[0].mxu0 %v100
    %v136 = vpop.f32.mrb[0].mxu0
    %v137 = vadd.f32 %v66, %v136
    %v138 = vpop.f32.mrb[0].mxu0
    %v139 = vadd.f32 %v70, %v138
    %v140 = vpop.f32.mrb[0].mxu0
    %v141 = vadd.f32 %v66, %v140
    %v142 = vpop.f32.mrb[0].mxu0
    %v143 = vadd.f32 %v70, %v142
    %144 = vdwg.mxu0
    %145 = vst [vmem:[#allocation8] sm:$0xff] %v137
    %146 = vst [vmem:[#allocation8 + $0x8] sm:$0xff] %v139
    %147 = vst [vmem:[#allocation8 + $0x10] sm:$0xff] %v141
    %148 = vst [vmem:[#allocation8 + $0x18] sm:$0xff] %v143
    // Predicated region
    $region26: #{gruvae_forward.9} parent=1 // pred_check
      _
    $region27: #{gruvae_forward.9} parent=1 // pred_check_branch
      %150 = sbr.rel (0) target = $region29
    $region28: #{gruvae_forward.9} parent=1 // pred_region
      %s152 = ssub.s32 512, 512
      %153 = vsyncadd [#allocation4], %s152
      %s154 = sshll.u32 [#allocation8], 4
      %s155 = int_to_ptr.vmem [resolvable:$true] %s154
      %160 = dma.vmem_to_hbm [thread:$0]  %s155, 512, %s3, [#allocation4], 256, 256, 16
    $region29: #{gruvae_forward.9} parent=1 // pred_fallthru
      _
    // Predicated region
    $region30: #{gruvae_forward.9} parent=1 // pred_check
      _
    $region31: #{gruvae_forward.9} parent=1 // pred_check_branch
      %162 = sbr.rel (0) target = $region33
    $region32: #{gruvae_forward.9} parent=1 // pred_region
      %163 = dma.done [#allocation4], 512
    $region33: #{gruvae_forward.9} parent=1 // pred_fallthru
      _
    %164 = vsyncpa [#allocation3], 1
    %165 = vsyncpa [#allocation6], 1
    %166 = vsyncpa [#allocation4], 1

// kernel: gruvae_forward.6
$region0: #{gruvae_forward.6}
  #allocation0 [shape = 'u32[]', space=smem, size = 0x4, offset = 0x4, fixed_abs, tag = 'smem constant byte address 0x4 - core index']
  #allocation1 [shape = 'u32[144,128]{1,0:T(1,128)}', space=vmem, size = 0x12000, scoped, tag = 'internal scratch']
  %s0 = inlined_call_operand.hbm [shape: bf16[8,2,96], index: 0, kind: input, shape index: {}]
  %s1 = inlined_call_operand.hbm [shape: bf16[1,32,96], index: 1, kind: input, shape index: {}]
  %s2 = inlined_call_operand.hbm [shape: f32[1,1,96], index: 2, kind: input, shape index: {}]
  %s3 = inlined_call_operand.hbm [shape: bf16[2,32,96], index: 3, kind: input, shape index: {}]
  %s4 = inlined_call_operand.hbm [shape: f32[2,1,96], index: 4, kind: input, shape index: {}]
  %s5 = inlined_call_operand.hbm [shape: f32[2,2,32], index: 5, kind: output, shape index: {}]
  %s6 = sld [smem:[#allocation0]]
  $region54: #{gruvae_forward.6} parent=0
    _
  %s8 = ssub.s32 1, %s6
  %s9 = scalar_select 0, %s8, %s6
  $region1: #{gruvae_forward.6} parent=0
    #allocation2 [shape = 'u8[4096]{0}', space=vmem, size = 0x1000, scoped, tag = 'input window, operand 0, single buffered']
    #allocation3 [shape = 's32[1]{0}', space=sflag, size = 0x4, scoped, tag = 'scoped memory for gruvae_forward.6']
    #allocation4 [shape = 's32[1]{0}', space=sflag, size = 0x4, scoped, tag = 'scoped memory for gruvae_forward.6']
    #allocation5 [shape = 'u8[8192]{0}', space=vmem, size = 0x2000, scoped, tag = 'input window, operand 1, single buffered']
    #allocation6 [shape = 's32[1]{0}', space=sflag, size = 0x4, scoped, tag = 'scoped memory for gruvae_forward.6']
    #allocation7 [shape = 'u8[512]{0}', space=vmem, size = 0x400, scoped, tag = 'input window, operand 2, single buffered']
    #allocation8 [shape = 'u8[16384]{0}', space=vmem, size = 0x4000, scoped, tag = 'input window, operand 3, single buffered']
    #allocation9 [shape = 's32[1]{0}', space=sflag, size = 0x4, scoped, tag = 'scoped memory for gruvae_forward.6']
    #allocation10 [shape = 'u8[1024]{0}', space=vmem, size = 0x400, scoped, tag = 'input window, operand 4, single buffered']
    #allocation11 [shape = 'u8[2048]{0}', space=vmem, size = 0x800, scoped, tag = 'output window, operand 0, single buffered']
    %10 = vsyncpa [#allocation3], 0
    %11 = vsyncpa [#allocation6], 0
    %12 = vsyncpa [#allocation9], 0
    %13 = vsyncpa [#allocation4], 0
    // Predicated region
    $region2: #{gruvae_forward.6} parent=1 // pred_check
      _
    $region3: #{gruvae_forward.6} parent=1 // pred_check_branch
      %15 = sbr.rel (0) target = $region5
    $region4: #{gruvae_forward.6} parent=1 // pred_region
      %s17 = ssub.s32 128, 128
      %18 = vsyncadd [#allocation3], %s17
      %s19 = sshll.u32 [#allocation2], 4
      %s20 = int_to_ptr.vmem [resolvable:$true] %s19
      %25 = dma.hbm_to_vmem [thread:$0]  %s0, 128, %s20, [#allocation3], 16, 16, 1
    $region5: #{gruvae_forward.6} parent=1 // pred_fallthru
      _
    // Predicated region
    $region6: #{gruvae_forward.6} parent=1 // pred_check
      _
    $region7: #{gruvae_forward.6} parent=1 // pred_check_branch
      %27 = sbr.rel (0) target = $region9
    $region8: #{gruvae_forward.6} parent=1 // pred_region
      %s29 = ssub.s32 256, 256
      %30 = vsyncadd [#allocation6], %s29
      %s31 = sshll.u32 [#allocation5], 4
      %s32 = int_to_ptr.vmem [resolvable:$true] %s31
      %37 = dma.hbm_to_vmem [thread:$0]  %s1, 256, %s32, [#allocation6], 64, 64, 4
    $region9: #{gruvae_forward.6} parent=1 // pred_fallthru
      _
    // Predicated region
    $region10: #{gruvae_forward.6} parent=1 // pred_check
      _
    $region11: #{gruvae_forward.6} parent=1 // pred_check_branch
      %39 = sbr.rel (0) target = $region13
    $region12: #{gruvae_forward.6} parent=1 // pred_region
      %s41 = ssub.s32 16, 16
      %42 = vsyncadd [#allocation6], %s41
      %s44 = sshll.u32 [#allocation7], 4
      %s45 = int_to_ptr.vmem [resolvable:$true] %s44
      %47 = dma.hbm_to_vmem [thread:$0]  %s2, 16, %s45, [#allocation6]
    $region13: #{gruvae_forward.6} parent=1 // pred_fallthru
      _
    // Predicated region
    $region14: #{gruvae_forward.6} parent=1 // pred_check
      _
    $region15: #{gruvae_forward.6} parent=1 // pred_check_branch
      %49 = sbr.rel (0) target = $region17
    $region16: #{gruvae_forward.6} parent=1 // pred_region
      %s51 = ssub.s32 512, 512
      %52 = vsyncadd [#allocation9], %s51
      %s53 = sshll.u32 [#allocation8], 4
      %s54 = int_to_ptr.vmem [resolvable:$true] %s53
      %59 = dma.hbm_to_vmem [thread:$0]  %s3, 512, %s54, [#allocation9], 64, 64, 4
    $region17: #{gruvae_forward.6} parent=1 // pred_fallthru
      _
    // Predicated region
    $region18: #{gruvae_forward.6} parent=1 // pred_check
      _
    $region19: #{gruvae_forward.6} parent=1 // pred_check_branch
      %61 = sbr.rel (0) target = $region21
    $region20: #{gruvae_forward.6} parent=1 // pred_region
      %s63 = ssub.s32 32, 32
      %64 = vsyncadd [#allocation9], %s63
      %s65 = sshll.u32 [#allocation10], 4
      %s66 = int_to_ptr.vmem [resolvable:$true] %s65
      %71 = dma.hbm_to_vmem [thread:$0]  %s4, 32, %s66, [#allocation9], 16, 16, 1
    $region21: #{gruvae_forward.6} parent=1 // pred_fallthru
      _
    // Predicated region
    $region22: #{gruvae_forward.6} parent=1 // pred_check
      _
    $region23: #{gruvae_forward.6} parent=1 // pred_check_branch
      %73 = sbr.rel (0) target = $region25
    $region24: #{gruvae_forward.6} parent=1 // pred_region
      %74 = dma.done [#allocation3], 128
    $region25: #{gruvae_forward.6} parent=1 // pred_fallthru
      _
    // Predicated region
    $region26: #{gruvae_forward.6} parent=1 // pred_check
      _
    $region27: #{gruvae_forward.6} parent=1 // pred_check_branch
      %76 = sbr.rel (0) target = $region29
    $region28: #{gruvae_forward.6} parent=1 // pred_region
      %77 = dma.done [#allocation6], 256
    $region29: #{gruvae_forward.6} parent=1 // pred_fallthru
      _
    // Predicated region
    $region30: #{gruvae_forward.6} parent=1 // pred_check
      _
    $region31: #{gruvae_forward.6} parent=1 // pred_check_branch
      %79 = sbr.rel (0) target = $region33
    $region32: #{gruvae_forward.6} parent=1 // pred_region
      %80 = dma.done [#allocation6], 16
    $region33: #{gruvae_forward.6} parent=1 // pred_fallthru
      _
    // Predicated region
    $region34: #{gruvae_forward.6} parent=1 // pred_check
      _
    $region35: #{gruvae_forward.6} parent=1 // pred_check_branch
      %82 = sbr.rel (0) target = $region37
    $region36: #{gruvae_forward.6} parent=1 // pred_region
      %83 = dma.done [#allocation9], 512
    $region37: #{gruvae_forward.6} parent=1 // pred_fallthru
      _
    // Predicated region
    $region38: #{gruvae_forward.6} parent=1 // pred_check
      _
    $region39: #{gruvae_forward.6} parent=1 // pred_check_branch
      %85 = sbr.rel (0) target = $region41
    $region40: #{gruvae_forward.6} parent=1 // pred_region
      %86 = dma.done [#allocation9], 32
    $region41: #{gruvae_forward.6} parent=1 // pred_fallthru
      _
    %p88 = scmp.eq.s32.totalorder 0, 0
    // Predicated region
    $region42: #{gruvae_forward.6} parent=1 // pred_check
      %p89 = pneg %p88
    $region43: #{gruvae_forward.6} parent=1 // pred_check_branch
      %91 = sbr.rel (%p89) target = $region45
    $region44: #{gruvae_forward.6} parent=1 // pred_region
      %vm92 = vcmask 254976
      %93 = vst.msk [vmem:[#allocation11] sm:$0x3] %vm92, 0.0
      %94 = vst.msk [vmem:[#allocation11 + $0x2] sm:$0x3] %vm92, 0.0
    $region45: #{gruvae_forward.6} parent=1 // pred_fallthru
      _
    %v95 = vld [vmem:[#allocation2] sm:$0x1]
    %v96 = vld [vmem:[#allocation11] sm:$0x3]
    %v97 = vld [vmem:[#allocation8] sm:$0xf]
    %v98 = vld [vmem:[#allocation8 + $0x4] sm:$0xf]
    %v99 = vld [vmem:[#allocation8 + $0x8] sm:$0xf]
    %v100 = vld [vmem:[#allocation8 + $0xc] sm:$0xf]
    %v101 = vld [vmem:[#allocation10] sm:$0x1]
    %v102 = vpack.c.bf16 %v96, %v96
    %v104 = vlaneseq
    %v105 = vshrl.u32 %v104, 7
    %v106 = vsub.s32 0, %v105
    %v107 = vrot.slane %v101, %v106
    %v113 = vunpack.c.l.b16 %v97
    %v114 = vunpack.c.l.b16 %v98
    %v115 = vunpack.c.l.b16 %v99
    %v116 = vunpack.c.l.b16 %v100
    %v117 = vpack.c.b16 %v114, %v113
    %v118 = vpack.c.b16 %v116, %v115
    %vm121 = vcmask 261120
    %v123 = vsel %vm121, %v102, 0
    %125 = vmatprep.subr.bf16.mxu0 0
    %126 = vmatpush1.bf16.msra.mxu0 %v117
    %127 = vmatprep.subr.bf16.mxu0 0
    %128 = vmatpush1.bf16.msra.mxu0 %v118
    %129 = vmatprep.subr.bf16.mxu0 0
    %130 = vmatpush1.bf16.msra.mxu0 0
    %131 = vmatprep.subr.bf16.mxu0 0
    %132 = vmatpush1.bf16.msra.mxu0 0
    %133 = vmatprep.subr.bf16.mxu0 0
    %134 = vmatpush1.bf16.msra.mxu0 0
    %135 = vmatprep.subr.bf16.mxu0 0
    %136 = vmatpush1.bf16.msra.mxu0 0
    %137 = vmatprep.subr.bf16.mxu0 0
    %138 = vmatpush1.bf16.msra.mxu0 0
    %139 = vmatprep.subr.bf16.mxu0 0
    %140 = vmatpush1.bf16.msra.mxu0 0
    %141 = vmatprep.subr.bf16.mxu0 0
    %142 = vmatpush1.bf16.msra.mxu0 0
    %143 = vmatprep.subr.bf16.mxu0 0
    %144 = vmatpush1.bf16.msra.mxu0 0
    %145 = vmatprep.subr.bf16.mxu0 0
    %146 = vmatpush1.bf16.msra.mxu0 0
    %147 = vmatprep.subr.bf16.mxu0 0
    %148 = vmatpush1.bf16.msra.mxu0 0
    %149 = vmatprep.subr.bf16.mxu0 0
    %150 = vmatpush1.bf16.msra.mxu0 0
    %151 = vmatprep.subr.bf16.mxu0 0
    %152 = vmatpush1.bf16.msra.mxu0 0
    %153 = vmatprep.subr.bf16.mxu0 0
    %154 = vmatpush1.bf16.msra.mxu0 0
    %155 = vmatprep.subr.bf16.mxu0 0
    %156 = vmatpush1.bf16.msra.mxu0 0
    %157 = vmatprep.mubr.bf16.mxu0 0
    %158 = vmatmul.mubr.bf16.gmra.mrb[0].mxu0 %v123
    %v159 = vpop.f32.mrb[0].mxu0
    %v160 = vadd.f32 %v107, %v159
    %v161 = vpop.f32.mrb[0].mxu0
    %v162 = vpop.f32.mrb[0].mxu0
    %v163 = vpop.f32.mrb[0].mxu0
    %164 = vdwg.mxu0
    %v165 = vunpack.c.l.bf16 %v95
    %v166 = vadd.f32 %v165, %v160
    %v167 = vxor.u32 %v166, 2147483648
    %v168 = vmul.f32 %v167, 1.442695
    %v169 = vpow.pop %v168
    %v170 = vadd.f32 %v169, 1.0
    %v171 = vrcp.pop %v170
    %v172 = vmul.f32 1.0, %v171
    %v175 = vunpack.c.l.s4 1983009808
    %v176 = vunpack.c.0.s8 %v175
    %v177 = vlaneseq
    %v178 = vshrl.u32 %v177, 7
    %v179 = vsub.s32 %v176, %v178
    %v180 = vrot.slane %v160, %v179
    %181 = vrot.lane.b32.xlu0 %v180, 64
    %v182 = vpop.permute.xlu0 %181
    %v184 = vmul.f32 %v172, %v182
    %186 = vrot.lane.b32.xlu0 %v184, 64
    %v187 = vpop.permute.xlu0 %186
    %v189 = vadd.f32 %v165, %v187
    %v190 = vtanh.pop %v189
    %v191 = vsub.f32 1.0, %v172
    %193 = vrot.lane.b32.xlu0 %v190, 96
    %v194 = vpop.permute.xlu0 %193
    %v196 = vmul.f32 %v191, %v194
    %v199 = vunpack.c.l.s4 1983009808
    %v200 = vunpack.c.0.s8 %v199
    %v201 = vlaneseq
    %v202 = vshrl.u32 %v201, 7
    %v203 = vsub.s32 %v200, %v202
    %v204 = vrot.slane %v96, %v203
    %205 = vrot.lane.b32.xlu0 %v204, 32
    %v206 = vpop.permute.xlu0 %205
    %v208 = vmul.f32 %v172, %v206
    %v209 = vadd.f32 %v196, %v208
    %v212 = vunpack.c.l.s4 1983009808
    %v213 = vunpack.c.0.s8 %v212
    %v214 = vlaneseq
    %v215 = vshrl.u32 %v214, 7
    %v216 = vsub.s32 %v213, %v215
    %v217 = vrot.slane %v209, %v216
    %218 = vrot.lane.b32.xlu0 %v217, 96
    %v219 = vpop.permute.xlu0 %218
    %vm221 = vcmask 254976
    %222 = vst.msk [vmem:[#allocation11] sm:$0x3] %vm221, %v219
    %v223 = vpack.c.bf16 %v209, %v209
    %v224 = vld [vmem:[#allocation5] sm:$0xf]
    %v225 = vld [vmem:[#allocation5 + $0x4] sm:$0xf]
    %v226 = vld [vmem:[#allocation5 + $0x8] sm:$0xf]
    %v227 = vld [vmem:[#allocation5 + $0xc] sm:$0xf]
    %v228 = vld [vmem:[#allocation7] sm:$0x1]
    %v230 = vlaneseq
    %v231 = vshrl.u32 %v230, 7
    %v232 = vsub.s32 0, %v231
    %v233 = vrot.slane %v228, %v232
    %236 = vrot.lane.b32.xlu0 %v223, 96
    %v237 = vpop.permute.xlu0 %236
    %v242 = vunpack.c.l.b16 %v224
    %v243 = vunpack.c.l.b16 %v225
    %v244 = vunpack.c.l.b16 %v226
    %v245 = vunpack.c.l.b16 %v227
    %v246 = vpack.c.b16 %v243, %v242
    %v247 = vpack.c.b16 %v245, %v244
    %v251 = vsel %vm121, %v237, 0
    %253 = vmatprep.subr.bf16.mxu0 0
    %254 = vmatpush1.bf16.msra.mxu0 %v246
    %255 = vmatprep.subr.bf16.mxu0 0
    %256 = vmatpush1.bf16.msra.mxu0 %v247
    %257 = vmatprep.subr.bf16.mxu0 0
    %258 = vmatpush1.bf16.msra.mxu0 0
    %259 = vmatprep.subr.bf16.mxu0 0
    %260 = vmatpush1.bf16.msra.mxu0 0
    %261 = vmatprep.subr.bf16.mxu0 0
    %262 = vmatpush1.bf16.msra.mxu0 0
    %263 = vmatprep.subr.bf16.mxu0 0
    %264 = vmatpush1.bf16.msra.mxu0 0
    %265 = vmatprep.subr.bf16.mxu0 0
    %266 = vmatpush1.bf16.msra.mxu0 0
    %267 = vmatprep.subr.bf16.mxu0 0
    %268 = vmatpush1.bf16.msra.mxu0 0
    %269 = vmatprep.subr.bf16.mxu0 0
    %270 = vmatpush1.bf16.msra.mxu0 0
    %271 = vmatprep.subr.bf16.mxu0 0
    %272 = vmatpush1.bf16.msra.mxu0 0
    %273 = vmatprep.subr.bf16.mxu0 0
    %274 = vmatpush1.bf16.msra.mxu0 0
    %275 = vmatprep.subr.bf16.mxu0 0
    %276 = vmatpush1.bf16.msra.mxu0 0
    %277 = vmatprep.subr.bf16.mxu0 0
    %278 = vmatpush1.bf16.msra.mxu0 0
    %279 = vmatprep.subr.bf16.mxu0 0
    %280 = vmatpush1.bf16.msra.mxu0 0
    %281 = vmatprep.subr.bf16.mxu0 0
    %282 = vmatpush1.bf16.msra.mxu0 0
    %283 = vmatprep.subr.bf16.mxu0 0
    %284 = vmatpush1.bf16.msra.mxu0 0
    %285 = vmatprep.mubr.bf16.mxu0 0
    %286 = vmatmul.mubr.bf16.gmra.mrb[0].mxu0 %v251
    %v287 = vpop.f32.mrb[0].mxu0
    %v288 = vadd.f32 %v233, %v287
    %v289 = vpop.f32.mrb[0].mxu0
    %v290 = vpop.f32.mrb[0].mxu0
    %v291 = vpop.f32.mrb[0].mxu0
    %292 = vdwg.mxu0
    %s293 = scalar_lea.vmem [#allocation11], 2
    %v294 = vld [vmem:[%s293] sm:$0x3]
    %s295 = scalar_lea.vmem [#allocation8], 16
    %v296 = vld [vmem:[%s295] sm:$0xf]
    %v297 = vld [vmem:[%s295 + $0x4] sm:$0xf]
    %v298 = vld [vmem:[%s295 + $0x8] sm:$0xf]
    %v299 = vld [vmem:[%s295 + $0xc] sm:$0xf]
    %s300 = scalar_lea.vmem [#allocation10], 1
    %v301 = vld [vmem:[%s300] sm:$0x1]
    %v302 = vpack.c.bf16 %v294, %v294
    %v304 = vlaneseq
    %v305 = vshrl.u32 %v304, 7
    %v306 = vsub.s32 0, %v305
    %v307 = vrot.slane %v301, %v306
    %v313 = vunpack.c.l.b16 %v296
    %v314 = vunpack.c.l.b16 %v297
    %v315 = vunpack.c.l.b16 %v298
    %v316 = vunpack.c.l.b16 %v299
    %v317 = vpack.c.b16 %v314, %v313
    %v318 = vpack.c.b16 %v316, %v315
    %v322 = vsel %vm121, %v302, 0
    %324 = vmatprep.subr.bf16.mxu0 0
    %325 = vmatpush1.bf16.msra.mxu0 %v317
    %326 = vmatprep.subr.bf16.mxu0 0
    %327 = vmatpush1.bf16.msra.mxu0 %v318
    %328 = vmatprep.subr.bf16.mxu0 0
    %329 = vmatpush1.bf16.msra.mxu0 0
    %330 = vmatprep.subr.bf16.mxu0 0
    %331 = vmatpush1.bf16.msra.mxu0 0
    %332 = vmatprep.subr.bf16.mxu0 0
    %333 = vmatpush1.bf16.msra.mxu0 0
    %334 = vmatprep.subr.bf16.mxu0 0
    %335 = vmatpush1.bf16.msra.mxu0 0
    %336 = vmatprep.subr.bf16.mxu0 0
    %337 = vmatpush1.bf16.msra.mxu0 0
    %338 = vmatprep.subr.bf16.mxu0 0
    %339 = vmatpush1.bf16.msra.mxu0 0
    %340 = vmatprep.subr.bf16.mxu0 0
    %341 = vmatpush1.bf16.msra.mxu0 0
    %342 = vmatprep.subr.bf16.mxu0 0
    %343 = vmatpush1.bf16.msra.mxu0 0
    %344 = vmatprep.subr.bf16.mxu0 0
    %345 = vmatpush1.bf16.msra.mxu0 0
    %346 = vmatprep.subr.bf16.mxu0 0
    %347 = vmatpush1.bf16.msra.mxu0 0
    %348 = vmatprep.subr.bf16.mxu0 0
    %349 = vmatpush1.bf16.msra.mxu0 0
    %350 = vmatprep.subr.bf16.mxu0 0
    %351 = vmatpush1.bf16.msra.mxu0 0
    %352 = vmatprep.subr.bf16.mxu0 0
    %353 = vmatpush1.bf16.msra.mxu0 0
    %354 = vmatprep.subr.bf16.mxu0 0
    %355 = vmatpush1.bf16.msra.mxu0 0
    %356 = vmatprep.mubr.bf16.mxu0 0
    %357 = vmatmul.mubr.bf16.gmra.mrb[0].mxu0 %v322
    %v358 = vpop.f32.mrb[0].mxu0
    %v359 = vadd.f32 %v307, %v358
    %v360 = vpop.f32.mrb[0].mxu0
    %v361 = vpop.f32.mrb[0].mxu0
    %v362 = vpop.f32.mrb[0].mxu0
    %363 = vdwg.mxu0
    %v364 = vadd.f32 %v288, %v359
    %v365 = vxor.u32 %v364, 2147483648
    %v366 = vmul.f32 %v365, 1.442695
    %v367 = vpow.pop %v366
    %v368 = vadd.f32 %v367, 1.0
    %v369 = vrcp.pop %v368
    %v370 = vmul.f32 1.0, %v369
    %372 = vrot.lane.b32.xlu0 %v359, 64
    %v373 = vpop.permute.xlu0 %372
    %v375 = vmul.f32 %v370, %v373
    %377 = vrot.lane.b32.xlu0 %v375, 64
    %v378 = vpop.permute.xlu0 %377
    %v380 = vadd.f32 %v288, %v378
    %v381 = vtanh.pop %v380
    %v382 = vsub.f32 1.0, %v370
    %384 = vrot.lane.b32.xlu0 %v381, 96
    %v385 = vpop.permute.xlu0 %384
    %v387 = vmul.f32 %v382, %v385
    %389 = vrot.lane.b32.xlu0 %v294, 32
    %v390 = vpop.permute.xlu0 %389
    %v392 = vmul.f32 %v370, %v390
    %v393 = vadd.f32 %v387, %v392
    %395 = vrot.lane.b32.xlu0 %v393, 96
    %v396 = vpop.permute.xlu0 %395
    %398 = vst.msk [vmem:[%s293] sm:$0x3] %vm221, %v396
    %s399 = scalar_lea.vmem [#allocation2], 1
    %v400 = vld [vmem:[%s399] sm:$0x1]
    %v401 = vld [vmem:[#allocation11] sm:$0x3]
    %v402 = vld [vmem:[#allocation8] sm:$0xf]
    %v403 = vld [vmem:[#allocation8 + $0x4] sm:$0xf]
    %v404 = vld [vmem:[#allocation8 + $0x8] sm:$0xf]
    %v405 = vld [vmem:[#allocation8 + $0xc] sm:$0xf]
    %v406 = vld [vmem:[#allocation10] sm:$0x1]
    %v407 = vpack.c.bf16 %v401, %v401
    %v409 = vlaneseq
    %v410 = vshrl.u32 %v409, 7
    %v411 = vsub.s32 0, %v410
    %v412 = vrot.slane %v406, %v411
    %v418 = vunpack.c.l.b16 %v402
    %v419 = vunpack.c.l.b16 %v403
    %v420 = vunpack.c.l.b16 %v404
    %v421 = vunpack.c.l.b16 %v405
    %v422 = vpack.c.b16 %v419, %v418
    %v423 = vpack.c.b16 %v421, %v420
    %v427 = vsel %vm121, %v407, 0
    %429 = vmatprep.subr.bf16.mxu0 0
    %430 = vmatpush1.bf16.msra.mxu0 %v422
    %431 = vmatprep.subr.bf16.mxu0 0
    %432 = vmatpush1.bf16.msra.mxu0 %v423
    %433 = vmatprep.subr.bf16.mxu0 0
    %434 = vmatpush1.bf16.msra.mxu0 0
    %435 = vmatprep.subr.bf16.mxu0 0
    %436 = vmatpush1.bf16.msra.mxu0 0
    %437 = vmatprep.subr.bf16.mxu0 0
    %438 = vmatpush1.bf16.msra.mxu0 0
    %439 = vmatprep.subr.bf16.mxu0 0
    %440 = vmatpush1.bf16.msra.mxu0 0
    %441 = vmatprep.subr.bf16.mxu0 0
    %442 = vmatpush1.bf16.msra.mxu0 0
    %443 = vmatprep.subr.bf16.mxu0 0
    %444 = vmatpush1.bf16.msra.mxu0 0
    %445 = vmatprep.subr.bf16.mxu0 0
    %446 = vmatpush1.bf16.msra.mxu0 0
    %447 = vmatprep.subr.bf16.mxu0 0
    %448 = vmatpush1.bf16.msra.mxu0 0
    %449 = vmatprep.subr.bf16.mxu0 0
    %450 = vmatpush1.bf16.msra.mxu0 0
    %451 = vmatprep.subr.bf16.mxu0 0
    %452 = vmatpush1.bf16.msra.mxu0 0
    %453 = vmatprep.subr.bf16.mxu0 0
    %454 = vmatpush1.bf16.msra.mxu0 0
    %455 = vmatprep.subr.bf16.mxu0 0
    %456 = vmatpush1.bf16.msra.mxu0 0
    %457 = vmatprep.subr.bf16.mxu0 0
    %458 = vmatpush1.bf16.msra.mxu0 0
    %459 = vmatprep.subr.bf16.mxu0 0
    %460 = vmatpush1.bf16.msra.mxu0 0
    %461 = vmatprep.mubr.bf16.mxu0 0
    %462 = vmatmul.mubr.bf16.gmra.mrb[0].mxu0 %v427
    %v463 = vpop.f32.mrb[0].mxu0
    %v464 = vadd.f32 %v412, %v463
    %v465 = vpop.f32.mrb[0].mxu0
    %v466 = vpop.f32.mrb[0].mxu0
    %v467 = vpop.f32.mrb[0].mxu0
    %468 = vdwg.mxu0
    %v469 = vunpack.c.l.bf16 %v400
    %v470 = vadd.f32 %v469, %v464
    %v471 = vxor.u32 %v470, 2147483648
    %v472 = vmul.f32 %v471, 1.442695
    %v473 = vpow.pop %v472
    %v474 = vadd.f32 %v473, 1.0
    %v475 = vrcp.pop %v474
    %v476 = vmul.f32 1.0, %v475
    %v479 = vunpack.c.l.s4 1983009808
    %v480 = vunpack.c.0.s8 %v479
    %v481 = vlaneseq
    %v482 = vshrl.u32 %v481, 7
    %v483 = vsub.s32 %v480, %v482
    %v484 = vrot.slane %v464, %v483
    %485 = vrot.lane.b32.xlu0 %v484, 64
    %v486 = vpop.permute.xlu0 %485
    %v488 = vmul.f32 %v476, %v486
    %490 = vrot.lane.b32.xlu0 %v488, 64
    %v491 = vpop.permute.xlu0 %490
    %v493 = vadd.f32 %v469, %v491
    %v494 = vtanh.pop %v493
    %v495 = vsub.f32 1.0, %v476
    %497 = vrot.lane.b32.xlu0 %v494, 96
    %v498 = vpop.permute.xlu0 %497
    %v500 = vmul.f32 %v495, %v498
    %v503 = vunpack.c.l.s4 1983009808
    %v504 = vunpack.c.0.s8 %v503
    %v505 = vlaneseq
    %v506 = vshrl.u32 %v505, 7
    %v507 = vsub.s32 %v504, %v506
    %v508 = vrot.slane %v401, %v507
    %509 = vrot.lane.b32.xlu0 %v508, 32
    %v510 = vpop.permute.xlu0 %509
    %v512 = vmul.f32 %v476, %v510
    %v513 = vadd.f32 %v500, %v512
    %v516 = vunpack.c.l.s4 1983009808
    %v517 = vunpack.c.0.s8 %v516
    %v518 = vlaneseq
    %v519 = vshrl.u32 %v518, 7
    %v520 = vsub.s32 %v517, %v519
    %v521 = vrot.slane %v513, %v520
    %522 = vrot.lane.b32.xlu0 %v521, 96
    %v523 = vpop.permute.xlu0 %522
    %525 = vst.msk [vmem:[#allocation11] sm:$0x3] %vm221, %v523
    %v526 = vpack.c.bf16 %v513, %v513
    %v527 = vld [vmem:[#allocation5] sm:$0xf]
    %v528 = vld [vmem:[#allocation5 + $0x4] sm:$0xf]
    %v529 = vld [vmem:[#allocation5 + $0x8] sm:$0xf]
    %v530 = vld [vmem:[#allocation5 + $0xc] sm:$0xf]
    %v531 = vld [vmem:[#allocation7] sm:$0x1]
    %v533 = vlaneseq
    %v534 = vshrl.u32 %v533, 7
    %v535 = vsub.s32 0, %v534
    %v536 = vrot.slane %v531, %v535
    %539 = vrot.lane.b32.xlu0 %v526, 96
    %v540 = vpop.permute.xlu0 %539
    %v545 = vunpack.c.l.b16 %v527
    %v546 = vunpack.c.l.b16 %v528
    %v547 = vunpack.c.l.b16 %v529
    %v548 = vunpack.c.l.b16 %v530
    %v549 = vpack.c.b16 %v546, %v545
    %v550 = vpack.c.b16 %v548, %v547
    %v554 = vsel %vm121, %v540, 0
    %556 = vmatprep.subr.bf16.mxu0 0
    %557 = vmatpush1.bf16.msra.mxu0 %v549
    %558 = vmatprep.subr.bf16.mxu0 0
    %559 = vmatpush1.bf16.msra.mxu0 %v550
    %560 = vmatprep.subr.bf16.mxu0 0
    %561 = vmatpush1.bf16.msra.mxu0 0
    %562 = vmatprep.subr.bf16.mxu0 0
    %563 = vmatpush1.bf16.msra.mxu0 0
    %564 = vmatprep.subr.bf16.mxu0 0
    %565 = vmatpush1.bf16.msra.mxu0 0
    %566 = vmatprep.subr.bf16.mxu0 0
    %567 = vmatpush1.bf16.msra.mxu0 0
    %568 = vmatprep.subr.bf16.mxu0 0
    %569 = vmatpush1.bf16.msra.mxu0 0
    %570 = vmatprep.subr.bf16.mxu0 0
    %571 = vmatpush1.bf16.msra.mxu0 0
    %572 = vmatprep.subr.bf16.mxu0 0
    %573 = vmatpush1.bf16.msra.mxu0 0
    %574 = vmatprep.subr.bf16.mxu0 0
    %575 = vmatpush1.bf16.msra.mxu0 0
    %576 = vmatprep.subr.bf16.mxu0 0
    %577 = vmatpush1.bf16.msra.mxu0 0
    %578 = vmatprep.subr.bf16.mxu0 0
    %579 = vmatpush1.bf16.msra.mxu0 0
    %580 = vmatprep.subr.bf16.mxu0 0
    %581 = vmatpush1.bf16.msra.mxu0 0
    %582 = vmatprep.subr.bf16.mxu0 0
    %583 = vmatpush1.bf16.msra.mxu0 0
    %584 = vmatprep.subr.bf16.mxu0 0
    %585 = vmatpush1.bf16.msra.mxu0 0
    %586 = vmatprep.subr.bf16.mxu0 0
    %587 = vmatpush1.bf16.msra.mxu0 0
    %588 = vmatprep.mubr.bf16.mxu0 0
    %589 = vmatmul.mubr.bf16.gmra.mrb[0].mxu0 %v554
    %v590 = vpop.f32.mrb[0].mxu0
    %v591 = vadd.f32 %v536, %v590
    %v592 = vpop.f32.mrb[0].mxu0
    %v593 = vpop.f32.mrb[0].mxu0
    %v594 = vpop.f32.mrb[0].mxu0
    %595 = vdwg.mxu0
    %v596 = vld [vmem:[%s293] sm:$0x3]
    %v597 = vld [vmem:[%s295] sm:$0xf]
    %v598 = vld [vmem:[%s295 + $0x4] sm:$0xf]
    %v599 = vld [vmem:[%s295 + $0x8] sm:$0xf]
    %v600 = vld [vmem:[%s295 + $0xc] sm:$0xf]
    %v601 = vld [vmem:[%s300] sm:$0x1]
    %v602 = vpack.c.bf16 %v596, %v596
    %v604 = vlaneseq
    %v605 = vshrl.u32 %v604, 7
    %v606 = vsub.s32 0, %v605
    %v607 = vrot.slane %v601, %v606
    %v613 = vunpack.c.l.b16 %v597
    %v614 = vunpack.c.l.b16 %v598
    %v615 = vunpack.c.l.b16 %v599
    %v616 = vunpack.c.l.b16 %v600
    %v617 = vpack.c.b16 %v614, %v613
    %v618 = vpack.c.b16 %v616, %v615
    %v622 = vsel %vm121, %v602, 0
    %624 = vmatprep.subr.bf16.mxu0 0
    %625 = vmatpush1.bf16.msra.mxu0 %v617
    %626 = vmatprep.subr.bf16.mxu0 0
    %627 = vmatpush1.bf16.msra.mxu0 %v618
    %628 = vmatprep.subr.bf16.mxu0 0
    %629 = vmatpush1.bf16.msra.mxu0 0
    %630 = vmatprep.subr.bf16.mxu0 0
    %631 = vmatpush1.bf16.msra.mxu0 0
    %632 = vmatprep.subr.bf16.mxu0 0
    %633 = vmatpush1.bf16.msra.mxu0 0
    %634 = vmatprep.subr.bf16.mxu0 0
    %635 = vmatpush1.bf16.msra.mxu0 0
    %636 = vmatprep.subr.bf16.mxu0 0
    %637 = vmatpush1.bf16.msra.mxu0 0
    %638 = vmatprep.subr.bf16.mxu0 0
    %639 = vmatpush1.bf16.msra.mxu0 0
    %640 = vmatprep.subr.bf16.mxu0 0
    %641 = vmatpush1.bf16.msra.mxu0 0
    %642 = vmatprep.subr.bf16.mxu0 0
    %643 = vmatpush1.bf16.msra.mxu0 0
    %644 = vmatprep.subr.bf16.mxu0 0
    %645 = vmatpush1.bf16.msra.mxu0 0
    %646 = vmatprep.subr.bf16.mxu0 0
    %647 = vmatpush1.bf16.msra.mxu0 0
    %648 = vmatprep.subr.bf16.mxu0 0
    %649 = vmatpush1.bf16.msra.mxu0 0
    %650 = vmatprep.subr.bf16.mxu0 0
    %651 = vmatpush1.bf16.msra.mxu0 0
    %652 = vmatprep.subr.bf16.mxu0 0
    %653 = vmatpush1.bf16.msra.mxu0 0
    %654 = vmatprep.subr.bf16.mxu0 0
    %655 = vmatpush1.bf16.msra.mxu0 0
    %656 = vmatprep.mubr.bf16.mxu0 0
    %657 = vmatmul.mubr.bf16.gmra.mrb[0].mxu0 %v622
    %v658 = vpop.f32.mrb[0].mxu0
    %v659 = vadd.f32 %v607, %v658
    %v660 = vpop.f32.mrb[0].mxu0
    %v661 = vpop.f32.mrb[0].mxu0
    %v662 = vpop.f32.mrb[0].mxu0
    %663 = vdwg.mxu0
    %v664 = vadd.f32 %v591, %v659
    %v665 = vxor.u32 %v664, 2147483648
    %v666 = vmul.f32 %v665, 1.442695
    %v667 = vpow.pop %v666
    %v668 = vadd.f32 %v667, 1.0
    %v669 = vrcp.pop %v668
    %v670 = vmul.f32 1.0, %v669
    %672 = vrot.lane.b32.xlu0 %v659, 64
    %v673 = vpop.permute.xlu0 %672
    %v675 = vmul.f32 %v670, %v673
    %677 = vrot.lane.b32.xlu0 %v675, 64
    %v678 = vpop.permute.xlu0 %677
    %v680 = vadd.f32 %v591, %v678
    %v681 = vtanh.pop %v680
    %v682 = vsub.f32 1.0, %v670
    %684 = vrot.lane.b32.xlu0 %v681, 96
    %v685 = vpop.permute.xlu0 %684
    %v687 = vmul.f32 %v682, %v685
    %689 = vrot.lane.b32.xlu0 %v596, 32
    %v690 = vpop.permute.xlu0 %689
    %v692 = vmul.f32 %v670, %v690
    %v693 = vadd.f32 %v687, %v692
    %695 = vrot.lane.b32.xlu0 %v693, 96
    %v696 = vpop.permute.xlu0 %695
    %698 = vst.msk [vmem:[%s293] sm:$0x3] %vm221, %v696
    %s699 = scalar_lea.vmem [#allocation2], 2
    %v700 = vld [vmem:[%s699] sm:$0x1]
    %v701 = vld [vmem:[#allocation11] sm:$0x3]
    %v702 = vld [vmem:[#allocation8] sm:$0xf]
    %v703 = vld [vmem:[#allocation8 + $0x4] sm:$0xf]
    %v704 = vld [vmem:[#allocation8 + $0x8] sm:$0xf]
    %v705 = vld [vmem:[#allocation8 + $0xc] sm:$0xf]
    %v706 = vld [vmem:[#allocation10] sm:$0x1]
    %v707 = vpack.c.bf16 %v701, %v701
    %v709 = vlaneseq
    %v710 = vshrl.u32 %v709, 7
    %v711 = vsub.s32 0, %v710
    %v712 = vrot.slane %v706, %v711
    %v718 = vunpack.c.l.b16 %v702
    %v719 = vunpack.c.l.b16 %v703
    %v720 = vunpack.c.l.b16 %v704
    %v721 = vunpack.c.l.b16 %v705
    %v722 = vpack.c.b16 %v719, %v718
    %v723 = vpack.c.b16 %v721, %v720
    %v727 = vsel %vm121, %v707, 0
    %729 = vmatprep.subr.bf16.mxu0 0
    %730 = vmatpush1.bf16.msra.mxu0 %v722
    %731 = vmatprep.subr.bf16.mxu0 0
    %732 = vmatpush1.bf16.msra.mxu0 %v723
    %733 = vmatprep.subr.bf16.mxu0 0
    %734 = vmatpush1.bf16.msra.mxu0 0
    %735 = vmatprep.subr.bf16.mxu0 0
    %736 = vmatpush1.bf16.msra.mxu0 0
    %737 = vmatprep.subr.bf16.mxu0 0
    %738 = vmatpush1.bf16.msra.mxu0 0
    %739 = vmatprep.subr.bf16.mxu0 0
    %740 = vmatpush1.bf16.msra.mxu0 0
    %741 = vmatprep.subr.bf16.mxu0 0
    %742 = vmatpush1.bf16.msra.mxu0 0
    %743 = vmatprep.subr.bf16.mxu0 0
    %744 = vmatpush1.bf16.msra.mxu0 0
    %745 = vmatprep.subr.bf16.mxu0 0
    %746 = vmatpush1.bf16.msra.mxu0 0
    %747 = vmatprep.subr.bf16.mxu0 0
    %748 = vmatpush1.bf16.msra.mxu0 0
    %749 = vmatprep.subr.bf16.mxu0 0
    %750 = vmatpush1.bf16.msra.mxu0 0
    %751 = vmatprep.subr.bf16.mxu0 0
    %752 = vmatpush1.bf16.msra.mxu0 0
    %753 = vmatprep.subr.bf16.mxu0 0
    %754 = vmatpush1.bf16.msra.mxu0 0
    %755 = vmatprep.subr.bf16.mxu0 0
    %756 = vmatpush1.bf16.msra.mxu0 0
    %757 = vmatprep.subr.bf16.mxu0 0
    %758 = vmatpush1.bf16.msra.mxu0 0
    %759 = vmatprep.subr.bf16.mxu0 0
    %760 = vmatpush1.bf16.msra.mxu0 0
    %761 = vmatprep.mubr.bf16.mxu0 0
    %762 = vmatmul.mubr.bf16.gmra.mrb[0].mxu0 %v727
    %v763 = vpop.f32.mrb[0].mxu0
    %v764 = vadd.f32 %v712, %v763
    %v765 = vpop.f32.mrb[0].mxu0
    %v766 = vpop.f32.mrb[0].mxu0
    %v767 = vpop.f32.mrb[0].mxu0
    %768 = vdwg.mxu0
    %v769 = vunpack.c.l.bf16 %v700
    %v770 = vadd.f32 %v769, %v764
    %v771 = vxor.u32 %v770, 2147483648
    %v772 = vmul.f32 %v771, 1.442695
    %v773 = vpow.pop %v772
    %v774 = vadd.f32 %v773, 1.0
    %v775 = vrcp.pop %v774
    %v776 = vmul.f32 1.0, %v775
    %v779 = vunpack.c.l.s4 1983009808
    %v780 = vunpack.c.0.s8 %v779
    %v781 = vlaneseq
    %v782 = vshrl.u32 %v781, 7
    %v783 = vsub.s32 %v780, %v782
    %v784 = vrot.slane %v764, %v783
    %785 = vrot.lane.b32.xlu0 %v784, 64
    %v786 = vpop.permute.xlu0 %785
    %v788 = vmul.f32 %v776, %v786
    %790 = vrot.lane.b32.xlu0 %v788, 64
    %v791 = vpop.permute.xlu0 %790
    %v793 = vadd.f32 %v769, %v791
    %v794 = vtanh.pop %v793
    %v795 = vsub.f32 1.0, %v776
    %797 = vrot.lane.b32.xlu0 %v794, 96
    %v798 = vpop.permute.xlu0 %797
    %v800 = vmul.f32 %v795, %v798
    %v803 = vunpack.c.l.s4 1983009808
    %v804 = vunpack.c.0.s8 %v803
    %v805 = vlaneseq
    %v806 = vshrl.u32 %v805, 7
    %v807 = vsub.s32 %v804, %v806
    %v808 = vrot.slane %v701, %v807
    %809 = vrot.lane.b32.xlu0 %v808, 32
    %v810 = vpop.permute.xlu0 %809
    %v812 = vmul.f32 %v776, %v810
    %v813 = vadd.f32 %v800, %v812
    %v816 = vunpack.c.l.s4 1983009808
    %v817 = vunpack.c.0.s8 %v816
    %v818 = vlaneseq
    %v819 = vshrl.u32 %v818, 7
    %v820 = vsub.s32 %v817, %v819
    %v821 = vrot.slane %v813, %v820
    %822 = vrot.lane.b32.xlu0 %v821, 96
    %v823 = vpop.permute.xlu0 %822
    %825 = vst.msk [vmem:[#allocation11] sm:$0x3] %vm221, %v823
    %v826 = vpack.c.bf16 %v813, %v813
    %v827 = vld [vmem:[#allocation5] sm:$0xf]
    %v828 = vld [vmem:[#allocation5 + $0x4] sm:$0xf]
    %v829 = vld [vmem:[#allocation5 + $0x8] sm:$0xf]
    %v830 = vld [vmem:[#allocation5 + $0xc] sm:$0xf]
    %v831 = vld [vmem:[#allocation7] sm:$0x1]
    %v833 = vlaneseq
    %v834 = vshrl.u32 %v833, 7
    %v835 = vsub.s32 0, %v834
    %v836 = vrot.slane %v831, %v835
    %839 = vrot.lane.b32.xlu0 %v826, 96
    %v840 = vpop.permute.xlu0 %839
    %v845 = vunpack.c.l.b16 %v827
    %v846 = vunpack.c.l.b16 %v828
    %v847 = vunpack.c.l.b16 %v829
    %v848 = vunpack.c.l.b16 %v830
    %v849 = vpack.c.b16 %v846, %v845
    %v850 = vpack.c.b16 %v848, %v847
    %v854 = vsel %vm121, %v840, 0
    %856 = vmatprep.subr.bf16.mxu0 0
    %857 = vmatpush1.bf16.msra.mxu0 %v849
    %858 = vmatprep.subr.bf16.mxu0 0
    %859 = vmatpush1.bf16.msra.mxu0 %v850
    %860 = vmatprep.subr.bf16.mxu0 0
    %861 = vmatpush1.bf16.msra.mxu0 0
    %862 = vmatprep.subr.bf16.mxu0 0
    %863 = vmatpush1.bf16.msra.mxu0 0
    %864 = vmatprep.subr.bf16.mxu0 0
    %865 = vmatpush1.bf16.msra.mxu0 0
    %866 = vmatprep.subr.bf16.mxu0 0
    %867 = vmatpush1.bf16.msra.mxu0 0
    %868 = vmatprep.subr.bf16.mxu0 0
    %869 = vmatpush1.bf16.msra.mxu0 0
    %870 = vmatprep.subr.bf16.mxu0 0
    %871 = vmatpush1.bf16.msra.mxu0 0
    %872 = vmatprep.subr.bf16.mxu0 0
    %873 = vmatpush1.bf16.msra.mxu0 0
    %874 = vmatprep.subr.bf16.mxu0 0
    %875 = vmatpush1.bf16.msra.mxu0 0
    %876 = vmatprep.subr.bf16.mxu0 0
    %877 = vmatpush1.bf16.msra.mxu0 0
    %878 = vmatprep.subr.bf16.mxu0 0
    %879 = vmatpush1.bf16.msra.mxu0 0
    %880 = vmatprep.subr.bf16.mxu0 0
    %881 = vmatpush1.bf16.msra.mxu0 0
    %882 = vmatprep.subr.bf16.mxu0 0
    %883 = vmatpush1.bf16.msra.mxu0 0
    %884 = vmatprep.subr.bf16.mxu0 0
    %885 = vmatpush1.bf16.msra.mxu0 0
    %886 = vmatprep.subr.bf16.mxu0 0
    %887 = vmatpush1.bf16.msra.mxu0 0
    %888 = vmatprep.mubr.bf16.mxu0 0
    %889 = vmatmul.mubr.bf16.gmra.mrb[0].mxu0 %v854
    %v890 = vpop.f32.mrb[0].mxu0
    %v891 = vadd.f32 %v836, %v890
    %v892 = vpop.f32.mrb[0].mxu0
    %v893 = vpop.f32.mrb[0].mxu0
    %v894 = vpop.f32.mrb[0].mxu0
    %895 = vdwg.mxu0
    %v896 = vld [vmem:[%s293] sm:$0x3]
    %v897 = vld [vmem:[%s295] sm:$0xf]
    %v898 = vld [vmem:[%s295 + $0x4] sm:$0xf]
    %v899 = vld [vmem:[%s295 + $0x8] sm:$0xf]
    %v900 = vld [vmem:[%s295 + $0xc] sm:$0xf]
    %v901 = vld [vmem:[%s300] sm:$0x1]
    %v902 = vpack.c.bf16 %v896, %v896
    %v904 = vlaneseq
    %v905 = vshrl.u32 %v904, 7
    %v906 = vsub.s32 0, %v905
    %v907 = vrot.slane %v901, %v906
    %v913 = vunpack.c.l.b16 %v897
    %v914 = vunpack.c.l.b16 %v898
    %v915 = vunpack.c.l.b16 %v899
    %v916 = vunpack.c.l.b16 %v900
    %v917 = vpack.c.b16 %v914, %v913
    %v918 = vpack.c.b16 %v916, %v915
    %v922 = vsel %vm121, %v902, 0
    %924 = vmatprep.subr.bf16.mxu0 0
    %925 = vmatpush1.bf16.msra.mxu0 %v917
    %926 = vmatprep.subr.bf16.mxu0 0
    %927 = vmatpush1.bf16.msra.mxu0 %v918
    %928 = vmatprep.subr.bf16.mxu0 0
    %929 = vmatpush1.bf16.msra.mxu0 0
    %930 = vmatprep.subr.bf16.mxu0 0
    %931 = vmatpush1.bf16.msra.mxu0 0
    %932 = vmatprep.subr.bf16.mxu0 0
    %933 = vmatpush1.bf16.msra.mxu0 0
    %934 = vmatprep.subr.bf16.mxu0 0
    %935 = vmatpush1.bf16.msra.mxu0 0
    %936 = vmatprep.subr.bf16.mxu0 0
    %937 = vmatpush1.bf16.msra.mxu0 0
    %938 = vmatprep.subr.bf16.mxu0 0
    %939 = vmatpush1.bf16.msra.mxu0 0
    %940 = vmatprep.subr.bf16.mxu0 0
    %941 = vmatpush1.bf16.msra.mxu0 0
    %942 = vmatprep.subr.bf16.mxu0 0
    %943 = vmatpush1.bf16.msra.mxu0 0
    %944 = vmatprep.subr.bf16.mxu0 0
    %945 = vmatpush1.bf16.msra.mxu0 0
    %946 = vmatprep.subr.bf16.mxu0 0
    %947 = vmatpush1.bf16.msra.mxu0 0
    %948 = vmatprep.subr.bf16.mxu0 0
    %949 = vmatpush1.bf16.msra.mxu0 0
    %950 = vmatprep.subr.bf16.mxu0 0
    %951 = vmatpush1.bf16.msra.mxu0 0
    %952 = vmatprep.subr.bf16.mxu0 0
    %953 = vmatpush1.bf16.msra.mxu0 0
    %954 = vmatprep.subr.bf16.mxu0 0
    %955 = vmatpush1.bf16.msra.mxu0 0
    %956 = vmatprep.mubr.bf16.mxu0 0
    %957 = vmatmul.mubr.bf16.gmra.mrb[0].mxu0 %v922
    %v958 = vpop.f32.mrb[0].mxu0
    %v959 = vadd.f32 %v907, %v958
    %v960 = vpop.f32.mrb[0].mxu0
    %v961 = vpop.f32.mrb[0].mxu0
    %v962 = vpop.f32.mrb[0].mxu0
    %963 = vdwg.mxu0
    %v964 = vadd.f32 %v891, %v959
    %v965 = vxor.u32 %v964, 2147483648
    %v966 = vmul.f32 %v965, 1.442695
    %v967 = vpow.pop %v966
    %v968 = vadd.f32 %v967, 1.0
    %v969 = vrcp.pop %v968
    %v970 = vmul.f32 1.0, %v969
    %972 = vrot.lane.b32.xlu0 %v959, 64
    %v973 = vpop.permute.xlu0 %972
    %v975 = vmul.f32 %v970, %v973
    %977 = vrot.lane.b32.xlu0 %v975, 64
    %v978 = vpop.permute.xlu0 %977
    %v980 = vadd.f32 %v891, %v978
    %v981 = vtanh.pop %v980
    %v982 = vsub.f32 1.0, %v970
    %984 = vrot.lane.b32.xlu0 %v981, 96
    %v985 = vpop.permute.xlu0 %984
    %v987 = vmul.f32 %v982, %v985
    %989 = vrot.lane.b32.xlu0 %v896, 32
    %v990 = vpop.permute.xlu0 %989
    %v992 = vmul.f32 %v970, %v990
    %v993 = vadd.f32 %v987, %v992
    %995 = vrot.lane.b32.xlu0 %v993, 96
    %v996 = vpop.permute.xlu0 %995
    %998 = vst.msk [vmem:[%s293] sm:$0x3] %vm221, %v996
    %s999 = scalar_lea.vmem [#allocation2], 3
    %v1000 = vld [vmem:[%s999] sm:$0x1]
    %v1001 = vld [vmem:[#allocation11] sm:$0x3]
    %v1002 = vld [vmem:[#allocation8] sm:$0xf]
    %v1003 = vld [vmem:[#allocation8 + $0x4] sm:$0xf]
    %v1004 = vld [vmem:[#allocation8 + $0x8] sm:$0xf]
    %v1005 = vld [vmem:[#allocation8 + $0xc] sm:$0xf]
    %v1006 = vld [vmem:[#allocation10] sm:$0x1]
    %v1007 = vpack.c.bf16 %v1001, %v1001
    %v1009 = vlaneseq
    %v1010 = vshrl.u32 %v1009, 7
    %v1011 = vsub.s32 0, %v1010
    %v1012 = vrot.slane %v1006, %v1011
    %v1018 = vunpack.c.l.b16 %v1002
    %v1019 = vunpack.c.l.b16 %v1003
    %v1020 = vunpack.c.l.b16 %v1004
    %v1021 = vunpack.c.l.b16 %v1005
    %v1022 = vpack.c.b16 %v1019, %v1018
    %v1023 = vpack.c.b16 %v1021, %v1020
    %v1027 = vsel %vm121, %v1007, 0
    %1029 = vmatprep.subr.bf16.mxu0 0
    %1030 = vmatpush1.bf16.msra.mxu0 %v1022
    %1031 = vmatprep.subr.bf16.mxu0 0
    %1032 = vmatpush1.bf16.msra.mxu0 %v1023
    %1033 = vmatprep.subr.bf16.mxu0 0
    %1034 = vmatpush1.bf16.msra.mxu0 0
    %1035 = vmatprep.subr.bf16.mxu0 0
    %1036 = vmatpush1.bf16.msra.mxu0 0
    %1037 = vmatprep.subr.bf16.mxu0 0
    %1038 = vmatpush1.bf16.msra.mxu0 0
    %1039 = vmatprep.subr.bf16.mxu0 0
    %1040 = vmatpush1.bf16.msra.mxu0 0
    %1041 = vmatprep.subr.bf16.mxu0 0
    %1042 = vmatpush1.bf16.msra.mxu0 0
    %1043 = vmatprep.subr.bf16.mxu0 0
    %1044 = vmatpush1.bf16.msra.mxu0 0
    %1045 = vmatprep.subr.bf16.mxu0 0
    %1046 = vmatpush1.bf16.msra.mxu0 0
    %1047 = vmatprep.subr.bf16.mxu0 0
    %1048 = vmatpush1.bf16.msra.mxu0 0
    %1049 = vmatprep.subr.bf16.mxu0 0
    %1050 = vmatpush1.bf16.msra.mxu0 0
    %1051 = vmatprep.subr.bf16.mxu0 0
    %1052 = vmatpush1.bf16.msra.mxu0 0
    %1053 = vmatprep.subr.bf16.mxu0 0
    %1054 = vmatpush1.bf16.msra.mxu0 0
    %1055 = vmatprep.subr.bf16.mxu0 0
    %1056 = vmatpush1.bf16.msra.mxu0 0
    %1057 = vmatprep.subr.bf16.mxu0 0
    %1058 = vmatpush1.bf16.msra.mxu0 0
    %1059 = vmatprep.subr.bf16.mxu0 0
    %1060 = vmatpush1.bf16.msra.mxu0 0
    %1061 = vmatprep.mubr.bf16.mxu0 0
    %1062 = vmatmul.mubr.bf16.gmra.mrb[0].mxu0 %v1027
    %v1063 = vpop.f32.mrb[0].mxu0
    %v1064 = vadd.f32 %v1012, %v1063
    %v1065 = vpop.f32.mrb[0].mxu0
    %v1066 = vpop.f32.mrb[0].mxu0
    %v1067 = vpop.f32.mrb[0].mxu0
    %1068 = vdwg.mxu0
    %v1069 = vunpack.c.l.bf16 %v1000
    %v1070 = vadd.f32 %v1069, %v1064
    %v1071 = vxor.u32 %v1070, 2147483648
    %v1072 = vmul.f32 %v1071, 1.442695
    %v1073 = vpow.pop %v1072
    %v1074 = vadd.f32 %v1073, 1.0
    %v1075 = vrcp.pop %v1074
    %v1076 = vmul.f32 1.0, %v1075
    %v1079 = vunpack.c.l.s4 1983009808
    %v1080 = vunpack.c.0.s8 %v1079
    %v1081 = vlaneseq
    %v1082 = vshrl.u32 %v1081, 7
    %v1083 = vsub.s32 %v1080, %v1082
    %v1084 = vrot.slane %v1064, %v1083
    %1085 = vrot.lane.b32.xlu0 %v1084, 64
    %v1086 = vpop.permute.xlu0 %1085
    %v1088 = vmul.f32 %v1076, %v1086
    %1090 = vrot.lane.b32.xlu0 %v1088, 64
    %v1091 = vpop.permute.xlu0 %1090
    %v1093 = vadd.f32 %v1069, %v1091
    %v1094 = vtanh.pop %v1093
    %v1095 = vsub.f32 1.0, %v1076
    %1097 = vrot.lane.b32.xlu0 %v1094, 96
    %v1098 = vpop.permute.xlu0 %1097
    %v1100 = vmul.f32 %v1095, %v1098
    %v1103 = vunpack.c.l.s4 1983009808
    %v1104 = vunpack.c.0.s8 %v1103
    %v1105 = vlaneseq
    %v1106 = vshrl.u32 %v1105, 7
    %v1107 = vsub.s32 %v1104, %v1106
    %v1108 = vrot.slane %v1001, %v1107
    %1109 = vrot.lane.b32.xlu0 %v1108, 32
    %v1110 = vpop.permute.xlu0 %1109
    %v1112 = vmul.f32 %v1076, %v1110
    %v1113 = vadd.f32 %v1100, %v1112
    %v1116 = vunpack.c.l.s4 1983009808
    %v1117 = vunpack.c.0.s8 %v1116
    %v1118 = vlaneseq
    %v1119 = vshrl.u32 %v1118, 7
    %v1120 = vsub.s32 %v1117, %v1119
    %v1121 = vrot.slane %v1113, %v1120
    %1122 = vrot.lane.b32.xlu0 %v1121, 96
    %v1123 = vpop.permute.xlu0 %1122
    %1125 = vst.msk [vmem:[#allocation11] sm:$0x3] %vm221, %v1123
    %v1126 = vpack.c.bf16 %v1113, %v1113
    %v1127 = vld [vmem:[#allocation5] sm:$0xf]
    %v1128 = vld [vmem:[#allocation5 + $0x4] sm:$0xf]
    %v1129 = vld [vmem:[#allocation5 + $0x8] sm:$0xf]
    %v1130 = vld [vmem:[#allocation5 + $0xc] sm:$0xf]
    %v1131 = vld [vmem:[#allocation7] sm:$0x1]
    %v1133 = vlaneseq
    %v1134 = vshrl.u32 %v1133, 7
    %v1135 = vsub.s32 0, %v1134
    %v1136 = vrot.slane %v1131, %v1135
    %1139 = vrot.lane.b32.xlu0 %v1126, 96
    %v1140 = vpop.permute.xlu0 %1139
    %v1145 = vunpack.c.l.b16 %v1127
    %v1146 = vunpack.c.l.b16 %v1128
    %v1147 = vunpack.c.l.b16 %v1129
    %v1148 = vunpack.c.l.b16 %v1130
    %v1149 = vpack.c.b16 %v1146, %v1145
    %v1150 = vpack.c.b16 %v1148, %v1147
    %v1154 = vsel %vm121, %v1140, 0
    %1156 = vmatprep.subr.bf16.mxu0 0
    %1157 = vmatpush1.bf16.msra.mxu0 %v1149
    %1158 = vmatprep.subr.bf16.mxu0 0
    %1159 = vmatpush1.bf16.msra.mxu0 %v1150
    %1160 = vmatprep.subr.bf16.mxu0 0
    %1161 = vmatpush1.bf16.msra.mxu0 0
    %1162 = vmatprep.subr.bf16.mxu0 0
    %1163 = vmatpush1.bf16.msra.mxu0 0
    %1164 = vmatprep.subr.bf16.mxu0 0
    %1165 = vmatpush1.bf16.msra.mxu0 0
    %1166 = vmatprep.subr.bf16.mxu0 0
    %1167 = vmatpush1.bf16.msra.mxu0 0
    %1168 = vmatprep.subr.bf16.mxu0 0
    %1169 = vmatpush1.bf16.msra.mxu0 0
    %1170 = vmatprep.subr.bf16.mxu0 0
    %1171 = vmatpush1.bf16.msra.mxu0 0
    %1172 = vmatprep.subr.bf16.mxu0 0
    %1173 = vmatpush1.bf16.msra.mxu0 0
    %1174 = vmatprep.subr.bf16.mxu0 0
    %1175 = vmatpush1.bf16.msra.mxu0 0
    %1176 = vmatprep.subr.bf16.mxu0 0
    %1177 = vmatpush1.bf16.msra.mxu0 0
    %1178 = vmatprep.subr.bf16.mxu0 0
    %1179 = vmatpush1.bf16.msra.mxu0 0
    %1180 = vmatprep.subr.bf16.mxu0 0
    %1181 = vmatpush1.bf16.msra.mxu0 0
    %1182 = vmatprep.subr.bf16.mxu0 0
    %1183 = vmatpush1.bf16.msra.mxu0 0
    %1184 = vmatprep.subr.bf16.mxu0 0
    %1185 = vmatpush1.bf16.msra.mxu0 0
    %1186 = vmatprep.subr.bf16.mxu0 0
    %1187 = vmatpush1.bf16.msra.mxu0 0
    %1188 = vmatprep.mubr.bf16.mxu0 0
    %1189 = vmatmul.mubr.bf16.gmra.mrb[0].mxu0 %v1154
    %v1190 = vpop.f32.mrb[0].mxu0
    %v1191 = vadd.f32 %v1136, %v1190
    %v1192 = vpop.f32.mrb[0].mxu0
    %v1193 = vpop.f32.mrb[0].mxu0
    %v1194 = vpop.f32.mrb[0].mxu0
    %1195 = vdwg.mxu0
    %v1196 = vld [vmem:[%s293] sm:$0x3]
    %v1197 = vld [vmem:[%s295] sm:$0xf]
    %v1198 = vld [vmem:[%s295 + $0x4] sm:$0xf]
    %v1199 = vld [vmem:[%s295 + $0x8] sm:$0xf]
    %v1200 = vld [vmem:[%s295 + $0xc] sm:$0xf]
    %v1201 = vld [vmem:[%s300] sm:$0x1]
    %v1202 = vpack.c.bf16 %v1196, %v1196
    %v1204 = vlaneseq
    %v1205 = vshrl.u32 %v1204, 7
    %v1206 = vsub.s32 0, %v1205
    %v1207 = vrot.slane %v1201, %v1206
    %v1213 = vunpack.c.l.b16 %v1197
    %v1214 = vunpack.c.l.b16 %v1198
    %v1215 = vunpack.c.l.b16 %v1199
    %v1216 = vunpack.c.l.b16 %v1200
    %v1217 = vpack.c.b16 %v1214, %v1213
    %v1218 = vpack.c.b16 %v1216, %v1215
    %v1222 = vsel %vm121, %v1202, 0
    %1224 = vmatprep.subr.bf16.mxu0 0
    %1225 = vmatpush1.bf16.msra.mxu0 %v1217
    %1226 = vmatprep.subr.bf16.mxu0 0
    %1227 = vmatpush1.bf16.msra.mxu0 %v1218
    %1228 = vmatprep.subr.bf16.mxu0 0
    %1229 = vmatpush1.bf16.msra.mxu0 0
    %1230 = vmatprep.subr.bf16.mxu0 0
    %1231 = vmatpush1.bf16.msra.mxu0 0
    %1232 = vmatprep.subr.bf16.mxu0 0
    %1233 = vmatpush1.bf16.msra.mxu0 0
    %1234 = vmatprep.subr.bf16.mxu0 0
    %1235 = vmatpush1.bf16.msra.mxu0 0
    %1236 = vmatprep.subr.bf16.mxu0 0
    %1237 = vmatpush1.bf16.msra.mxu0 0
    %1238 = vmatprep.subr.bf16.mxu0 0
    %1239 = vmatpush1.bf16.msra.mxu0 0
    %1240 = vmatprep.subr.bf16.mxu0 0
    %1241 = vmatpush1.bf16.msra.mxu0 0
    %1242 = vmatprep.subr.bf16.mxu0 0
    %1243 = vmatpush1.bf16.msra.mxu0 0
    %1244 = vmatprep.subr.bf16.mxu0 0
    %1245 = vmatpush1.bf16.msra.mxu0 0
    %1246 = vmatprep.subr.bf16.mxu0 0
    %1247 = vmatpush1.bf16.msra.mxu0 0
    %1248 = vmatprep.subr.bf16.mxu0 0
    %1249 = vmatpush1.bf16.msra.mxu0 0
    %1250 = vmatprep.subr.bf16.mxu0 0
    %1251 = vmatpush1.bf16.msra.mxu0 0
    %1252 = vmatprep.subr.bf16.mxu0 0
    %1253 = vmatpush1.bf16.msra.mxu0 0
    %1254 = vmatprep.subr.bf16.mxu0 0
    %1255 = vmatpush1.bf16.msra.mxu0 0
    %1256 = vmatprep.mubr.bf16.mxu0 0
    %1257 = vmatmul.mubr.bf16.gmra.mrb[0].mxu0 %v1222
    %v1258 = vpop.f32.mrb[0].mxu0
    %v1259 = vadd.f32 %v1207, %v1258
    %v1260 = vpop.f32.mrb[0].mxu0
    %v1261 = vpop.f32.mrb[0].mxu0
    %v1262 = vpop.f32.mrb[0].mxu0
    %1263 = vdwg.mxu0
    %v1264 = vadd.f32 %v1191, %v1259
    %v1265 = vxor.u32 %v1264, 2147483648
    %v1266 = vmul.f32 %v1265, 1.442695
    %v1267 = vpow.pop %v1266
    %v1268 = vadd.f32 %v1267, 1.0
    %v1269 = vrcp.pop %v1268
    %v1270 = vmul.f32 1.0, %v1269
    %1272 = vrot.lane.b32.xlu0 %v1259, 64
    %v1273 = vpop.permute.xlu0 %1272
    %v1275 = vmul.f32 %v1270, %v1273
    %1277 = vrot.lane.b32.xlu0 %v1275, 64
    %v1278 = vpop.permute.xlu0 %1277
    %v1280 = vadd.f32 %v1191, %v1278
    %v1281 = vtanh.pop %v1280
    %v1282 = vsub.f32 1.0, %v1270
    %1284 = vrot.lane.b32.xlu0 %v1281, 96
    %v1285 = vpop.permute.xlu0 %1284
    %v1287 = vmul.f32 %v1282, %v1285
    %1289 = vrot.lane.b32.xlu0 %v1196, 32
    %v1290 = vpop.permute.xlu0 %1289
    %v1292 = vmul.f32 %v1270, %v1290
    %v1293 = vadd.f32 %v1287, %v1292
    %1295 = vrot.lane.b32.xlu0 %v1293, 96
    %v1296 = vpop.permute.xlu0 %1295
    %1298 = vst.msk [vmem:[%s293] sm:$0x3] %vm221, %v1296
    %s1299 = scalar_lea.vmem [#allocation2], 4
    %v1300 = vld [vmem:[%s1299] sm:$0x1]
    %v1301 = vld [vmem:[#allocation11] sm:$0x3]
    %v1302 = vld [vmem:[#allocation8] sm:$0xf]
    %v1303 = vld [vmem:[#allocation8 + $0x4] sm:$0xf]
    %v1304 = vld [vmem:[#allocation8 + $0x8] sm:$0xf]
    %v1305 = vld [vmem:[#allocation8 + $0xc] sm:$0xf]
    %v1306 = vld [vmem:[#allocation10] sm:$0x1]
    %v1307 = vpack.c.bf16 %v1301, %v1301
    %v1309 = vlaneseq
    %v1310 = vshrl.u32 %v1309, 7
    %v1311 = vsub.s32 0, %v1310
    %v1312 = vrot.slane %v1306, %v1311
    %v1318 = vunpack.c.l.b16 %v1302
    %v1319 = vunpack.c.l.b16 %v1303
    %v1320 = vunpack.c.l.b16 %v1304
    %v1321 = vunpack.c.l.b16 %v1305
    %v1322 = vpack.c.b16 %v1319, %v1318
    %v1323 = vpack.c.b16 %v1321, %v1320
    %v1327 = vsel %vm121, %v1307, 0
    %1329 = vmatprep.subr.bf16.mxu0 0
    %1330 = vmatpush1.bf16.msra.mxu0 %v1322
    %1331 = vmatprep.subr.bf16.mxu0 0
    %1332 = vmatpush1.bf16.msra.mxu0 %v1323
    %1333 = vmatprep.subr.bf16.mxu0 0
    %1334 = vmatpush1.bf16.msra.mxu0 0
    %1335 = vmatprep.subr.bf16.mxu0 0
    %1336 = vmatpush1.bf16.msra.mxu0 0
    %1337 = vmatprep.subr.bf16.mxu0 0
    %1338 = vmatpush1.bf16.msra.mxu0 0
    %1339 = vmatprep.subr.bf16.mxu0 0
    %1340 = vmatpush1.bf16.msra.mxu0 0
    %1341 = vmatprep.subr.bf16.mxu0 0
    %1342 = vmatpush1.bf16.msra.mxu0 0
    %1343 = vmatprep.subr.bf16.mxu0 0
    %1344 = vmatpush1.bf16.msra.mxu0 0
    %1345 = vmatprep.subr.bf16.mxu0 0
    %1346 = vmatpush1.bf16.msra.mxu0 0
    %1347 = vmatprep.subr.bf16.mxu0 0
    %1348 = vmatpush1.bf16.msra.mxu0 0
    %1349 = vmatprep.subr.bf16.mxu0 0
    %1350 = vmatpush1.bf16.msra.mxu0 0
    %1351 = vmatprep.subr.bf16.mxu0 0
    %1352 = vmatpush1.bf16.msra.mxu0 0
    %1353 = vmatprep.subr.bf16.mxu0 0
    %1354 = vmatpush1.bf16.msra.mxu0 0
    %1355 = vmatprep.subr.bf16.mxu0 0
    %1356 = vmatpush1.bf16.msra.mxu0 0
    %1357 = vmatprep.subr.bf16.mxu0 0
    %1358 = vmatpush1.bf16.msra.mxu0 0
    %1359 = vmatprep.subr.bf16.mxu0 0
    %1360 = vmatpush1.bf16.msra.mxu0 0
    %1361 = vmatprep.mubr.bf16.mxu0 0
    %1362 = vmatmul.mubr.bf16.gmra.mrb[0].mxu0 %v1327
    %v1363 = vpop.f32.mrb[0].mxu0
    %v1364 = vadd.f32 %v1312, %v1363
    %v1365 = vpop.f32.mrb[0].mxu0
    %v1366 = vpop.f32.mrb[0].mxu0
    %v1367 = vpop.f32.mrb[0].mxu0
    %1368 = vdwg.mxu0
    %v1369 = vunpack.c.l.bf16 %v1300
    %v1370 = vadd.f32 %v1369, %v1364
    %v1371 = vxor.u32 %v1370, 2147483648
    %v1372 = vmul.f32 %v1371, 1.442695
    %v1373 = vpow.pop %v1372
    %v1374 = vadd.f32 %v1373, 1.0
    %v1375 = vrcp.pop %v1374
    %v1376 = vmul.f32 1.0, %v1375
    %v1379 = vunpack.c.l.s4 1983009808
    %v1380 = vunpack.c.0.s8 %v1379
    %v1381 = vlaneseq
    %v1382 = vshrl.u32 %v1381, 7
    %v1383 = vsub.s32 %v1380, %v1382
    %v1384 = vrot.slane %v1364, %v1383
    %1385 = vrot.lane.b32.xlu0 %v1384, 64
    %v1386 = vpop.permute.xlu0 %1385
    %v1388 = vmul.f32 %v1376, %v1386
    %1390 = vrot.lane.b32.xlu0 %v1388, 64
    %v1391 = vpop.permute.xlu0 %1390
    %v1393 = vadd.f32 %v1369, %v1391
    %v1394 = vtanh.pop %v1393
    %v1395 = vsub.f32 1.0, %v1376
    %1397 = vrot.lane.b32.xlu0 %v1394, 96
    %v1398 = vpop.permute.xlu0 %1397
    %v1400 = vmul.f32 %v1395, %v1398
    %v1403 = vunpack.c.l.s4 1983009808
    %v1404 = vunpack.c.0.s8 %v1403
    %v1405 = vlaneseq
    %v1406 = vshrl.u32 %v1405, 7
    %v1407 = vsub.s32 %v1404, %v1406
    %v1408 = vrot.slane %v1301, %v1407
    %1409 = vrot.lane.b32.xlu0 %v1408, 32
    %v1410 = vpop.permute.xlu0 %1409
    %v1412 = vmul.f32 %v1376, %v1410
    %v1413 = vadd.f32 %v1400, %v1412
    %v1416 = vunpack.c.l.s4 1983009808
    %v1417 = vunpack.c.0.s8 %v1416
    %v1418 = vlaneseq
    %v1419 = vshrl.u32 %v1418, 7
    %v1420 = vsub.s32 %v1417, %v1419
    %v1421 = vrot.slane %v1413, %v1420
    %1422 = vrot.lane.b32.xlu0 %v1421, 96
    %v1423 = vpop.permute.xlu0 %1422
    %1425 = vst.msk [vmem:[#allocation11] sm:$0x3] %vm221, %v1423
    %v1426 = vpack.c.bf16 %v1413, %v1413
    %v1427 = vld [vmem:[#allocation5] sm:$0xf]
    %v1428 = vld [vmem:[#allocation5 + $0x4] sm:$0xf]
    %v1429 = vld [vmem:[#allocation5 + $0x8] sm:$0xf]
    %v1430 = vld [vmem:[#allocation5 + $0xc] sm:$0xf]
    %v1431 = vld [vmem:[#allocation7] sm:$0x1]
    %v1433 = vlaneseq
    %v1434 = vshrl.u32 %v1433, 7
    %v1435 = vsub.s32 0, %v1434
    %v1436 = vrot.slane %v1431, %v1435
    %1439 = vrot.lane.b32.xlu0 %v1426, 96
    %v1440 = vpop.permute.xlu0 %1439
    %v1445 = vunpack.c.l.b16 %v1427
    %v1446 = vunpack.c.l.b16 %v1428
    %v1447 = vunpack.c.l.b16 %v1429
    %v1448 = vunpack.c.l.b16 %v1430
    %v1449 = vpack.c.b16 %v1446, %v1445
    %v1450 = vpack.c.b16 %v1448, %v1447
    %v1454 = vsel %vm121, %v1440, 0
    %1456 = vmatprep.subr.bf16.mxu0 0
    %1457 = vmatpush1.bf16.msra.mxu0 %v1449
    %1458 = vmatprep.subr.bf16.mxu0 0
    %1459 = vmatpush1.bf16.msra.mxu0 %v1450
    %1460 = vmatprep.subr.bf16.mxu0 0
    %1461 = vmatpush1.bf16.msra.mxu0 0
    %1462 = vmatprep.subr.bf16.mxu0 0
    %1463 = vmatpush1.bf16.msra.mxu0 0
    %1464 = vmatprep.subr.bf16.mxu0 0
    %1465 = vmatpush1.bf16.msra.mxu0 0
    %1466 = vmatprep.subr.bf16.mxu0 0
    %1467 = vmatpush1.bf16.msra.mxu0 0
    %1468 = vmatprep.subr.bf16.mxu0 0
    %1469 = vmatpush1.bf16.msra.mxu0 0
    %1470 = vmatprep.subr.bf16.mxu0 0
    %1471 = vmatpush1.bf16.msra.mxu0 0
    %1472 = vmatprep.subr.bf16.mxu0 0
    %1473 = vmatpush1.bf16.msra.mxu0 0
    %1474 = vmatprep.subr.bf16.mxu0 0
    %1475 = vmatpush1.bf16.msra.mxu0 0
    %1476 = vmatprep.subr.bf16.mxu0 0
    %1477 = vmatpush1.bf16.msra.mxu0 0
    %1478 = vmatprep.subr.bf16.mxu0 0
    %1479 = vmatpush1.bf16.msra.mxu0 0
    %1480 = vmatprep.subr.bf16.mxu0 0
    %1481 = vmatpush1.bf16.msra.mxu0 0
    %1482 = vmatprep.subr.bf16.mxu0 0
    %1483 = vmatpush1.bf16.msra.mxu0 0
    %1484 = vmatprep.subr.bf16.mxu0 0
    %1485 = vmatpush1.bf16.msra.mxu0 0
    %1486 = vmatprep.subr.bf16.mxu0 0
    %1487 = vmatpush1.bf16.msra.mxu0 0
    %1488 = vmatprep.mubr.bf16.mxu0 0
    %1489 = vmatmul.mubr.bf16.gmra.mrb[0].mxu0 %v1454
    %v1490 = vpop.f32.mrb[0].mxu0
    %v1491 = vadd.f32 %v1436, %v1490
    %v1492 = vpop.f32.mrb[0].mxu0
    %v1493 = vpop.f32.mrb[0].mxu0
    %v1494 = vpop.f32.mrb[0].mxu0
    %1495 = vdwg.mxu0
    %v1496 = vld [vmem:[%s293] sm:$0x3]
    %v1497 = vld [vmem:[%s295] sm:$0xf]
    %v1498 = vld [vmem:[%s295 + $0x4] sm:$0xf]
    %v1499 = vld [vmem:[%s295 + $0x8] sm:$0xf]
    %v1500 = vld [vmem:[%s295 + $0xc] sm:$0xf]
    %v1501 = vld [vmem:[%s300] sm:$0x1]
    %v1502 = vpack.c.bf16 %v1496, %v1496
    %v1504 = vlaneseq
    %v1505 = vshrl.u32 %v1504, 7
    %v1506 = vsub.s32 0, %v1505
    %v1507 = vrot.slane %v1501, %v1506
    %v1513 = vunpack.c.l.b16 %v1497
    %v1514 = vunpack.c.l.b16 %v1498
    %v1515 = vunpack.c.l.b16 %v1499
    %v1516 = vunpack.c.l.b16 %v1500
    %v1517 = vpack.c.b16 %v1514, %v1513
    %v1518 = vpack.c.b16 %v1516, %v1515
    %v1522 = vsel %vm121, %v1502, 0
    %1524 = vmatprep.subr.bf16.mxu0 0
    %1525 = vmatpush1.bf16.msra.mxu0 %v1517
    %1526 = vmatprep.subr.bf16.mxu0 0
    %1527 = vmatpush1.bf16.msra.mxu0 %v1518
    %1528 = vmatprep.subr.bf16.mxu0 0
    %1529 = vmatpush1.bf16.msra.mxu0 0
    %1530 = vmatprep.subr.bf16.mxu0 0
    %1531 = vmatpush1.bf16.msra.mxu0 0
    %1532 = vmatprep.subr.bf16.mxu0 0
    %1533 = vmatpush1.bf16.msra.mxu0 0
    %1534 = vmatprep.subr.bf16.mxu0 0
    %1535 = vmatpush1.bf16.msra.mxu0 0
    %1536 = vmatprep.subr.bf16.mxu0 0
    %1537 = vmatpush1.bf16.msra.mxu0 0
    %1538 = vmatprep.subr.bf16.mxu0 0
    %1539 = vmatpush1.bf16.msra.mxu0 0
    %1540 = vmatprep.subr.bf16.mxu0 0
    %1541 = vmatpush1.bf16.msra.mxu0 0
    %1542 = vmatprep.subr.bf16.mxu0 0
    %1543 = vmatpush1.bf16.msra.mxu0 0
    %1544 = vmatprep.subr.bf16.mxu0 0
    %1545 = vmatpush1.bf16.msra.mxu0 0
    %1546 = vmatprep.subr.bf16.mxu0 0
    %1547 = vmatpush1.bf16.msra.mxu0 0
    %1548 = vmatprep.subr.bf16.mxu0 0
    %1549 = vmatpush1.bf16.msra.mxu0 0
    %1550 = vmatprep.subr.bf16.mxu0 0
    %1551 = vmatpush1.bf16.msra.mxu0 0
    %1552 = vmatprep.subr.bf16.mxu0 0
    %1553 = vmatpush1.bf16.msra.mxu0 0
    %1554 = vmatprep.subr.bf16.mxu0 0
    %1555 = vmatpush1.bf16.msra.mxu0 0
    %1556 = vmatprep.mubr.bf16.mxu0 0
    %1557 = vmatmul.mubr.bf16.gmra.mrb[0].mxu0 %v1522
    %v1558 = vpop.f32.mrb[0].mxu0
    %v1559 = vadd.f32 %v1507, %v1558
    %v1560 = vpop.f32.mrb[0].mxu0
    %v1561 = vpop.f32.mrb[0].mxu0
    %v1562 = vpop.f32.mrb[0].mxu0
    %1563 = vdwg.mxu0
    %v1564 = vadd.f32 %v1491, %v1559
    %v1565 = vxor.u32 %v1564, 2147483648
    %v1566 = vmul.f32 %v1565, 1.442695
    %v1567 = vpow.pop %v1566
    %v1568 = vadd.f32 %v1567, 1.0
    %v1569 = vrcp.pop %v1568
    %v1570 = vmul.f32 1.0, %v1569
    %1572 = vrot.lane.b32.xlu0 %v1559, 64
    %v1573 = vpop.permute.xlu0 %1572
    %v1575 = vmul.f32 %v1570, %v1573
    %1577 = vrot.lane.b32.xlu0 %v1575, 64
    %v1578 = vpop.permute.xlu0 %1577
    %v1580 = vadd.f32 %v1491, %v1578
    %v1581 = vtanh.pop %v1580
    %v1582 = vsub.f32 1.0, %v1570
    %1584 = vrot.lane.b32.xlu0 %v1581, 96
    %v1585 = vpop.permute.xlu0 %1584
    %v1587 = vmul.f32 %v1582, %v1585
    %1589 = vrot.lane.b32.xlu0 %v1496, 32
    %v1590 = vpop.permute.xlu0 %1589
    %v1592 = vmul.f32 %v1570, %v1590
    %v1593 = vadd.f32 %v1587, %v1592
    %1595 = vrot.lane.b32.xlu0 %v1593, 96
    %v1596 = vpop.permute.xlu0 %1595
    %1598 = vst.msk [vmem:[%s293] sm:$0x3] %vm221, %v1596
    %s1599 = scalar_lea.vmem [#allocation2], 5
    %v1600 = vld [vmem:[%s1599] sm:$0x1]
    %v1601 = vld [vmem:[#allocation11] sm:$0x3]
    %v1602 = vld [vmem:[#allocation8] sm:$0xf]
    %v1603 = vld [vmem:[#allocation8 + $0x4] sm:$0xf]
    %v1604 = vld [vmem:[#allocation8 + $0x8] sm:$0xf]
    %v1605 = vld [vmem:[#allocation8 + $0xc] sm:$0xf]
    %v1606 = vld [vmem:[#allocation10] sm:$0x1]
    %v1607 = vpack.c.bf16 %v1601, %v1601
    %v1609 = vlaneseq
    %v1610 = vshrl.u32 %v1609, 7
    %v1611 = vsub.s32 0, %v1610
    %v1612 = vrot.slane %v1606, %v1611
    %v1618 = vunpack.c.l.b16 %v1602
    %v1619 = vunpack.c.l.b16 %v1603
    %v1620 = vunpack.c.l.b16 %v1604
    %v1621 = vunpack.c.l.b16 %v1605
    %v1622 = vpack.c.b16 %v1619, %v1618
    %v1623 = vpack.c.b16 %v1621, %v1620
    %v1627 = vsel %vm121, %v1607, 0
    %1629 = vmatprep.subr.bf16.mxu0 0
    %1630 = vmatpush1.bf16.msra.mxu0 %v1622
    %1631 = vmatprep.subr.bf16.mxu0 0
    %1632 = vmatpush1.bf16.msra.mxu0 %v1623
    %1633 = vmatprep.subr.bf16.mxu0 0
    %1634 = vmatpush1.bf16.msra.mxu0 0
    %1635 = vmatprep.subr.bf16.mxu0 0
    %1636 = vmatpush1.bf16.msra.mxu0 0
    %1637 = vmatprep.subr.bf16.mxu0 0
    %1638 = vmatpush1.bf16.msra.mxu0 0
    %1639 = vmatprep.subr.bf16.mxu0 0
    %1640 = vmatpush1.bf16.msra.mxu0 0
    %1641 = vmatprep.subr.bf16.mxu0 0
    %1642 = vmatpush1.bf16.msra.mxu0 0
    %1643 = vmatprep.subr.bf16.mxu0 0
    %1644 = vmatpush1.bf16.msra.mxu0 0
    %1645 = vmatprep.subr.bf16.mxu0 0
    %1646 = vmatpush1.bf16.msra.mxu0 0
    %1647 = vmatprep.subr.bf16.mxu0 0
    %1648 = vmatpush1.bf16.msra.mxu0 0
    %1649 = vmatprep.subr.bf16.mxu0 0
    %1650 = vmatpush1.bf16.msra.mxu0 0
    %1651 = vmatprep.subr.bf16.mxu0 0
    %1652 = vmatpush1.bf16.msra.mxu0 0
    %1653 = vmatprep.subr.bf16.mxu0 0
    %1654 = vmatpush1.bf16.msra.mxu0 0
    %1655 = vmatprep.subr.bf16.mxu0 0
    %1656 = vmatpush1.bf16.msra.mxu0 0
    %1657 = vmatprep.subr.bf16.mxu0 0
    %1658 = vmatpush1.bf16.msra.mxu0 0
    %1659 = vmatprep.subr.bf16.mxu0 0
    %1660 = vmatpush1.bf16.msra.mxu0 0
    %1661 = vmatprep.mubr.bf16.mxu0 0
    %1662 = vmatmul.mubr.bf16.gmra.mrb[0].mxu0 %v1627
    %v1663 = vpop.f32.mrb[0].mxu0
    %v1664 = vadd.f32 %v1612, %v1663
    %v1665 = vpop.f32.mrb[0].mxu0
    %v1666 = vpop.f32.mrb[0].mxu0
    %v1667 = vpop.f32.mrb[0].mxu0
    %1668 = vdwg.mxu0
    %v1669 = vunpack.c.l.bf16 %v1600
    %v1670 = vadd.f32 %v1669, %v1664
    %v1671 = vxor.u32 %v1670, 2147483648
    %v1672 = vmul.f32 %v1671, 1.442695
    %v1673 = vpow.pop %v1672
    %v1674 = vadd.f32 %v1673, 1.0
    %v1675 = vrcp.pop %v1674
    %v1676 = vmul.f32 1.0, %v1675
    %v1679 = vunpack.c.l.s4 1983009808
    %v1680 = vunpack.c.0.s8 %v1679
    %v1681 = vlaneseq
    %v1682 = vshrl.u32 %v1681, 7
    %v1683 = vsub.s32 %v1680, %v1682
    %v1684 = vrot.slane %v1664, %v1683
    %1685 = vrot.lane.b32.xlu0 %v1684, 64
    %v1686 = vpop.permute.xlu0 %1685
    %v1688 = vmul.f32 %v1676, %v1686
    %1690 = vrot.lane.b32.xlu0 %v1688, 64
    %v1691 = vpop.permute.xlu0 %1690
    %v1693 = vadd.f32 %v1669, %v1691
    %v1694 = vtanh.pop %v1693
    %v1695 = vsub.f32 1.0, %v1676
    %1697 = vrot.lane.b32.xlu0 %v1694, 96
    %v1698 = vpop.permute.xlu0 %1697
    %v1700 = vmul.f32 %v1695, %v1698
    %v1703 = vunpack.c.l.s4 1983009808
    %v1704 = vunpack.c.0.s8 %v1703
    %v1705 = vlaneseq
    %v1706 = vshrl.u32 %v1705, 7
    %v1707 = vsub.s32 %v1704, %v1706
    %v1708 = vrot.slane %v1601, %v1707
    %1709 = vrot.lane.b32.xlu0 %v1708, 32
    %v1710 = vpop.permute.xlu0 %1709
    %v1712 = vmul.f32 %v1676, %v1710
    %v1713 = vadd.f32 %v1700, %v1712
    %v1716 = vunpack.c.l.s4 1983009808
    %v1717 = vunpack.c.0.s8 %v1716
    %v1718 = vlaneseq
    %v1719 = vshrl.u32 %v1718, 7
    %v1720 = vsub.s32 %v1717, %v1719
    %v1721 = vrot.slane %v1713, %v1720
    %1722 = vrot.lane.b32.xlu0 %v1721, 96
    %v1723 = vpop.permute.xlu0 %1722
    %1725 = vst.msk [vmem:[#allocation11] sm:$0x3] %vm221, %v1723
    %v1726 = vpack.c.bf16 %v1713, %v1713
    %v1727 = vld [vmem:[#allocation5] sm:$0xf]
    %v1728 = vld [vmem:[#allocation5 + $0x4] sm:$0xf]
    %v1729 = vld [vmem:[#allocation5 + $0x8] sm:$0xf]
    %v1730 = vld [vmem:[#allocation5 + $0xc] sm:$0xf]
    %v1731 = vld [vmem:[#allocation7] sm:$0x1]
    %v1733 = vlaneseq
    %v1734 = vshrl.u32 %v1733, 7
    %v1735 = vsub.s32 0, %v1734
    %v1736 = vrot.slane %v1731, %v1735
    %1739 = vrot.lane.b32.xlu0 %v1726, 96
    %v1740 = vpop.permute.xlu0 %1739
    %v1745 = vunpack.c.l.b16 %v1727
    %v1746 = vunpack.c.l.b16 %v1728
    %v1747 = vunpack.c.l.b16 %v1729
    %v1748 = vunpack.c.l.b16 %v1730
    %v1749 = vpack.c.b16 %v1746, %v1745
    %v1750 = vpack.c.b16 %v1748, %v1747
    %v1754 = vsel %vm121, %v1740, 0
    %1756 = vmatprep.subr.bf16.mxu0 0
    %1757 = vmatpush1.bf16.msra.mxu0 %v1749
    %1758 = vmatprep.subr.bf16.mxu0 0
    %1759 = vmatpush1.bf16.msra.mxu0 %v1750
    %1760 = vmatprep.subr.bf16.mxu0 0
    %1761 = vmatpush1.bf16.msra.mxu0 0
    %1762 = vmatprep.subr.bf16.mxu0 0
    %1763 = vmatpush1.bf16.msra.mxu0 0
    %1764 = vmatprep.subr.bf16.mxu0 0
    %1765 = vmatpush1.bf16.msra.mxu0 0
    %1766 = vmatprep.subr.bf16.mxu0 0
    %1767 = vmatpush1.bf16.msra.mxu0 0
    %1768 = vmatprep.subr.bf16.mxu0 0
    %1769 = vmatpush1.bf16.msra.mxu0 0
    %1770 = vmatprep.subr.bf16.mxu0 0
    %1771 = vmatpush1.bf16.msra.mxu0 0
    %1772 = vmatprep.subr.bf16.mxu0 0
    %1773 = vmatpush1.bf16.msra.mxu0 0
    %1774 = vmatprep.subr.bf16.mxu0 0
    %1775 = vmatpush1.bf16.msra.mxu0 0
    %1776 = vmatprep.subr.bf16.mxu0 0
    %1777 = vmatpush1.bf16.msra.mxu0 0
    %1778 = vmatprep.subr.bf16.mxu0 0
    %1779 = vmatpush1.bf16.msra.mxu0 0
    %1780 = vmatprep.subr.bf16.mxu0 0
    %1781 = vmatpush1.bf16.msra.mxu0 0
    %1782 = vmatprep.subr.bf16.mxu0 0
    %1783 = vmatpush1.bf16.msra.mxu0 0
    %1784 = vmatprep.subr.bf16.mxu0 0
    %1785 = vmatpush1.bf16.msra.mxu0 0
    %1786 = vmatprep.subr.bf16.mxu0 0
    %1787 = vmatpush1.bf16.msra.mxu0 0
    %1788 = vmatprep.mubr.bf16.mxu0 0
    %1789 = vmatmul.mubr.bf16.gmra.mrb[0].mxu0 %v1754
    %v1790 = vpop.f32.mrb[0].mxu0
    %v1791 = vadd.f32 %v1736, %v1790
    %v1792 = vpop.f32.mrb[0].mxu0
    %v1793 = vpop.f32.mrb[0].mxu0
    %v1794 = vpop.f32.mrb[0].mxu0
    %1795 = vdwg.mxu0
    %v1796 = vld [vmem:[%s293] sm:$0x3]
    %v1797 = vld [vmem:[%s295] sm:$0xf]
    %v1798 = vld [vmem:[%s295 + $0x4] sm:$0xf]
    %v1799 = vld [vmem:[%s295 + $0x8] sm:$0xf]
    %v1800 = vld [vmem:[%s295 + $0xc] sm:$0xf]
    %v1801 = vld [vmem:[%s300] sm:$0x1]
    %v1802 = vpack.c.bf16 %v1796, %v1796
    %v1804 = vlaneseq
    %v1805 = vshrl.u32 %v1804, 7
    %v1806 = vsub.s32 0, %v1805
    %v1807 = vrot.slane %v1801, %v1806
    %v1813 = vunpack.c.l.b16 %v1797
    %v1814 = vunpack.c.l.b16 %v1798
    %v1815 = vunpack.c.l.b16 %v1799
    %v1816 = vunpack.c.l.b16 %v1800
    %v1817 = vpack.c.b16 %v1814, %v1813
    %v1818 = vpack.c.b16 %v1816, %v1815
    %v1822 = vsel %vm121, %v1802, 0
    %1824 = vmatprep.subr.bf16.mxu0 0
    %1825 = vmatpush1.bf16.msra.mxu0 %v1817
    %1826 = vmatprep.subr.bf16.mxu0 0
    %1827 = vmatpush1.bf16.msra.mxu0 %v1818
    %1828 = vmatprep.subr.bf16.mxu0 0
    %1829 = vmatpush1.bf16.msra.mxu0 0
    %1830 = vmatprep.subr.bf16.mxu0 0
    %1831 = vmatpush1.bf16.msra.mxu0 0
    %1832 = vmatprep.subr.bf16.mxu0 0
    %1833 = vmatpush1.bf16.msra.mxu0 0
    %1834 = vmatprep.subr.bf16.mxu0 0
    %1835 = vmatpush1.bf16.msra.mxu0 0
    %1836 = vmatprep.subr.bf16.mxu0 0
    %1837 = vmatpush1.bf16.msra.mxu0 0
    %1838 = vmatprep.subr.bf16.mxu0 0
    %1839 = vmatpush1.bf16.msra.mxu0 0
    %1840 = vmatprep.subr.bf16.mxu0 0
    %1841 = vmatpush1.bf16.msra.mxu0 0
    %1842 = vmatprep.subr.bf16.mxu0 0
    %1843 = vmatpush1.bf16.msra.mxu0 0
    %1844 = vmatprep.subr.bf16.mxu0 0
    %1845 = vmatpush1.bf16.msra.mxu0 0
    %1846 = vmatprep.subr.bf16.mxu0 0
    %1847 = vmatpush1.bf16.msra.mxu0 0
    %1848 = vmatprep.subr.bf16.mxu0 0
    %1849 = vmatpush1.bf16.msra.mxu0 0
    %1850 = vmatprep.subr.bf16.mxu0 0
    %1851 = vmatpush1.bf16.msra.mxu0 0
    %1852 = vmatprep.subr.bf16.mxu0 0
    %1853 = vmatpush1.bf16.msra.mxu0 0
    %1854 = vmatprep.subr.bf16.mxu0 0
    %1855 = vmatpush1.bf16.msra.mxu0 0
    %1856 = vmatprep.mubr.bf16.mxu0 0
    %1857 = vmatmul.mubr.bf16.gmra.mrb[0].mxu0 %v1822
    %v1858 = vpop.f32.mrb[0].mxu0
    %v1859 = vadd.f32 %v1807, %v1858
    %v1860 = vpop.f32.mrb[0].mxu0
    %v1861 = vpop.f32.mrb[0].mxu0
    %v1862 = vpop.f32.mrb[0].mxu0
    %1863 = vdwg.mxu0
    %v1864 = vadd.f32 %v1791, %v1859
    %v1865 = vxor.u32 %v1864, 2147483648
    %v1866 = vmul.f32 %v1865, 1.442695
    %v1867 = vpow.pop %v1866
    %v1868 = vadd.f32 %v1867, 1.0
    %v1869 = vrcp.pop %v1868
    %v1870 = vmul.f32 1.0, %v1869
    %1872 = vrot.lane.b32.xlu0 %v1859, 64
    %v1873 = vpop.permute.xlu0 %1872
    %v1875 = vmul.f32 %v1870, %v1873
    %1877 = vrot.lane.b32.xlu0 %v1875, 64
    %v1878 = vpop.permute.xlu0 %1877
    %v1880 = vadd.f32 %v1791, %v1878
    %v1881 = vtanh.pop %v1880
    %v1882 = vsub.f32 1.0, %v1870
    %1884 = vrot.lane.b32.xlu0 %v1881, 96
    %v1885 = vpop.permute.xlu0 %1884
    %v1887 = vmul.f32 %v1882, %v1885
    %1889 = vrot.lane.b32.xlu0 %v1796, 32
    %v1890 = vpop.permute.xlu0 %1889
    %v1892 = vmul.f32 %v1870, %v1890
    %v1893 = vadd.f32 %v1887, %v1892
    %1895 = vrot.lane.b32.xlu0 %v1893, 96
    %v1896 = vpop.permute.xlu0 %1895
    %1898 = vst.msk [vmem:[%s293] sm:$0x3] %vm221, %v1896
    %s1899 = scalar_lea.vmem [#allocation2], 6
    %v1900 = vld [vmem:[%s1899] sm:$0x1]
    %v1901 = vld [vmem:[#allocation11] sm:$0x3]
    %v1902 = vld [vmem:[#allocation8] sm:$0xf]
    %v1903 = vld [vmem:[#allocation8 + $0x4] sm:$0xf]
    %v1904 = vld [vmem:[#allocation8 + $0x8] sm:$0xf]
    %v1905 = vld [vmem:[#allocation8 + $0xc] sm:$0xf]
    %v1906 = vld [vmem:[#allocation10] sm:$0x1]
    %v1907 = vpack.c.bf16 %v1901, %v1901
    %v1909 = vlaneseq
    %v1910 = vshrl.u32 %v1909, 7
    %v1911 = vsub.s32 0, %v1910
    %v1912 = vrot.slane %v1906, %v1911
    %v1918 = vunpack.c.l.b16 %v1902
    %v1919 = vunpack.c.l.b16 %v1903
    %v1920 = vunpack.c.l.b16 %v1904
    %v1921 = vunpack.c.l.b16 %v1905
    %v1922 = vpack.c.b16 %v1919, %v1918
    %v1923 = vpack.c.b16 %v1921, %v1920
    %v1927 = vsel %vm121, %v1907, 0
    %1929 = vmatprep.subr.bf16.mxu0 0
    %1930 = vmatpush1.bf16.msra.mxu0 %v1922
    %1931 = vmatprep.subr.bf16.mxu0 0
    %1932 = vmatpush1.bf16.msra.mxu0 %v1923
    %1933 = vmatprep.subr.bf16.mxu0 0
    %1934 = vmatpush1.bf16.msra.mxu0 0
    %1935 = vmatprep.subr.bf16.mxu0 0
    %1936 = vmatpush1.bf16.msra.mxu0 0
    %1937 = vmatprep.subr.bf16.mxu0 0
    %1938 = vmatpush1.bf16.msra.mxu0 0
    %1939 = vmatprep.subr.bf16.mxu0 0
    %1940 = vmatpush1.bf16.msra.mxu0 0
    %1941 = vmatprep.subr.bf16.mxu0 0
    %1942 = vmatpush1.bf16.msra.mxu0 0
    %1943 = vmatprep.subr.bf16.mxu0 0
    %1944 = vmatpush1.bf16.msra.mxu0 0
    %1945 = vmatprep.subr.bf16.mxu0 0
    %1946 = vmatpush1.bf16.msra.mxu0 0
    %1947 = vmatprep.subr.bf16.mxu0 0
    %1948 = vmatpush1.bf16.msra.mxu0 0
    %1949 = vmatprep.subr.bf16.mxu0 0
    %1950 = vmatpush1.bf16.msra.mxu0 0
    %1951 = vmatprep.subr.bf16.mxu0 0
    %1952 = vmatpush1.bf16.msra.mxu0 0
    %1953 = vmatprep.subr.bf16.mxu0 0
    %1954 = vmatpush1.bf16.msra.mxu0 0
    %1955 = vmatprep.subr.bf16.mxu0 0
    %1956 = vmatpush1.bf16.msra.mxu0 0
    %1957 = vmatprep.subr.bf16.mxu0 0
    %1958 = vmatpush1.bf16.msra.mxu0 0
    %1959 = vmatprep.subr.bf16.mxu0 0
    %1960 = vmatpush1.bf16.msra.mxu0 0
    %1961 = vmatprep.mubr.bf16.mxu0 0
    %1962 = vmatmul.mubr.bf16.gmra.mrb[0].mxu0 %v1927
    %v1963 = vpop.f32.mrb[0].mxu0
    %v1964 = vadd.f32 %v1912, %v1963
    %v1965 = vpop.f32.mrb[0].mxu0
    %v1966 = vpop.f32.mrb[0].mxu0
    %v1967 = vpop.f32.mrb[0].mxu0
    %1968 = vdwg.mxu0
    %v1969 = vunpack.c.l.bf16 %v1900
    %v1970 = vadd.f32 %v1969, %v1964
    %v1971 = vxor.u32 %v1970, 2147483648
    %v1972 = vmul.f32 %v1971, 1.442695
    %v1973 = vpow.pop %v1972
    %v1974 = vadd.f32 %v1973, 1.0
    %v1975 = vrcp.pop %v1974
    %v1976 = vmul.f32 1.0, %v1975
    %v1979 = vunpack.c.l.s4 1983009808
    %v1980 = vunpack.c.0.s8 %v1979
    %v1981 = vlaneseq
    %v1982 = vshrl.u32 %v1981, 7
    %v1983 = vsub.s32 %v1980, %v1982
    %v1984 = vrot.slane %v1964, %v1983
    %1985 = vrot.lane.b32.xlu0 %v1984, 64
    %v1986 = vpop.permute.xlu0 %1985
    %v1988 = vmul.f32 %v1976, %v1986
    %1990 = vrot.lane.b32.xlu0 %v1988, 64
    %v1991 = vpop.permute.xlu0 %1990
    %v1993 = vadd.f32 %v1969, %v1991
    %v1994 = vtanh.pop %v1993
    %v1995 = vsub.f32 1.0, %v1976
    %1997 = vrot.lane.b32.xlu0 %v1994, 96
    %v1998 = vpop.permute.xlu0 %1997
    %v2000 = vmul.f32 %v1995, %v1998
    %v2003 = vunpack.c.l.s4 1983009808
    %v2004 = vunpack.c.0.s8 %v2003
    %v2005 = vlaneseq
    %v2006 = vshrl.u32 %v2005, 7
    %v2007 = vsub.s32 %v2004, %v2006
    %v2008 = vrot.slane %v1901, %v2007
    %2009 = vrot.lane.b32.xlu0 %v2008, 32
    %v2010 = vpop.permute.xlu0 %2009
    %v2012 = vmul.f32 %v1976, %v2010
    %v2013 = vadd.f32 %v2000, %v2012
    %v2016 = vunpack.c.l.s4 1983009808
    %v2017 = vunpack.c.0.s8 %v2016
    %v2018 = vlaneseq
    %v2019 = vshrl.u32 %v2018, 7
    %v2020 = vsub.s32 %v2017, %v2019
    %v2021 = vrot.slane %v2013, %v2020
    %2022 = vrot.lane.b32.xlu0 %v2021, 96
    %v2023 = vpop.permute.xlu0 %2022
    %2025 = vst.msk [vmem:[#allocation11] sm:$0x3] %vm221, %v2023
    %v2026 = vpack.c.bf16 %v2013, %v2013
    %v2027 = vld [vmem:[#allocation5] sm:$0xf]
    %v2028 = vld [vmem:[#allocation5 + $0x4] sm:$0xf]
    %v2029 = vld [vmem:[#allocation5 + $0x8] sm:$0xf]
    %v2030 = vld [vmem:[#allocation5 + $0xc] sm:$0xf]
    %v2031 = vld [vmem:[#allocation7] sm:$0x1]
    %v2033 = vlaneseq
    %v2034 = vshrl.u32 %v2033, 7
    %v2035 = vsub.s32 0, %v2034
    %v2036 = vrot.slane %v2031, %v2035
    %2039 = vrot.lane.b32.xlu0 %v2026, 96
    %v2040 = vpop.permute.xlu0 %2039
    %v2045 = vunpack.c.l.b16 %v2027
    %v2046 = vunpack.c.l.b16 %v2028
    %v2047 = vunpack.c.l.b16 %v2029
    %v2048 = vunpack.c.l.b16 %v2030
    %v2049 = vpack.c.b16 %v2046, %v2045
    %v2050 = vpack.c.b16 %v2048, %v2047
    %v2054 = vsel %vm121, %v2040, 0
    %2056 = vmatprep.subr.bf16.mxu0 0
    %2057 = vmatpush1.bf16.msra.mxu0 %v2049
    %2058 = vmatprep.subr.bf16.mxu0 0
    %2059 = vmatpush1.bf16.msra.mxu0 %v2050
    %2060 = vmatprep.subr.bf16.mxu0 0
    %2061 = vmatpush1.bf16.msra.mxu0 0
    %2062 = vmatprep.subr.bf16.mxu0 0
    %2063 = vmatpush1.bf16.msra.mxu0 0
    %2064 = vmatprep.subr.bf16.mxu0 0
    %2065 = vmatpush1.bf16.msra.mxu0 0
    %2066 = vmatprep.subr.bf16.mxu0 0
    %2067 = vmatpush1.bf16.msra.mxu0 0
    %2068 = vmatprep.subr.bf16.mxu0 0
    %2069 = vmatpush1.bf16.msra.mxu0 0
    %2070 = vmatprep.subr.bf16.mxu0 0
    %2071 = vmatpush1.bf16.msra.mxu0 0
    %2072 = vmatprep.subr.bf16.mxu0 0
    %2073 = vmatpush1.bf16.msra.mxu0 0
    %2074 = vmatprep.subr.bf16.mxu0 0
    %2075 = vmatpush1.bf16.msra.mxu0 0
    %2076 = vmatprep.subr.bf16.mxu0 0
    %2077 = vmatpush1.bf16.msra.mxu0 0
    %2078 = vmatprep.subr.bf16.mxu0 0
    %2079 = vmatpush1.bf16.msra.mxu0 0
    %2080 = vmatprep.subr.bf16.mxu0 0
    %2081 = vmatpush1.bf16.msra.mxu0 0
    %2082 = vmatprep.subr.bf16.mxu0 0
    %2083 = vmatpush1.bf16.msra.mxu0 0
    %2084 = vmatprep.subr.bf16.mxu0 0
    %2085 = vmatpush1.bf16.msra.mxu0 0
    %2086 = vmatprep.subr.bf16.mxu0 0
    %2087 = vmatpush1.bf16.msra.mxu0 0
    %2088 = vmatprep.mubr.bf16.mxu0 0
    %2089 = vmatmul.mubr.bf16.gmra.mrb[0].mxu0 %v2054
    %v2090 = vpop.f32.mrb[0].mxu0
    %v2091 = vadd.f32 %v2036, %v2090
    %v2092 = vpop.f32.mrb[0].mxu0
    %v2093 = vpop.f32.mrb[0].mxu0
    %v2094 = vpop.f32.mrb[0].mxu0
    %2095 = vdwg.mxu0
    %v2096 = vld [vmem:[%s293] sm:$0x3]
    %v2097 = vld [vmem:[%s295] sm:$0xf]
    %v2098 = vld [vmem:[%s295 + $0x4] sm:$0xf]
    %v2099 = vld [vmem:[%s295 + $0x8] sm:$0xf]
    %v2100 = vld [vmem:[%s295 + $0xc] sm:$0xf]
    %v2101 = vld [vmem:[%s300] sm:$0x1]
    %v2102 = vpack.c.bf16 %v2096, %v2096
    %v2104 = vlaneseq
    %v2105 = vshrl.u32 %v2104, 7
    %v2106 = vsub.s32 0, %v2105
    %v2107 = vrot.slane %v2101, %v2106
    %v2113 = vunpack.c.l.b16 %v2097
    %v2114 = vunpack.c.l.b16 %v2098
    %v2115 = vunpack.c.l.b16 %v2099
    %v2116 = vunpack.c.l.b16 %v2100
    %v2117 = vpack.c.b16 %v2114, %v2113
    %v2118 = vpack.c.b16 %v2116, %v2115
    %v2122 = vsel %vm121, %v2102, 0
    %2124 = vmatprep.subr.bf16.mxu0 0
    %2125 = vmatpush1.bf16.msra.mxu0 %v2117
    %2126 = vmatprep.subr.bf16.mxu0 0
    %2127 = vmatpush1.bf16.msra.mxu0 %v2118
    %2128 = vmatprep.subr.bf16.mxu0 0
    %2129 = vmatpush1.bf16.msra.mxu0 0
    %2130 = vmatprep.subr.bf16.mxu0 0
    %2131 = vmatpush1.bf16.msra.mxu0 0
    %2132 = vmatprep.subr.bf16.mxu0 0
    %2133 = vmatpush1.bf16.msra.mxu0 0
    %2134 = vmatprep.subr.bf16.mxu0 0
    %2135 = vmatpush1.bf16.msra.mxu0 0
    %2136 = vmatprep.subr.bf16.mxu0 0
    %2137 = vmatpush1.bf16.msra.mxu0 0
    %2138 = vmatprep.subr.bf16.mxu0 0
    %2139 = vmatpush1.bf16.msra.mxu0 0
    %2140 = vmatprep.subr.bf16.mxu0 0
    %2141 = vmatpush1.bf16.msra.mxu0 0
    %2142 = vmatprep.subr.bf16.mxu0 0
    %2143 = vmatpush1.bf16.msra.mxu0 0
    %2144 = vmatprep.subr.bf16.mxu0 0
    %2145 = vmatpush1.bf16.msra.mxu0 0
    %2146 = vmatprep.subr.bf16.mxu0 0
    %2147 = vmatpush1.bf16.msra.mxu0 0
    %2148 = vmatprep.subr.bf16.mxu0 0
    %2149 = vmatpush1.bf16.msra.mxu0 0
    %2150 = vmatprep.subr.bf16.mxu0 0
    %2151 = vmatpush1.bf16.msra.mxu0 0
    %2152 = vmatprep.subr.bf16.mxu0 0
    %2153 = vmatpush1.bf16.msra.mxu0 0
    %2154 = vmatprep.subr.bf16.mxu0 0
    %2155 = vmatpush1.bf16.msra.mxu0 0
    %2156 = vmatprep.mubr.bf16.mxu0 0
    %2157 = vmatmul.mubr.bf16.gmra.mrb[0].mxu0 %v2122
    %v2158 = vpop.f32.mrb[0].mxu0
    %v2159 = vadd.f32 %v2107, %v2158
    %v2160 = vpop.f32.mrb[0].mxu0
    %v2161 = vpop.f32.mrb[0].mxu0
    %v2162 = vpop.f32.mrb[0].mxu0
    %2163 = vdwg.mxu0
    %v2164 = vadd.f32 %v2091, %v2159
    %v2165 = vxor.u32 %v2164, 2147483648
    %v2166 = vmul.f32 %v2165, 1.442695
    %v2167 = vpow.pop %v2166
    %v2168 = vadd.f32 %v2167, 1.0
    %v2169 = vrcp.pop %v2168
    %v2170 = vmul.f32 1.0, %v2169
    %2172 = vrot.lane.b32.xlu0 %v2159, 64
    %v2173 = vpop.permute.xlu0 %2172
    %v2175 = vmul.f32 %v2170, %v2173
    %2177 = vrot.lane.b32.xlu0 %v2175, 64
    %v2178 = vpop.permute.xlu0 %2177
    %v2180 = vadd.f32 %v2091, %v2178
    %v2181 = vtanh.pop %v2180
    %v2182 = vsub.f32 1.0, %v2170
    %2184 = vrot.lane.b32.xlu0 %v2181, 96
    %v2185 = vpop.permute.xlu0 %2184
    %v2187 = vmul.f32 %v2182, %v2185
    %2189 = vrot.lane.b32.xlu0 %v2096, 32
    %v2190 = vpop.permute.xlu0 %2189
    %v2192 = vmul.f32 %v2170, %v2190
    %v2193 = vadd.f32 %v2187, %v2192
    %2195 = vrot.lane.b32.xlu0 %v2193, 96
    %v2196 = vpop.permute.xlu0 %2195
    %2198 = vst.msk [vmem:[%s293] sm:$0x3] %vm221, %v2196
    %s2199 = scalar_lea.vmem [#allocation2], 7
    %v2200 = vld [vmem:[%s2199] sm:$0x1]
    %v2201 = vld [vmem:[#allocation11] sm:$0x3]
    %v2202 = vld [vmem:[#allocation8] sm:$0xf]
    %v2203 = vld [vmem:[#allocation8 + $0x4] sm:$0xf]
    %v2204 = vld [vmem:[#allocation8 + $0x8] sm:$0xf]
    %v2205 = vld [vmem:[#allocation8 + $0xc] sm:$0xf]
    %v2206 = vld [vmem:[#allocation10] sm:$0x1]
    %v2207 = vpack.c.bf16 %v2201, %v2201
    %v2209 = vlaneseq
    %v2210 = vshrl.u32 %v2209, 7
    %v2211 = vsub.s32 0, %v2210
    %v2212 = vrot.slane %v2206, %v2211
    %v2218 = vunpack.c.l.b16 %v2202
    %v2219 = vunpack.c.l.b16 %v2203
    %v2220 = vunpack.c.l.b16 %v2204
    %v2221 = vunpack.c.l.b16 %v2205
    %v2222 = vpack.c.b16 %v2219, %v2218
    %v2223 = vpack.c.b16 %v2221, %v2220
    %v2227 = vsel %vm121, %v2207, 0
    %2229 = vmatprep.subr.bf16.mxu0 0
    %2230 = vmatpush1.bf16.msra.mxu0 %v2222
    %2231 = vmatprep.subr.bf16.mxu0 0
    %2232 = vmatpush1.bf16.msra.mxu0 %v2223
    %2233 = vmatprep.subr.bf16.mxu0 0
    %2234 = vmatpush1.bf16.msra.mxu0 0
    %2235 = vmatprep.subr.bf16.mxu0 0
    %2236 = vmatpush1.bf16.msra.mxu0 0
    %2237 = vmatprep.subr.bf16.mxu0 0
    %2238 = vmatpush1.bf16.msra.mxu0 0
    %2239 = vmatprep.subr.bf16.mxu0 0
    %2240 = vmatpush1.bf16.msra.mxu0 0
    %2241 = vmatprep.subr.bf16.mxu0 0
    %2242 = vmatpush1.bf16.msra.mxu0 0
    %2243 = vmatprep.subr.bf16.mxu0 0
    %2244 = vmatpush1.bf16.msra.mxu0 0
    %2245 = vmatprep.subr.bf16.mxu0 0
    %2246 = vmatpush1.bf16.msra.mxu0 0
    %2247 = vmatprep.subr.bf16.mxu0 0
    %2248 = vmatpush1.bf16.msra.mxu0 0
    %2249 = vmatprep.subr.bf16.mxu0 0
    %2250 = vmatpush1.bf16.msra.mxu0 0
    %2251 = vmatprep.subr.bf16.mxu0 0
    %2252 = vmatpush1.bf16.msra.mxu0 0
    %2253 = vmatprep.subr.bf16.mxu0 0
    %2254 = vmatpush1.bf16.msra.mxu0 0
    %2255 = vmatprep.subr.bf16.mxu0 0
    %2256 = vmatpush1.bf16.msra.mxu0 0
    %2257 = vmatprep.subr.bf16.mxu0 0
    %2258 = vmatpush1.bf16.msra.mxu0 0
    %2259 = vmatprep.subr.bf16.mxu0 0
    %2260 = vmatpush1.bf16.msra.mxu0 0
    %2261 = vmatprep.mubr.bf16.mxu0 0
    %2262 = vmatmul.mubr.bf16.gmra.mrb[0].mxu0 %v2227
    %v2263 = vpop.f32.mrb[0].mxu0
    %v2264 = vadd.f32 %v2212, %v2263
    %v2265 = vpop.f32.mrb[0].mxu0
    %v2266 = vpop.f32.mrb[0].mxu0
    %v2267 = vpop.f32.mrb[0].mxu0
    %2268 = vdwg.mxu0
    %v2269 = vunpack.c.l.bf16 %v2200
    %v2270 = vadd.f32 %v2269, %v2264
    %v2271 = vxor.u32 %v2270, 2147483648
    %v2272 = vmul.f32 %v2271, 1.442695
    %v2273 = vpow.pop %v2272
    %v2274 = vadd.f32 %v2273, 1.0
    %v2275 = vrcp.pop %v2274
    %v2276 = vmul.f32 1.0, %v2275
    %v2279 = vunpack.c.l.s4 1983009808
    %v2280 = vunpack.c.0.s8 %v2279
    %v2281 = vlaneseq
    %v2282 = vshrl.u32 %v2281, 7
    %v2283 = vsub.s32 %v2280, %v2282
    %v2284 = vrot.slane %v2264, %v2283
    %2285 = vrot.lane.b32.xlu0 %v2284, 64
    %v2286 = vpop.permute.xlu0 %2285
    %v2288 = vmul.f32 %v2276, %v2286
    %2290 = vrot.lane.b32.xlu0 %v2288, 64
    %v2291 = vpop.permute.xlu0 %2290
    %v2293 = vadd.f32 %v2269, %v2291
    %v2294 = vtanh.pop %v2293
    %v2295 = vsub.f32 1.0, %v2276
    %2297 = vrot.lane.b32.xlu0 %v2294, 96
    %v2298 = vpop.permute.xlu0 %2297
    %v2300 = vmul.f32 %v2295, %v2298
    %v2303 = vunpack.c.l.s4 1983009808
    %v2304 = vunpack.c.0.s8 %v2303
    %v2305 = vlaneseq
    %v2306 = vshrl.u32 %v2305, 7
    %v2307 = vsub.s32 %v2304, %v2306
    %v2308 = vrot.slane %v2201, %v2307
    %2309 = vrot.lane.b32.xlu0 %v2308, 32
    %v2310 = vpop.permute.xlu0 %2309
    %v2312 = vmul.f32 %v2276, %v2310
    %v2313 = vadd.f32 %v2300, %v2312
    %v2316 = vunpack.c.l.s4 1983009808
    %v2317 = vunpack.c.0.s8 %v2316
    %v2318 = vlaneseq
    %v2319 = vshrl.u32 %v2318, 7
    %v2320 = vsub.s32 %v2317, %v2319
    %v2321 = vrot.slane %v2313, %v2320
    %2322 = vrot.lane.b32.xlu0 %v2321, 96
    %v2323 = vpop.permute.xlu0 %2322
    %2325 = vst.msk [vmem:[#allocation11] sm:$0x3] %vm221, %v2323
    %v2326 = vpack.c.bf16 %v2313, %v2313
    %v2327 = vld [vmem:[#allocation5] sm:$0xf]
    %v2328 = vld [vmem:[#allocation5 + $0x4] sm:$0xf]
    %v2329 = vld [vmem:[#allocation5 + $0x8] sm:$0xf]
    %v2330 = vld [vmem:[#allocation5 + $0xc] sm:$0xf]
    %v2331 = vld [vmem:[#allocation7] sm:$0x1]
    %v2333 = vlaneseq
    %v2334 = vshrl.u32 %v2333, 7
    %v2335 = vsub.s32 0, %v2334
    %v2336 = vrot.slane %v2331, %v2335
    %2339 = vrot.lane.b32.xlu0 %v2326, 96
    %v2340 = vpop.permute.xlu0 %2339
    %v2345 = vunpack.c.l.b16 %v2327
    %v2346 = vunpack.c.l.b16 %v2328
    %v2347 = vunpack.c.l.b16 %v2329
    %v2348 = vunpack.c.l.b16 %v2330
    %v2349 = vpack.c.b16 %v2346, %v2345
    %v2350 = vpack.c.b16 %v2348, %v2347
    %v2354 = vsel %vm121, %v2340, 0
    %2356 = vmatprep.subr.bf16.mxu0 0
    %2357 = vmatpush1.bf16.msra.mxu0 %v2349
    %2358 = vmatprep.subr.bf16.mxu0 0
    %2359 = vmatpush1.bf16.msra.mxu0 %v2350
    %2360 = vmatprep.subr.bf16.mxu0 0
    %2361 = vmatpush1.bf16.msra.mxu0 0
    %2362 = vmatprep.subr.bf16.mxu0 0
    %2363 = vmatpush1.bf16.msra.mxu0 0
    %2364 = vmatprep.subr.bf16.mxu0 0
    %2365 = vmatpush1.bf16.msra.mxu0 0
    %2366 = vmatprep.subr.bf16.mxu0 0
    %2367 = vmatpush1.bf16.msra.mxu0 0
    %2368 = vmatprep.subr.bf16.mxu0 0
    %2369 = vmatpush1.bf16.msra.mxu0 0
    %2370 = vmatprep.subr.bf16.mxu0 0
    %2371 = vmatpush1.bf16.msra.mxu0 0
    %2372 = vmatprep.subr.bf16.mxu0 0
    %2373 = vmatpush1.bf16.msra.mxu0 0
    %2374 = vmatprep.subr.bf16.mxu0 0
    %2375 = vmatpush1.bf16.msra.mxu0 0
    %2376 = vmatprep.subr.bf16.mxu0 0
    %2377 = vmatpush1.bf16.msra.mxu0 0
    %2378 = vmatprep.subr.bf16.mxu0 0
    %2379 = vmatpush1.bf16.msra.mxu0 0
    %2380 = vmatprep.subr.bf16.mxu0 0
    %2381 = vmatpush1.bf16.msra.mxu0 0
    %2382 = vmatprep.subr.bf16.mxu0 0
    %2383 = vmatpush1.bf16.msra.mxu0 0
    %2384 = vmatprep.subr.bf16.mxu0 0
    %2385 = vmatpush1.bf16.msra.mxu0 0
    %2386 = vmatprep.subr.bf16.mxu0 0
    %2387 = vmatpush1.bf16.msra.mxu0 0
    %2388 = vmatprep.mubr.bf16.mxu0 0
    %2389 = vmatmul.mubr.bf16.gmra.mrb[0].mxu0 %v2354
    %v2390 = vpop.f32.mrb[0].mxu0
    %v2391 = vadd.f32 %v2336, %v2390
    %v2392 = vpop.f32.mrb[0].mxu0
    %v2393 = vpop.f32.mrb[0].mxu0
    %v2394 = vpop.f32.mrb[0].mxu0
    %2395 = vdwg.mxu0
    %v2396 = vld [vmem:[%s293] sm:$0x3]
    %v2397 = vld [vmem:[%s295] sm:$0xf]
    %v2398 = vld [vmem:[%s295 + $0x4] sm:$0xf]
    %v2399 = vld [vmem:[%s295 + $0x8] sm:$0xf]
    %v2400 = vld [vmem:[%s295 + $0xc] sm:$0xf]
    %v2401 = vld [vmem:[%s300] sm:$0x1]
    %v2402 = vpack.c.bf16 %v2396, %v2396
    %v2404 = vlaneseq
    %v2405 = vshrl.u32 %v2404, 7
    %v2406 = vsub.s32 0, %v2405
    %v2407 = vrot.slane %v2401, %v2406
    %v2413 = vunpack.c.l.b16 %v2397
    %v2414 = vunpack.c.l.b16 %v2398
    %v2415 = vunpack.c.l.b16 %v2399
    %v2416 = vunpack.c.l.b16 %v2400
    %v2417 = vpack.c.b16 %v2414, %v2413
    %v2418 = vpack.c.b16 %v2416, %v2415
    %v2422 = vsel %vm121, %v2402, 0
    %2424 = vmatprep.subr.bf16.mxu0 0
    %2425 = vmatpush1.bf16.msra.mxu0 %v2417
    %2426 = vmatprep.subr.bf16.mxu0 0
    %2427 = vmatpush1.bf16.msra.mxu0 %v2418
    %2428 = vmatprep.subr.bf16.mxu0 0
    %2429 = vmatpush1.bf16.msra.mxu0 0
    %2430 = vmatprep.subr.bf16.mxu0 0
    %2431 = vmatpush1.bf16.msra.mxu0 0
    %2432 = vmatprep.subr.bf16.mxu0 0
    %2433 = vmatpush1.bf16.msra.mxu0 0
    %2434 = vmatprep.subr.bf16.mxu0 0
    %2435 = vmatpush1.bf16.msra.mxu0 0
    %2436 = vmatprep.subr.bf16.mxu0 0
    %2437 = vmatpush1.bf16.msra.mxu0 0
    %2438 = vmatprep.subr.bf16.mxu0 0
    %2439 = vmatpush1.bf16.msra.mxu0 0
    %2440 = vmatprep.subr.bf16.mxu0 0
    %2441 = vmatpush1.bf16.msra.mxu0 0
    %2442 = vmatprep.subr.bf16.mxu0 0
    %2443 = vmatpush1.bf16.msra.mxu0 0
    %2444 = vmatprep.subr.bf16.mxu0 0
    %2445 = vmatpush1.bf16.msra.mxu0 0
    %2446 = vmatprep.subr.bf16.mxu0 0
    %2447 = vmatpush1.bf16.msra.mxu0 0
    %2448 = vmatprep.subr.bf16.mxu0 0
    %2449 = vmatpush1.bf16.msra.mxu0 0
    %2450 = vmatprep.subr.bf16.mxu0 0
    %2451 = vmatpush1.bf16.msra.mxu0 0
    %2452 = vmatprep.subr.bf16.mxu0 0
    %2453 = vmatpush1.bf16.msra.mxu0 0
    %2454 = vmatprep.subr.bf16.mxu0 0
    %2455 = vmatpush1.bf16.msra.mxu0 0
    %2456 = vmatprep.mubr.bf16.mxu0 0
    %2457 = vmatmul.mubr.bf16.gmra.mrb[0].mxu0 %v2422
    %v2458 = vpop.f32.mrb[0].mxu0
    %v2459 = vadd.f32 %v2407, %v2458
    %v2460 = vpop.f32.mrb[0].mxu0
    %v2461 = vpop.f32.mrb[0].mxu0
    %v2462 = vpop.f32.mrb[0].mxu0
    %2463 = vdwg.mxu0
    %v2464 = vadd.f32 %v2391, %v2459
    %v2465 = vxor.u32 %v2464, 2147483648
    %v2466 = vmul.f32 %v2465, 1.442695
    %v2467 = vpow.pop %v2466
    %v2468 = vadd.f32 %v2467, 1.0
    %v2469 = vrcp.pop %v2468
    %v2470 = vmul.f32 1.0, %v2469
    %2472 = vrot.lane.b32.xlu0 %v2459, 64
    %v2473 = vpop.permute.xlu0 %2472
    %v2475 = vmul.f32 %v2470, %v2473
    %2477 = vrot.lane.b32.xlu0 %v2475, 64
    %v2478 = vpop.permute.xlu0 %2477
    %v2480 = vadd.f32 %v2391, %v2478
    %v2481 = vtanh.pop %v2480
    %v2482 = vsub.f32 1.0, %v2470
    %2484 = vrot.lane.b32.xlu0 %v2481, 96
    %v2485 = vpop.permute.xlu0 %2484
    %v2487 = vmul.f32 %v2482, %v2485
    %2489 = vrot.lane.b32.xlu0 %v2396, 32
    %v2490 = vpop.permute.xlu0 %2489
    %v2492 = vmul.f32 %v2470, %v2490
    %v2493 = vadd.f32 %v2487, %v2492
    %2495 = vrot.lane.b32.xlu0 %v2493, 96
    %v2496 = vpop.permute.xlu0 %2495
    %2498 = vst.msk [vmem:[%s293] sm:$0x3] %vm221, %v2496
    // Predicated region
    $region46: #{gruvae_forward.6} parent=1 // pred_check
      _
    $region47: #{gruvae_forward.6} parent=1 // pred_check_branch
      %2500 = sbr.rel (0) target = $region49
    $region48: #{gruvae_forward.6} parent=1 // pred_region
      %s2502 = ssub.s32 64, 64
      %2503 = vsyncadd [#allocation4], %s2502
      %s2504 = sshll.u32 [#allocation11], 4
      %s2505 = int_to_ptr.vmem [resolvable:$true] %s2504
      %2510 = dma.vmem_to_hbm [thread:$0]  %s2505, 64, %s5, [#allocation4], 32, 32, 2
    $region49: #{gruvae_forward.6} parent=1 // pred_fallthru
      _
    // Predicated region
    $region50: #{gruvae_forward.6} parent=1 // pred_check
      _
    $region51: #{gruvae_forward.6} parent=1 // pred_check_branch
      %2512 = sbr.rel (0) target = $region53
    $region52: #{gruvae_forward.6} parent=1 // pred_region
      %2513 = dma.done [#allocation4], 64
    $region53: #{gruvae_forward.6} parent=1 // pred_fallthru
      _
    %2514 = vsyncpa [#allocation3], 1
    %2515 = vsyncpa [#allocation6], 1
    %2516 = vsyncpa [#allocation9], 1
    %2517 = vsyncpa [#allocation4], 1

// kernel: gruvae_forward.8
$region0: #{gruvae_forward.8}
  #allocation0 [shape = 'u32[]', space=smem, size = 0x4, offset = 0x4, fixed_abs, tag = 'smem constant byte address 0x4 - core index']
  #allocation1 [shape = 'u32[144,128]{1,0:T(1,128)}', space=vmem, size = 0x12000, scoped, tag = 'internal scratch']
  #allocation2 [shape = 'f32[2,2,32]{2,1,0:T(2,128)}', space=vmem, size = 0x800, scoped, tag = 'scratch operand']
  %s0 = inlined_call_operand.hbm [shape: bf16[8,2,96], index: 0, kind: input, shape index: {}]
  %s1 = inlined_call_operand.hbm [shape: f32[2,2,32], index: 1, kind: input, shape index: {}]
  %s2 = inlined_call_operand.hbm [shape: bf16[1,32,96], index: 2, kind: input, shape index: {}]
  %s3 = inlined_call_operand.hbm [shape: f32[1,1,96], index: 3, kind: input, shape index: {}]
  %s4 = inlined_call_operand.hbm [shape: bf16[2,32,96], index: 4, kind: input, shape index: {}]
  %s5 = inlined_call_operand.hbm [shape: f32[2,1,96], index: 5, kind: input, shape index: {}]
  %s6 = inlined_call_operand.hbm [shape: bf16[2,8,32], index: 6, kind: output, shape index: {}]
  %s7 = sld [smem:[#allocation0]]
  $region62: #{gruvae_forward.8} parent=0
    _
  %s9 = ssub.s32 1, %s7
  %s10 = scalar_select 0, %s9, %s7
  $region1: #{gruvae_forward.8} parent=0
    #allocation3 [shape = 'u8[4096]{0}', space=vmem, size = 0x1000, scoped, tag = 'input window, operand 0, single buffered']
    #allocation4 [shape = 's32[1]{0}', space=sflag, size = 0x4, scoped, tag = 'scoped memory for gruvae_forward.8']
    #allocation5 [shape = 's32[1]{0}', space=sflag, size = 0x4, scoped, tag = 'scoped memory for gruvae_forward.8']
    #allocation6 [shape = 'u8[2048]{0}', space=vmem, size = 0x800, scoped, tag = 'input window, operand 1, single buffered']
    #allocation7 [shape = 's32[1]{0}', space=sflag, size = 0x4, scoped, tag = 'scoped memory for gruvae_forward.8']
    #allocation8 [shape = 'u8[8192]{0}', space=vmem, size = 0x2000, scoped, tag = 'input window, operand 2, single buffered']
    #allocation9 [shape = 'u8[512]{0}', space=vmem, size = 0x400, scoped, tag = 'input window, operand 3, single buffered']
    #allocation10 [shape = 's32[1]{0}', space=sflag, size = 0x4, scoped, tag = 'scoped memory for gruvae_forward.8']
    #allocation11 [shape = 'u8[16384]{0}', space=vmem, size = 0x4000, scoped, tag = 'input window, operand 4, single buffered']
    #allocation12 [shape = 'u8[1024]{0}', space=vmem, size = 0x400, scoped, tag = 'input window, operand 5, single buffered']
    #allocation13 [shape = 's32[1]{0}', space=sflag, size = 0x4, scoped, tag = 'scoped memory for gruvae_forward.8']
    #allocation14 [shape = 'u8[4096]{0}', space=vmem, size = 0x1000, scoped, tag = 'output window, operand 0, single buffered']
    %11 = vsyncpa [#allocation4], 0
    %12 = vsyncpa [#allocation7], 0
    %13 = vsyncpa [#allocation10], 0
    %14 = vsyncpa [#allocation13], 0
    %15 = vsyncpa [#allocation5], 0
    // Predicated region
    $region2: #{gruvae_forward.8} parent=1 // pred_check
      _
    $region3: #{gruvae_forward.8} parent=1 // pred_check_branch
      %17 = sbr.rel (0) target = $region5
    $region4: #{gruvae_forward.8} parent=1 // pred_region
      %s19 = ssub.s32 128, 128
      %20 = vsyncadd [#allocation4], %s19
      %s21 = sshll.u32 [#allocation3], 4
      %s22 = int_to_ptr.vmem [resolvable:$true] %s21
      %27 = dma.hbm_to_vmem [thread:$0]  %s0, 128, %s22, [#allocation4], 16, 16, 1
    $region5: #{gruvae_forward.8} parent=1 // pred_fallthru
      _
    // Predicated region
    $region6: #{gruvae_forward.8} parent=1 // pred_check
      _
    $region7: #{gruvae_forward.8} parent=1 // pred_check_branch
      %29 = sbr.rel (0) target = $region9
    $region8: #{gruvae_forward.8} parent=1 // pred_region
      %s31 = ssub.s32 64, 64
      %32 = vsyncadd [#allocation7], %s31
      %s33 = sshll.u32 [#allocation6], 4
      %s34 = int_to_ptr.vmem [resolvable:$true] %s33
      %39 = dma.hbm_to_vmem [thread:$0]  %s1, 64, %s34, [#allocation7], 32, 32, 2
    $region9: #{gruvae_forward.8} parent=1 // pred_fallthru
      _
    // Predicated region
    $region10: #{gruvae_forward.8} parent=1 // pred_check
      _
    $region11: #{gruvae_forward.8} parent=1 // pred_check_branch
      %41 = sbr.rel (0) target = $region13
    $region12: #{gruvae_forward.8} parent=1 // pred_region
      %s43 = ssub.s32 256, 256
      %44 = vsyncadd [#allocation7], %s43
      %s45 = sshll.u32 [#allocation8], 4
      %s46 = int_to_ptr.vmem [resolvable:$true] %s45
      %51 = dma.hbm_to_vmem [thread:$0]  %s2, 256, %s46, [#allocation7], 64, 64, 4
    $region13: #{gruvae_forward.8} parent=1 // pred_fallthru
      _
    // Predicated region
    $region14: #{gruvae_forward.8} parent=1 // pred_check
      _
    $region15: #{gruvae_forward.8} parent=1 // pred_check_branch
      %53 = sbr.rel (0) target = $region17
    $region16: #{gruvae_forward.8} parent=1 // pred_region
      %s55 = ssub.s32 16, 16
      %56 = vsyncadd [#allocation10], %s55
      %s58 = sshll.u32 [#allocation9], 4
      %s59 = int_to_ptr.vmem [resolvable:$true] %s58
      %61 = dma.hbm_to_vmem [thread:$0]  %s3, 16, %s59, [#allocation10]
    $region17: #{gruvae_forward.8} parent=1 // pred_fallthru
      _
    // Predicated region
    $region18: #{gruvae_forward.8} parent=1 // pred_check
      _
    $region19: #{gruvae_forward.8} parent=1 // pred_check_branch
      %63 = sbr.rel (0) target = $region21
    $region20: #{gruvae_forward.8} parent=1 // pred_region
      %s65 = ssub.s32 512, 512
      %66 = vsyncadd [#allocation10], %s65
      %s67 = sshll.u32 [#allocation11], 4
      %s68 = int_to_ptr.vmem [resolvable:$true] %s67
      %73 = dma.hbm_to_vmem [thread:$0]  %s4, 512, %s68, [#allocation10], 64, 64, 4
    $region21: #{gruvae_forward.8} parent=1 // pred_fallthru
      _
    // Predicated region
    $region22: #{gruvae_forward.8} parent=1 // pred_check
      _
    $region23: #{gruvae_forward.8} parent=1 // pred_check_branch
      %75 = sbr.rel (0) target = $region25
    $region24: #{gruvae_forward.8} parent=1 // pred_region
      %s77 = ssub.s32 32, 32
      %78 = vsyncadd [#allocation13], %s77
      %s79 = sshll.u32 [#allocation12], 4
      %s80 = int_to_ptr.vmem [resolvable:$true] %s79
      %85 = dma.hbm_to_vmem [thread:$0]  %s5, 32, %s80, [#allocation13], 16, 16, 1
    $region25: #{gruvae_forward.8} parent=1 // pred_fallthru
      _
    // Predicated region
    $region26: #{gruvae_forward.8} parent=1 // pred_check
      _
    $region27: #{gruvae_forward.8} parent=1 // pred_check_branch
      %87 = sbr.rel (0) target = $region29
    $region28: #{gruvae_forward.8} parent=1 // pred_region
      %88 = dma.done [#allocation4], 128
    $region29: #{gruvae_forward.8} parent=1 // pred_fallthru
      _
    // Predicated region
    $region30: #{gruvae_forward.8} parent=1 // pred_check
      _
    $region31: #{gruvae_forward.8} parent=1 // pred_check_branch
      %90 = sbr.rel (0) target = $region33
    $region32: #{gruvae_forward.8} parent=1 // pred_region
      %91 = dma.done [#allocation7], 64
    $region33: #{gruvae_forward.8} parent=1 // pred_fallthru
      _
    // Predicated region
    $region34: #{gruvae_forward.8} parent=1 // pred_check
      _
    $region35: #{gruvae_forward.8} parent=1 // pred_check_branch
      %93 = sbr.rel (0) target = $region37
    $region36: #{gruvae_forward.8} parent=1 // pred_region
      %94 = dma.done [#allocation7], 256
    $region37: #{gruvae_forward.8} parent=1 // pred_fallthru
      _
    // Predicated region
    $region38: #{gruvae_forward.8} parent=1 // pred_check
      _
    $region39: #{gruvae_forward.8} parent=1 // pred_check_branch
      %96 = sbr.rel (0) target = $region41
    $region40: #{gruvae_forward.8} parent=1 // pred_region
      %97 = dma.done [#allocation10], 16
    $region41: #{gruvae_forward.8} parent=1 // pred_fallthru
      _
    // Predicated region
    $region42: #{gruvae_forward.8} parent=1 // pred_check
      _
    $region43: #{gruvae_forward.8} parent=1 // pred_check_branch
      %99 = sbr.rel (0) target = $region45
    $region44: #{gruvae_forward.8} parent=1 // pred_region
      %100 = dma.done [#allocation10], 512
    $region45: #{gruvae_forward.8} parent=1 // pred_fallthru
      _
    // Predicated region
    $region46: #{gruvae_forward.8} parent=1 // pred_check
      _
    $region47: #{gruvae_forward.8} parent=1 // pred_check_branch
      %102 = sbr.rel (0) target = $region49
    $region48: #{gruvae_forward.8} parent=1 // pred_region
      %103 = dma.done [#allocation13], 32
    $region49: #{gruvae_forward.8} parent=1 // pred_fallthru
      _
    %p105 = scmp.eq.s32.totalorder 0, 0
    // Predicated region
    $region50: #{gruvae_forward.8} parent=1 // pred_check
      %p106 = pneg %p105
    $region51: #{gruvae_forward.8} parent=1 // pred_check_branch
      %108 = sbr.rel (%p106) target = $region53
    $region52: #{gruvae_forward.8} parent=1 // pred_region
      %v109 = vld [vmem:[#allocation6] sm:$0x3]
      %v110 = vld [vmem:[#allocation6 + $0x2] sm:$0x3]
      %vm111 = vcmask 254976
      %112 = vst.msk [vmem:[#allocation2] sm:$0x3] %vm111, %v109
      %113 = vst.msk [vmem:[#allocation2 + $0x2] sm:$0x3] %vm111, %v110
    $region53: #{gruvae_forward.8} parent=1 // pred_fallthru
      _
    %v114 = vld [vmem:[#allocation3] sm:$0x1]
    %v115 = vld [vmem:[#allocation2] sm:$0x3]
    %v116 = vld [vmem:[#allocation11] sm:$0xf]
    %v117 = vld [vmem:[#allocation11 + $0x4] sm:$0xf]
    %v118 = vld [vmem:[#allocation11 + $0x8] sm:$0xf]
    %v119 = vld [vmem:[#allocation11 + $0xc] sm:$0xf]
    %v120 = vld [vmem:[#allocation12] sm:$0x1]
    %v121 = vpack.c.bf16 %v115, %v115
    %v123 = vlaneseq
    %v124 = vshrl.u32 %v123, 7
    %v125 = vsub.s32 0, %v124
    %v126 = vrot.slane %v120, %v125
    %v132 = vunpack.c.l.b16 %v116
    %v133 = vunpack.c.l.b16 %v117
    %v134 = vunpack.c.l.b16 %v118
    %v135 = vunpack.c.l.b16 %v119
    %v136 = vpack.c.b16 %v133, %v132
    %v137 = vpack.c.b16 %v135, %v134
    %vm140 = vcmask 261120
    %v142 = vsel %vm140, %v121, 0
    %144 = vmatprep.subr.bf16.mxu0 0
    %145 = vmatpush1.bf16.msra.mxu0 %v136
    %146 = vmatprep.subr.bf16.mxu0 0
    %147 = vmatpush1.bf16.msra.mxu0 %v137
    %148 = vmatprep.subr.bf16.mxu0 0
    %149 = vmatpush1.bf16.msra.mxu0 0
    %150 = vmatprep.subr.bf16.mxu0 0
    %151 = vmatpush1.bf16.msra.mxu0 0
    %152 = vmatprep.subr.bf16.mxu0 0
    %153 = vmatpush1.bf16.msra.mxu0 0
    %154 = vmatprep.subr.bf16.mxu0 0
    %155 = vmatpush1.bf16.msra.mxu0 0
    %156 = vmatprep.subr.bf16.mxu0 0
    %157 = vmatpush1.bf16.msra.mxu0 0
    %158 = vmatprep.subr.bf16.mxu0 0
    %159 = vmatpush1.bf16.msra.mxu0 0
    %160 = vmatprep.subr.bf16.mxu0 0
    %161 = vmatpush1.bf16.msra.mxu0 0
    %162 = vmatprep.subr.bf16.mxu0 0
    %163 = vmatpush1.bf16.msra.mxu0 0
    %164 = vmatprep.subr.bf16.mxu0 0
    %165 = vmatpush1.bf16.msra.mxu0 0
    %166 = vmatprep.subr.bf16.mxu0 0
    %167 = vmatpush1.bf16.msra.mxu0 0
    %168 = vmatprep.subr.bf16.mxu0 0
    %169 = vmatpush1.bf16.msra.mxu0 0
    %170 = vmatprep.subr.bf16.mxu0 0
    %171 = vmatpush1.bf16.msra.mxu0 0
    %172 = vmatprep.subr.bf16.mxu0 0
    %173 = vmatpush1.bf16.msra.mxu0 0
    %174 = vmatprep.subr.bf16.mxu0 0
    %175 = vmatpush1.bf16.msra.mxu0 0
    %176 = vmatprep.mubr.bf16.mxu0 0
    %177 = vmatmul.mubr.bf16.gmra.mrb[0].mxu0 %v142
    %v178 = vpop.f32.mrb[0].mxu0
    %v179 = vadd.f32 %v126, %v178
    %v180 = vpop.f32.mrb[0].mxu0
    %v181 = vpop.f32.mrb[0].mxu0
    %v182 = vpop.f32.mrb[0].mxu0
    %183 = vdwg.mxu0
    %v184 = vunpack.c.l.bf16 %v114
    %v185 = vadd.f32 %v184, %v179
    %v186 = vxor.u32 %v185, 2147483648
    %v187 = vmul.f32 %v186, 1.442695
    %v188 = vpow.pop %v187
    %v189 = vadd.f32 %v188, 1.0
    %v190 = vrcp.pop %v189
    %v191 = vmul.f32 1.0, %v190
    %v194 = vunpack.c.l.s4 1983009808
    %v195 = vunpack.c.0.s8 %v194
    %v196 = vlaneseq
    %v197 = vshrl.u32 %v196, 7
    %v198 = vsub.s32 %v195, %v197
    %v199 = vrot.slane %v179, %v198
    %200 = vrot.lane.b32.xlu0 %v199, 64
    %v201 = vpop.permute.xlu0 %200
    %v203 = vmul.f32 %v191, %v201
    %205 = vrot.lane.b32.xlu0 %v203, 64
    %v206 = vpop.permute.xlu0 %205
    %v208 = vadd.f32 %v184, %v206
    %v209 = vtanh.pop %v208
    %v210 = vsub.f32 1.0, %v191
    %212 = vrot.lane.b32.xlu0 %v209, 96
    %v213 = vpop.permute.xlu0 %212
    %v215 = vmul.f32 %v210, %v213
    %v218 = vunpack.c.l.s4 1983009808
    %v219 = vunpack.c.0.s8 %v218
    %v220 = vlaneseq
    %v221 = vshrl.u32 %v220, 7
    %v222 = vsub.s32 %v219, %v221
    %v223 = vrot.slane %v115, %v222
    %224 = vrot.lane.b32.xlu0 %v223, 32
    %v225 = vpop.permute.xlu0 %224
    %v227 = vmul.f32 %v191, %v225
    %v228 = vadd.f32 %v215, %v227
    %v231 = vunpack.c.l.s4 1983009808
    %v232 = vunpack.c.0.s8 %v231
    %v233 = vlaneseq
    %v234 = vshrl.u32 %v233, 7
    %v235 = vsub.s32 %v232, %v234
    %v236 = vrot.slane %v228, %v235
    %237 = vrot.lane.b32.xlu0 %v236, 96
    %v238 = vpop.permute.xlu0 %237
    %vm240 = vcmask 254976
    %241 = vst.msk [vmem:[#allocation2] sm:$0x3] %vm240, %v238
    %v242 = vpack.c.bf16 %v228, %v228
    %v243 = vld [vmem:[#allocation8] sm:$0xf]
    %v244 = vld [vmem:[#allocation8 + $0x4] sm:$0xf]
    %v245 = vld [vmem:[#allocation8 + $0x8] sm:$0xf]
    %v246 = vld [vmem:[#allocation8 + $0xc] sm:$0xf]
    %v247 = vld [vmem:[#allocation9] sm:$0x1]
    %v249 = vlaneseq
    %v250 = vshrl.u32 %v249, 7
    %v251 = vsub.s32 0, %v250
    %v252 = vrot.slane %v247, %v251
    %255 = vrot.lane.b32.xlu0 %v242, 96
    %v256 = vpop.permute.xlu0 %255
    %v261 = vunpack.c.l.b16 %v243
    %v262 = vunpack.c.l.b16 %v244
    %v263 = vunpack.c.l.b16 %v245
    %v264 = vunpack.c.l.b16 %v246
    %v265 = vpack.c.b16 %v262, %v261
    %v266 = vpack.c.b16 %v264, %v263
    %v270 = vsel %vm140, %v256, 0
    %272 = vmatprep.subr.bf16.mxu0 0
    %273 = vmatpush1.bf16.msra.mxu0 %v265
    %274 = vmatprep.subr.bf16.mxu0 0
    %275 = vmatpush1.bf16.msra.mxu0 %v266
    %276 = vmatprep.subr.bf16.mxu0 0
    %277 = vmatpush1.bf16.msra.mxu0 0
    %278 = vmatprep.subr.bf16.mxu0 0
    %279 = vmatpush1.bf16.msra.mxu0 0
    %280 = vmatprep.subr.bf16.mxu0 0
    %281 = vmatpush1.bf16.msra.mxu0 0
    %282 = vmatprep.subr.bf16.mxu0 0
    %283 = vmatpush1.bf16.msra.mxu0 0
    %284 = vmatprep.subr.bf16.mxu0 0
    %285 = vmatpush1.bf16.msra.mxu0 0
    %286 = vmatprep.subr.bf16.mxu0 0
    %287 = vmatpush1.bf16.msra.mxu0 0
    %288 = vmatprep.subr.bf16.mxu0 0
    %289 = vmatpush1.bf16.msra.mxu0 0
    %290 = vmatprep.subr.bf16.mxu0 0
    %291 = vmatpush1.bf16.msra.mxu0 0
    %292 = vmatprep.subr.bf16.mxu0 0
    %293 = vmatpush1.bf16.msra.mxu0 0
    %294 = vmatprep.subr.bf16.mxu0 0
    %295 = vmatpush1.bf16.msra.mxu0 0
    %296 = vmatprep.subr.bf16.mxu0 0
    %297 = vmatpush1.bf16.msra.mxu0 0
    %298 = vmatprep.subr.bf16.mxu0 0
    %299 = vmatpush1.bf16.msra.mxu0 0
    %300 = vmatprep.subr.bf16.mxu0 0
    %301 = vmatpush1.bf16.msra.mxu0 0
    %302 = vmatprep.subr.bf16.mxu0 0
    %303 = vmatpush1.bf16.msra.mxu0 0
    %304 = vmatprep.mubr.bf16.mxu0 0
    %305 = vmatmul.mubr.bf16.gmra.mrb[0].mxu0 %v270
    %v306 = vpop.f32.mrb[0].mxu0
    %v307 = vadd.f32 %v252, %v306
    %v308 = vpop.f32.mrb[0].mxu0
    %v309 = vpop.f32.mrb[0].mxu0
    %v310 = vpop.f32.mrb[0].mxu0
    %311 = vdwg.mxu0
    %s312 = scalar_lea.vmem [#allocation2], 2
    %v313 = vld [vmem:[%s312] sm:$0x3]
    %s314 = scalar_lea.vmem [#allocation11], 16
    %v315 = vld [vmem:[%s314] sm:$0xf]
    %v316 = vld [vmem:[%s314 + $0x4] sm:$0xf]
    %v317 = vld [vmem:[%s314 + $0x8] sm:$0xf]
    %v318 = vld [vmem:[%s314 + $0xc] sm:$0xf]
    %s319 = scalar_lea.vmem [#allocation12], 1
    %v320 = vld [vmem:[%s319] sm:$0x1]
    %v321 = vpack.c.bf16 %v313, %v313
    %v323 = vlaneseq
    %v324 = vshrl.u32 %v323, 7
    %v325 = vsub.s32 0, %v324
    %v326 = vrot.slane %v320, %v325
    %v332 = vunpack.c.l.b16 %v315
    %v333 = vunpack.c.l.b16 %v316
    %v334 = vunpack.c.l.b16 %v317
    %v335 = vunpack.c.l.b16 %v318
    %v336 = vpack.c.b16 %v333, %v332
    %v337 = vpack.c.b16 %v335, %v334
    %v341 = vsel %vm140, %v321, 0
    %343 = vmatprep.subr.bf16.mxu0 0
    %344 = vmatpush1.bf16.msra.mxu0 %v336
    %345 = vmatprep.subr.bf16.mxu0 0
    %346 = vmatpush1.bf16.msra.mxu0 %v337
    %347 = vmatprep.subr.bf16.mxu0 0
    %348 = vmatpush1.bf16.msra.mxu0 0
    %349 = vmatprep.subr.bf16.mxu0 0
    %350 = vmatpush1.bf16.msra.mxu0 0
    %351 = vmatprep.subr.bf16.mxu0 0
    %352 = vmatpush1.bf16.msra.mxu0 0
    %353 = vmatprep.subr.bf16.mxu0 0
    %354 = vmatpush1.bf16.msra.mxu0 0
    %355 = vmatprep.subr.bf16.mxu0 0
    %356 = vmatpush1.bf16.msra.mxu0 0
    %357 = vmatprep.subr.bf16.mxu0 0
    %358 = vmatpush1.bf16.msra.mxu0 0
    %359 = vmatprep.subr.bf16.mxu0 0
    %360 = vmatpush1.bf16.msra.mxu0 0
    %361 = vmatprep.subr.bf16.mxu0 0
    %362 = vmatpush1.bf16.msra.mxu0 0
    %363 = vmatprep.subr.bf16.mxu0 0
    %364 = vmatpush1.bf16.msra.mxu0 0
    %365 = vmatprep.subr.bf16.mxu0 0
    %366 = vmatpush1.bf16.msra.mxu0 0
    %367 = vmatprep.subr.bf16.mxu0 0
    %368 = vmatpush1.bf16.msra.mxu0 0
    %369 = vmatprep.subr.bf16.mxu0 0
    %370 = vmatpush1.bf16.msra.mxu0 0
    %371 = vmatprep.subr.bf16.mxu0 0
    %372 = vmatpush1.bf16.msra.mxu0 0
    %373 = vmatprep.subr.bf16.mxu0 0
    %374 = vmatpush1.bf16.msra.mxu0 0
    %375 = vmatprep.mubr.bf16.mxu0 0
    %376 = vmatmul.mubr.bf16.gmra.mrb[0].mxu0 %v341
    %v377 = vpop.f32.mrb[0].mxu0
    %v378 = vadd.f32 %v326, %v377
    %v379 = vpop.f32.mrb[0].mxu0
    %v380 = vpop.f32.mrb[0].mxu0
    %v381 = vpop.f32.mrb[0].mxu0
    %382 = vdwg.mxu0
    %v383 = vadd.f32 %v307, %v378
    %v384 = vxor.u32 %v383, 2147483648
    %v385 = vmul.f32 %v384, 1.442695
    %v386 = vpow.pop %v385
    %v387 = vadd.f32 %v386, 1.0
    %v388 = vrcp.pop %v387
    %v389 = vmul.f32 1.0, %v388
    %391 = vrot.lane.b32.xlu0 %v378, 64
    %v392 = vpop.permute.xlu0 %391
    %v394 = vmul.f32 %v389, %v392
    %396 = vrot.lane.b32.xlu0 %v394, 64
    %v397 = vpop.permute.xlu0 %396
    %v399 = vadd.f32 %v307, %v397
    %v400 = vtanh.pop %v399
    %v401 = vsub.f32 1.0, %v389
    %403 = vrot.lane.b32.xlu0 %v400, 96
    %v404 = vpop.permute.xlu0 %403
    %v406 = vmul.f32 %v401, %v404
    %408 = vrot.lane.b32.xlu0 %v313, 32
    %v409 = vpop.permute.xlu0 %408
    %v411 = vmul.f32 %v389, %v409
    %v412 = vadd.f32 %v406, %v411
    %414 = vrot.lane.b32.xlu0 %v412, 96
    %v415 = vpop.permute.xlu0 %414
    %417 = vst.msk [vmem:[%s312] sm:$0x3] %vm240, %v415
    %v419 = vunpack.c.l.s4 1966171168
    %v420 = vunpack.c.0.s8 %v419
    %v421 = vlaneseq
    %v422 = vshrl.u32 %v421, 7
    %v423 = vsub.s32 %v420, %v422
    %v424 = vrot.slane %v412, %v423
    %v425 = vcombine.high %v424, %v424
    %v427 = vunpack.c.l.s4 1966171168
    %v428 = vunpack.c.0.s8 %v427
    %v429 = vlaneseq
    %v430 = vshrl.u32 %v429, 7
    %v431 = vsub.s32 %v428, %v430
    %v432 = vrot.slane %v424, %v431
    %v434 = vunpack.c.l.s4 1966171168
    %v435 = vunpack.c.0.s8 %v434
    %v436 = vlaneseq
    %v437 = vshrl.u32 %v436, 7
    %v438 = vsub.s32 %v435, %v437
    %v439 = vrot.slane %v425, %v438
    %v442 = vpack.c.bf16 %v432, %v432
    %v443 = vpack.c.bf16 %v439, %v439
    %v446 = vunpack.c.l.b16 %v442
    %v447 = vunpack.c.l.b16 %v443
    %v448 = vpack.c.b16 %v446, %v446
    %v449 = vpack.c.b16 %v447, %v447
    %450 = vrot.lane.b32.xlu0 %v448, 96
    %v451 = vpop.permute.xlu0 %450
    %452 = vrot.lane.b32.xlu0 %v449, 96
    %v453 = vpop.permute.xlu0 %452
    %vm456 = vcmask 253952
    %vm457 = vsmask.f32 256
    %vm458 = vmand %vm456, %vm457
    %v459 = vld [vmem:[#allocation14] sm:$0x1]
    %v460 = vsel %vm458, %v451, %v459
    %461 = vst [vmem:[#allocation14] sm:$0x1] %v460
    %v462 = vld [vmem:[#allocation14 + $0x4] sm:$0x1]
    %v463 = vsel %vm458, %v453, %v462
    %464 = vst [vmem:[#allocation14 + $0x4] sm:$0x1] %v463
    %s465 = scalar_lea.vmem [#allocation3], 1
    %v466 = vld [vmem:[%s465] sm:$0x1]
    %v467 = vld [vmem:[#allocation2] sm:$0x3]
    %v468 = vld [vmem:[#allocation11] sm:$0xf]
    %v469 = vld [vmem:[#allocation11 + $0x4] sm:$0xf]
    %v470 = vld [vmem:[#allocation11 + $0x8] sm:$0xf]
    %v471 = vld [vmem:[#allocation11 + $0xc] sm:$0xf]
    %v472 = vld [vmem:[#allocation12] sm:$0x1]
    %v473 = vpack.c.bf16 %v467, %v467
    %v475 = vlaneseq
    %v476 = vshrl.u32 %v475, 7
    %v477 = vsub.s32 0, %v476
    %v478 = vrot.slane %v472, %v477
    %v484 = vunpack.c.l.b16 %v468
    %v485 = vunpack.c.l.b16 %v469
    %v486 = vunpack.c.l.b16 %v470
    %v487 = vunpack.c.l.b16 %v471
    %v488 = vpack.c.b16 %v485, %v484
    %v489 = vpack.c.b16 %v487, %v486
    %v493 = vsel %vm140, %v473, 0
    %495 = vmatprep.subr.bf16.mxu0 0
    %496 = vmatpush1.bf16.msra.mxu0 %v488
    %497 = vmatprep.subr.bf16.mxu0 0
    %498 = vmatpush1.bf16.msra.mxu0 %v489
    %499 = vmatprep.subr.bf16.mxu0 0
    %500 = vmatpush1.bf16.msra.mxu0 0
    %501 = vmatprep.subr.bf16.mxu0 0
    %502 = vmatpush1.bf16.msra.mxu0 0
    %503 = vmatprep.subr.bf16.mxu0 0
    %504 = vmatpush1.bf16.msra.mxu0 0
    %505 = vmatprep.subr.bf16.mxu0 0
    %506 = vmatpush1.bf16.msra.mxu0 0
    %507 = vmatprep.subr.bf16.mxu0 0
    %508 = vmatpush1.bf16.msra.mxu0 0
    %509 = vmatprep.subr.bf16.mxu0 0
    %510 = vmatpush1.bf16.msra.mxu0 0
    %511 = vmatprep.subr.bf16.mxu0 0
    %512 = vmatpush1.bf16.msra.mxu0 0
    %513 = vmatprep.subr.bf16.mxu0 0
    %514 = vmatpush1.bf16.msra.mxu0 0
    %515 = vmatprep.subr.bf16.mxu0 0
    %516 = vmatpush1.bf16.msra.mxu0 0
    %517 = vmatprep.subr.bf16.mxu0 0
    %518 = vmatpush1.bf16.msra.mxu0 0
    %519 = vmatprep.subr.bf16.mxu0 0
    %520 = vmatpush1.bf16.msra.mxu0 0
    %521 = vmatprep.subr.bf16.mxu0 0
    %522 = vmatpush1.bf16.msra.mxu0 0
    %523 = vmatprep.subr.bf16.mxu0 0
    %524 = vmatpush1.bf16.msra.mxu0 0
    %525 = vmatprep.subr.bf16.mxu0 0
    %526 = vmatpush1.bf16.msra.mxu0 0
    %527 = vmatprep.mubr.bf16.mxu0 0
    %528 = vmatmul.mubr.bf16.gmra.mrb[0].mxu0 %v493
    %v529 = vpop.f32.mrb[0].mxu0
    %v530 = vadd.f32 %v478, %v529
    %v531 = vpop.f32.mrb[0].mxu0
    %v532 = vpop.f32.mrb[0].mxu0
    %v533 = vpop.f32.mrb[0].mxu0
    %534 = vdwg.mxu0
    %v535 = vunpack.c.l.bf16 %v466
    %v536 = vadd.f32 %v535, %v530
    %v537 = vxor.u32 %v536, 2147483648
    %v538 = vmul.f32 %v537, 1.442695
    %v539 = vpow.pop %v538
    %v540 = vadd.f32 %v539, 1.0
    %v541 = vrcp.pop %v540
    %v542 = vmul.f32 1.0, %v541
    %v545 = vunpack.c.l.s4 1983009808
    %v546 = vunpack.c.0.s8 %v545
    %v547 = vlaneseq
    %v548 = vshrl.u32 %v547, 7
    %v549 = vsub.s32 %v546, %v548
    %v550 = vrot.slane %v530, %v549
    %551 = vrot.lane.b32.xlu0 %v550, 64
    %v552 = vpop.permute.xlu0 %551
    %v554 = vmul.f32 %v542, %v552
    %556 = vrot.lane.b32.xlu0 %v554, 64
    %v557 = vpop.permute.xlu0 %556
    %v559 = vadd.f32 %v535, %v557
    %v560 = vtanh.pop %v559
    %v561 = vsub.f32 1.0, %v542
    %563 = vrot.lane.b32.xlu0 %v560, 96
    %v564 = vpop.permute.xlu0 %563
    %v566 = vmul.f32 %v561, %v564
    %v569 = vunpack.c.l.s4 1983009808
    %v570 = vunpack.c.0.s8 %v569
    %v571 = vlaneseq
    %v572 = vshrl.u32 %v571, 7
    %v573 = vsub.s32 %v570, %v572
    %v574 = vrot.slane %v467, %v573
    %575 = vrot.lane.b32.xlu0 %v574, 32
    %v576 = vpop.permute.xlu0 %575
    %v578 = vmul.f32 %v542, %v576
    %v579 = vadd.f32 %v566, %v578
    %v582 = vunpack.c.l.s4 1983009808
    %v583 = vunpack.c.0.s8 %v582
    %v584 = vlaneseq
    %v585 = vshrl.u32 %v584, 7
    %v586 = vsub.s32 %v583, %v585
    %v587 = vrot.slane %v579, %v586
    %588 = vrot.lane.b32.xlu0 %v587, 96
    %v589 = vpop.permute.xlu0 %588
    %591 = vst.msk [vmem:[#allocation2] sm:$0x3] %vm240, %v589
    %v592 = vpack.c.bf16 %v579, %v579
    %v593 = vld [vmem:[#allocation8] sm:$0xf]
    %v594 = vld [vmem:[#allocation8 + $0x4] sm:$0xf]
    %v595 = vld [vmem:[#allocation8 + $0x8] sm:$0xf]
    %v596 = vld [vmem:[#allocation8 + $0xc] sm:$0xf]
    %v597 = vld [vmem:[#allocation9] sm:$0x1]
    %v599 = vlaneseq
    %v600 = vshrl.u32 %v599, 7
    %v601 = vsub.s32 0, %v600
    %v602 = vrot.slane %v597, %v601
    %605 = vrot.lane.b32.xlu0 %v592, 96
    %v606 = vpop.permute.xlu0 %605
    %v611 = vunpack.c.l.b16 %v593
    %v612 = vunpack.c.l.b16 %v594
    %v613 = vunpack.c.l.b16 %v595
    %v614 = vunpack.c.l.b16 %v596
    %v615 = vpack.c.b16 %v612, %v611
    %v616 = vpack.c.b16 %v614, %v613
    %v620 = vsel %vm140, %v606, 0
    %622 = vmatprep.subr.bf16.mxu0 0
    %623 = vmatpush1.bf16.msra.mxu0 %v615
    %624 = vmatprep.subr.bf16.mxu0 0
    %625 = vmatpush1.bf16.msra.mxu0 %v616
    %626 = vmatprep.subr.bf16.mxu0 0
    %627 = vmatpush1.bf16.msra.mxu0 0
    %628 = vmatprep.subr.bf16.mxu0 0
    %629 = vmatpush1.bf16.msra.mxu0 0
    %630 = vmatprep.subr.bf16.mxu0 0
    %631 = vmatpush1.bf16.msra.mxu0 0
    %632 = vmatprep.subr.bf16.mxu0 0
    %633 = vmatpush1.bf16.msra.mxu0 0
    %634 = vmatprep.subr.bf16.mxu0 0
    %635 = vmatpush1.bf16.msra.mxu0 0
    %636 = vmatprep.subr.bf16.mxu0 0
    %637 = vmatpush1.bf16.msra.mxu0 0
    %638 = vmatprep.subr.bf16.mxu0 0
    %639 = vmatpush1.bf16.msra.mxu0 0
    %640 = vmatprep.subr.bf16.mxu0 0
    %641 = vmatpush1.bf16.msra.mxu0 0
    %642 = vmatprep.subr.bf16.mxu0 0
    %643 = vmatpush1.bf16.msra.mxu0 0
    %644 = vmatprep.subr.bf16.mxu0 0
    %645 = vmatpush1.bf16.msra.mxu0 0
    %646 = vmatprep.subr.bf16.mxu0 0
    %647 = vmatpush1.bf16.msra.mxu0 0
    %648 = vmatprep.subr.bf16.mxu0 0
    %649 = vmatpush1.bf16.msra.mxu0 0
    %650 = vmatprep.subr.bf16.mxu0 0
    %651 = vmatpush1.bf16.msra.mxu0 0
    %652 = vmatprep.subr.bf16.mxu0 0
    %653 = vmatpush1.bf16.msra.mxu0 0
    %654 = vmatprep.mubr.bf16.mxu0 0
    %655 = vmatmul.mubr.bf16.gmra.mrb[0].mxu0 %v620
    %v656 = vpop.f32.mrb[0].mxu0
    %v657 = vadd.f32 %v602, %v656
    %v658 = vpop.f32.mrb[0].mxu0
    %v659 = vpop.f32.mrb[0].mxu0
    %v660 = vpop.f32.mrb[0].mxu0
    %661 = vdwg.mxu0
    %v662 = vld [vmem:[%s312] sm:$0x3]
    %v663 = vld [vmem:[%s314] sm:$0xf]
    %v664 = vld [vmem:[%s314 + $0x4] sm:$0xf]
    %v665 = vld [vmem:[%s314 + $0x8] sm:$0xf]
    %v666 = vld [vmem:[%s314 + $0xc] sm:$0xf]
    %v667 = vld [vmem:[%s319] sm:$0x1]
    %v668 = vpack.c.bf16 %v662, %v662
    %v670 = vlaneseq
    %v671 = vshrl.u32 %v670, 7
    %v672 = vsub.s32 0, %v671
    %v673 = vrot.slane %v667, %v672
    %v679 = vunpack.c.l.b16 %v663
    %v680 = vunpack.c.l.b16 %v664
    %v681 = vunpack.c.l.b16 %v665
    %v682 = vunpack.c.l.b16 %v666
    %v683 = vpack.c.b16 %v680, %v679
    %v684 = vpack.c.b16 %v682, %v681
    %v688 = vsel %vm140, %v668, 0
    %690 = vmatprep.subr.bf16.mxu0 0
    %691 = vmatpush1.bf16.msra.mxu0 %v683
    %692 = vmatprep.subr.bf16.mxu0 0
    %693 = vmatpush1.bf16.msra.mxu0 %v684
    %694 = vmatprep.subr.bf16.mxu0 0
    %695 = vmatpush1.bf16.msra.mxu0 0
    %696 = vmatprep.subr.bf16.mxu0 0
    %697 = vmatpush1.bf16.msra.mxu0 0
    %698 = vmatprep.subr.bf16.mxu0 0
    %699 = vmatpush1.bf16.msra.mxu0 0
    %700 = vmatprep.subr.bf16.mxu0 0
    %701 = vmatpush1.bf16.msra.mxu0 0
    %702 = vmatprep.subr.bf16.mxu0 0
    %703 = vmatpush1.bf16.msra.mxu0 0
    %704 = vmatprep.subr.bf16.mxu0 0
    %705 = vmatpush1.bf16.msra.mxu0 0
    %706 = vmatprep.subr.bf16.mxu0 0
    %707 = vmatpush1.bf16.msra.mxu0 0
    %708 = vmatprep.subr.bf16.mxu0 0
    %709 = vmatpush1.bf16.msra.mxu0 0
    %710 = vmatprep.subr.bf16.mxu0 0
    %711 = vmatpush1.bf16.msra.mxu0 0
    %712 = vmatprep.subr.bf16.mxu0 0
    %713 = vmatpush1.bf16.msra.mxu0 0
    %714 = vmatprep.subr.bf16.mxu0 0
    %715 = vmatpush1.bf16.msra.mxu0 0
    %716 = vmatprep.subr.bf16.mxu0 0
    %717 = vmatpush1.bf16.msra.mxu0 0
    %718 = vmatprep.subr.bf16.mxu0 0
    %719 = vmatpush1.bf16.msra.mxu0 0
    %720 = vmatprep.subr.bf16.mxu0 0
    %721 = vmatpush1.bf16.msra.mxu0 0
    %722 = vmatprep.mubr.bf16.mxu0 0
    %723 = vmatmul.mubr.bf16.gmra.mrb[0].mxu0 %v688
    %v724 = vpop.f32.mrb[0].mxu0
    %v725 = vadd.f32 %v673, %v724
    %v726 = vpop.f32.mrb[0].mxu0
    %v727 = vpop.f32.mrb[0].mxu0
    %v728 = vpop.f32.mrb[0].mxu0
    %729 = vdwg.mxu0
    %v730 = vadd.f32 %v657, %v725
    %v731 = vxor.u32 %v730, 2147483648
    %v732 = vmul.f32 %v731, 1.442695
    %v733 = vpow.pop %v732
    %v734 = vadd.f32 %v733, 1.0
    %v735 = vrcp.pop %v734
    %v736 = vmul.f32 1.0, %v735
    %738 = vrot.lane.b32.xlu0 %v725, 64
    %v739 = vpop.permute.xlu0 %738
    %v741 = vmul.f32 %v736, %v739
    %743 = vrot.lane.b32.xlu0 %v741, 64
    %v744 = vpop.permute.xlu0 %743
    %v746 = vadd.f32 %v657, %v744
    %v747 = vtanh.pop %v746
    %v748 = vsub.f32 1.0, %v736
    %750 = vrot.lane.b32.xlu0 %v747, 96
    %v751 = vpop.permute.xlu0 %750
    %v753 = vmul.f32 %v748, %v751
    %755 = vrot.lane.b32.xlu0 %v662, 32
    %v756 = vpop.permute.xlu0 %755
    %v758 = vmul.f32 %v736, %v756
    %v759 = vadd.f32 %v753, %v758
    %761 = vrot.lane.b32.xlu0 %v759, 96
    %v762 = vpop.permute.xlu0 %761
    %764 = vst.msk [vmem:[%s312] sm:$0x3] %vm240, %v762
    %v766 = vunpack.c.l.s4 1966171168
    %v767 = vunpack.c.0.s8 %v766
    %v768 = vlaneseq
    %v769 = vshrl.u32 %v768, 7
    %v770 = vsub.s32 %v767, %v769
    %v771 = vrot.slane %v759, %v770
    %v772 = vcombine.high %v771, %v771
    %v774 = vunpack.c.l.s4 1966171168
    %v775 = vunpack.c.0.s8 %v774
    %v776 = vlaneseq
    %v777 = vshrl.u32 %v776, 7
    %v778 = vsub.s32 %v775, %v777
    %v779 = vrot.slane %v771, %v778
    %v781 = vunpack.c.l.s4 1966171168
    %v782 = vunpack.c.0.s8 %v781
    %v783 = vlaneseq
    %v784 = vshrl.u32 %v783, 7
    %v785 = vsub.s32 %v782, %v784
    %v786 = vrot.slane %v772, %v785
    %v789 = vpack.c.bf16 %v779, %v779
    %v790 = vpack.c.bf16 %v786, %v786
    %v793 = vunpack.c.l.b16 %v789
    %v794 = vunpack.c.l.b16 %v790
    %v795 = vpack.c.b16 %v793, %v793
    %v796 = vpack.c.b16 %v794, %v794
    %v798 = vshll.u32 %v795, 16
    %v801 = vshll.u32 %v796, 16
    %803 = vrot.lane.b32.xlu0 %v798, 96
    %v804 = vpop.permute.xlu0 %803
    %805 = vrot.lane.b32.xlu0 %v801, 96
    %v806 = vpop.permute.xlu0 %805
    %vm809 = vsmask.f32 7938
    %vm810 = vmand %vm456, %vm809
    %v811 = vld [vmem:[#allocation14] sm:$0x1]
    %v812 = vsel %vm810, %v804, %v811
    %813 = vst [vmem:[#allocation14] sm:$0x1] %v812
    %v814 = vld [vmem:[#allocation14 + $0x4] sm:$0x1]
    %v815 = vsel %vm810, %v806, %v814
    %816 = vst [vmem:[#allocation14 + $0x4] sm:$0x1] %v815
    %s817 = scalar_lea.vmem [#allocation3], 2
    %v818 = vld [vmem:[%s817] sm:$0x1]
    %v819 = vld [vmem:[#allocation2] sm:$0x3]
    %v820 = vld [vmem:[#allocation11] sm:$0xf]
    %v821 = vld [vmem:[#allocation11 + $0x4] sm:$0xf]
    %v822 = vld [vmem:[#allocation11 + $0x8] sm:$0xf]
    %v823 = vld [vmem:[#allocation11 + $0xc] sm:$0xf]
    %v824 = vld [vmem:[#allocation12] sm:$0x1]
    %v825 = vpack.c.bf16 %v819, %v819
    %v827 = vlaneseq
    %v828 = vshrl.u32 %v827, 7
    %v829 = vsub.s32 0, %v828
    %v830 = vrot.slane %v824, %v829
    %v836 = vunpack.c.l.b16 %v820
    %v837 = vunpack.c.l.b16 %v821
    %v838 = vunpack.c.l.b16 %v822
    %v839 = vunpack.c.l.b16 %v823
    %v840 = vpack.c.b16 %v837, %v836
    %v841 = vpack.c.b16 %v839, %v838
    %v845 = vsel %vm140, %v825, 0
    %847 = vmatprep.subr.bf16.mxu0 0
    %848 = vmatpush1.bf16.msra.mxu0 %v840
    %849 = vmatprep.subr.bf16.mxu0 0
    %850 = vmatpush1.bf16.msra.mxu0 %v841
    %851 = vmatprep.subr.bf16.mxu0 0
    %852 = vmatpush1.bf16.msra.mxu0 0
    %853 = vmatprep.subr.bf16.mxu0 0
    %854 = vmatpush1.bf16.msra.mxu0 0
    %855 = vmatprep.subr.bf16.mxu0 0
    %856 = vmatpush1.bf16.msra.mxu0 0
    %857 = vmatprep.subr.bf16.mxu0 0
    %858 = vmatpush1.bf16.msra.mxu0 0
    %859 = vmatprep.subr.bf16.mxu0 0
    %860 = vmatpush1.bf16.msra.mxu0 0
    %861 = vmatprep.subr.bf16.mxu0 0
    %862 = vmatpush1.bf16.msra.mxu0 0
    %863 = vmatprep.subr.bf16.mxu0 0
    %864 = vmatpush1.bf16.msra.mxu0 0
    %865 = vmatprep.subr.bf16.mxu0 0
    %866 = vmatpush1.bf16.msra.mxu0 0
    %867 = vmatprep.subr.bf16.mxu0 0
    %868 = vmatpush1.bf16.msra.mxu0 0
    %869 = vmatprep.subr.bf16.mxu0 0
    %870 = vmatpush1.bf16.msra.mxu0 0
    %871 = vmatprep.subr.bf16.mxu0 0
    %872 = vmatpush1.bf16.msra.mxu0 0
    %873 = vmatprep.subr.bf16.mxu0 0
    %874 = vmatpush1.bf16.msra.mxu0 0
    %875 = vmatprep.subr.bf16.mxu0 0
    %876 = vmatpush1.bf16.msra.mxu0 0
    %877 = vmatprep.subr.bf16.mxu0 0
    %878 = vmatpush1.bf16.msra.mxu0 0
    %879 = vmatprep.mubr.bf16.mxu0 0
    %880 = vmatmul.mubr.bf16.gmra.mrb[0].mxu0 %v845
    %v881 = vpop.f32.mrb[0].mxu0
    %v882 = vadd.f32 %v830, %v881
    %v883 = vpop.f32.mrb[0].mxu0
    %v884 = vpop.f32.mrb[0].mxu0
    %v885 = vpop.f32.mrb[0].mxu0
    %886 = vdwg.mxu0
    %v887 = vunpack.c.l.bf16 %v818
    %v888 = vadd.f32 %v887, %v882
    %v889 = vxor.u32 %v888, 2147483648
    %v890 = vmul.f32 %v889, 1.442695
    %v891 = vpow.pop %v890
    %v892 = vadd.f32 %v891, 1.0
    %v893 = vrcp.pop %v892
    %v894 = vmul.f32 1.0, %v893
    %v897 = vunpack.c.l.s4 1983009808
    %v898 = vunpack.c.0.s8 %v897
    %v899 = vlaneseq
    %v900 = vshrl.u32 %v899, 7
    %v901 = vsub.s32 %v898, %v900
    %v902 = vrot.slane %v882, %v901
    %903 = vrot.lane.b32.xlu0 %v902, 64
    %v904 = vpop.permute.xlu0 %903
    %v906 = vmul.f32 %v894, %v904
    %908 = vrot.lane.b32.xlu0 %v906, 64
    %v909 = vpop.permute.xlu0 %908
    %v911 = vadd.f32 %v887, %v909
    %v912 = vtanh.pop %v911
    %v913 = vsub.f32 1.0, %v894
    %915 = vrot.lane.b32.xlu0 %v912, 96
    %v916 = vpop.permute.xlu0 %915
    %v918 = vmul.f32 %v913, %v916
    %v921 = vunpack.c.l.s4 1983009808
    %v922 = vunpack.c.0.s8 %v921
    %v923 = vlaneseq
    %v924 = vshrl.u32 %v923, 7
    %v925 = vsub.s32 %v922, %v924
    %v926 = vrot.slane %v819, %v925
    %927 = vrot.lane.b32.xlu0 %v926, 32
    %v928 = vpop.permute.xlu0 %927
    %v930 = vmul.f32 %v894, %v928
    %v931 = vadd.f32 %v918, %v930
    %v934 = vunpack.c.l.s4 1983009808
    %v935 = vunpack.c.0.s8 %v934
    %v936 = vlaneseq
    %v937 = vshrl.u32 %v936, 7
    %v938 = vsub.s32 %v935, %v937
    %v939 = vrot.slane %v931, %v938
    %940 = vrot.lane.b32.xlu0 %v939, 96
    %v941 = vpop.permute.xlu0 %940
    %943 = vst.msk [vmem:[#allocation2] sm:$0x3] %vm240, %v941
    %v944 = vpack.c.bf16 %v931, %v931
    %v945 = vld [vmem:[#allocation8] sm:$0xf]
    %v946 = vld [vmem:[#allocation8 + $0x4] sm:$0xf]
    %v947 = vld [vmem:[#allocation8 + $0x8] sm:$0xf]
    %v948 = vld [vmem:[#allocation8 + $0xc] sm:$0xf]
    %v949 = vld [vmem:[#allocation9] sm:$0x1]
    %v951 = vlaneseq
    %v952 = vshrl.u32 %v951, 7
    %v953 = vsub.s32 0, %v952
    %v954 = vrot.slane %v949, %v953
    %957 = vrot.lane.b32.xlu0 %v944, 96
    %v958 = vpop.permute.xlu0 %957
    %v963 = vunpack.c.l.b16 %v945
    %v964 = vunpack.c.l.b16 %v946
    %v965 = vunpack.c.l.b16 %v947
    %v966 = vunpack.c.l.b16 %v948
    %v967 = vpack.c.b16 %v964, %v963
    %v968 = vpack.c.b16 %v966, %v965
    %v972 = vsel %vm140, %v958, 0
    %974 = vmatprep.subr.bf16.mxu0 0
    %975 = vmatpush1.bf16.msra.mxu0 %v967
    %976 = vmatprep.subr.bf16.mxu0 0
    %977 = vmatpush1.bf16.msra.mxu0 %v968
    %978 = vmatprep.subr.bf16.mxu0 0
    %979 = vmatpush1.bf16.msra.mxu0 0
    %980 = vmatprep.subr.bf16.mxu0 0
    %981 = vmatpush1.bf16.msra.mxu0 0
    %982 = vmatprep.subr.bf16.mxu0 0
    %983 = vmatpush1.bf16.msra.mxu0 0
    %984 = vmatprep.subr.bf16.mxu0 0
    %985 = vmatpush1.bf16.msra.mxu0 0
    %986 = vmatprep.subr.bf16.mxu0 0
    %987 = vmatpush1.bf16.msra.mxu0 0
    %988 = vmatprep.subr.bf16.mxu0 0
    %989 = vmatpush1.bf16.msra.mxu0 0
    %990 = vmatprep.subr.bf16.mxu0 0
    %991 = vmatpush1.bf16.msra.mxu0 0
    %992 = vmatprep.subr.bf16.mxu0 0
    %993 = vmatpush1.bf16.msra.mxu0 0
    %994 = vmatprep.subr.bf16.mxu0 0
    %995 = vmatpush1.bf16.msra.mxu0 0
    %996 = vmatprep.subr.bf16.mxu0 0
    %997 = vmatpush1.bf16.msra.mxu0 0
    %998 = vmatprep.subr.bf16.mxu0 0
    %999 = vmatpush1.bf16.msra.mxu0 0
    %1000 = vmatprep.subr.bf16.mxu0 0
    %1001 = vmatpush1.bf16.msra.mxu0 0
    %1002 = vmatprep.subr.bf16.mxu0 0
    %1003 = vmatpush1.bf16.msra.mxu0 0
    %1004 = vmatprep.subr.bf16.mxu0 0
    %1005 = vmatpush1.bf16.msra.mxu0 0
    %1006 = vmatprep.mubr.bf16.mxu0 0
    %1007 = vmatmul.mubr.bf16.gmra.mrb[0].mxu0 %v972
    %v1008 = vpop.f32.mrb[0].mxu0
    %v1009 = vadd.f32 %v954, %v1008
    %v1010 = vpop.f32.mrb[0].mxu0
    %v1011 = vpop.f32.mrb[0].mxu0
    %v1012 = vpop.f32.mrb[0].mxu0
    %1013 = vdwg.mxu0
    %v1014 = vld [vmem:[%s312] sm:$0x3]
    %v1015 = vld [vmem:[%s314] sm:$0xf]
    %v1016 = vld [vmem:[%s314 + $0x4] sm:$0xf]
    %v1017 = vld [vmem:[%s314 + $0x8] sm:$0xf]
    %v1018 = vld [vmem:[%s314 + $0xc] sm:$0xf]
    %v1019 = vld [vmem:[%s319] sm:$0x1]
    %v1020 = vpack.c.bf16 %v1014, %v1014
    %v1022 = vlaneseq
    %v1023 = vshrl.u32 %v1022, 7
    %v1024 = vsub.s32 0, %v1023
    %v1025 = vrot.slane %v1019, %v1024
    %v1031 = vunpack.c.l.b16 %v1015
    %v1032 = vunpack.c.l.b16 %v1016
    %v1033 = vunpack.c.l.b16 %v1017
    %v1034 = vunpack.c.l.b16 %v1018
    %v1035 = vpack.c.b16 %v1032, %v1031
    %v1036 = vpack.c.b16 %v1034, %v1033
    %v1040 = vsel %vm140, %v1020, 0
    %1042 = vmatprep.subr.bf16.mxu0 0
    %1043 = vmatpush1.bf16.msra.mxu0 %v1035
    %1044 = vmatprep.subr.bf16.mxu0 0
    %1045 = vmatpush1.bf16.msra.mxu0 %v1036
    %1046 = vmatprep.subr.bf16.mxu0 0
    %1047 = vmatpush1.bf16.msra.mxu0 0
    %1048 = vmatprep.subr.bf16.mxu0 0
    %1049 = vmatpush1.bf16.msra.mxu0 0
    %1050 = vmatprep.subr.bf16.mxu0 0
    %1051 = vmatpush1.bf16.msra.mxu0 0
    %1052 = vmatprep.subr.bf16.mxu0 0
    %1053 = vmatpush1.bf16.msra.mxu0 0
    %1054 = vmatprep.subr.bf16.mxu0 0
    %1055 = vmatpush1.bf16.msra.mxu0 0
    %1056 = vmatprep.subr.bf16.mxu0 0
    %1057 = vmatpush1.bf16.msra.mxu0 0
    %1058 = vmatprep.subr.bf16.mxu0 0
    %1059 = vmatpush1.bf16.msra.mxu0 0
    %1060 = vmatprep.subr.bf16.mxu0 0
    %1061 = vmatpush1.bf16.msra.mxu0 0
    %1062 = vmatprep.subr.bf16.mxu0 0
    %1063 = vmatpush1.bf16.msra.mxu0 0
    %1064 = vmatprep.subr.bf16.mxu0 0
    %1065 = vmatpush1.bf16.msra.mxu0 0
    %1066 = vmatprep.subr.bf16.mxu0 0
    %1067 = vmatpush1.bf16.msra.mxu0 0
    %1068 = vmatprep.subr.bf16.mxu0 0
    %1069 = vmatpush1.bf16.msra.mxu0 0
    %1070 = vmatprep.subr.bf16.mxu0 0
    %1071 = vmatpush1.bf16.msra.mxu0 0
    %1072 = vmatprep.subr.bf16.mxu0 0
    %1073 = vmatpush1.bf16.msra.mxu0 0
    %1074 = vmatprep.mubr.bf16.mxu0 0
    %1075 = vmatmul.mubr.bf16.gmra.mrb[0].mxu0 %v1040
    %v1076 = vpop.f32.mrb[0].mxu0
    %v1077 = vadd.f32 %v1025, %v1076
    %v1078 = vpop.f32.mrb[0].mxu0
    %v1079 = vpop.f32.mrb[0].mxu0
    %v1080 = vpop.f32.mrb[0].mxu0
    %1081 = vdwg.mxu0
    %v1082 = vadd.f32 %v1009, %v1077
    %v1083 = vxor.u32 %v1082, 2147483648
    %v1084 = vmul.f32 %v1083, 1.442695
    %v1085 = vpow.pop %v1084
    %v1086 = vadd.f32 %v1085, 1.0
    %v1087 = vrcp.pop %v1086
    %v1088 = vmul.f32 1.0, %v1087
    %1090 = vrot.lane.b32.xlu0 %v1077, 64
    %v1091 = vpop.permute.xlu0 %1090
    %v1093 = vmul.f32 %v1088, %v1091
    %1095 = vrot.lane.b32.xlu0 %v1093, 64
    %v1096 = vpop.permute.xlu0 %1095
    %v1098 = vadd.f32 %v1009, %v1096
    %v1099 = vtanh.pop %v1098
    %v1100 = vsub.f32 1.0, %v1088
    %1102 = vrot.lane.b32.xlu0 %v1099, 96
    %v1103 = vpop.permute.xlu0 %1102
    %v1105 = vmul.f32 %v1100, %v1103
    %1107 = vrot.lane.b32.xlu0 %v1014, 32
    %v1108 = vpop.permute.xlu0 %1107
    %v1110 = vmul.f32 %v1088, %v1108
    %v1111 = vadd.f32 %v1105, %v1110
    %1113 = vrot.lane.b32.xlu0 %v1111, 96
    %v1114 = vpop.permute.xlu0 %1113
    %1116 = vst.msk [vmem:[%s312] sm:$0x3] %vm240, %v1114
    %v1118 = vunpack.c.l.s4 1966171168
    %v1119 = vunpack.c.0.s8 %v1118
    %v1120 = vlaneseq
    %v1121 = vshrl.u32 %v1120, 7
    %v1122 = vsub.s32 %v1119, %v1121
    %v1123 = vrot.slane %v1111, %v1122
    %v1124 = vcombine.high %v1123, %v1123
    %v1126 = vunpack.c.l.s4 1966171168
    %v1127 = vunpack.c.0.s8 %v1126
    %v1128 = vlaneseq
    %v1129 = vshrl.u32 %v1128, 7
    %v1130 = vsub.s32 %v1127, %v1129
    %v1131 = vrot.slane %v1123, %v1130
    %v1133 = vunpack.c.l.s4 1966171168
    %v1134 = vunpack.c.0.s8 %v1133
    %v1135 = vlaneseq
    %v1136 = vshrl.u32 %v1135, 7
    %v1137 = vsub.s32 %v1134, %v1136
    %v1138 = vrot.slane %v1124, %v1137
    %v1141 = vpack.c.bf16 %v1131, %v1131
    %v1142 = vpack.c.bf16 %v1138, %v1138
    %v1145 = vunpack.c.l.b16 %v1141
    %v1146 = vunpack.c.l.b16 %v1142
    %v1147 = vpack.c.b16 %v1145, %v1145
    %v1148 = vpack.c.b16 %v1146, %v1146
    %v1149 = vrot.slane %v1147, 7
    %v1150 = vrot.slane %v1148, 7
    %1151 = vrot.lane.b32.xlu0 %v1149, 96
    %v1152 = vpop.permute.xlu0 %1151
    %1153 = vrot.lane.b32.xlu0 %v1150, 96
    %v1154 = vpop.permute.xlu0 %1153
    %vm1157 = vcmask 254977
    %vm1158 = vsmask.f32 1280
    %vm1159 = vmand %vm1157, %vm1158
    %v1160 = vld [vmem:[#allocation14] sm:$0x2]
    %v1161 = vsel %vm1159, %v1152, %v1160
    %1162 = vst [vmem:[#allocation14] sm:$0x2] %v1161
    %v1163 = vld [vmem:[#allocation14 + $0x4] sm:$0x2]
    %v1164 = vsel %vm1159, %v1154, %v1163
    %1165 = vst [vmem:[#allocation14 + $0x4] sm:$0x2] %v1164
    %s1166 = scalar_lea.vmem [#allocation3], 3
    %v1167 = vld [vmem:[%s1166] sm:$0x1]
    %v1168 = vld [vmem:[#allocation2] sm:$0x3]
    %v1169 = vld [vmem:[#allocation11] sm:$0xf]
    %v1170 = vld [vmem:[#allocation11 + $0x4] sm:$0xf]
    %v1171 = vld [vmem:[#allocation11 + $0x8] sm:$0xf]
    %v1172 = vld [vmem:[#allocation11 + $0xc] sm:$0xf]
    %v1173 = vld [vmem:[#allocation12] sm:$0x1]
    %v1174 = vpack.c.bf16 %v1168, %v1168
    %v1176 = vlaneseq
    %v1177 = vshrl.u32 %v1176, 7
    %v1178 = vsub.s32 0, %v1177
    %v1179 = vrot.slane %v1173, %v1178
    %v1185 = vunpack.c.l.b16 %v1169
    %v1186 = vunpack.c.l.b16 %v1170
    %v1187 = vunpack.c.l.b16 %v1171
    %v1188 = vunpack.c.l.b16 %v1172
    %v1189 = vpack.c.b16 %v1186, %v1185
    %v1190 = vpack.c.b16 %v1188, %v1187
    %v1194 = vsel %vm140, %v1174, 0
    %1196 = vmatprep.subr.bf16.mxu0 0
    %1197 = vmatpush1.bf16.msra.mxu0 %v1189
    %1198 = vmatprep.subr.bf16.mxu0 0
    %1199 = vmatpush1.bf16.msra.mxu0 %v1190
    %1200 = vmatprep.subr.bf16.mxu0 0
    %1201 = vmatpush1.bf16.msra.mxu0 0
    %1202 = vmatprep.subr.bf16.mxu0 0
    %1203 = vmatpush1.bf16.msra.mxu0 0
    %1204 = vmatprep.subr.bf16.mxu0 0
    %1205 = vmatpush1.bf16.msra.mxu0 0
    %1206 = vmatprep.subr.bf16.mxu0 0
    %1207 = vmatpush1.bf16.msra.mxu0 0
    %1208 = vmatprep.subr.bf16.mxu0 0
    %1209 = vmatpush1.bf16.msra.mxu0 0
    %1210 = vmatprep.subr.bf16.mxu0 0
    %1211 = vmatpush1.bf16.msra.mxu0 0
    %1212 = vmatprep.subr.bf16.mxu0 0
    %1213 = vmatpush1.bf16.msra.mxu0 0
    %1214 = vmatprep.subr.bf16.mxu0 0
    %1215 = vmatpush1.bf16.msra.mxu0 0
    %1216 = vmatprep.subr.bf16.mxu0 0
    %1217 = vmatpush1.bf16.msra.mxu0 0
    %1218 = vmatprep.subr.bf16.mxu0 0
    %1219 = vmatpush1.bf16.msra.mxu0 0
    %1220 = vmatprep.subr.bf16.mxu0 0
    %1221 = vmatpush1.bf16.msra.mxu0 0
    %1222 = vmatprep.subr.bf16.mxu0 0
    %1223 = vmatpush1.bf16.msra.mxu0 0
    %1224 = vmatprep.subr.bf16.mxu0 0
    %1225 = vmatpush1.bf16.msra.mxu0 0
    %1226 = vmatprep.subr.bf16.mxu0 0
    %1227 = vmatpush1.bf16.msra.mxu0 0
    %1228 = vmatprep.mubr.bf16.mxu0 0
    %1229 = vmatmul.mubr.bf16.gmra.mrb[0].mxu0 %v1194
    %v1230 = vpop.f32.mrb[0].mxu0
    %v1231 = vadd.f32 %v1179, %v1230
    %v1232 = vpop.f32.mrb[0].mxu0
    %v1233 = vpop.f32.mrb[0].mxu0
    %v1234 = vpop.f32.mrb[0].mxu0
    %1235 = vdwg.mxu0
    %v1236 = vunpack.c.l.bf16 %v1167
    %v1237 = vadd.f32 %v1236, %v1231
    %v1238 = vxor.u32 %v1237, 2147483648
    %v1239 = vmul.f32 %v1238, 1.442695
    %v1240 = vpow.pop %v1239
    %v1241 = vadd.f32 %v1240, 1.0
    %v1242 = vrcp.pop %v1241
    %v1243 = vmul.f32 1.0, %v1242
    %v1246 = vunpack.c.l.s4 1983009808
    %v1247 = vunpack.c.0.s8 %v1246
    %v1248 = vlaneseq
    %v1249 = vshrl.u32 %v1248, 7
    %v1250 = vsub.s32 %v1247, %v1249
    %v1251 = vrot.slane %v1231, %v1250
    %1252 = vrot.lane.b32.xlu0 %v1251, 64
    %v1253 = vpop.permute.xlu0 %1252
    %v1255 = vmul.f32 %v1243, %v1253
    %1257 = vrot.lane.b32.xlu0 %v1255, 64
    %v1258 = vpop.permute.xlu0 %1257
    %v1260 = vadd.f32 %v1236, %v1258
    %v1261 = vtanh.pop %v1260
    %v1262 = vsub.f32 1.0, %v1243
    %1264 = vrot.lane.b32.xlu0 %v1261, 96
    %v1265 = vpop.permute.xlu0 %1264
    %v1267 = vmul.f32 %v1262, %v1265
    %v1270 = vunpack.c.l.s4 1983009808
    %v1271 = vunpack.c.0.s8 %v1270
    %v1272 = vlaneseq
    %v1273 = vshrl.u32 %v1272, 7
    %v1274 = vsub.s32 %v1271, %v1273
    %v1275 = vrot.slane %v1168, %v1274
    %1276 = vrot.lane.b32.xlu0 %v1275, 32
    %v1277 = vpop.permute.xlu0 %1276
    %v1279 = vmul.f32 %v1243, %v1277
    %v1280 = vadd.f32 %v1267, %v1279
    %v1283 = vunpack.c.l.s4 1983009808
    %v1284 = vunpack.c.0.s8 %v1283
    %v1285 = vlaneseq
    %v1286 = vshrl.u32 %v1285, 7
    %v1287 = vsub.s32 %v1284, %v1286
    %v1288 = vrot.slane %v1280, %v1287
    %1289 = vrot.lane.b32.xlu0 %v1288, 96
    %v1290 = vpop.permute.xlu0 %1289
    %1292 = vst.msk [vmem:[#allocation2] sm:$0x3] %vm240, %v1290
    %v1293 = vpack.c.bf16 %v1280, %v1280
    %v1294 = vld [vmem:[#allocation8] sm:$0xf]
    %v1295 = vld [vmem:[#allocation8 + $0x4] sm:$0xf]
    %v1296 = vld [vmem:[#allocation8 + $0x8] sm:$0xf]
    %v1297 = vld [vmem:[#allocation8 + $0xc] sm:$0xf]
    %v1298 = vld [vmem:[#allocation9] sm:$0x1]
    %v1300 = vlaneseq
    %v1301 = vshrl.u32 %v1300, 7
    %v1302 = vsub.s32 0, %v1301
    %v1303 = vrot.slane %v1298, %v1302
    %1306 = vrot.lane.b32.xlu0 %v1293, 96
    %v1307 = vpop.permute.xlu0 %1306
    %v1312 = vunpack.c.l.b16 %v1294
    %v1313 = vunpack.c.l.b16 %v1295
    %v1314 = vunpack.c.l.b16 %v1296
    %v1315 = vunpack.c.l.b16 %v1297
    %v1316 = vpack.c.b16 %v1313, %v1312
    %v1317 = vpack.c.b16 %v1315, %v1314
    %v1321 = vsel %vm140, %v1307, 0
    %1323 = vmatprep.subr.bf16.mxu0 0
    %1324 = vmatpush1.bf16.msra.mxu0 %v1316
    %1325 = vmatprep.subr.bf16.mxu0 0
    %1326 = vmatpush1.bf16.msra.mxu0 %v1317
    %1327 = vmatprep.subr.bf16.mxu0 0
    %1328 = vmatpush1.bf16.msra.mxu0 0
    %1329 = vmatprep.subr.bf16.mxu0 0
    %1330 = vmatpush1.bf16.msra.mxu0 0
    %1331 = vmatprep.subr.bf16.mxu0 0
    %1332 = vmatpush1.bf16.msra.mxu0 0
    %1333 = vmatprep.subr.bf16.mxu0 0
    %1334 = vmatpush1.bf16.msra.mxu0 0
    %1335 = vmatprep.subr.bf16.mxu0 0
    %1336 = vmatpush1.bf16.msra.mxu0 0
    %1337 = vmatprep.subr.bf16.mxu0 0
    %1338 = vmatpush1.bf16.msra.mxu0 0
    %1339 = vmatprep.subr.bf16.mxu0 0
    %1340 = vmatpush1.bf16.msra.mxu0 0
    %1341 = vmatprep.subr.bf16.mxu0 0
    %1342 = vmatpush1.bf16.msra.mxu0 0
    %1343 = vmatprep.subr.bf16.mxu0 0
    %1344 = vmatpush1.bf16.msra.mxu0 0
    %1345 = vmatprep.subr.bf16.mxu0 0
    %1346 = vmatpush1.bf16.msra.mxu0 0
    %1347 = vmatprep.subr.bf16.mxu0 0
    %1348 = vmatpush1.bf16.msra.mxu0 0
    %1349 = vmatprep.subr.bf16.mxu0 0
    %1350 = vmatpush1.bf16.msra.mxu0 0
    %1351 = vmatprep.subr.bf16.mxu0 0
    %1352 = vmatpush1.bf16.msra.mxu0 0
    %1353 = vmatprep.subr.bf16.mxu0 0
    %1354 = vmatpush1.bf16.msra.mxu0 0
    %1355 = vmatprep.mubr.bf16.mxu0 0
    %1356 = vmatmul.mubr.bf16.gmra.mrb[0].mxu0 %v1321
    %v1357 = vpop.f32.mrb[0].mxu0
    %v1358 = vadd.f32 %v1303, %v1357
    %v1359 = vpop.f32.mrb[0].mxu0
    %v1360 = vpop.f32.mrb[0].mxu0
    %v1361 = vpop.f32.mrb[0].mxu0
    %1362 = vdwg.mxu0
    %v1363 = vld [vmem:[%s312] sm:$0x3]
    %v1364 = vld [vmem:[%s314] sm:$0xf]
    %v1365 = vld [vmem:[%s314 + $0x4] sm:$0xf]
    %v1366 = vld [vmem:[%s314 + $0x8] sm:$0xf]
    %v1367 = vld [vmem:[%s314 + $0xc] sm:$0xf]
    %v1368 = vld [vmem:[%s319] sm:$0x1]
    %v1369 = vpack.c.bf16 %v1363, %v1363
    %v1371 = vlaneseq
    %v1372 = vshrl.u32 %v1371, 7
    %v1373 = vsub.s32 0, %v1372
    %v1374 = vrot.slane %v1368, %v1373
    %v1380 = vunpack.c.l.b16 %v1364
    %v1381 = vunpack.c.l.b16 %v1365
    %v1382 = vunpack.c.l.b16 %v1366
    %v1383 = vunpack.c.l.b16 %v1367
    %v1384 = vpack.c.b16 %v1381, %v1380
    %v1385 = vpack.c.b16 %v1383, %v1382
    %v1389 = vsel %vm140, %v1369, 0
    %1391 = vmatprep.subr.bf16.mxu0 0
    %1392 = vmatpush1.bf16.msra.mxu0 %v1384
    %1393 = vmatprep.subr.bf16.mxu0 0
    %1394 = vmatpush1.bf16.msra.mxu0 %v1385
    %1395 = vmatprep.subr.bf16.mxu0 0
    %1396 = vmatpush1.bf16.msra.mxu0 0
    %1397 = vmatprep.subr.bf16.mxu0 0
    %1398 = vmatpush1.bf16.msra.mxu0 0
    %1399 = vmatprep.subr.bf16.mxu0 0
    %1400 = vmatpush1.bf16.msra.mxu0 0
    %1401 = vmatprep.subr.bf16.mxu0 0
    %1402 = vmatpush1.bf16.msra.mxu0 0
    %1403 = vmatprep.subr.bf16.mxu0 0
    %1404 = vmatpush1.bf16.msra.mxu0 0
    %1405 = vmatprep.subr.bf16.mxu0 0
    %1406 = vmatpush1.bf16.msra.mxu0 0
    %1407 = vmatprep.subr.bf16.mxu0 0
    %1408 = vmatpush1.bf16.msra.mxu0 0
    %1409 = vmatprep.subr.bf16.mxu0 0
    %1410 = vmatpush1.bf16.msra.mxu0 0
    %1411 = vmatprep.subr.bf16.mxu0 0
    %1412 = vmatpush1.bf16.msra.mxu0 0
    %1413 = vmatprep.subr.bf16.mxu0 0
    %1414 = vmatpush1.bf16.msra.mxu0 0
    %1415 = vmatprep.subr.bf16.mxu0 0
    %1416 = vmatpush1.bf16.msra.mxu0 0
    %1417 = vmatprep.subr.bf16.mxu0 0
    %1418 = vmatpush1.bf16.msra.mxu0 0
    %1419 = vmatprep.subr.bf16.mxu0 0
    %1420 = vmatpush1.bf16.msra.mxu0 0
    %1421 = vmatprep.subr.bf16.mxu0 0
    %1422 = vmatpush1.bf16.msra.mxu0 0
    %1423 = vmatprep.mubr.bf16.mxu0 0
    %1424 = vmatmul.mubr.bf16.gmra.mrb[0].mxu0 %v1389
    %v1425 = vpop.f32.mrb[0].mxu0
    %v1426 = vadd.f32 %v1374, %v1425
    %v1427 = vpop.f32.mrb[0].mxu0
    %v1428 = vpop.f32.mrb[0].mxu0
    %v1429 = vpop.f32.mrb[0].mxu0
    %1430 = vdwg.mxu0
    %v1431 = vadd.f32 %v1358, %v1426
    %v1432 = vxor.u32 %v1431, 2147483648
    %v1433 = vmul.f32 %v1432, 1.442695
    %v1434 = vpow.pop %v1433
    %v1435 = vadd.f32 %v1434, 1.0
    %v1436 = vrcp.pop %v1435
    %v1437 = vmul.f32 1.0, %v1436
    %1439 = vrot.lane.b32.xlu0 %v1426, 64
    %v1440 = vpop.permute.xlu0 %1439
    %v1442 = vmul.f32 %v1437, %v1440
    %1444 = vrot.lane.b32.xlu0 %v1442, 64
    %v1445 = vpop.permute.xlu0 %1444
    %v1447 = vadd.f32 %v1358, %v1445
    %v1448 = vtanh.pop %v1447
    %v1449 = vsub.f32 1.0, %v1437
    %1451 = vrot.lane.b32.xlu0 %v1448, 96
    %v1452 = vpop.permute.xlu0 %1451
    %v1454 = vmul.f32 %v1449, %v1452
    %1456 = vrot.lane.b32.xlu0 %v1363, 32
    %v1457 = vpop.permute.xlu0 %1456
    %v1459 = vmul.f32 %v1437, %v1457
    %v1460 = vadd.f32 %v1454, %v1459
    %1462 = vrot.lane.b32.xlu0 %v1460, 96
    %v1463 = vpop.permute.xlu0 %1462
    %1465 = vst.msk [vmem:[%s312] sm:$0x3] %vm240, %v1463
    %v1467 = vunpack.c.l.s4 1966171168
    %v1468 = vunpack.c.0.s8 %v1467
    %v1469 = vlaneseq
    %v1470 = vshrl.u32 %v1469, 7
    %v1471 = vsub.s32 %v1468, %v1470
    %v1472 = vrot.slane %v1460, %v1471
    %v1473 = vcombine.high %v1472, %v1472
    %v1475 = vunpack.c.l.s4 1966171168
    %v1476 = vunpack.c.0.s8 %v1475
    %v1477 = vlaneseq
    %v1478 = vshrl.u32 %v1477, 7
    %v1479 = vsub.s32 %v1476, %v1478
    %v1480 = vrot.slane %v1472, %v1479
    %v1482 = vunpack.c.l.s4 1966171168
    %v1483 = vunpack.c.0.s8 %v1482
    %v1484 = vlaneseq
    %v1485 = vshrl.u32 %v1484, 7
    %v1486 = vsub.s32 %v1483, %v1485
    %v1487 = vrot.slane %v1473, %v1486
    %v1490 = vpack.c.bf16 %v1480, %v1480
    %v1491 = vpack.c.bf16 %v1487, %v1487
    %v1494 = vunpack.c.l.b16 %v1490
    %v1495 = vunpack.c.l.b16 %v1491
    %v1496 = vpack.c.b16 %v1494, %v1494
    %v1497 = vpack.c.b16 %v1495, %v1495
    %v1499 = vshll.u32 %v1496, 16
    %v1501 = vrot.slane %v1499, 7
    %v1503 = vshll.u32 %v1497, 16
    %v1505 = vrot.slane %v1503, 7
    %1506 = vrot.lane.b32.xlu0 %v1501, 96
    %v1507 = vpop.permute.xlu0 %1506
    %1508 = vrot.lane.b32.xlu0 %v1505, 96
    %v1509 = vpop.permute.xlu0 %1508
    %vm1512 = vsmask.f32 7942
    %vm1513 = vmand %vm1157, %vm1512
    %v1514 = vld [vmem:[#allocation14] sm:$0x2]
    %v1515 = vsel %vm1513, %v1507, %v1514
    %1516 = vst [vmem:[#allocation14] sm:$0x2] %v1515
    %v1517 = vld [vmem:[#allocation14 + $0x4] sm:$0x2]
    %v1518 = vsel %vm1513, %v1509, %v1517
    %1519 = vst [vmem:[#allocation14 + $0x4] sm:$0x2] %v1518
    %s1520 = scalar_lea.vmem [#allocation3], 4
    %v1521 = vld [vmem:[%s1520] sm:$0x1]
    %v1522 = vld [vmem:[#allocation2] sm:$0x3]
    %v1523 = vld [vmem:[#allocation11] sm:$0xf]
    %v1524 = vld [vmem:[#allocation11 + $0x4] sm:$0xf]
    %v1525 = vld [vmem:[#allocation11 + $0x8] sm:$0xf]
    %v1526 = vld [vmem:[#allocation11 + $0xc] sm:$0xf]
    %v1527 = vld [vmem:[#allocation12] sm:$0x1]
    %v1528 = vpack.c.bf16 %v1522, %v1522
    %v1530 = vlaneseq
    %v1531 = vshrl.u32 %v1530, 7
    %v1532 = vsub.s32 0, %v1531
    %v1533 = vrot.slane %v1527, %v1532
    %v1539 = vunpack.c.l.b16 %v1523
    %v1540 = vunpack.c.l.b16 %v1524
    %v1541 = vunpack.c.l.b16 %v1525
    %v1542 = vunpack.c.l.b16 %v1526
    %v1543 = vpack.c.b16 %v1540, %v1539
    %v1544 = vpack.c.b16 %v1542, %v1541
    %v1548 = vsel %vm140, %v1528, 0
    %1550 = vmatprep.subr.bf16.mxu0 0
    %1551 = vmatpush1.bf16.msra.mxu0 %v1543
    %1552 = vmatprep.subr.bf16.mxu0 0
    %1553 = vmatpush1.bf16.msra.mxu0 %v1544
    %1554 = vmatprep.subr.bf16.mxu0 0
    %1555 = vmatpush1.bf16.msra.mxu0 0
    %1556 = vmatprep.subr.bf16.mxu0 0
    %1557 = vmatpush1.bf16.msra.mxu0 0
    %1558 = vmatprep.subr.bf16.mxu0 0
    %1559 = vmatpush1.bf16.msra.mxu0 0
    %1560 = vmatprep.subr.bf16.mxu0 0
    %1561 = vmatpush1.bf16.msra.mxu0 0
    %1562 = vmatprep.subr.bf16.mxu0 0
    %1563 = vmatpush1.bf16.msra.mxu0 0
    %1564 = vmatprep.subr.bf16.mxu0 0
    %1565 = vmatpush1.bf16.msra.mxu0 0
    %1566 = vmatprep.subr.bf16.mxu0 0
    %1567 = vmatpush1.bf16.msra.mxu0 0
    %1568 = vmatprep.subr.bf16.mxu0 0
    %1569 = vmatpush1.bf16.msra.mxu0 0
    %1570 = vmatprep.subr.bf16.mxu0 0
    %1571 = vmatpush1.bf16.msra.mxu0 0
    %1572 = vmatprep.subr.bf16.mxu0 0
    %1573 = vmatpush1.bf16.msra.mxu0 0
    %1574 = vmatprep.subr.bf16.mxu0 0
    %1575 = vmatpush1.bf16.msra.mxu0 0
    %1576 = vmatprep.subr.bf16.mxu0 0
    %1577 = vmatpush1.bf16.msra.mxu0 0
    %1578 = vmatprep.subr.bf16.mxu0 0
    %1579 = vmatpush1.bf16.msra.mxu0 0
    %1580 = vmatprep.subr.bf16.mxu0 0
    %1581 = vmatpush1.bf16.msra.mxu0 0
    %1582 = vmatprep.mubr.bf16.mxu0 0
    %1583 = vmatmul.mubr.bf16.gmra.mrb[0].mxu0 %v1548
    %v1584 = vpop.f32.mrb[0].mxu0
    %v1585 = vadd.f32 %v1533, %v1584
    %v1586 = vpop.f32.mrb[0].mxu0
    %v1587 = vpop.f32.mrb[0].mxu0
    %v1588 = vpop.f32.mrb[0].mxu0
    %1589 = vdwg.mxu0
    %v1590 = vunpack.c.l.bf16 %v1521
    %v1591 = vadd.f32 %v1590, %v1585
    %v1592 = vxor.u32 %v1591, 2147483648
    %v1593 = vmul.f32 %v1592, 1.442695
    %v1594 = vpow.pop %v1593
    %v1595 = vadd.f32 %v1594, 1.0
    %v1596 = vrcp.pop %v1595
    %v1597 = vmul.f32 1.0, %v1596
    %v1600 = vunpack.c.l.s4 1983009808
    %v1601 = vunpack.c.0.s8 %v1600
    %v1602 = vlaneseq
    %v1603 = vshrl.u32 %v1602, 7
    %v1604 = vsub.s32 %v1601, %v1603
    %v1605 = vrot.slane %v1585, %v1604
    %1606 = vrot.lane.b32.xlu0 %v1605, 64
    %v1607 = vpop.permute.xlu0 %1606
    %v1609 = vmul.f32 %v1597, %v1607
    %1611 = vrot.lane.b32.xlu0 %v1609, 64
    %v1612 = vpop.permute.xlu0 %1611
    %v1614 = vadd.f32 %v1590, %v1612
    %v1615 = vtanh.pop %v1614
    %v1616 = vsub.f32 1.0, %v1597
    %1618 = vrot.lane.b32.xlu0 %v1615, 96
    %v1619 = vpop.permute.xlu0 %1618
    %v1621 = vmul.f32 %v1616, %v1619
    %v1624 = vunpack.c.l.s4 1983009808
    %v1625 = vunpack.c.0.s8 %v1624
    %v1626 = vlaneseq
    %v1627 = vshrl.u32 %v1626, 7
    %v1628 = vsub.s32 %v1625, %v1627
    %v1629 = vrot.slane %v1522, %v1628
    %1630 = vrot.lane.b32.xlu0 %v1629, 32
    %v1631 = vpop.permute.xlu0 %1630
    %v1633 = vmul.f32 %v1597, %v1631
    %v1634 = vadd.f32 %v1621, %v1633
    %v1637 = vunpack.c.l.s4 1983009808
    %v1638 = vunpack.c.0.s8 %v1637
    %v1639 = vlaneseq
    %v1640 = vshrl.u32 %v1639, 7
    %v1641 = vsub.s32 %v1638, %v1640
    %v1642 = vrot.slane %v1634, %v1641
    %1643 = vrot.lane.b32.xlu0 %v1642, 96
    %v1644 = vpop.permute.xlu0 %1643
    %1646 = vst.msk [vmem:[#allocation2] sm:$0x3] %vm240, %v1644
    %v1647 = vpack.c.bf16 %v1634, %v1634
    %v1648 = vld [vmem:[#allocation8] sm:$0xf]
    %v1649 = vld [vmem:[#allocation8 + $0x4] sm:$0xf]
    %v1650 = vld [vmem:[#allocation8 + $0x8] sm:$0xf]
    %v1651 = vld [vmem:[#allocation8 + $0xc] sm:$0xf]
    %v1652 = vld [vmem:[#allocation9] sm:$0x1]
    %v1654 = vlaneseq
    %v1655 = vshrl.u32 %v1654, 7
    %v1656 = vsub.s32 0, %v1655
    %v1657 = vrot.slane %v1652, %v1656
    %1660 = vrot.lane.b32.xlu0 %v1647, 96
    %v1661 = vpop.permute.xlu0 %1660
    %v1666 = vunpack.c.l.b16 %v1648
    %v1667 = vunpack.c.l.b16 %v1649
    %v1668 = vunpack.c.l.b16 %v1650
    %v1669 = vunpack.c.l.b16 %v1651
    %v1670 = vpack.c.b16 %v1667, %v1666
    %v1671 = vpack.c.b16 %v1669, %v1668
    %v1675 = vsel %vm140, %v1661, 0
    %1677 = vmatprep.subr.bf16.mxu0 0
    %1678 = vmatpush1.bf16.msra.mxu0 %v1670
    %1679 = vmatprep.subr.bf16.mxu0 0
    %1680 = vmatpush1.bf16.msra.mxu0 %v1671
    %1681 = vmatprep.subr.bf16.mxu0 0
    %1682 = vmatpush1.bf16.msra.mxu0 0
    %1683 = vmatprep.subr.bf16.mxu0 0
    %1684 = vmatpush1.bf16.msra.mxu0 0
    %1685 = vmatprep.subr.bf16.mxu0 0
    %1686 = vmatpush1.bf16.msra.mxu0 0
    %1687 = vmatprep.subr.bf16.mxu0 0
    %1688 = vmatpush1.bf16.msra.mxu0 0
    %1689 = vmatprep.subr.bf16.mxu0 0
    %1690 = vmatpush1.bf16.msra.mxu0 0
    %1691 = vmatprep.subr.bf16.mxu0 0
    %1692 = vmatpush1.bf16.msra.mxu0 0
    %1693 = vmatprep.subr.bf16.mxu0 0
    %1694 = vmatpush1.bf16.msra.mxu0 0
    %1695 = vmatprep.subr.bf16.mxu0 0
    %1696 = vmatpush1.bf16.msra.mxu0 0
    %1697 = vmatprep.subr.bf16.mxu0 0
    %1698 = vmatpush1.bf16.msra.mxu0 0
    %1699 = vmatprep.subr.bf16.mxu0 0
    %1700 = vmatpush1.bf16.msra.mxu0 0
    %1701 = vmatprep.subr.bf16.mxu0 0
    %1702 = vmatpush1.bf16.msra.mxu0 0
    %1703 = vmatprep.subr.bf16.mxu0 0
    %1704 = vmatpush1.bf16.msra.mxu0 0
    %1705 = vmatprep.subr.bf16.mxu0 0
    %1706 = vmatpush1.bf16.msra.mxu0 0
    %1707 = vmatprep.subr.bf16.mxu0 0
    %1708 = vmatpush1.bf16.msra.mxu0 0
    %1709 = vmatprep.mubr.bf16.mxu0 0
    %1710 = vmatmul.mubr.bf16.gmra.mrb[0].mxu0 %v1675
    %v1711 = vpop.f32.mrb[0].mxu0
    %v1712 = vadd.f32 %v1657, %v1711
    %v1713 = vpop.f32.mrb[0].mxu0
    %v1714 = vpop.f32.mrb[0].mxu0
    %v1715 = vpop.f32.mrb[0].mxu0
    %1716 = vdwg.mxu0
    %v1717 = vld [vmem:[%s312] sm:$0x3]
    %v1718 = vld [vmem:[%s314] sm:$0xf]
    %v1719 = vld [vmem:[%s314 + $0x4] sm:$0xf]
    %v1720 = vld [vmem:[%s314 + $0x8] sm:$0xf]
    %v1721 = vld [vmem:[%s314 + $0xc] sm:$0xf]
    %v1722 = vld [vmem:[%s319] sm:$0x1]
    %v1723 = vpack.c.bf16 %v1717, %v1717
    %v1725 = vlaneseq
    %v1726 = vshrl.u32 %v1725, 7
    %v1727 = vsub.s32 0, %v1726
    %v1728 = vrot.slane %v1722, %v1727
    %v1734 = vunpack.c.l.b16 %v1718
    %v1735 = vunpack.c.l.b16 %v1719
    %v1736 = vunpack.c.l.b16 %v1720
    %v1737 = vunpack.c.l.b16 %v1721
    %v1738 = vpack.c.b16 %v1735, %v1734
    %v1739 = vpack.c.b16 %v1737, %v1736
    %v1743 = vsel %vm140, %v1723, 0
    %1745 = vmatprep.subr.bf16.mxu0 0
    %1746 = vmatpush1.bf16.msra.mxu0 %v1738
    %1747 = vmatprep.subr.bf16.mxu0 0
    %1748 = vmatpush1.bf16.msra.mxu0 %v1739
    %1749 = vmatprep.subr.bf16.mxu0 0
    %1750 = vmatpush1.bf16.msra.mxu0 0
    %1751 = vmatprep.subr.bf16.mxu0 0
    %1752 = vmatpush1.bf16.msra.mxu0 0
    %1753 = vmatprep.subr.bf16.mxu0 0
    %1754 = vmatpush1.bf16.msra.mxu0 0
    %1755 = vmatprep.subr.bf16.mxu0 0
    %1756 = vmatpush1.bf16.msra.mxu0 0
    %1757 = vmatprep.subr.bf16.mxu0 0
    %1758 = vmatpush1.bf16.msra.mxu0 0
    %1759 = vmatprep.subr.bf16.mxu0 0
    %1760 = vmatpush1.bf16.msra.mxu0 0
    %1761 = vmatprep.subr.bf16.mxu0 0
    %1762 = vmatpush1.bf16.msra.mxu0 0
    %1763 = vmatprep.subr.bf16.mxu0 0
    %1764 = vmatpush1.bf16.msra.mxu0 0
    %1765 = vmatprep.subr.bf16.mxu0 0
    %1766 = vmatpush1.bf16.msra.mxu0 0
    %1767 = vmatprep.subr.bf16.mxu0 0
    %1768 = vmatpush1.bf16.msra.mxu0 0
    %1769 = vmatprep.subr.bf16.mxu0 0
    %1770 = vmatpush1.bf16.msra.mxu0 0
    %1771 = vmatprep.subr.bf16.mxu0 0
    %1772 = vmatpush1.bf16.msra.mxu0 0
    %1773 = vmatprep.subr.bf16.mxu0 0
    %1774 = vmatpush1.bf16.msra.mxu0 0
    %1775 = vmatprep.subr.bf16.mxu0 0
    %1776 = vmatpush1.bf16.msra.mxu0 0
    %1777 = vmatprep.mubr.bf16.mxu0 0
    %1778 = vmatmul.mubr.bf16.gmra.mrb[0].mxu0 %v1743
    %v1779 = vpop.f32.mrb[0].mxu0
    %v1780 = vadd.f32 %v1728, %v1779
    %v1781 = vpop.f32.mrb[0].mxu0
    %v1782 = vpop.f32.mrb[0].mxu0
    %v1783 = vpop.f32.mrb[0].mxu0
    %1784 = vdwg.mxu0
    %v1785 = vadd.f32 %v1712, %v1780
    %v1786 = vxor.u32 %v1785, 2147483648
    %v1787 = vmul.f32 %v1786, 1.442695
    %v1788 = vpow.pop %v1787
    %v1789 = vadd.f32 %v1788, 1.0
    %v1790 = vrcp.pop %v1789
    %v1791 = vmul.f32 1.0, %v1790
    %1793 = vrot.lane.b32.xlu0 %v1780, 64
    %v1794 = vpop.permute.xlu0 %1793
    %v1796 = vmul.f32 %v1791, %v1794
    %1798 = vrot.lane.b32.xlu0 %v1796, 64
    %v1799 = vpop.permute.xlu0 %1798
    %v1801 = vadd.f32 %v1712, %v1799
    %v1802 = vtanh.pop %v1801
    %v1803 = vsub.f32 1.0, %v1791
    %1805 = vrot.lane.b32.xlu0 %v1802, 96
    %v1806 = vpop.permute.xlu0 %1805
    %v1808 = vmul.f32 %v1803, %v1806
    %1810 = vrot.lane.b32.xlu0 %v1717, 32
    %v1811 = vpop.permute.xlu0 %1810
    %v1813 = vmul.f32 %v1791, %v1811
    %v1814 = vadd.f32 %v1808, %v1813
    %1816 = vrot.lane.b32.xlu0 %v1814, 96
    %v1817 = vpop.permute.xlu0 %1816
    %1819 = vst.msk [vmem:[%s312] sm:$0x3] %vm240, %v1817
    %v1821 = vunpack.c.l.s4 1966171168
    %v1822 = vunpack.c.0.s8 %v1821
    %v1823 = vlaneseq
    %v1824 = vshrl.u32 %v1823, 7
    %v1825 = vsub.s32 %v1822, %v1824
    %v1826 = vrot.slane %v1814, %v1825
    %v1827 = vcombine.high %v1826, %v1826
    %v1829 = vunpack.c.l.s4 1966171168
    %v1830 = vunpack.c.0.s8 %v1829
    %v1831 = vlaneseq
    %v1832 = vshrl.u32 %v1831, 7
    %v1833 = vsub.s32 %v1830, %v1832
    %v1834 = vrot.slane %v1826, %v1833
    %v1836 = vunpack.c.l.s4 1966171168
    %v1837 = vunpack.c.0.s8 %v1836
    %v1838 = vlaneseq
    %v1839 = vshrl.u32 %v1838, 7
    %v1840 = vsub.s32 %v1837, %v1839
    %v1841 = vrot.slane %v1827, %v1840
    %v1844 = vpack.c.bf16 %v1834, %v1834
    %v1845 = vpack.c.bf16 %v1841, %v1841
    %v1848 = vunpack.c.l.b16 %v1844
    %v1849 = vunpack.c.l.b16 %v1845
    %v1850 = vpack.c.b16 %v1848, %v1848
    %v1851 = vpack.c.b16 %v1849, %v1849
    %v1852 = vrot.slane %v1850, 6
    %v1853 = vrot.slane %v1851, 6
    %1854 = vrot.lane.b32.xlu0 %v1852, 96
    %v1855 = vpop.permute.xlu0 %1854
    %1856 = vrot.lane.b32.xlu0 %v1853, 96
    %v1857 = vpop.permute.xlu0 %1856
    %vm1860 = vcmask 256002
    %vm1861 = vsmask.f32 2304
    %vm1862 = vmand %vm1860, %vm1861
    %v1863 = vld [vmem:[#allocation14] sm:$0x4]
    %v1864 = vsel %vm1862, %v1855, %v1863
    %1865 = vst [vmem:[#allocation14] sm:$0x4] %v1864
    %v1866 = vld [vmem:[#allocation14 + $0x4] sm:$0x4]
    %v1867 = vsel %vm1862, %v1857, %v1866
    %1868 = vst [vmem:[#allocation14 + $0x4] sm:$0x4] %v1867
    %s1869 = scalar_lea.vmem [#allocation3], 5
    %v1870 = vld [vmem:[%s1869] sm:$0x1]
    %v1871 = vld [vmem:[#allocation2] sm:$0x3]
    %v1872 = vld [vmem:[#allocation11] sm:$0xf]
    %v1873 = vld [vmem:[#allocation11 + $0x4] sm:$0xf]
    %v1874 = vld [vmem:[#allocation11 + $0x8] sm:$0xf]
    %v1875 = vld [vmem:[#allocation11 + $0xc] sm:$0xf]
    %v1876 = vld [vmem:[#allocation12] sm:$0x1]
    %v1877 = vpack.c.bf16 %v1871, %v1871
    %v1879 = vlaneseq
    %v1880 = vshrl.u32 %v1879, 7
    %v1881 = vsub.s32 0, %v1880
    %v1882 = vrot.slane %v1876, %v1881
    %v1888 = vunpack.c.l.b16 %v1872
    %v1889 = vunpack.c.l.b16 %v1873
    %v1890 = vunpack.c.l.b16 %v1874
    %v1891 = vunpack.c.l.b16 %v1875
    %v1892 = vpack.c.b16 %v1889, %v1888
    %v1893 = vpack.c.b16 %v1891, %v1890
    %v1897 = vsel %vm140, %v1877, 0
    %1899 = vmatprep.subr.bf16.mxu0 0
    %1900 = vmatpush1.bf16.msra.mxu0 %v1892
    %1901 = vmatprep.subr.bf16.mxu0 0
    %1902 = vmatpush1.bf16.msra.mxu0 %v1893
    %1903 = vmatprep.subr.bf16.mxu0 0
    %1904 = vmatpush1.bf16.msra.mxu0 0
    %1905 = vmatprep.subr.bf16.mxu0 0
    %1906 = vmatpush1.bf16.msra.mxu0 0
    %1907 = vmatprep.subr.bf16.mxu0 0
    %1908 = vmatpush1.bf16.msra.mxu0 0
    %1909 = vmatprep.subr.bf16.mxu0 0
    %1910 = vmatpush1.bf16.msra.mxu0 0
    %1911 = vmatprep.subr.bf16.mxu0 0
    %1912 = vmatpush1.bf16.msra.mxu0 0
    %1913 = vmatprep.subr.bf16.mxu0 0
    %1914 = vmatpush1.bf16.msra.mxu0 0
    %1915 = vmatprep.subr.bf16.mxu0 0
    %1916 = vmatpush1.bf16.msra.mxu0 0
    %1917 = vmatprep.subr.bf16.mxu0 0
    %1918 = vmatpush1.bf16.msra.mxu0 0
    %1919 = vmatprep.subr.bf16.mxu0 0
    %1920 = vmatpush1.bf16.msra.mxu0 0
    %1921 = vmatprep.subr.bf16.mxu0 0
    %1922 = vmatpush1.bf16.msra.mxu0 0
    %1923 = vmatprep.subr.bf16.mxu0 0
    %1924 = vmatpush1.bf16.msra.mxu0 0
    %1925 = vmatprep.subr.bf16.mxu0 0
    %1926 = vmatpush1.bf16.msra.mxu0 0
    %1927 = vmatprep.subr.bf16.mxu0 0
    %1928 = vmatpush1.bf16.msra.mxu0 0
    %1929 = vmatprep.subr.bf16.mxu0 0
    %1930 = vmatpush1.bf16.msra.mxu0 0
    %1931 = vmatprep.mubr.bf16.mxu0 0
    %1932 = vmatmul.mubr.bf16.gmra.mrb[0].mxu0 %v1897
    %v1933 = vpop.f32.mrb[0].mxu0
    %v1934 = vadd.f32 %v1882, %v1933
    %v1935 = vpop.f32.mrb[0].mxu0
    %v1936 = vpop.f32.mrb[0].mxu0
    %v1937 = vpop.f32.mrb[0].mxu0
    %1938 = vdwg.mxu0
    %v1939 = vunpack.c.l.bf16 %v1870
    %v1940 = vadd.f32 %v1939, %v1934
    %v1941 = vxor.u32 %v1940, 2147483648
    %v1942 = vmul.f32 %v1941, 1.442695
    %v1943 = vpow.pop %v1942
    %v1944 = vadd.f32 %v1943, 1.0
    %v1945 = vrcp.pop %v1944
    %v1946 = vmul.f32 1.0, %v1945
    %v1949 = vunpack.c.l.s4 1983009808
    %v1950 = vunpack.c.0.s8 %v1949
    %v1951 = vlaneseq
    %v1952 = vshrl.u32 %v1951, 7
    %v1953 = vsub.s32 %v1950, %v1952
    %v1954 = vrot.slane %v1934, %v1953
    %1955 = vrot.lane.b32.xlu0 %v1954, 64
    %v1956 = vpop.permute.xlu0 %1955
    %v1958 = vmul.f32 %v1946, %v1956
    %1960 = vrot.lane.b32.xlu0 %v1958, 64
    %v1961 = vpop.permute.xlu0 %1960
    %v1963 = vadd.f32 %v1939, %v1961
    %v1964 = vtanh.pop %v1963
    %v1965 = vsub.f32 1.0, %v1946
    %1967 = vrot.lane.b32.xlu0 %v1964, 96
    %v1968 = vpop.permute.xlu0 %1967
    %v1970 = vmul.f32 %v1965, %v1968
    %v1973 = vunpack.c.l.s4 1983009808
    %v1974 = vunpack.c.0.s8 %v1973
    %v1975 = vlaneseq
    %v1976 = vshrl.u32 %v1975, 7
    %v1977 = vsub.s32 %v1974, %v1976
    %v1978 = vrot.slane %v1871, %v1977
    %1979 = vrot.lane.b32.xlu0 %v1978, 32
    %v1980 = vpop.permute.xlu0 %1979
    %v1982 = vmul.f32 %v1946, %v1980
    %v1983 = vadd.f32 %v1970, %v1982
    %v1986 = vunpack.c.l.s4 1983009808
    %v1987 = vunpack.c.0.s8 %v1986
    %v1988 = vlaneseq
    %v1989 = vshrl.u32 %v1988, 7
    %v1990 = vsub.s32 %v1987, %v1989
    %v1991 = vrot.slane %v1983, %v1990
    %1992 = vrot.lane.b32.xlu0 %v1991, 96
    %v1993 = vpop.permute.xlu0 %1992
    %1995 = vst.msk [vmem:[#allocation2] sm:$0x3] %vm240, %v1993
    %v1996 = vpack.c.bf16 %v1983, %v1983
    %v1997 = vld [vmem:[#allocation8] sm:$0xf]
    %v1998 = vld [vmem:[#allocation8 + $0x4] sm:$0xf]
    %v1999 = vld [vmem:[#allocation8 + $0x8] sm:$0xf]
    %v2000 = vld [vmem:[#allocation8 + $0xc] sm:$0xf]
    %v2001 = vld [vmem:[#allocation9] sm:$0x1]
    %v2003 = vlaneseq
    %v2004 = vshrl.u32 %v2003, 7
    %v2005 = vsub.s32 0, %v2004
    %v2006 = vrot.slane %v2001, %v2005
    %2009 = vrot.lane.b32.xlu0 %v1996, 96
    %v2010 = vpop.permute.xlu0 %2009
    %v2015 = vunpack.c.l.b16 %v1997
    %v2016 = vunpack.c.l.b16 %v1998
    %v2017 = vunpack.c.l.b16 %v1999
    %v2018 = vunpack.c.l.b16 %v2000
    %v2019 = vpack.c.b16 %v2016, %v2015
    %v2020 = vpack.c.b16 %v2018, %v2017
    %v2024 = vsel %vm140, %v2010, 0
    %2026 = vmatprep.subr.bf16.mxu0 0
    %2027 = vmatpush1.bf16.msra.mxu0 %v2019
    %2028 = vmatprep.subr.bf16.mxu0 0
    %2029 = vmatpush1.bf16.msra.mxu0 %v2020
    %2030 = vmatprep.subr.bf16.mxu0 0
    %2031 = vmatpush1.bf16.msra.mxu0 0
    %2032 = vmatprep.subr.bf16.mxu0 0
    %2033 = vmatpush1.bf16.msra.mxu0 0
    %2034 = vmatprep.subr.bf16.mxu0 0
    %2035 = vmatpush1.bf16.msra.mxu0 0
    %2036 = vmatprep.subr.bf16.mxu0 0
    %2037 = vmatpush1.bf16.msra.mxu0 0
    %2038 = vmatprep.subr.bf16.mxu0 0
    %2039 = vmatpush1.bf16.msra.mxu0 0
    %2040 = vmatprep.subr.bf16.mxu0 0
    %2041 = vmatpush1.bf16.msra.mxu0 0
    %2042 = vmatprep.subr.bf16.mxu0 0
    %2043 = vmatpush1.bf16.msra.mxu0 0
    %2044 = vmatprep.subr.bf16.mxu0 0
    %2045 = vmatpush1.bf16.msra.mxu0 0
    %2046 = vmatprep.subr.bf16.mxu0 0
    %2047 = vmatpush1.bf16.msra.mxu0 0
    %2048 = vmatprep.subr.bf16.mxu0 0
    %2049 = vmatpush1.bf16.msra.mxu0 0
    %2050 = vmatprep.subr.bf16.mxu0 0
    %2051 = vmatpush1.bf16.msra.mxu0 0
    %2052 = vmatprep.subr.bf16.mxu0 0
    %2053 = vmatpush1.bf16.msra.mxu0 0
    %2054 = vmatprep.subr.bf16.mxu0 0
    %2055 = vmatpush1.bf16.msra.mxu0 0
    %2056 = vmatprep.subr.bf16.mxu0 0
    %2057 = vmatpush1.bf16.msra.mxu0 0
    %2058 = vmatprep.mubr.bf16.mxu0 0
    %2059 = vmatmul.mubr.bf16.gmra.mrb[0].mxu0 %v2024
    %v2060 = vpop.f32.mrb[0].mxu0
    %v2061 = vadd.f32 %v2006, %v2060
    %v2062 = vpop.f32.mrb[0].mxu0
    %v2063 = vpop.f32.mrb[0].mxu0
    %v2064 = vpop.f32.mrb[0].mxu0
    %2065 = vdwg.mxu0
    %v2066 = vld [vmem:[%s312] sm:$0x3]
    %v2067 = vld [vmem:[%s314] sm:$0xf]
    %v2068 = vld [vmem:[%s314 + $0x4] sm:$0xf]
    %v2069 = vld [vmem:[%s314 + $0x8] sm:$0xf]
    %v2070 = vld [vmem:[%s314 + $0xc] sm:$0xf]
    %v2071 = vld [vmem:[%s319] sm:$0x1]
    %v2072 = vpack.c.bf16 %v2066, %v2066
    %v2074 = vlaneseq
    %v2075 = vshrl.u32 %v2074, 7
    %v2076 = vsub.s32 0, %v2075
    %v2077 = vrot.slane %v2071, %v2076
    %v2083 = vunpack.c.l.b16 %v2067
    %v2084 = vunpack.c.l.b16 %v2068
    %v2085 = vunpack.c.l.b16 %v2069
    %v2086 = vunpack.c.l.b16 %v2070
    %v2087 = vpack.c.b16 %v2084, %v2083
    %v2088 = vpack.c.b16 %v2086, %v2085
    %v2092 = vsel %vm140, %v2072, 0
    %2094 = vmatprep.subr.bf16.mxu0 0
    %2095 = vmatpush1.bf16.msra.mxu0 %v2087
    %2096 = vmatprep.subr.bf16.mxu0 0
    %2097 = vmatpush1.bf16.msra.mxu0 %v2088
    %2098 = vmatprep.subr.bf16.mxu0 0
    %2099 = vmatpush1.bf16.msra.mxu0 0
    %2100 = vmatprep.subr.bf16.mxu0 0
    %2101 = vmatpush1.bf16.msra.mxu0 0
    %2102 = vmatprep.subr.bf16.mxu0 0
    %2103 = vmatpush1.bf16.msra.mxu0 0
    %2104 = vmatprep.subr.bf16.mxu0 0
    %2105 = vmatpush1.bf16.msra.mxu0 0
    %2106 = vmatprep.subr.bf16.mxu0 0
    %2107 = vmatpush1.bf16.msra.mxu0 0
    %2108 = vmatprep.subr.bf16.mxu0 0
    %2109 = vmatpush1.bf16.msra.mxu0 0
    %2110 = vmatprep.subr.bf16.mxu0 0
    %2111 = vmatpush1.bf16.msra.mxu0 0
    %2112 = vmatprep.subr.bf16.mxu0 0
    %2113 = vmatpush1.bf16.msra.mxu0 0
    %2114 = vmatprep.subr.bf16.mxu0 0
    %2115 = vmatpush1.bf16.msra.mxu0 0
    %2116 = vmatprep.subr.bf16.mxu0 0
    %2117 = vmatpush1.bf16.msra.mxu0 0
    %2118 = vmatprep.subr.bf16.mxu0 0
    %2119 = vmatpush1.bf16.msra.mxu0 0
    %2120 = vmatprep.subr.bf16.mxu0 0
    %2121 = vmatpush1.bf16.msra.mxu0 0
    %2122 = vmatprep.subr.bf16.mxu0 0
    %2123 = vmatpush1.bf16.msra.mxu0 0
    %2124 = vmatprep.subr.bf16.mxu0 0
    %2125 = vmatpush1.bf16.msra.mxu0 0
    %2126 = vmatprep.mubr.bf16.mxu0 0
    %2127 = vmatmul.mubr.bf16.gmra.mrb[0].mxu0 %v2092
    %v2128 = vpop.f32.mrb[0].mxu0
    %v2129 = vadd.f32 %v2077, %v2128
    %v2130 = vpop.f32.mrb[0].mxu0
    %v2131 = vpop.f32.mrb[0].mxu0
    %v2132 = vpop.f32.mrb[0].mxu0
    %2133 = vdwg.mxu0
    %v2134 = vadd.f32 %v2061, %v2129
    %v2135 = vxor.u32 %v2134, 2147483648
    %v2136 = vmul.f32 %v2135, 1.442695
    %v2137 = vpow.pop %v2136
    %v2138 = vadd.f32 %v2137, 1.0
    %v2139 = vrcp.pop %v2138
    %v2140 = vmul.f32 1.0, %v2139
    %2142 = vrot.lane.b32.xlu0 %v2129, 64
    %v2143 = vpop.permute.xlu0 %2142
    %v2145 = vmul.f32 %v2140, %v2143
    %2147 = vrot.lane.b32.xlu0 %v2145, 64
    %v2148 = vpop.permute.xlu0 %2147
    %v2150 = vadd.f32 %v2061, %v2148
    %v2151 = vtanh.pop %v2150
    %v2152 = vsub.f32 1.0, %v2140
    %2154 = vrot.lane.b32.xlu0 %v2151, 96
    %v2155 = vpop.permute.xlu0 %2154
    %v2157 = vmul.f32 %v2152, %v2155
    %2159 = vrot.lane.b32.xlu0 %v2066, 32
    %v2160 = vpop.permute.xlu0 %2159
    %v2162 = vmul.f32 %v2140, %v2160
    %v2163 = vadd.f32 %v2157, %v2162
    %2165 = vrot.lane.b32.xlu0 %v2163, 96
    %v2166 = vpop.permute.xlu0 %2165
    %2168 = vst.msk [vmem:[%s312] sm:$0x3] %vm240, %v2166
    %v2170 = vunpack.c.l.s4 1966171168
    %v2171 = vunpack.c.0.s8 %v2170
    %v2172 = vlaneseq
    %v2173 = vshrl.u32 %v2172, 7
    %v2174 = vsub.s32 %v2171, %v2173
    %v2175 = vrot.slane %v2163, %v2174
    %v2176 = vcombine.high %v2175, %v2175
    %v2178 = vunpack.c.l.s4 1966171168
    %v2179 = vunpack.c.0.s8 %v2178
    %v2180 = vlaneseq
    %v2181 = vshrl.u32 %v2180, 7
    %v2182 = vsub.s32 %v2179, %v2181
    %v2183 = vrot.slane %v2175, %v2182
    %v2185 = vunpack.c.l.s4 1966171168
    %v2186 = vunpack.c.0.s8 %v2185
    %v2187 = vlaneseq
    %v2188 = vshrl.u32 %v2187, 7
    %v2189 = vsub.s32 %v2186, %v2188
    %v2190 = vrot.slane %v2176, %v2189
    %v2193 = vpack.c.bf16 %v2183, %v2183
    %v2194 = vpack.c.bf16 %v2190, %v2190
    %v2197 = vunpack.c.l.b16 %v2193
    %v2198 = vunpack.c.l.b16 %v2194
    %v2199 = vpack.c.b16 %v2197, %v2197
    %v2200 = vpack.c.b16 %v2198, %v2198
    %v2202 = vshll.u32 %v2199, 16
    %v2204 = vrot.slane %v2202, 6
    %v2206 = vshll.u32 %v2200, 16
    %v2208 = vrot.slane %v2206, 6
    %2209 = vrot.lane.b32.xlu0 %v2204, 96
    %v2210 = vpop.permute.xlu0 %2209
    %2211 = vrot.lane.b32.xlu0 %v2208, 96
    %v2212 = vpop.permute.xlu0 %2211
    %vm2215 = vsmask.f32 7946
    %vm2216 = vmand %vm1860, %vm2215
    %v2217 = vld [vmem:[#allocation14] sm:$0x4]
    %v2218 = vsel %vm2216, %v2210, %v2217
    %2219 = vst [vmem:[#allocation14] sm:$0x4] %v2218
    %v2220 = vld [vmem:[#allocation14 + $0x4] sm:$0x4]
    %v2221 = vsel %vm2216, %v2212, %v2220
    %2222 = vst [vmem:[#allocation14 + $0x4] sm:$0x4] %v2221
    %s2223 = scalar_lea.vmem [#allocation3], 6
    %v2224 = vld [vmem:[%s2223] sm:$0x1]
    %v2225 = vld [vmem:[#allocation2] sm:$0x3]
    %v2226 = vld [vmem:[#allocation11] sm:$0xf]
    %v2227 = vld [vmem:[#allocation11 + $0x4] sm:$0xf]
    %v2228 = vld [vmem:[#allocation11 + $0x8] sm:$0xf]
    %v2229 = vld [vmem:[#allocation11 + $0xc] sm:$0xf]
    %v2230 = vld [vmem:[#allocation12] sm:$0x1]
    %v2231 = vpack.c.bf16 %v2225, %v2225
    %v2233 = vlaneseq
    %v2234 = vshrl.u32 %v2233, 7
    %v2235 = vsub.s32 0, %v2234
    %v2236 = vrot.slane %v2230, %v2235
    %v2242 = vunpack.c.l.b16 %v2226
    %v2243 = vunpack.c.l.b16 %v2227
    %v2244 = vunpack.c.l.b16 %v2228
    %v2245 = vunpack.c.l.b16 %v2229
    %v2246 = vpack.c.b16 %v2243, %v2242
    %v2247 = vpack.c.b16 %v2245, %v2244
    %v2251 = vsel %vm140, %v2231, 0
    %2253 = vmatprep.subr.bf16.mxu0 0
    %2254 = vmatpush1.bf16.msra.mxu0 %v2246
    %2255 = vmatprep.subr.bf16.mxu0 0
    %2256 = vmatpush1.bf16.msra.mxu0 %v2247
    %2257 = vmatprep.subr.bf16.mxu0 0
    %2258 = vmatpush1.bf16.msra.mxu0 0
    %2259 = vmatprep.subr.bf16.mxu0 0
    %2260 = vmatpush1.bf16.msra.mxu0 0
    %2261 = vmatprep.subr.bf16.mxu0 0
    %2262 = vmatpush1.bf16.msra.mxu0 0
    %2263 = vmatprep.subr.bf16.mxu0 0
    %2264 = vmatpush1.bf16.msra.mxu0 0
    %2265 = vmatprep.subr.bf16.mxu0 0
    %2266 = vmatpush1.bf16.msra.mxu0 0
    %2267 = vmatprep.subr.bf16.mxu0 0
    %2268 = vmatpush1.bf16.msra.mxu0 0
    %2269 = vmatprep.subr.bf16.mxu0 0
    %2270 = vmatpush1.bf16.msra.mxu0 0
    %2271 = vmatprep.subr.bf16.mxu0 0
    %2272 = vmatpush1.bf16.msra.mxu0 0
    %2273 = vmatprep.subr.bf16.mxu0 0
    %2274 = vmatpush1.bf16.msra.mxu0 0
    %2275 = vmatprep.subr.bf16.mxu0 0
    %2276 = vmatpush1.bf16.msra.mxu0 0
    %2277 = vmatprep.subr.bf16.mxu0 0
    %2278 = vmatpush1.bf16.msra.mxu0 0
    %2279 = vmatprep.subr.bf16.mxu0 0
    %2280 = vmatpush1.bf16.msra.mxu0 0
    %2281 = vmatprep.subr.bf16.mxu0 0
    %2282 = vmatpush1.bf16.msra.mxu0 0
    %2283 = vmatprep.subr.bf16.mxu0 0
    %2284 = vmatpush1.bf16.msra.mxu0 0
    %2285 = vmatprep.mubr.bf16.mxu0 0
    %2286 = vmatmul.mubr.bf16.gmra.mrb[0].mxu0 %v2251
    %v2287 = vpop.f32.mrb[0].mxu0
    %v2288 = vadd.f32 %v2236, %v2287
    %v2289 = vpop.f32.mrb[0].mxu0
    %v2290 = vpop.f32.mrb[0].mxu0
    %v2291 = vpop.f32.mrb[0].mxu0
    %2292 = vdwg.mxu0
    %v2293 = vunpack.c.l.bf16 %v2224
    %v2294 = vadd.f32 %v2293, %v2288
    %v2295 = vxor.u32 %v2294, 2147483648
    %v2296 = vmul.f32 %v2295, 1.442695
    %v2297 = vpow.pop %v2296
    %v2298 = vadd.f32 %v2297, 1.0
    %v2299 = vrcp.pop %v2298
    %v2300 = vmul.f32 1.0, %v2299
    %v2303 = vunpack.c.l.s4 1983009808
    %v2304 = vunpack.c.0.s8 %v2303
    %v2305 = vlaneseq
    %v2306 = vshrl.u32 %v2305, 7
    %v2307 = vsub.s32 %v2304, %v2306
    %v2308 = vrot.slane %v2288, %v2307
    %2309 = vrot.lane.b32.xlu0 %v2308, 64
    %v2310 = vpop.permute.xlu0 %2309
    %v2312 = vmul.f32 %v2300, %v2310
    %2314 = vrot.lane.b32.xlu0 %v2312, 64
    %v2315 = vpop.permute.xlu0 %2314
    %v2317 = vadd.f32 %v2293, %v2315
    %v2318 = vtanh.pop %v2317
    %v2319 = vsub.f32 1.0, %v2300
    %2321 = vrot.lane.b32.xlu0 %v2318, 96
    %v2322 = vpop.permute.xlu0 %2321
    %v2324 = vmul.f32 %v2319, %v2322
    %v2327 = vunpack.c.l.s4 1983009808
    %v2328 = vunpack.c.0.s8 %v2327
    %v2329 = vlaneseq
    %v2330 = vshrl.u32 %v2329, 7
    %v2331 = vsub.s32 %v2328, %v2330
    %v2332 = vrot.slane %v2225, %v2331
    %2333 = vrot.lane.b32.xlu0 %v2332, 32
    %v2334 = vpop.permute.xlu0 %2333
    %v2336 = vmul.f32 %v2300, %v2334
    %v2337 = vadd.f32 %v2324, %v2336
    %v2340 = vunpack.c.l.s4 1983009808
    %v2341 = vunpack.c.0.s8 %v2340
    %v2342 = vlaneseq
    %v2343 = vshrl.u32 %v2342, 7
    %v2344 = vsub.s32 %v2341, %v2343
    %v2345 = vrot.slane %v2337, %v2344
    %2346 = vrot.lane.b32.xlu0 %v2345, 96
    %v2347 = vpop.permute.xlu0 %2346
    %2349 = vst.msk [vmem:[#allocation2] sm:$0x3] %vm240, %v2347
    %v2350 = vpack.c.bf16 %v2337, %v2337
    %v2351 = vld [vmem:[#allocation8] sm:$0xf]
    %v2352 = vld [vmem:[#allocation8 + $0x4] sm:$0xf]
    %v2353 = vld [vmem:[#allocation8 + $0x8] sm:$0xf]
    %v2354 = vld [vmem:[#allocation8 + $0xc] sm:$0xf]
    %v2355 = vld [vmem:[#allocation9] sm:$0x1]
    %v2357 = vlaneseq
    %v2358 = vshrl.u32 %v2357, 7
    %v2359 = vsub.s32 0, %v2358
    %v2360 = vrot.slane %v2355, %v2359
    %2363 = vrot.lane.b32.xlu0 %v2350, 96
    %v2364 = vpop.permute.xlu0 %2363
    %v2369 = vunpack.c.l.b16 %v2351
    %v2370 = vunpack.c.l.b16 %v2352
    %v2371 = vunpack.c.l.b16 %v2353
    %v2372 = vunpack.c.l.b16 %v2354
    %v2373 = vpack.c.b16 %v2370, %v2369
    %v2374 = vpack.c.b16 %v2372, %v2371
    %v2378 = vsel %vm140, %v2364, 0
    %2380 = vmatprep.subr.bf16.mxu0 0
    %2381 = vmatpush1.bf16.msra.mxu0 %v2373
    %2382 = vmatprep.subr.bf16.mxu0 0
    %2383 = vmatpush1.bf16.msra.mxu0 %v2374
    %2384 = vmatprep.subr.bf16.mxu0 0
    %2385 = vmatpush1.bf16.msra.mxu0 0
    %2386 = vmatprep.subr.bf16.mxu0 0
    %2387 = vmatpush1.bf16.msra.mxu0 0
    %2388 = vmatprep.subr.bf16.mxu0 0
    %2389 = vmatpush1.bf16.msra.mxu0 0
    %2390 = vmatprep.subr.bf16.mxu0 0
    %2391 = vmatpush1.bf16.msra.mxu0 0
    %2392 = vmatprep.subr.bf16.mxu0 0
    %2393 = vmatpush1.bf16.msra.mxu0 0
    %2394 = vmatprep.subr.bf16.mxu0 0
    %2395 = vmatpush1.bf16.msra.mxu0 0
    %2396 = vmatprep.subr.bf16.mxu0 0
    %2397 = vmatpush1.bf16.msra.mxu0 0
    %2398 = vmatprep.subr.bf16.mxu0 0
    %2399 = vmatpush1.bf16.msra.mxu0 0
    %2400 = vmatprep.subr.bf16.mxu0 0
    %2401 = vmatpush1.bf16.msra.mxu0 0
    %2402 = vmatprep.subr.bf16.mxu0 0
    %2403 = vmatpush1.bf16.msra.mxu0 0
    %2404 = vmatprep.subr.bf16.mxu0 0
    %2405 = vmatpush1.bf16.msra.mxu0 0
    %2406 = vmatprep.subr.bf16.mxu0 0
    %2407 = vmatpush1.bf16.msra.mxu0 0
    %2408 = vmatprep.subr.bf16.mxu0 0
    %2409 = vmatpush1.bf16.msra.mxu0 0
    %2410 = vmatprep.subr.bf16.mxu0 0
    %2411 = vmatpush1.bf16.msra.mxu0 0
    %2412 = vmatprep.mubr.bf16.mxu0 0
    %2413 = vmatmul.mubr.bf16.gmra.mrb[0].mxu0 %v2378
    %v2414 = vpop.f32.mrb[0].mxu0
    %v2415 = vadd.f32 %v2360, %v2414
    %v2416 = vpop.f32.mrb[0].mxu0
    %v2417 = vpop.f32.mrb[0].mxu0
    %v2418 = vpop.f32.mrb[0].mxu0
    %2419 = vdwg.mxu0
    %v2420 = vld [vmem:[%s312] sm:$0x3]
    %v2421 = vld [vmem:[%s314] sm:$0xf]
    %v2422 = vld [vmem:[%s314 + $0x4] sm:$0xf]
    %v2423 = vld [vmem:[%s314 + $0x8] sm:$0xf]
    %v2424 = vld [vmem:[%s314 + $0xc] sm:$0xf]
    %v2425 = vld [vmem:[%s319] sm:$0x1]
    %v2426 = vpack.c.bf16 %v2420, %v2420
    %v2428 = vlaneseq
    %v2429 = vshrl.u32 %v2428, 7
    %v2430 = vsub.s32 0, %v2429
    %v2431 = vrot.slane %v2425, %v2430
    %v2437 = vunpack.c.l.b16 %v2421
    %v2438 = vunpack.c.l.b16 %v2422
    %v2439 = vunpack.c.l.b16 %v2423
    %v2440 = vunpack.c.l.b16 %v2424
    %v2441 = vpack.c.b16 %v2438, %v2437
    %v2442 = vpack.c.b16 %v2440, %v2439
    %v2446 = vsel %vm140, %v2426, 0
    %2448 = vmatprep.subr.bf16.mxu0 0
    %2449 = vmatpush1.bf16.msra.mxu0 %v2441
    %2450 = vmatprep.subr.bf16.mxu0 0
    %2451 = vmatpush1.bf16.msra.mxu0 %v2442
    %2452 = vmatprep.subr.bf16.mxu0 0
    %2453 = vmatpush1.bf16.msra.mxu0 0
    %2454 = vmatprep.subr.bf16.mxu0 0
    %2455 = vmatpush1.bf16.msra.mxu0 0
    %2456 = vmatprep.subr.bf16.mxu0 0
    %2457 = vmatpush1.bf16.msra.mxu0 0
    %2458 = vmatprep.subr.bf16.mxu0 0
    %2459 = vmatpush1.bf16.msra.mxu0 0
    %2460 = vmatprep.subr.bf16.mxu0 0
    %2461 = vmatpush1.bf16.msra.mxu0 0
    %2462 = vmatprep.subr.bf16.mxu0 0
    %2463 = vmatpush1.bf16.msra.mxu0 0
    %2464 = vmatprep.subr.bf16.mxu0 0
    %2465 = vmatpush1.bf16.msra.mxu0 0
    %2466 = vmatprep.subr.bf16.mxu0 0
    %2467 = vmatpush1.bf16.msra.mxu0 0
    %2468 = vmatprep.subr.bf16.mxu0 0
    %2469 = vmatpush1.bf16.msra.mxu0 0
    %2470 = vmatprep.subr.bf16.mxu0 0
    %2471 = vmatpush1.bf16.msra.mxu0 0
    %2472 = vmatprep.subr.bf16.mxu0 0
    %2473 = vmatpush1.bf16.msra.mxu0 0
    %2474 = vmatprep.subr.bf16.mxu0 0
    %2475 = vmatpush1.bf16.msra.mxu0 0
    %2476 = vmatprep.subr.bf16.mxu0 0
    %2477 = vmatpush1.bf16.msra.mxu0 0
    %2478 = vmatprep.subr.bf16.mxu0 0
    %2479 = vmatpush1.bf16.msra.mxu0 0
    %2480 = vmatprep.mubr.bf16.mxu0 0
    %2481 = vmatmul.mubr.bf16.gmra.mrb[0].mxu0 %v2446
    %v2482 = vpop.f32.mrb[0].mxu0
    %v2483 = vadd.f32 %v2431, %v2482
    %v2484 = vpop.f32.mrb[0].mxu0
    %v2485 = vpop.f32.mrb[0].mxu0
    %v2486 = vpop.f32.mrb[0].mxu0
    %2487 = vdwg.mxu0
    %v2488 = vadd.f32 %v2415, %v2483
    %v2489 = vxor.u32 %v2488, 2147483648
    %v2490 = vmul.f32 %v2489, 1.442695
    %v2491 = vpow.pop %v2490
    %v2492 = vadd.f32 %v2491, 1.0
    %v2493 = vrcp.pop %v2492
    %v2494 = vmul.f32 1.0, %v2493
    %2496 = vrot.lane.b32.xlu0 %v2483, 64
    %v2497 = vpop.permute.xlu0 %2496
    %v2499 = vmul.f32 %v2494, %v2497
    %2501 = vrot.lane.b32.xlu0 %v2499, 64
    %v2502 = vpop.permute.xlu0 %2501
    %v2504 = vadd.f32 %v2415, %v2502
    %v2505 = vtanh.pop %v2504
    %v2506 = vsub.f32 1.0, %v2494
    %2508 = vrot.lane.b32.xlu0 %v2505, 96
    %v2509 = vpop.permute.xlu0 %2508
    %v2511 = vmul.f32 %v2506, %v2509
    %2513 = vrot.lane.b32.xlu0 %v2420, 32
    %v2514 = vpop.permute.xlu0 %2513
    %v2516 = vmul.f32 %v2494, %v2514
    %v2517 = vadd.f32 %v2511, %v2516
    %2519 = vrot.lane.b32.xlu0 %v2517, 96
    %v2520 = vpop.permute.xlu0 %2519
    %2522 = vst.msk [vmem:[%s312] sm:$0x3] %vm240, %v2520
    %v2524 = vunpack.c.l.s4 1966171168
    %v2525 = vunpack.c.0.s8 %v2524
    %v2526 = vlaneseq
    %v2527 = vshrl.u32 %v2526, 7
    %v2528 = vsub.s32 %v2525, %v2527
    %v2529 = vrot.slane %v2517, %v2528
    %v2530 = vcombine.high %v2529, %v2529
    %v2532 = vunpack.c.l.s4 1966171168
    %v2533 = vunpack.c.0.s8 %v2532
    %v2534 = vlaneseq
    %v2535 = vshrl.u32 %v2534, 7
    %v2536 = vsub.s32 %v2533, %v2535
    %v2537 = vrot.slane %v2529, %v2536
    %v2539 = vunpack.c.l.s4 1966171168
    %v2540 = vunpack.c.0.s8 %v2539
    %v2541 = vlaneseq
    %v2542 = vshrl.u32 %v2541, 7
    %v2543 = vsub.s32 %v2540, %v2542
    %v2544 = vrot.slane %v2530, %v2543
    %v2547 = vpack.c.bf16 %v2537, %v2537
    %v2548 = vpack.c.bf16 %v2544, %v2544
    %v2551 = vunpack.c.l.b16 %v2547
    %v2552 = vunpack.c.l.b16 %v2548
    %v2553 = vpack.c.b16 %v2551, %v2551
    %v2554 = vpack.c.b16 %v2552, %v2552
    %v2555 = vrot.slane %v2553, 5
    %v2556 = vrot.slane %v2554, 5
    %2557 = vrot.lane.b32.xlu0 %v2555, 96
    %v2558 = vpop.permute.xlu0 %2557
    %2559 = vrot.lane.b32.xlu0 %v2556, 96
    %v2560 = vpop.permute.xlu0 %2559
    %vm2563 = vcmask 257027
    %vm2564 = vsmask.f32 3328
    %vm2565 = vmand %vm2563, %vm2564
    %v2566 = vld [vmem:[#allocation14] sm:$0x8]
    %v2567 = vsel %vm2565, %v2558, %v2566
    %2568 = vst [vmem:[#allocation14] sm:$0x8] %v2567
    %v2569 = vld [vmem:[#allocation14 + $0x4] sm:$0x8]
    %v2570 = vsel %vm2565, %v2560, %v2569
    %2571 = vst [vmem:[#allocation14 + $0x4] sm:$0x8] %v2570
    %s2572 = scalar_lea.vmem [#allocation3], 7
    %v2573 = vld [vmem:[%s2572] sm:$0x1]
    %v2574 = vld [vmem:[#allocation2] sm:$0x3]
    %v2575 = vld [vmem:[#allocation11] sm:$0xf]
    %v2576 = vld [vmem:[#allocation11 + $0x4] sm:$0xf]
    %v2577 = vld [vmem:[#allocation11 + $0x8] sm:$0xf]
    %v2578 = vld [vmem:[#allocation11 + $0xc] sm:$0xf]
    %v2579 = vld [vmem:[#allocation12] sm:$0x1]
    %v2580 = vpack.c.bf16 %v2574, %v2574
    %v2582 = vlaneseq
    %v2583 = vshrl.u32 %v2582, 7
    %v2584 = vsub.s32 0, %v2583
    %v2585 = vrot.slane %v2579, %v2584
    %v2591 = vunpack.c.l.b16 %v2575
    %v2592 = vunpack.c.l.b16 %v2576
    %v2593 = vunpack.c.l.b16 %v2577
    %v2594 = vunpack.c.l.b16 %v2578
    %v2595 = vpack.c.b16 %v2592, %v2591
    %v2596 = vpack.c.b16 %v2594, %v2593
    %v2600 = vsel %vm140, %v2580, 0
    %2602 = vmatprep.subr.bf16.mxu0 0
    %2603 = vmatpush1.bf16.msra.mxu0 %v2595
    %2604 = vmatprep.subr.bf16.mxu0 0
    %2605 = vmatpush1.bf16.msra.mxu0 %v2596
    %2606 = vmatprep.subr.bf16.mxu0 0
    %2607 = vmatpush1.bf16.msra.mxu0 0
    %2608 = vmatprep.subr.bf16.mxu0 0
    %2609 = vmatpush1.bf16.msra.mxu0 0
    %2610 = vmatprep.subr.bf16.mxu0 0
    %2611 = vmatpush1.bf16.msra.mxu0 0
    %2612 = vmatprep.subr.bf16.mxu0 0
    %2613 = vmatpush1.bf16.msra.mxu0 0
    %2614 = vmatprep.subr.bf16.mxu0 0
    %2615 = vmatpush1.bf16.msra.mxu0 0
    %2616 = vmatprep.subr.bf16.mxu0 0
    %2617 = vmatpush1.bf16.msra.mxu0 0
    %2618 = vmatprep.subr.bf16.mxu0 0
    %2619 = vmatpush1.bf16.msra.mxu0 0
    %2620 = vmatprep.subr.bf16.mxu0 0
    %2621 = vmatpush1.bf16.msra.mxu0 0
    %2622 = vmatprep.subr.bf16.mxu0 0
    %2623 = vmatpush1.bf16.msra.mxu0 0
    %2624 = vmatprep.subr.bf16.mxu0 0
    %2625 = vmatpush1.bf16.msra.mxu0 0
    %2626 = vmatprep.subr.bf16.mxu0 0
    %2627 = vmatpush1.bf16.msra.mxu0 0
    %2628 = vmatprep.subr.bf16.mxu0 0
    %2629 = vmatpush1.bf16.msra.mxu0 0
    %2630 = vmatprep.subr.bf16.mxu0 0
    %2631 = vmatpush1.bf16.msra.mxu0 0
    %2632 = vmatprep.subr.bf16.mxu0 0
    %2633 = vmatpush1.bf16.msra.mxu0 0
    %2634 = vmatprep.mubr.bf16.mxu0 0
    %2635 = vmatmul.mubr.bf16.gmra.mrb[0].mxu0 %v2600
    %v2636 = vpop.f32.mrb[0].mxu0
    %v2637 = vadd.f32 %v2585, %v2636
    %v2638 = vpop.f32.mrb[0].mxu0
    %v2639 = vpop.f32.mrb[0].mxu0
    %v2640 = vpop.f32.mrb[0].mxu0
    %2641 = vdwg.mxu0
    %v2642 = vunpack.c.l.bf16 %v2573
    %v2643 = vadd.f32 %v2642, %v2637
    %v2644 = vxor.u32 %v2643, 2147483648
    %v2645 = vmul.f32 %v2644, 1.442695
    %v2646 = vpow.pop %v2645
    %v2647 = vadd.f32 %v2646, 1.0
    %v2648 = vrcp.pop %v2647
    %v2649 = vmul.f32 1.0, %v2648
    %v2652 = vunpack.c.l.s4 1983009808
    %v2653 = vunpack.c.0.s8 %v2652
    %v2654 = vlaneseq
    %v2655 = vshrl.u32 %v2654, 7
    %v2656 = vsub.s32 %v2653, %v2655
    %v2657 = vrot.slane %v2637, %v2656
    %2658 = vrot.lane.b32.xlu0 %v2657, 64
    %v2659 = vpop.permute.xlu0 %2658
    %v2661 = vmul.f32 %v2649, %v2659
    %2663 = vrot.lane.b32.xlu0 %v2661, 64
    %v2664 = vpop.permute.xlu0 %2663
    %v2666 = vadd.f32 %v2642, %v2664
    %v2667 = vtanh.pop %v2666
    %v2668 = vsub.f32 1.0, %v2649
    %2670 = vrot.lane.b32.xlu0 %v2667, 96
    %v2671 = vpop.permute.xlu0 %2670
    %v2673 = vmul.f32 %v2668, %v2671
    %v2676 = vunpack.c.l.s4 1983009808
    %v2677 = vunpack.c.0.s8 %v2676
    %v2678 = vlaneseq
    %v2679 = vshrl.u32 %v2678, 7
    %v2680 = vsub.s32 %v2677, %v2679
    %v2681 = vrot.slane %v2574, %v2680
    %2682 = vrot.lane.b32.xlu0 %v2681, 32
    %v2683 = vpop.permute.xlu0 %2682
    %v2685 = vmul.f32 %v2649, %v2683
    %v2686 = vadd.f32 %v2673, %v2685
    %v2689 = vunpack.c.l.s4 1983009808
    %v2690 = vunpack.c.0.s8 %v2689
    %v2691 = vlaneseq
    %v2692 = vshrl.u32 %v2691, 7
    %v2693 = vsub.s32 %v2690, %v2692
    %v2694 = vrot.slane %v2686, %v2693
    %2695 = vrot.lane.b32.xlu0 %v2694, 96
    %v2696 = vpop.permute.xlu0 %2695
    %2698 = vst.msk [vmem:[#allocation2] sm:$0x3] %vm240, %v2696
    %v2699 = vpack.c.bf16 %v2686, %v2686
    %v2700 = vld [vmem:[#allocation8] sm:$0xf]
    %v2701 = vld [vmem:[#allocation8 + $0x4] sm:$0xf]
    %v2702 = vld [vmem:[#allocation8 + $0x8] sm:$0xf]
    %v2703 = vld [vmem:[#allocation8 + $0xc] sm:$0xf]
    %v2704 = vld [vmem:[#allocation9] sm:$0x1]
    %v2706 = vlaneseq
    %v2707 = vshrl.u32 %v2706, 7
    %v2708 = vsub.s32 0, %v2707
    %v2709 = vrot.slane %v2704, %v2708
    %2712 = vrot.lane.b32.xlu0 %v2699, 96
    %v2713 = vpop.permute.xlu0 %2712
    %v2718 = vunpack.c.l.b16 %v2700
    %v2719 = vunpack.c.l.b16 %v2701
    %v2720 = vunpack.c.l.b16 %v2702
    %v2721 = vunpack.c.l.b16 %v2703
    %v2722 = vpack.c.b16 %v2719, %v2718
    %v2723 = vpack.c.b16 %v2721, %v2720
    %v2727 = vsel %vm140, %v2713, 0
    %2729 = vmatprep.subr.bf16.mxu0 0
    %2730 = vmatpush1.bf16.msra.mxu0 %v2722
    %2731 = vmatprep.subr.bf16.mxu0 0
    %2732 = vmatpush1.bf16.msra.mxu0 %v2723
    %2733 = vmatprep.subr.bf16.mxu0 0
    %2734 = vmatpush1.bf16.msra.mxu0 0
    %2735 = vmatprep.subr.bf16.mxu0 0
    %2736 = vmatpush1.bf16.msra.mxu0 0
    %2737 = vmatprep.subr.bf16.mxu0 0
    %2738 = vmatpush1.bf16.msra.mxu0 0
    %2739 = vmatprep.subr.bf16.mxu0 0
    %2740 = vmatpush1.bf16.msra.mxu0 0
    %2741 = vmatprep.subr.bf16.mxu0 0
    %2742 = vmatpush1.bf16.msra.mxu0 0
    %2743 = vmatprep.subr.bf16.mxu0 0
    %2744 = vmatpush1.bf16.msra.mxu0 0
    %2745 = vmatprep.subr.bf16.mxu0 0
    %2746 = vmatpush1.bf16.msra.mxu0 0
    %2747 = vmatprep.subr.bf16.mxu0 0
    %2748 = vmatpush1.bf16.msra.mxu0 0
    %2749 = vmatprep.subr.bf16.mxu0 0
    %2750 = vmatpush1.bf16.msra.mxu0 0
    %2751 = vmatprep.subr.bf16.mxu0 0
    %2752 = vmatpush1.bf16.msra.mxu0 0
    %2753 = vmatprep.subr.bf16.mxu0 0
    %2754 = vmatpush1.bf16.msra.mxu0 0
    %2755 = vmatprep.subr.bf16.mxu0 0
    %2756 = vmatpush1.bf16.msra.mxu0 0
    %2757 = vmatprep.subr.bf16.mxu0 0
    %2758 = vmatpush1.bf16.msra.mxu0 0
    %2759 = vmatprep.subr.bf16.mxu0 0
    %2760 = vmatpush1.bf16.msra.mxu0 0
    %2761 = vmatprep.mubr.bf16.mxu0 0
    %2762 = vmatmul.mubr.bf16.gmra.mrb[0].mxu0 %v2727
    %v2763 = vpop.f32.mrb[0].mxu0
    %v2764 = vadd.f32 %v2709, %v2763
    %v2765 = vpop.f32.mrb[0].mxu0
    %v2766 = vpop.f32.mrb[0].mxu0
    %v2767 = vpop.f32.mrb[0].mxu0
    %2768 = vdwg.mxu0
    %v2769 = vld [vmem:[%s312] sm:$0x3]
    %v2770 = vld [vmem:[%s314] sm:$0xf]
    %v2771 = vld [vmem:[%s314 + $0x4] sm:$0xf]
    %v2772 = vld [vmem:[%s314 + $0x8] sm:$0xf]
    %v2773 = vld [vmem:[%s314 + $0xc] sm:$0xf]
    %v2774 = vld [vmem:[%s319] sm:$0x1]
    %v2775 = vpack.c.bf16 %v2769, %v2769
    %v2777 = vlaneseq
    %v2778 = vshrl.u32 %v2777, 7
    %v2779 = vsub.s32 0, %v2778
    %v2780 = vrot.slane %v2774, %v2779
    %v2786 = vunpack.c.l.b16 %v2770
    %v2787 = vunpack.c.l.b16 %v2771
    %v2788 = vunpack.c.l.b16 %v2772
    %v2789 = vunpack.c.l.b16 %v2773
    %v2790 = vpack.c.b16 %v2787, %v2786
    %v2791 = vpack.c.b16 %v2789, %v2788
    %v2795 = vsel %vm140, %v2775, 0
    %2797 = vmatprep.subr.bf16.mxu0 0
    %2798 = vmatpush1.bf16.msra.mxu0 %v2790
    %2799 = vmatprep.subr.bf16.mxu0 0
    %2800 = vmatpush1.bf16.msra.mxu0 %v2791
    %2801 = vmatprep.subr.bf16.mxu0 0
    %2802 = vmatpush1.bf16.msra.mxu0 0
    %2803 = vmatprep.subr.bf16.mxu0 0
    %2804 = vmatpush1.bf16.msra.mxu0 0
    %2805 = vmatprep.subr.bf16.mxu0 0
    %2806 = vmatpush1.bf16.msra.mxu0 0
    %2807 = vmatprep.subr.bf16.mxu0 0
    %2808 = vmatpush1.bf16.msra.mxu0 0
    %2809 = vmatprep.subr.bf16.mxu0 0
    %2810 = vmatpush1.bf16.msra.mxu0 0
    %2811 = vmatprep.subr.bf16.mxu0 0
    %2812 = vmatpush1.bf16.msra.mxu0 0
    %2813 = vmatprep.subr.bf16.mxu0 0
    %2814 = vmatpush1.bf16.msra.mxu0 0
    %2815 = vmatprep.subr.bf16.mxu0 0
    %2816 = vmatpush1.bf16.msra.mxu0 0
    %2817 = vmatprep.subr.bf16.mxu0 0
    %2818 = vmatpush1.bf16.msra.mxu0 0
    %2819 = vmatprep.subr.bf16.mxu0 0
    %2820 = vmatpush1.bf16.msra.mxu0 0
    %2821 = vmatprep.subr.bf16.mxu0 0
    %2822 = vmatpush1.bf16.msra.mxu0 0
    %2823 = vmatprep.subr.bf16.mxu0 0
    %2824 = vmatpush1.bf16.msra.mxu0 0
    %2825 = vmatprep.subr.bf16.mxu0 0
    %2826 = vmatpush1.bf16.msra.mxu0 0
    %2827 = vmatprep.subr.bf16.mxu0 0
    %2828 = vmatpush1.bf16.msra.mxu0 0
    %2829 = vmatprep.mubr.bf16.mxu0 0
    %2830 = vmatmul.mubr.bf16.gmra.mrb[0].mxu0 %v2795
    %v2831 = vpop.f32.mrb[0].mxu0
    %v2832 = vadd.f32 %v2780, %v2831
    %v2833 = vpop.f32.mrb[0].mxu0
    %v2834 = vpop.f32.mrb[0].mxu0
    %v2835 = vpop.f32.mrb[0].mxu0
    %2836 = vdwg.mxu0
    %v2837 = vadd.f32 %v2764, %v2832
    %v2838 = vxor.u32 %v2837, 2147483648
    %v2839 = vmul.f32 %v2838, 1.442695
    %v2840 = vpow.pop %v2839
    %v2841 = vadd.f32 %v2840, 1.0
    %v2842 = vrcp.pop %v2841
    %v2843 = vmul.f32 1.0, %v2842
    %2845 = vrot.lane.b32.xlu0 %v2832, 64
    %v2846 = vpop.permute.xlu0 %2845
    %v2848 = vmul.f32 %v2843, %v2846
    %2850 = vrot.lane.b32.xlu0 %v2848, 64
    %v2851 = vpop.permute.xlu0 %2850
    %v2853 = vadd.f32 %v2764, %v2851
    %v2854 = vtanh.pop %v2853
    %v2855 = vsub.f32 1.0, %v2843
    %2857 = vrot.lane.b32.xlu0 %v2854, 96
    %v2858 = vpop.permute.xlu0 %2857
    %v2860 = vmul.f32 %v2855, %v2858
    %2862 = vrot.lane.b32.xlu0 %v2769, 32
    %v2863 = vpop.permute.xlu0 %2862
    %v2865 = vmul.f32 %v2843, %v2863
    %v2866 = vadd.f32 %v2860, %v2865
    %2868 = vrot.lane.b32.xlu0 %v2866, 96
    %v2869 = vpop.permute.xlu0 %2868
    %2871 = vst.msk [vmem:[%s312] sm:$0x3] %vm240, %v2869
    %v2873 = vunpack.c.l.s4 1966171168
    %v2874 = vunpack.c.0.s8 %v2873
    %v2875 = vlaneseq
    %v2876 = vshrl.u32 %v2875, 7
    %v2877 = vsub.s32 %v2874, %v2876
    %v2878 = vrot.slane %v2866, %v2877
    %v2879 = vcombine.high %v2878, %v2878
    %v2881 = vunpack.c.l.s4 1966171168
    %v2882 = vunpack.c.0.s8 %v2881
    %v2883 = vlaneseq
    %v2884 = vshrl.u32 %v2883, 7
    %v2885 = vsub.s32 %v2882, %v2884
    %v2886 = vrot.slane %v2878, %v2885
    %v2888 = vunpack.c.l.s4 1966171168
    %v2889 = vunpack.c.0.s8 %v2888
    %v2890 = vlaneseq
    %v2891 = vshrl.u32 %v2890, 7
    %v2892 = vsub.s32 %v2889, %v2891
    %v2893 = vrot.slane %v2879, %v2892
    %v2896 = vpack.c.bf16 %v2886, %v2886
    %v2897 = vpack.c.bf16 %v2893, %v2893
    %v2900 = vunpack.c.l.b16 %v2896
    %v2901 = vunpack.c.l.b16 %v2897
    %v2902 = vpack.c.b16 %v2900, %v2900
    %v2903 = vpack.c.b16 %v2901, %v2901
    %v2905 = vshll.u32 %v2902, 16
    %v2907 = vrot.slane %v2905, 5
    %v2909 = vshll.u32 %v2903, 16
    %v2911 = vrot.slane %v2909, 5
    %2912 = vrot.lane.b32.xlu0 %v2907, 96
    %v2913 = vpop.permute.xlu0 %2912
    %2914 = vrot.lane.b32.xlu0 %v2911, 96
    %v2915 = vpop.permute.xlu0 %2914
    %vm2918 = vsmask.f32 7950
    %vm2919 = vmand %vm2563, %vm2918
    %v2920 = vld [vmem:[#allocation14] sm:$0x8]
    %v2921 = vsel %vm2919, %v2913, %v2920
    %2922 = vst [vmem:[#allocation14] sm:$0x8] %v2921
    %v2923 = vld [vmem:[#allocation14 + $0x4] sm:$0x8]
    %v2924 = vsel %vm2919, %v2915, %v2923
    %2925 = vst [vmem:[#allocation14 + $0x4] sm:$0x8] %v2924
    // Predicated region
    $region54: #{gruvae_forward.8} parent=1 // pred_check
      _
    $region55: #{gruvae_forward.8} parent=1 // pred_check_branch
      %2927 = sbr.rel (0) target = $region57
    $region56: #{gruvae_forward.8} parent=1 // pred_region
      %s2929 = ssub.s32 128, 128
      %2930 = vsyncadd [#allocation5], %s2929
      %s2931 = sshll.u32 [#allocation14], 4
      %s2932 = int_to_ptr.vmem [resolvable:$true] %s2931
      %2937 = dma.vmem_to_hbm [thread:$0]  %s2932, 128, %s6, [#allocation5], 64, 64, 4
    $region57: #{gruvae_forward.8} parent=1 // pred_fallthru
      _
    // Predicated region
    $region58: #{gruvae_forward.8} parent=1 // pred_check
      _
    $region59: #{gruvae_forward.8} parent=1 // pred_check_branch
      %2939 = sbr.rel (0) target = $region61
    $region60: #{gruvae_forward.8} parent=1 // pred_region
      %2940 = dma.done [#allocation5], 128
    $region61: #{gruvae_forward.8} parent=1 // pred_fallthru
      _
    %2941 = vsyncpa [#allocation4], 1
    %2942 = vsyncpa [#allocation7], 1
    %2943 = vsyncpa [#allocation10], 1
    %2944 = vsyncpa [#allocation13], 1
    %2945 = vsyncpa [#allocation5], 1

</llo_original>
